<compile_context>
chip_gen: v7x
topology: tpu7x:2x2x1
jax: 0.10.0
libtpu: 0.0.40
codegen_flags: <defaults>
</compile_context>

<pallas_src>
import functools

import jax
import jax.numpy as jnp
from jax.experimental import pallas as pl
from jax.experimental.pallas import tpu as pltpu


# --------------------------------------------------------------------------------------
# Kernel
# --------------------------------------------------------------------------------------
def _dense_capsule_kernel(x_ref, w_ref, expand_ref, reduce_ref, o_ref, *,
                          routings, out_num_caps, out_dim_caps):
    Ni, TB, Di = x_ref.shape            # input caps, batch tile, input cap dim
    No, Do = out_num_caps, out_dim_caps
    NoDo = No * Do

    x = x_ref[...]                      # (Ni, TB, Di)    bf16
    w = w_ref[...]                      # (Ni, Di, NoDo)  bf16, lane-dense
    expand = expand_ref[...]            # (No, NoDo) f32: broadcast per-capsule value to Do lanes
    reduce_ = reduce_ref[...]           # (NoDo, No) f32: sum each capsule's Do lanes

    # x_hat[i, t, o*Do + d] = sum_k W[o, i, d, k] * x[t, i, k]
    # bf16 MXU batched (over Ni) matmul, f32 accumulation; output lane-dense (NoDo lanes).
    xh3 = jnp.einsum("itk,ikn->itn", x, w,
                     preferred_element_type=jnp.float32)        # (Ni, TB, NoDo) f32
    R = Ni * TB
    xh2 = xh3.reshape(R, NoDo)          # TB % 8 == 0 -> layout-preserving reshape

    def squash_lanes(s_l):
        # squash each output capsule's Do lanes of s_l (TB, NoDo)
        mag_sq = jnp.dot(s_l * s_l, reduce_,
                         preferred_element_type=jnp.float32)                 # (TB, No)
        mag = jnp.sqrt(mag_sq)
        factor = mag_sq * pl.reciprocal((1.0 + mag_sq) * (mag + 1e-8),
                                        approx=True)                         # (TB, No)
        return s_l * jnp.dot(factor, expand, preferred_element_type=jnp.float32)

    # --- routing iteration 0: b == 0  =>  c is uniformly 1/No.
    # Skips the softmax pass AND the full (R, NoDo) c*x_hat elementwise pass.
    s_l = jnp.sum(xh3, axis=0) * (1.0 / No)                                  # (TB, NoDo)
    v_l = squash_lanes(s_l)

    # Routing logits b[(i, t), o]; softmax over o == torch F.softmax(b, dim=1).
    b2 = jnp.zeros((R, No), jnp.float32)
    for _ in range(1, routings):        # routings is static -> unrolled
        # agreement from previous v: b[(i,t), o] += sum_d v[t, o, d] * x_hat[t, o, i, d]
        p2 = (xh3 * v_l[None, :, :]).reshape(R, NoDo)
        b2 = b2 + jnp.dot(p2, reduce_, preferred_element_type=jnp.float32)   # (R, No)

        # softmax over output capsules
        e = jnp.exp(b2 - jnp.max(b2, axis=-1, keepdims=True))
        c2 = e * pl.reciprocal(jnp.sum(e, axis=-1, keepdims=True), approx=True)  # (R, No)
        c_exp = jnp.dot(c2, expand, preferred_element_type=jnp.float32)      # (R, NoDo)
        # s[t, o, d] = sum_i c[t, o, i] * x_hat[t, o, i, d]
        s_l = jnp.sum((c_exp * xh2).reshape(Ni, TB, NoDo), axis=0)           # (TB, NoDo)
        v_l = squash_lanes(s_l)

    # TODO(synk): on v6e/v7x keep xh3/xh2 and c_exp in bf16 for the routing elementwise
    # passes (f32 accumulators only), and relayout the routing loop to a batch-on-lanes
    # orientation to drop the (R, No) lane padding, once re-validated on hardware.
    o_ref[...] = v_l.astype(o_ref.dtype)


# --------------------------------------------------------------------------------------
# Wrapper
# --------------------------------------------------------------------------------------
def _round_up(a, m):
    return ((a + m - 1) // m) * m


def dense_capsule(x, weight, routings=3, block_b=None):
    """x: (B, in_num_caps, in_dim_caps) f32; weight: (No, Ni, Do, Di) f32."""
    assert routings > 0, "The 'routings' should be > 0."
    B, Ni, Di = x.shape
    No, Ni_w, Do, Di_w = weight.shape
    assert (Ni, Di) == (Ni_w, Di_w)
    NoDo = No * Do

    # One-time lane-dense weight layout (Ni, Di, No*Do); bf16 for the MXU.
    w2 = jnp.transpose(weight, (1, 3, 0, 2)).reshape(Ni, Di, NoDo).astype(jnp.bfloat16)

    # Constant 0/1 block-expand / block-reduce matrices (hoisted out of the kernel).
    oc = jnp.arange(No, dtype=jnp.int32)[:, None]
    nc = jnp.arange(NoDo, dtype=jnp.int32)[None, :]
    expand = ((nc >= oc * Do) & (nc < (oc + 1) * Do)).astype(jnp.float32)    # (No, NoDo)
    reduce_ = expand.T                                                        # (NoDo, No)

    # Per-TensorCore VMEM capacity (v7x: 64 MiB/TC, v5e/v6e: 128 MiB).
    try:
        vmem_cap = int(getattr(pltpu.get_tpu_info(), "vmem_capacity_bytes", 64 * 2**20))
    except Exception:
        vmem_cap = 64 * 2**20

    if block_b is None:
        # Live working set per batch row (f32): ~5 x_hat-sized copies (Ni*NoDo lanes)
        # + a couple of lane-padded (R, No) routing arrays.  Target ~55% of VMEM.
        per_row = Ni * NoDo * 4 * 5 + Ni * 128 * 4 * 2
        tb = int(0.55 * vmem_cap) // max(per_row, 1)      # ~256 on v7x, ~512 on v5e/v6e
        tb = max(8, min(512, tb))
        steps = -(-B // tb)
        if B > 128:
            steps = max(steps, 2)       # >=2 grid steps -> both TensorCores on v7x
        block_b = _round_up(-(-B // steps), 8)            # balance tile, minimize padding
    TB = int(block_b)
    assert TB >= 8 and TB % 8 == 0, "batch tile must be a multiple of 8 sublanes"
    B_pad = _round_up(B, TB)

    x_pad = x if B_pad == B else jnp.concatenate(
        [x, jnp.zeros((B_pad - B, Ni, Di), x.dtype)], axis=0)
    # (Ni, B_pad, Di): input-capsule axis leads so it is the MXU batch dim in-kernel.
    # TODO(synk): relayout to (Ni, Di, B_pad) (batch on lanes, no Di=8 lane padding) once
    # the transposed-LHS batched contraction is validated on all target generations.
    x_t = jnp.transpose(x_pad, (1, 0, 2)).astype(jnp.bfloat16)

    # Per-tile VMEM estimate (bytes): pipeline buffers + in-kernel f32 temporaries.
    est = (
        2 * Ni * TB * 128 * 2               # x blocks (bf16, Di lane-padded, double-buffered)
        + 2 * Ni * Di * NoDo * 2            # weight blocks (bf16, double-buffered)
        + 2 * (No * NoDo + NoDo * 128) * 4  # expand / reduce blocks (reduce lane-padded)
        + 2 * TB * NoDo * 4                 # output blocks (f32, double-buffered)
        + 5 * Ni * TB * NoDo * 4            # x_hat + big routing temporaries (f32)
        + 3 * Ni * TB * 128 * 4             # (R, No) routing arrays, lane-padded to 128
    )
    vmem_limit = int(min(max(int(1.5 * est), 32 * 2**20), int(0.92 * vmem_cap)))

    flops = (2 * B_pad * Ni * Di * NoDo                  # x_hat matmul
             + routings * 6 * B_pad * Ni * NoDo)         # routing elementwise / reduce work
    transcendentals = routings * B_pad * Ni * No         # exp (+ same-order rsqrt/rcp)
    bytes_accessed = (x_t.size * 2 + w2.size * 2
                      + (expand.size + reduce_.size) * 4 + B_pad * NoDo * 4)

    kernel = functools.partial(_dense_capsule_kernel, routings=routings,
                               out_num_caps=No, out_dim_caps=Do)
    out_flat = pl.pallas_call(
        kernel,
        out_shape=jax.ShapeDtypeStruct((B_pad, NoDo), x.dtype),
        grid_spec=pltpu.PrefetchScalarGridSpec(
            num_scalar_prefetch=0,
            grid=(B_pad // TB,),
            in_specs=[
                pl.BlockSpec((Ni, TB, Di), lambda b: (0, b, 0)),
                # Grid-invariant blocks (constant index_map -> fetched once, re-used).
                # TODO(synk): single-buffer these (pipeline_mode=pl.Buffered(1)) once
                # buffer_count=1 is confirmed supported, reclaiming their second buffers.
                pl.BlockSpec((Ni, Di, NoDo), lambda b: (0, 0, 0)),
                pl.BlockSpec((No, NoDo), lambda b: (0, 0)),
                pl.BlockSpec((NoDo, No), lambda b: (0, 0)),
            ],
            out_specs=pl.BlockSpec((TB, NoDo), lambda b: (b, 0)),   # lane-dense output
        ),
        compiler_params=pltpu.CompilerParams(
            dimension_semantics=("parallel",),     # batch tiles independent (2 TCs on v7x)
            vmem_limit_bytes=vmem_limit,
        ),
        cost_estimate=pl.CostEstimate(flops=int(flops),
                                      transcendentals=int(transcendentals),
                                      bytes_accessed=int(bytes_accessed)),
    )(x_t, w2, expand, reduce_)

    return out_flat[:B].reshape(B, No, Do)


# --------------------------------------------------------------------------------------
# Pure-JAX reference (mirrors the PyTorch forward)
# --------------------------------------------------------------------------------------
def _squash(s, eps=1e-8):
    mag_sq = jnp.sum(s * s, axis=-1, keepdims=True)
    mag = jnp.sqrt(mag_sq)
    return mag_sq / (1.0 + mag_sq) * (s / (mag + eps))


def dense_capsule_ref(x, weight, routings=3):
    x_hat = jnp.einsum("oidk,bik->boid", weight, x,
                       precision=jax.lax.Precision.HIGHEST)     # (B, No, Ni, Do)
    b = jnp.zeros(x_hat.shape[:3], jnp.float32)
    v = None
    for i in range(routings):
        c = jax.nn.softmax(b, axis=1)
        s = jnp.sum(c[..., None] * x_hat, axis=2)               # (B, No, Do)
        v = _squash(s)
        if i < routings - 1:
            b = b + jnp.sum(v[:, :, None, :] * x_hat, axis=-1)
    return v


# --------------------------------------------------------------------------------------
if __name__ == "__main__":
    in_num_caps, in_dim_caps = 32, 8
    out_num_caps, out_dim_caps = 10, 16
    routings = 3

    key = jax.random.PRNGKey(0)
    k_x1, k_x2, k_w = jax.random.split(key, 3)
    # nn.Parameter(0.01 * torch.randn(out_num_caps, in_num_caps, out_dim_caps, in_dim_caps))
    weight = 0.01 * jax.random.normal(
        k_w, (out_num_caps, in_num_caps, out_dim_caps, in_dim_caps), dtype=jnp.float32)

    # Small batch: auto tile -> single grid step, batch padded 12 -> 16.
    B1 = 12
    x1 = jax.random.normal(k_x1, (B1, in_num_caps, in_dim_caps), dtype=jnp.float32)
    out1 = jax.block_until_ready(dense_capsule(x1, weight, routings=routings))
    ref1 = dense_capsule_ref(x1, weight, routings=routings)
    assert out1.shape == (B1, out_num_caps, out_dim_caps)
    # Tolerance accommodates the bf16 x_hat matmul + EUP approximate reciprocals.
    assert jnp.allclose(out1, ref1, atol=1e-3, rtol=1e-2), (
        f"mismatch vs reference (max abs err {float(jnp.max(jnp.abs(out1 - ref1)))})")

    # Larger batch with an explicit small tile: multi-step grid + batch padding (200 -> 256).
    B2 = 200
    x2 = jax.random.normal(k_x2, (B2, in_num_caps, in_dim_caps), dtype=jnp.float32)
    out2 = jax.block_until_ready(dense_capsule(x2, weight, routings=routings, block_b=64))
    ref2 = dense_capsule_ref(x2, weight, routings=routings)
    assert out2.shape == (B2, out_num_caps, out_dim_caps)
    assert jnp.allclose(out2, ref2, atol=1e-3, rtol=1e-2), (
        f"mismatch vs reference (max abs err {float(jnp.max(jnp.abs(out2 - ref2)))})")

    print("KERNEL_OK")
</pallas_src>

<mosaic_0001>
module attributes {stable_mosaic.version = 11 : i64} {
  func.func @_dense_capsule_kernel(%arg0: i32, %arg1: memref<32x16x8xbf16, #tpu.memory_space<vmem>>, %arg2: memref<32x8x160xbf16, #tpu.memory_space<vmem>>, %arg3: memref<10x160xf32, #tpu.memory_space<vmem>>, %arg4: memref<160x10xf32, #tpu.memory_space<vmem>>, %arg5: memref<16x160xf32, #tpu.memory_space<vmem>>) attributes {dimension_semantics = [#tpu.dimension_semantics<parallel>], iteration_bounds = array<i64: 1>, scalar_prefetch = 0 : i64, scratch_operands = 0 : i64, tpu.core_type = #tpu.core_type<tc>, window_params = [{transform_indices = @transform_0, window_bounds = array<i64: 32, 16, 8>}, {pipeline_mode = #tpu.pipeline_mode<synchronous>, transform_indices = @transform_1, window_bounds = array<i64: 32, 8, 160>}, {pipeline_mode = #tpu.pipeline_mode<synchronous>, transform_indices = @transform_2, window_bounds = array<i64: 10, 160>}, {pipeline_mode = #tpu.pipeline_mode<synchronous>, transform_indices = @transform_3, window_bounds = array<i64: 160, 10>}, {transform_indices = @transform_4, window_bounds = array<i64: 16, 160>}]} {
    %c0 = arith.constant 0 : index
    %c0_0 = arith.constant 0 : index
    %c0_1 = arith.constant 0 : index
    %0 = vector.load %arg1[%c0, %c0_0, %c0_1] : memref<32x16x8xbf16, #tpu.memory_space<vmem>>, vector<32x16x8xbf16>
    %c0_2 = arith.constant 0 : index
    %c0_3 = arith.constant 0 : index
    %c0_4 = arith.constant 0 : index
    %1 = vector.load %arg2[%c0_2, %c0_3, %c0_4] : memref<32x8x160xbf16, #tpu.memory_space<vmem>>, vector<32x8x160xbf16>
    %c0_5 = arith.constant 0 : index
    %c0_6 = arith.constant 0 : index
    %2 = vector.load %arg3[%c0_5, %c0_6] : memref<10x160xf32, #tpu.memory_space<vmem>>, vector<10x160xf32>
    %c0_7 = arith.constant 0 : index
    %c0_8 = arith.constant 0 : index
    %3 = vector.load %arg4[%c0_7, %c0_8] : memref<160x10xf32, #tpu.memory_space<vmem>>, vector<160x10xf32>
    "tpu.trace_start"() <{level = 10 : i32, message = "itk,ikn->itn"}> : () -> ()
    %cst = arith.constant dense<0.000000e+00> : vector<32x16x160xf32>
    %4 = tpu.matmul %0, %1, %cst {dimension_numbers = #tpu.dot_dimension_numbers<[2], [1], [1], [2], [0, 0, 0, 1, 1, 2], [0], [0]>} : vector<32x16x8xbf16>, vector<32x8x160xbf16>, vector<32x16x160xf32> -> vector<32x16x160xf32>
    "tpu.trace_stop"() : () -> ()
    %5 = vector.shape_cast %4 : vector<32x16x160xf32> to vector<512x160xf32>
    %cst_9 = arith.constant dense<0.000000e+00> : vector<16x160xf32>
    %6 = vector.multi_reduction <add>, %4, %cst_9 [0] : vector<32x16x160xf32> to vector<16x160xf32>
    %cst_10 = arith.constant 1.000000e-01 : f32
    %7 = vector.broadcast %cst_10 : f32 to vector<16x160xf32>
    %8 = arith.mulf %6, %7 : vector<16x160xf32>
    %9 = arith.mulf %8, %8 : vector<16x160xf32>
    %cst_11 = arith.constant dense<0.000000e+00> : vector<16x10xf32>
    %10 = tpu.matmul %9, %3, %cst_11 {dimension_numbers = #tpu.dot_dimension_numbers<[1], [0], [0], [1], [0, 0, 1, 1], [], []>} : vector<16x160xf32>, vector<160x10xf32>, vector<16x10xf32> -> vector<16x10xf32>
    %11 = math.sqrt %10 : vector<16x10xf32>
    %cst_12 = arith.constant 1.000000e+00 : f32
    %12 = vector.broadcast %cst_12 : f32 to vector<16x10xf32>
    %13 = arith.addf %12, %10 : vector<16x10xf32>
    %cst_13 = arith.constant 9.99999993E-9 : f32
    %14 = vector.broadcast %cst_13 : f32 to vector<16x10xf32>
    %15 = arith.addf %11, %14 : vector<16x10xf32>
    %16 = arith.mulf %13, %15 : vector<16x10xf32>
    %17 = tpu.reciprocal %16 {approx = true} : vector<16x10xf32> -> vector<16x10xf32>
    %18 = arith.mulf %10, %17 : vector<16x10xf32>
    %cst_14 = arith.constant dense<0.000000e+00> : vector<16x160xf32>
    %19 = tpu.matmul %18, %2, %cst_14 {dimension_numbers = #tpu.dot_dimension_numbers<[1], [0], [0], [1], [0, 0, 1, 1], [], []>} : vector<16x10xf32>, vector<10x160xf32>, vector<16x160xf32> -> vector<16x160xf32>
    %20 = arith.mulf %8, %19 : vector<16x160xf32>
    %cst_15 = arith.constant 0.000000e+00 : f32
    %21 = vector.broadcast %cst_15 : f32 to vector<512x10xf32>
    %22 = vector.shape_cast %20 : vector<16x160xf32> to vector<1x16x160xf32>
    %23 = vector.broadcast %22 : vector<1x16x160xf32> to vector<32x16x160xf32>
    %24 = arith.mulf %4, %23 : vector<32x16x160xf32>
    %25 = vector.shape_cast %24 : vector<32x16x160xf32> to vector<512x160xf32>
    %cst_16 = arith.constant dense<0.000000e+00> : vector<512x10xf32>
    %26 = tpu.matmul %25, %3, %cst_16 {dimension_numbers = #tpu.dot_dimension_numbers<[1], [0], [0], [1], [0, 0, 1, 1], [], []>} : vector<512x160xf32>, vector<160x10xf32>, vector<512x10xf32> -> vector<512x10xf32>
    %27 = arith.addf %21, %26 : vector<512x10xf32>
    %cst_17 = arith.constant dense<0xFF800000> : vector<512xf32>
    %28 = vector.multi_reduction <maximumf>, %27, %cst_17 [1] : vector<512x10xf32> to vector<512xf32>
    %29 = vector.shape_cast %28 : vector<512xf32> to vector<512x1xf32>
    %30 = vector.broadcast %29 : vector<512x1xf32> to vector<512x10xf32>
    %31 = arith.subf %27, %30 : vector<512x10xf32>
    %32 = math.exp %31 : vector<512x10xf32>
    %cst_18 = arith.constant dense<0.000000e+00> : vector<512xf32>
    %33 = vector.multi_reduction <add>, %32, %cst_18 [1] : vector<512x10xf32> to vector<512xf32>
    %34 = vector.shape_cast %33 : vector<512xf32> to vector<512x1xf32>
    %35 = tpu.reciprocal %34 {approx = true} : vector<512x1xf32> -> vector<512x1xf32>
    %36 = vector.broadcast %35 : vector<512x1xf32> to vector<512x10xf32>
    %37 = arith.mulf %32, %36 : vector<512x10xf32>
    %cst_19 = arith.constant dense<0.000000e+00> : vector<512x160xf32>
    %38 = tpu.matmul %37, %2, %cst_19 {dimension_numbers = #tpu.dot_dimension_numbers<[1], [0], [0], [1], [0, 0, 1, 1], [], []>} : vector<512x10xf32>, vector<10x160xf32>, vector<512x160xf32> -> vector<512x160xf32>
    %39 = arith.mulf %38, %5 : vector<512x160xf32>
    %40 = vector.shape_cast %39 : vector<512x160xf32> to vector<32x16x160xf32>
    %cst_20 = arith.constant dense<0.000000e+00> : vector<16x160xf32>
    %41 = vector.multi_reduction <add>, %40, %cst_20 [0] : vector<32x16x160xf32> to vector<16x160xf32>
    %42 = arith.mulf %41, %41 : vector<16x160xf32>
    %cst_21 = arith.constant dense<0.000000e+00> : vector<16x10xf32>
    %43 = tpu.matmul %42, %3, %cst_21 {dimension_numbers = #tpu.dot_dimension_numbers<[1], [0], [0], [1], [0, 0, 1, 1], [], []>} : vector<16x160xf32>, vector<160x10xf32>, vector<16x10xf32> -> vector<16x10xf32>
    %44 = math.sqrt %43 : vector<16x10xf32>
    %cst_22 = arith.constant 1.000000e+00 : f32
    %45 = vector.broadcast %cst_22 : f32 to vector<16x10xf32>
    %46 = arith.addf %45, %43 : vector<16x10xf32>
    %cst_23 = arith.constant 9.99999993E-9 : f32
    %47 = vector.broadcast %cst_23 : f32 to vector<16x10xf32>
    %48 = arith.addf %44, %47 : vector<16x10xf32>
    %49 = arith.mulf %46, %48 : vector<16x10xf32>
    %50 = tpu.reciprocal %49 {approx = true} : vector<16x10xf32> -> vector<16x10xf32>
    %51 = arith.mulf %43, %50 : vector<16x10xf32>
    %cst_24 = arith.constant dense<0.000000e+00> : vector<16x160xf32>
    %52 = tpu.matmul %51, %2, %cst_24 {dimension_numbers = #tpu.dot_dimension_numbers<[1], [0], [0], [1], [0, 0, 1, 1], [], []>} : vector<16x10xf32>, vector<10x160xf32>, vector<16x160xf32> -> vector<16x160xf32>
    %53 = arith.mulf %41, %52 : vector<16x160xf32>
    %54 = vector.shape_cast %53 : vector<16x160xf32> to vector<1x16x160xf32>
    %55 = vector.broadcast %54 : vector<1x16x160xf32> to vector<32x16x160xf32>
    %56 = arith.mulf %4, %55 : vector<32x16x160xf32>
    %57 = vector.shape_cast %56 : vector<32x16x160xf32> to vector<512x160xf32>
    %cst_25 = arith.constant dense<0.000000e+00> : vector<512x10xf32>
    %58 = tpu.matmul %57, %3, %cst_25 {dimension_numbers = #tpu.dot_dimension_numbers<[1], [0], [0], [1], [0, 0, 1, 1], [], []>} : vector<512x160xf32>, vector<160x10xf32>, vector<512x10xf32> -> vector<512x10xf32>
    %59 = arith.addf %27, %58 : vector<512x10xf32>
    %cst_26 = arith.constant dense<0xFF800000> : vector<512xf32>
    %60 = vector.multi_reduction <maximumf>, %59, %cst_26 [1] : vector<512x10xf32> to vector<512xf32>
    %61 = vector.shape_cast %60 : vector<512xf32> to vector<512x1xf32>
    %62 = vector.broadcast %61 : vector<512x1xf32> to vector<512x10xf32>
    %63 = arith.subf %59, %62 : vector<512x10xf32>
    %64 = math.exp %63 : vector<512x10xf32>
    %cst_27 = arith.constant dense<0.000000e+00> : vector<512xf32>
    %65 = vector.multi_reduction <add>, %64, %cst_27 [1] : vector<512x10xf32> to vector<512xf32>
    %66 = vector.shape_cast %65 : vector<512xf32> to vector<512x1xf32>
    %67 = tpu.reciprocal %66 {approx = true} : vector<512x1xf32> -> vector<512x1xf32>
    %68 = vector.broadcast %67 : vector<512x1xf32> to vector<512x10xf32>
    %69 = arith.mulf %64, %68 : vector<512x10xf32>
    %cst_28 = arith.constant dense<0.000000e+00> : vector<512x160xf32>
    %70 = tpu.matmul %69, %2, %cst_28 {dimension_numbers = #tpu.dot_dimension_numbers<[1], [0], [0], [1], [0, 0, 1, 1], [], []>} : vector<512x10xf32>, vector<10x160xf32>, vector<512x160xf32> -> vector<512x160xf32>
    %71 = arith.mulf %70, %5 : vector<512x160xf32>
    %72 = vector.shape_cast %71 : vector<512x160xf32> to vector<32x16x160xf32>
    %cst_29 = arith.constant dense<0.000000e+00> : vector<16x160xf32>
    %73 = vector.multi_reduction <add>, %72, %cst_29 [0] : vector<32x16x160xf32> to vector<16x160xf32>
    %74 = arith.mulf %73, %73 : vector<16x160xf32>
    %cst_30 = arith.constant dense<0.000000e+00> : vector<16x10xf32>
    %75 = tpu.matmul %74, %3, %cst_30 {dimension_numbers = #tpu.dot_dimension_numbers<[1], [0], [0], [1], [0, 0, 1, 1], [], []>} : vector<16x160xf32>, vector<160x10xf32>, vector<16x10xf32> -> vector<16x10xf32>
    %76 = math.sqrt %75 : vector<16x10xf32>
    %cst_31 = arith.constant 1.000000e+00 : f32
    %77 = vector.broadcast %cst_31 : f32 to vector<16x10xf32>
    %78 = arith.addf %77, %75 : vector<16x10xf32>
    %cst_32 = arith.constant 9.99999993E-9 : f32
    %79 = vector.broadcast %cst_32 : f32 to vector<16x10xf32>
    %80 = arith.addf %76, %79 : vector<16x10xf32>
    %81 = arith.mulf %78, %80 : vector<16x10xf32>
    %82 = tpu.reciprocal %81 {approx = true} : vector<16x10xf32> -> vector<16x10xf32>
    %83 = arith.mulf %75, %82 : vector<16x10xf32>
    %cst_33 = arith.constant dense<0.000000e+00> : vector<16x160xf32>
    %84 = tpu.matmul %83, %2, %cst_33 {dimension_numbers = #tpu.dot_dimension_numbers<[1], [0], [0], [1], [0, 0, 1, 1], [], []>} : vector<16x10xf32>, vector<10x160xf32>, vector<16x160xf32> -> vector<16x160xf32>
    %85 = arith.mulf %73, %84 : vector<16x160xf32>
    %c0_34 = arith.constant 0 : index
    %c0_35 = arith.constant 0 : index
    %86 = vector.load %arg5[%c0_34, %c0_35] : memref<16x160xf32, #tpu.memory_space<vmem>>, vector<16x160xf32>
    tpu.vector_store %arg5[%c0_34, %c0_35], %85 {strides = array<i32>} : memref<16x160xf32, #tpu.memory_space<vmem>>, vector<16x160xf32>,
    return
  }
  func.func @transform_0(%arg0: i32) -> (i32, i32, i32) {
    %c0_i32 = arith.constant 0 : i32
    %c0_i32_0 = arith.constant 0 : i32
    %c0_i32_1 = arith.constant 0 : i32
    return %c0_i32, %arg0, %c0_i32_0 : i32, i32, i32
  }
  func.func @transform_1(%arg0: i32) -> (i32, i32, i32) {
    %c0_i32 = arith.constant 0 : i32
    %c0_i32_0 = arith.constant 0 : i32
    %c0_i32_1 = arith.constant 0 : i32
    %c0_i32_2 = arith.constant 0 : i32
    return %c0_i32, %c0_i32_0, %c0_i32_1 : i32, i32, i32
  }
  func.func @transform_2(%arg0: i32) -> (i32, i32) {
    %c0_i32 = arith.constant 0 : i32
    %c0_i32_0 = arith.constant 0 : i32
    %c0_i32_1 = arith.constant 0 : i32
    return %c0_i32, %c0_i32_0 : i32, i32
  }
  func.func @transform_3(%arg0: i32) -> (i32, i32) {
    %c0_i32 = arith.constant 0 : i32
    %c0_i32_0 = arith.constant 0 : i32
    %c0_i32_1 = arith.constant 0 : i32
    return %c0_i32, %c0_i32_0 : i32, i32
  }
  func.func @transform_4(%arg0: i32) -> (i32, i32) {
    %c0_i32 = arith.constant 0 : i32
    %c0_i32_0 = arith.constant 0 : i32
    return %arg0, %c0_i32 : i32, i32
  }
}

</mosaic_0001>

<llo_original>
// kernel: tpu_custom_call.1
$region0: #{tpu_custom_call.1}
  #allocation0 [shape = 'u32[]', space=smem, size = 0x4, offset = 0x4, fixed_abs, tag = 'smem constant byte address 0x4 - core index']
  #allocation1 [shape = 'u32[144,128]{1,0:T(1,128)}', space=vmem, size = 0x12000, scoped, tag = 'internal scratch']
  %s0 = inlined_call_operand.vmem [shape: bf16[32,16,8], index: 0, kind: input, shape index: {}]
  %s1 = inlined_call_operand.vmem [shape: bf16[32,8,160], index: 1, kind: input, shape index: {}]
  %s2 = inlined_call_operand.vmem [shape: f32[10,160], index: 2, kind: input, shape index: {}]
  %s3 = inlined_call_operand.vmem [shape: f32[160,10], index: 3, kind: input, shape index: {}]
  %s4 = inlined_call_operand.hbm [shape: f32[16,160], index: 4, kind: output, shape index: {}]
  %s5 = sld [smem:[#allocation0]]
  $region26: #{tpu_custom_call.1} parent=0
    _
  %s7 = ssub.s32 1, %s5
  %s8 = scalar_select 0, %s7, %s5
  $region1: #{tpu_custom_call.1} parent=0
    #allocation2 [shape = 'u8[16384]{0}', space=vmem, size = 0x4000, scoped, tag = 'output window, operand 0, single buffered']
    #allocation3 [shape = 's32[1]{0}', space=sflag, size = 0x4, scoped, tag = 'scoped memory for tpu_custom_call.1']
    %9 = vsyncpa [#allocation3], 0
    // Predicated region
    $region2: #{tpu_custom_call.1} parent=1 // pred_check
      _
    $region3: #{tpu_custom_call.1} parent=1 // pred_check_branch
      %11 = sbr.rel (0) target = $region5
    $region4: #{tpu_custom_call.1} parent=1 // pred_region
      _
    $region5: #{tpu_custom_call.1} parent=1 // pred_fallthru
      _
    // Predicated region
    $region6: #{tpu_custom_call.1} parent=1 // pred_check
      _
    $region7: #{tpu_custom_call.1} parent=1 // pred_check_branch
      %13 = sbr.rel (0) target = $region9
    $region8: #{tpu_custom_call.1} parent=1 // pred_region
      _
    $region9: #{tpu_custom_call.1} parent=1 // pred_fallthru
      _
    // Predicated region
    $region10: #{tpu_custom_call.1} parent=1 // pred_check
      _
    $region11: #{tpu_custom_call.1} parent=1 // pred_check_branch
      %15 = sbr.rel (0) target = $region13
    $region12: #{tpu_custom_call.1} parent=1 // pred_region
      _
    $region13: #{tpu_custom_call.1} parent=1 // pred_fallthru
      _
    // Predicated region
    $region14: #{tpu_custom_call.1} parent=1 // pred_check
      _
    $region15: #{tpu_custom_call.1} parent=1 // pred_check_branch
      %17 = sbr.rel (0) target = $region17
    $region16: #{tpu_custom_call.1} parent=1 // pred_region
      _
    $region17: #{tpu_custom_call.1} parent=1 // pred_fallthru
      _
    %v19 = vld [vmem:[%s0] sm:$0xf]
    %v20 = vld [vmem:[%s0 + $0x4] sm:$0xf]
    %v21 = vld [vmem:[%s0 + $0x8] sm:$0xf]
    %v22 = vld [vmem:[%s0 + $0xc] sm:$0xf]
    %v23 = vld [vmem:[%s0 + $0x10] sm:$0xf]
    %v24 = vld [vmem:[%s0 + $0x14] sm:$0xf]
    %v25 = vld [vmem:[%s0 + $0x18] sm:$0xf]
    %v26 = vld [vmem:[%s0 + $0x1c] sm:$0xf]
    %v27 = vld [vmem:[%s0 + $0x20] sm:$0xf]
    %v28 = vld [vmem:[%s0 + $0x24] sm:$0xf]
    %v29 = vld [vmem:[%s0 + $0x28] sm:$0xf]
    %v30 = vld [vmem:[%s0 + $0x2c] sm:$0xf]
    %v31 = vld [vmem:[%s0 + $0x30] sm:$0xf]
    %v32 = vld [vmem:[%s0 + $0x34] sm:$0xf]
    %v33 = vld [vmem:[%s0 + $0x38] sm:$0xf]
    %v34 = vld [vmem:[%s0 + $0x3c] sm:$0xf]
    %v35 = vld [vmem:[%s0 + $0x40] sm:$0xf]
    %v36 = vld [vmem:[%s0 + $0x44] sm:$0xf]
    %v37 = vld [vmem:[%s0 + $0x48] sm:$0xf]
    %v38 = vld [vmem:[%s0 + $0x4c] sm:$0xf]
    %v39 = vld [vmem:[%s0 + $0x50] sm:$0xf]
    %v40 = vld [vmem:[%s0 + $0x54] sm:$0xf]
    %v41 = vld [vmem:[%s0 + $0x58] sm:$0xf]
    %v42 = vld [vmem:[%s0 + $0x5c] sm:$0xf]
    %v43 = vld [vmem:[%s0 + $0x60] sm:$0xf]
    %v44 = vld [vmem:[%s0 + $0x64] sm:$0xf]
    %v45 = vld [vmem:[%s0 + $0x68] sm:$0xf]
    %v46 = vld [vmem:[%s0 + $0x6c] sm:$0xf]
    %v47 = vld [vmem:[%s0 + $0x70] sm:$0xf]
    %v48 = vld [vmem:[%s0 + $0x74] sm:$0xf]
    %v49 = vld [vmem:[%s0 + $0x78] sm:$0xf]
    %v50 = vld [vmem:[%s0 + $0x7c] sm:$0xf]
    %v51 = vld [vmem:[%s0 + $0x80] sm:$0xf]
    %v52 = vld [vmem:[%s0 + $0x84] sm:$0xf]
    %v53 = vld [vmem:[%s0 + $0x88] sm:$0xf]
    %v54 = vld [vmem:[%s0 + $0x8c] sm:$0xf]
    %v55 = vld [vmem:[%s0 + $0x90] sm:$0xf]
    %v56 = vld [vmem:[%s0 + $0x94] sm:$0xf]
    %v57 = vld [vmem:[%s0 + $0x98] sm:$0xf]
    %v58 = vld [vmem:[%s0 + $0x9c] sm:$0xf]
    %v59 = vld [vmem:[%s0 + $0xa0] sm:$0xf]
    %v60 = vld [vmem:[%s0 + $0xa4] sm:$0xf]
    %v61 = vld [vmem:[%s0 + $0xa8] sm:$0xf]
    %v62 = vld [vmem:[%s0 + $0xac] sm:$0xf]
    %v63 = vld [vmem:[%s0 + $0xb0] sm:$0xf]
    %v64 = vld [vmem:[%s0 + $0xb4] sm:$0xf]
    %v65 = vld [vmem:[%s0 + $0xb8] sm:$0xf]
    %v66 = vld [vmem:[%s0 + $0xbc] sm:$0xf]
    %v67 = vld [vmem:[%s0 + $0xc0] sm:$0xf]
    %v68 = vld [vmem:[%s0 + $0xc4] sm:$0xf]
    %v69 = vld [vmem:[%s0 + $0xc8] sm:$0xf]
    %v70 = vld [vmem:[%s0 + $0xcc] sm:$0xf]
    %v71 = vld [vmem:[%s0 + $0xd0] sm:$0xf]
    %v72 = vld [vmem:[%s0 + $0xd4] sm:$0xf]
    %v73 = vld [vmem:[%s0 + $0xd8] sm:$0xf]
    %v74 = vld [vmem:[%s0 + $0xdc] sm:$0xf]
    %v75 = vld [vmem:[%s0 + $0xe0] sm:$0xf]
    %v76 = vld [vmem:[%s0 + $0xe4] sm:$0xf]
    %v77 = vld [vmem:[%s0 + $0xe8] sm:$0xf]
    %v78 = vld [vmem:[%s0 + $0xec] sm:$0xf]
    %v79 = vld [vmem:[%s0 + $0xf0] sm:$0xf]
    %v80 = vld [vmem:[%s0 + $0xf4] sm:$0xf]
    %v81 = vld [vmem:[%s0 + $0xf8] sm:$0xf]
    %v82 = vld [vmem:[%s0 + $0xfc] sm:$0xf]
    %v83 = vld [vmem:[%s1] sm:$0xff]
    %v84 = vld [vmem:[%s1 + $0x8] sm:$0xff]
    %v85 = vld [vmem:[%s1 + $0x10] sm:$0xff]
    %v86 = vld [vmem:[%s1 + $0x18] sm:$0xff]
    %v87 = vld [vmem:[%s1 + $0x20] sm:$0xff]
    %v88 = vld [vmem:[%s1 + $0x28] sm:$0xff]
    %v89 = vld [vmem:[%s1 + $0x30] sm:$0xff]
    %v90 = vld [vmem:[%s1 + $0x38] sm:$0xff]
    %v91 = vld [vmem:[%s1 + $0x40] sm:$0xff]
    %v92 = vld [vmem:[%s1 + $0x48] sm:$0xff]
    %v93 = vld [vmem:[%s1 + $0x50] sm:$0xff]
    %v94 = vld [vmem:[%s1 + $0x58] sm:$0xff]
    %v95 = vld [vmem:[%s1 + $0x60] sm:$0xff]
    %v96 = vld [vmem:[%s1 + $0x68] sm:$0xff]
    %v97 = vld [vmem:[%s1 + $0x70] sm:$0xff]
    %v98 = vld [vmem:[%s1 + $0x78] sm:$0xff]
    %v99 = vld [vmem:[%s1 + $0x80] sm:$0xff]
    %v100 = vld [vmem:[%s1 + $0x88] sm:$0xff]
    %v101 = vld [vmem:[%s1 + $0x90] sm:$0xff]
    %v102 = vld [vmem:[%s1 + $0x98] sm:$0xff]
    %v103 = vld [vmem:[%s1 + $0xa0] sm:$0xff]
    %v104 = vld [vmem:[%s1 + $0xa8] sm:$0xff]
    %v105 = vld [vmem:[%s1 + $0xb0] sm:$0xff]
    %v106 = vld [vmem:[%s1 + $0xb8] sm:$0xff]
    %v107 = vld [vmem:[%s1 + $0xc0] sm:$0xff]
    %v108 = vld [vmem:[%s1 + $0xc8] sm:$0xff]
    %v109 = vld [vmem:[%s1 + $0xd0] sm:$0xff]
    %v110 = vld [vmem:[%s1 + $0xd8] sm:$0xff]
    %v111 = vld [vmem:[%s1 + $0xe0] sm:$0xff]
    %v112 = vld [vmem:[%s1 + $0xe8] sm:$0xff]
    %v113 = vld [vmem:[%s1 + $0xf0] sm:$0xff]
    %v114 = vld [vmem:[%s1 + $0xf8] sm:$0xff]
    %v115 = vld [vmem:[%s2] sm:$0xff]
    %v116 = vld [vmem:[%s2 + $0x8] sm:$0xff]
    %v117 = vld [vmem:[%s2 + $0x10] sm:$0x3]
    %v118 = vld [vmem:[%s2 + $0x18] sm:$0x3]
    %v119 = vld [vmem:[%s3] sm:$0xff]
    %v120 = vld [vmem:[%s3 + $0x8] sm:$0xff]
    %v121 = vld [vmem:[%s3 + $0x10] sm:$0xff]
    %v122 = vld [vmem:[%s3 + $0x18] sm:$0xff]
    %v123 = vld [vmem:[%s3 + $0x20] sm:$0xff]
    %v124 = vld [vmem:[%s3 + $0x28] sm:$0xff]
    %v125 = vld [vmem:[%s3 + $0x30] sm:$0xff]
    %v126 = vld [vmem:[%s3 + $0x38] sm:$0xff]
    %v127 = vld [vmem:[%s3 + $0x40] sm:$0xff]
    %v128 = vld [vmem:[%s3 + $0x48] sm:$0xff]
    %v129 = vld [vmem:[%s3 + $0x50] sm:$0xff]
    %v130 = vld [vmem:[%s3 + $0x58] sm:$0xff]
    %v131 = vld [vmem:[%s3 + $0x60] sm:$0xff]
    %v132 = vld [vmem:[%s3 + $0x68] sm:$0xff]
    %v133 = vld [vmem:[%s3 + $0x70] sm:$0xff]
    %v134 = vld [vmem:[%s3 + $0x78] sm:$0xff]
    %v135 = vld [vmem:[%s3 + $0x80] sm:$0xff]
    %v136 = vld [vmem:[%s3 + $0x88] sm:$0xff]
    %v137 = vld [vmem:[%s3 + $0x90] sm:$0xff]
    %v138 = vld [vmem:[%s3 + $0x98] sm:$0xff]
    %v141 = vunpack.c.l.b16 %v19
    %v142 = vunpack.c.l.b16 %v20
    %v143 = vpack.c.b16 %v142, %v141
    %v145 = vunpack.c.l.b16 %v83
    %v146 = vunpack.c.h.b16 %v83
    %v147 = vpack.c.b16 %v145, %v145
    %v148 = vpack.c.b16 %v146, %v146
    %vm149 = vcmask 64512
    %v151 = vsel %vm149, %v143, 0
    %vm153 = vcmask 1043456
    %v155 = vsel %vm153, %v147, 0
    %v158 = vsel %vm153, %v148, 0
    %160 = vmatprep.subr.bf16.mxu0 %v158
    %161 = vmatpush1.bf16.msra.mxu0 %v155
    %162 = vmatprep.subr.bf16.mxu0 0
    %163 = vmatpush1.bf16.msra.mxu0 0
    %164 = vmatprep.subr.bf16.mxu0 0
    %165 = vmatpush1.bf16.msra.mxu0 0
    %166 = vmatprep.subr.bf16.mxu0 0
    %167 = vmatpush1.bf16.msra.mxu0 0
    %168 = vmatprep.subr.bf16.mxu0 0
    %169 = vmatpush1.bf16.msra.mxu0 0
    %170 = vmatprep.subr.bf16.mxu0 0
    %171 = vmatpush1.bf16.msra.mxu0 0
    %172 = vmatprep.subr.bf16.mxu0 0
    %173 = vmatpush1.bf16.msra.mxu0 0
    %174 = vmatprep.subr.bf16.mxu0 0
    %175 = vmatpush1.bf16.msra.mxu0 0
    %176 = vmatprep.subr.bf16.mxu0 0
    %177 = vmatpush1.bf16.msra.mxu0 0
    %178 = vmatprep.subr.bf16.mxu0 0
    %179 = vmatpush1.bf16.msra.mxu0 0
    %180 = vmatprep.subr.bf16.mxu0 0
    %181 = vmatpush1.bf16.msra.mxu0 0
    %182 = vmatprep.subr.bf16.mxu0 0
    %183 = vmatpush1.bf16.msra.mxu0 0
    %184 = vmatprep.subr.bf16.mxu0 0
    %185 = vmatpush1.bf16.msra.mxu0 0
    %186 = vmatprep.subr.bf16.mxu0 0
    %187 = vmatpush1.bf16.msra.mxu0 0
    %188 = vmatprep.subr.bf16.mxu0 0
    %189 = vmatpush1.bf16.msra.mxu0 0
    %190 = vmatprep.subr.bf16.mxu0 0
    %191 = vmatpush1.bf16.msra.mxu0 0
    %192 = vmatprep.mubr.bf16.mxu0 0
    %193 = vmatmul.mubr.bf16.gmra.mrb[0].mxu0 %v151
    %v194 = vpop.f32.mrb[0].mxu0
    %v195 = vadd.f32 0.0, %v194
    %v196 = vpop.f32.mrb[0].mxu0
    %v197 = vadd.f32 0.0, %v196
    %v198 = vpop.f32.mrb[0].mxu0
    %v199 = vadd.f32 0.0, %v198
    %v200 = vpop.f32.mrb[0].mxu0
    %v201 = vadd.f32 0.0, %v200
    %202 = vdwg.mxu0
    %v205 = vunpack.c.l.b16 %v21
    %v206 = vunpack.c.l.b16 %v22
    %v207 = vpack.c.b16 %v206, %v205
    %v209 = vunpack.c.l.b16 %v84
    %v210 = vunpack.c.h.b16 %v84
    %v211 = vpack.c.b16 %v209, %v209
    %v212 = vpack.c.b16 %v210, %v210
    %v214 = vsel %vm149, %v207, 0
    %v217 = vsel %vm153, %v211, 0
    %v220 = vsel %vm153, %v212, 0
    %222 = vmatprep.subr.bf16.mxu0 %v220
    %223 = vmatpush1.bf16.msra.mxu0 %v217
    %224 = vmatprep.subr.bf16.mxu0 0
    %225 = vmatpush1.bf16.msra.mxu0 0
    %226 = vmatprep.subr.bf16.mxu0 0
    %227 = vmatpush1.bf16.msra.mxu0 0
    %228 = vmatprep.subr.bf16.mxu0 0
    %229 = vmatpush1.bf16.msra.mxu0 0
    %230 = vmatprep.subr.bf16.mxu0 0
    %231 = vmatpush1.bf16.msra.mxu0 0
    %232 = vmatprep.subr.bf16.mxu0 0
    %233 = vmatpush1.bf16.msra.mxu0 0
    %234 = vmatprep.subr.bf16.mxu0 0
    %235 = vmatpush1.bf16.msra.mxu0 0
    %236 = vmatprep.subr.bf16.mxu0 0
    %237 = vmatpush1.bf16.msra.mxu0 0
    %238 = vmatprep.subr.bf16.mxu0 0
    %239 = vmatpush1.bf16.msra.mxu0 0
    %240 = vmatprep.subr.bf16.mxu0 0
    %241 = vmatpush1.bf16.msra.mxu0 0
    %242 = vmatprep.subr.bf16.mxu0 0
    %243 = vmatpush1.bf16.msra.mxu0 0
    %244 = vmatprep.subr.bf16.mxu0 0
    %245 = vmatpush1.bf16.msra.mxu0 0
    %246 = vmatprep.subr.bf16.mxu0 0
    %247 = vmatpush1.bf16.msra.mxu0 0
    %248 = vmatprep.subr.bf16.mxu0 0
    %249 = vmatpush1.bf16.msra.mxu0 0
    %250 = vmatprep.subr.bf16.mxu0 0
    %251 = vmatpush1.bf16.msra.mxu0 0
    %252 = vmatprep.subr.bf16.mxu0 0
    %253 = vmatpush1.bf16.msra.mxu0 0
    %254 = vmatprep.mubr.bf16.mxu0 0
    %255 = vmatmul.mubr.bf16.gmra.mrb[0].mxu0 %v214
    %v256 = vpop.f32.mrb[0].mxu0
    %v257 = vadd.f32 0.0, %v256
    %v258 = vpop.f32.mrb[0].mxu0
    %v259 = vadd.f32 0.0, %v258
    %v260 = vpop.f32.mrb[0].mxu0
    %v261 = vadd.f32 0.0, %v260
    %v262 = vpop.f32.mrb[0].mxu0
    %v263 = vadd.f32 0.0, %v262
    %264 = vdwg.mxu0
    %v267 = vunpack.c.l.b16 %v23
    %v268 = vunpack.c.l.b16 %v24
    %v269 = vpack.c.b16 %v268, %v267
    %v271 = vunpack.c.l.b16 %v85
    %v272 = vunpack.c.h.b16 %v85
    %v273 = vpack.c.b16 %v271, %v271
    %v274 = vpack.c.b16 %v272, %v272
    %v276 = vsel %vm149, %v269, 0
    %v279 = vsel %vm153, %v273, 0
    %v282 = vsel %vm153, %v274, 0
    %284 = vmatprep.subr.bf16.mxu0 %v282
    %285 = vmatpush1.bf16.msra.mxu0 %v279
    %286 = vmatprep.subr.bf16.mxu0 0
    %287 = vmatpush1.bf16.msra.mxu0 0
    %288 = vmatprep.subr.bf16.mxu0 0
    %289 = vmatpush1.bf16.msra.mxu0 0
    %290 = vmatprep.subr.bf16.mxu0 0
    %291 = vmatpush1.bf16.msra.mxu0 0
    %292 = vmatprep.subr.bf16.mxu0 0
    %293 = vmatpush1.bf16.msra.mxu0 0
    %294 = vmatprep.subr.bf16.mxu0 0
    %295 = vmatpush1.bf16.msra.mxu0 0
    %296 = vmatprep.subr.bf16.mxu0 0
    %297 = vmatpush1.bf16.msra.mxu0 0
    %298 = vmatprep.subr.bf16.mxu0 0
    %299 = vmatpush1.bf16.msra.mxu0 0
    %300 = vmatprep.subr.bf16.mxu0 0
    %301 = vmatpush1.bf16.msra.mxu0 0
    %302 = vmatprep.subr.bf16.mxu0 0
    %303 = vmatpush1.bf16.msra.mxu0 0
    %304 = vmatprep.subr.bf16.mxu0 0
    %305 = vmatpush1.bf16.msra.mxu0 0
    %306 = vmatprep.subr.bf16.mxu0 0
    %307 = vmatpush1.bf16.msra.mxu0 0
    %308 = vmatprep.subr.bf16.mxu0 0
    %309 = vmatpush1.bf16.msra.mxu0 0
    %310 = vmatprep.subr.bf16.mxu0 0
    %311 = vmatpush1.bf16.msra.mxu0 0
    %312 = vmatprep.subr.bf16.mxu0 0
    %313 = vmatpush1.bf16.msra.mxu0 0
    %314 = vmatprep.subr.bf16.mxu0 0
    %315 = vmatpush1.bf16.msra.mxu0 0
    %316 = vmatprep.mubr.bf16.mxu0 0
    %317 = vmatmul.mubr.bf16.gmra.mrb[0].mxu0 %v276
    %v318 = vpop.f32.mrb[0].mxu0
    %v319 = vadd.f32 0.0, %v318
    %v320 = vpop.f32.mrb[0].mxu0
    %v321 = vadd.f32 0.0, %v320
    %v322 = vpop.f32.mrb[0].mxu0
    %v323 = vadd.f32 0.0, %v322
    %v324 = vpop.f32.mrb[0].mxu0
    %v325 = vadd.f32 0.0, %v324
    %326 = vdwg.mxu0
    %v329 = vunpack.c.l.b16 %v25
    %v330 = vunpack.c.l.b16 %v26
    %v331 = vpack.c.b16 %v330, %v329
    %v333 = vunpack.c.l.b16 %v86
    %v334 = vunpack.c.h.b16 %v86
    %v335 = vpack.c.b16 %v333, %v333
    %v336 = vpack.c.b16 %v334, %v334
    %v338 = vsel %vm149, %v331, 0
    %v341 = vsel %vm153, %v335, 0
    %v344 = vsel %vm153, %v336, 0
    %346 = vmatprep.subr.bf16.mxu0 %v344
    %347 = vmatpush1.bf16.msra.mxu0 %v341
    %348 = vmatprep.subr.bf16.mxu0 0
    %349 = vmatpush1.bf16.msra.mxu0 0
    %350 = vmatprep.subr.bf16.mxu0 0
    %351 = vmatpush1.bf16.msra.mxu0 0
    %352 = vmatprep.subr.bf16.mxu0 0
    %353 = vmatpush1.bf16.msra.mxu0 0
    %354 = vmatprep.subr.bf16.mxu0 0
    %355 = vmatpush1.bf16.msra.mxu0 0
    %356 = vmatprep.subr.bf16.mxu0 0
    %357 = vmatpush1.bf16.msra.mxu0 0
    %358 = vmatprep.subr.bf16.mxu0 0
    %359 = vmatpush1.bf16.msra.mxu0 0
    %360 = vmatprep.subr.bf16.mxu0 0
    %361 = vmatpush1.bf16.msra.mxu0 0
    %362 = vmatprep.subr.bf16.mxu0 0
    %363 = vmatpush1.bf16.msra.mxu0 0
    %364 = vmatprep.subr.bf16.mxu0 0
    %365 = vmatpush1.bf16.msra.mxu0 0
    %366 = vmatprep.subr.bf16.mxu0 0
    %367 = vmatpush1.bf16.msra.mxu0 0
    %368 = vmatprep.subr.bf16.mxu0 0
    %369 = vmatpush1.bf16.msra.mxu0 0
    %370 = vmatprep.subr.bf16.mxu0 0
    %371 = vmatpush1.bf16.msra.mxu0 0
    %372 = vmatprep.subr.bf16.mxu0 0
    %373 = vmatpush1.bf16.msra.mxu0 0
    %374 = vmatprep.subr.bf16.mxu0 0
    %375 = vmatpush1.bf16.msra.mxu0 0
    %376 = vmatprep.subr.bf16.mxu0 0
    %377 = vmatpush1.bf16.msra.mxu0 0
    %378 = vmatprep.mubr.bf16.mxu0 0
    %379 = vmatmul.mubr.bf16.gmra.mrb[0].mxu0 %v338
    %v380 = vpop.f32.mrb[0].mxu0
    %v381 = vadd.f32 0.0, %v380
    %v382 = vpop.f32.mrb[0].mxu0
    %v383 = vadd.f32 0.0, %v382
    %v384 = vpop.f32.mrb[0].mxu0
    %v385 = vadd.f32 0.0, %v384
    %v386 = vpop.f32.mrb[0].mxu0
    %v387 = vadd.f32 0.0, %v386
    %388 = vdwg.mxu0
    %v391 = vunpack.c.l.b16 %v27
    %v392 = vunpack.c.l.b16 %v28
    %v393 = vpack.c.b16 %v392, %v391
    %v395 = vunpack.c.l.b16 %v87
    %v396 = vunpack.c.h.b16 %v87
    %v397 = vpack.c.b16 %v395, %v395
    %v398 = vpack.c.b16 %v396, %v396
    %v400 = vsel %vm149, %v393, 0
    %v403 = vsel %vm153, %v397, 0
    %v406 = vsel %vm153, %v398, 0
    %408 = vmatprep.subr.bf16.mxu0 %v406
    %409 = vmatpush1.bf16.msra.mxu0 %v403
    %410 = vmatprep.subr.bf16.mxu0 0
    %411 = vmatpush1.bf16.msra.mxu0 0
    %412 = vmatprep.subr.bf16.mxu0 0
    %413 = vmatpush1.bf16.msra.mxu0 0
    %414 = vmatprep.subr.bf16.mxu0 0
    %415 = vmatpush1.bf16.msra.mxu0 0
    %416 = vmatprep.subr.bf16.mxu0 0
    %417 = vmatpush1.bf16.msra.mxu0 0
    %418 = vmatprep.subr.bf16.mxu0 0
    %419 = vmatpush1.bf16.msra.mxu0 0
    %420 = vmatprep.subr.bf16.mxu0 0
    %421 = vmatpush1.bf16.msra.mxu0 0
    %422 = vmatprep.subr.bf16.mxu0 0
    %423 = vmatpush1.bf16.msra.mxu0 0
    %424 = vmatprep.subr.bf16.mxu0 0
    %425 = vmatpush1.bf16.msra.mxu0 0
    %426 = vmatprep.subr.bf16.mxu0 0
    %427 = vmatpush1.bf16.msra.mxu0 0
    %428 = vmatprep.subr.bf16.mxu0 0
    %429 = vmatpush1.bf16.msra.mxu0 0
    %430 = vmatprep.subr.bf16.mxu0 0
    %431 = vmatpush1.bf16.msra.mxu0 0
    %432 = vmatprep.subr.bf16.mxu0 0
    %433 = vmatpush1.bf16.msra.mxu0 0
    %434 = vmatprep.subr.bf16.mxu0 0
    %435 = vmatpush1.bf16.msra.mxu0 0
    %436 = vmatprep.subr.bf16.mxu0 0
    %437 = vmatpush1.bf16.msra.mxu0 0
    %438 = vmatprep.subr.bf16.mxu0 0
    %439 = vmatpush1.bf16.msra.mxu0 0
    %440 = vmatprep.mubr.bf16.mxu0 0
    %441 = vmatmul.mubr.bf16.gmra.mrb[0].mxu0 %v400
    %v442 = vpop.f32.mrb[0].mxu0
    %v443 = vadd.f32 0.0, %v442
    %v444 = vpop.f32.mrb[0].mxu0
    %v445 = vadd.f32 0.0, %v444
    %v446 = vpop.f32.mrb[0].mxu0
    %v447 = vadd.f32 0.0, %v446
    %v448 = vpop.f32.mrb[0].mxu0
    %v449 = vadd.f32 0.0, %v448
    %450 = vdwg.mxu0
    %v453 = vunpack.c.l.b16 %v29
    %v454 = vunpack.c.l.b16 %v30
    %v455 = vpack.c.b16 %v454, %v453
    %v457 = vunpack.c.l.b16 %v88
    %v458 = vunpack.c.h.b16 %v88
    %v459 = vpack.c.b16 %v457, %v457
    %v460 = vpack.c.b16 %v458, %v458
    %v462 = vsel %vm149, %v455, 0
    %v465 = vsel %vm153, %v459, 0
    %v468 = vsel %vm153, %v460, 0
    %470 = vmatprep.subr.bf16.mxu0 %v468
    %471 = vmatpush1.bf16.msra.mxu0 %v465
    %472 = vmatprep.subr.bf16.mxu0 0
    %473 = vmatpush1.bf16.msra.mxu0 0
    %474 = vmatprep.subr.bf16.mxu0 0
    %475 = vmatpush1.bf16.msra.mxu0 0
    %476 = vmatprep.subr.bf16.mxu0 0
    %477 = vmatpush1.bf16.msra.mxu0 0
    %478 = vmatprep.subr.bf16.mxu0 0
    %479 = vmatpush1.bf16.msra.mxu0 0
    %480 = vmatprep.subr.bf16.mxu0 0
    %481 = vmatpush1.bf16.msra.mxu0 0
    %482 = vmatprep.subr.bf16.mxu0 0
    %483 = vmatpush1.bf16.msra.mxu0 0
    %484 = vmatprep.subr.bf16.mxu0 0
    %485 = vmatpush1.bf16.msra.mxu0 0
    %486 = vmatprep.subr.bf16.mxu0 0
    %487 = vmatpush1.bf16.msra.mxu0 0
    %488 = vmatprep.subr.bf16.mxu0 0
    %489 = vmatpush1.bf16.msra.mxu0 0
    %490 = vmatprep.subr.bf16.mxu0 0
    %491 = vmatpush1.bf16.msra.mxu0 0
    %492 = vmatprep.subr.bf16.mxu0 0
    %493 = vmatpush1.bf16.msra.mxu0 0
    %494 = vmatprep.subr.bf16.mxu0 0
    %495 = vmatpush1.bf16.msra.mxu0 0
    %496 = vmatprep.subr.bf16.mxu0 0
    %497 = vmatpush1.bf16.msra.mxu0 0
    %498 = vmatprep.subr.bf16.mxu0 0
    %499 = vmatpush1.bf16.msra.mxu0 0
    %500 = vmatprep.subr.bf16.mxu0 0
    %501 = vmatpush1.bf16.msra.mxu0 0
    %502 = vmatprep.mubr.bf16.mxu0 0
    %503 = vmatmul.mubr.bf16.gmra.mrb[0].mxu0 %v462
    %v504 = vpop.f32.mrb[0].mxu0
    %v505 = vadd.f32 0.0, %v504
    %v506 = vpop.f32.mrb[0].mxu0
    %v507 = vadd.f32 0.0, %v506
    %v508 = vpop.f32.mrb[0].mxu0
    %v509 = vadd.f32 0.0, %v508
    %v510 = vpop.f32.mrb[0].mxu0
    %v511 = vadd.f32 0.0, %v510
    %512 = vdwg.mxu0
    %v515 = vunpack.c.l.b16 %v31
    %v516 = vunpack.c.l.b16 %v32
    %v517 = vpack.c.b16 %v516, %v515
    %v519 = vunpack.c.l.b16 %v89
    %v520 = vunpack.c.h.b16 %v89
    %v521 = vpack.c.b16 %v519, %v519
    %v522 = vpack.c.b16 %v520, %v520
    %v524 = vsel %vm149, %v517, 0
    %v527 = vsel %vm153, %v521, 0
    %v530 = vsel %vm153, %v522, 0
    %532 = vmatprep.subr.bf16.mxu0 %v530
    %533 = vmatpush1.bf16.msra.mxu0 %v527
    %534 = vmatprep.subr.bf16.mxu0 0
    %535 = vmatpush1.bf16.msra.mxu0 0
    %536 = vmatprep.subr.bf16.mxu0 0
    %537 = vmatpush1.bf16.msra.mxu0 0
    %538 = vmatprep.subr.bf16.mxu0 0
    %539 = vmatpush1.bf16.msra.mxu0 0
    %540 = vmatprep.subr.bf16.mxu0 0
    %541 = vmatpush1.bf16.msra.mxu0 0
    %542 = vmatprep.subr.bf16.mxu0 0
    %543 = vmatpush1.bf16.msra.mxu0 0
    %544 = vmatprep.subr.bf16.mxu0 0
    %545 = vmatpush1.bf16.msra.mxu0 0
    %546 = vmatprep.subr.bf16.mxu0 0
    %547 = vmatpush1.bf16.msra.mxu0 0
    %548 = vmatprep.subr.bf16.mxu0 0
    %549 = vmatpush1.bf16.msra.mxu0 0
    %550 = vmatprep.subr.bf16.mxu0 0
    %551 = vmatpush1.bf16.msra.mxu0 0
    %552 = vmatprep.subr.bf16.mxu0 0
    %553 = vmatpush1.bf16.msra.mxu0 0
    %554 = vmatprep.subr.bf16.mxu0 0
    %555 = vmatpush1.bf16.msra.mxu0 0
    %556 = vmatprep.subr.bf16.mxu0 0
    %557 = vmatpush1.bf16.msra.mxu0 0
    %558 = vmatprep.subr.bf16.mxu0 0
    %559 = vmatpush1.bf16.msra.mxu0 0
    %560 = vmatprep.subr.bf16.mxu0 0
    %561 = vmatpush1.bf16.msra.mxu0 0
    %562 = vmatprep.subr.bf16.mxu0 0
    %563 = vmatpush1.bf16.msra.mxu0 0
    %564 = vmatprep.mubr.bf16.mxu0 0
    %565 = vmatmul.mubr.bf16.gmra.mrb[0].mxu0 %v524
    %v566 = vpop.f32.mrb[0].mxu0
    %v567 = vadd.f32 0.0, %v566
    %v568 = vpop.f32.mrb[0].mxu0
    %v569 = vadd.f32 0.0, %v568
    %v570 = vpop.f32.mrb[0].mxu0
    %v571 = vadd.f32 0.0, %v570
    %v572 = vpop.f32.mrb[0].mxu0
    %v573 = vadd.f32 0.0, %v572
    %574 = vdwg.mxu0
    %v577 = vunpack.c.l.b16 %v33
    %v578 = vunpack.c.l.b16 %v34
    %v579 = vpack.c.b16 %v578, %v577
    %v581 = vunpack.c.l.b16 %v90
    %v582 = vunpack.c.h.b16 %v90
    %v583 = vpack.c.b16 %v581, %v581
    %v584 = vpack.c.b16 %v582, %v582
    %v586 = vsel %vm149, %v579, 0
    %v589 = vsel %vm153, %v583, 0
    %v592 = vsel %vm153, %v584, 0
    %594 = vmatprep.subr.bf16.mxu0 %v592
    %595 = vmatpush1.bf16.msra.mxu0 %v589
    %596 = vmatprep.subr.bf16.mxu0 0
    %597 = vmatpush1.bf16.msra.mxu0 0
    %598 = vmatprep.subr.bf16.mxu0 0
    %599 = vmatpush1.bf16.msra.mxu0 0
    %600 = vmatprep.subr.bf16.mxu0 0
    %601 = vmatpush1.bf16.msra.mxu0 0
    %602 = vmatprep.subr.bf16.mxu0 0
    %603 = vmatpush1.bf16.msra.mxu0 0
    %604 = vmatprep.subr.bf16.mxu0 0
    %605 = vmatpush1.bf16.msra.mxu0 0
    %606 = vmatprep.subr.bf16.mxu0 0
    %607 = vmatpush1.bf16.msra.mxu0 0
    %608 = vmatprep.subr.bf16.mxu0 0
    %609 = vmatpush1.bf16.msra.mxu0 0
    %610 = vmatprep.subr.bf16.mxu0 0
    %611 = vmatpush1.bf16.msra.mxu0 0
    %612 = vmatprep.subr.bf16.mxu0 0
    %613 = vmatpush1.bf16.msra.mxu0 0
    %614 = vmatprep.subr.bf16.mxu0 0
    %615 = vmatpush1.bf16.msra.mxu0 0
    %616 = vmatprep.subr.bf16.mxu0 0
    %617 = vmatpush1.bf16.msra.mxu0 0
    %618 = vmatprep.subr.bf16.mxu0 0
    %619 = vmatpush1.bf16.msra.mxu0 0
    %620 = vmatprep.subr.bf16.mxu0 0
    %621 = vmatpush1.bf16.msra.mxu0 0
    %622 = vmatprep.subr.bf16.mxu0 0
    %623 = vmatpush1.bf16.msra.mxu0 0
    %624 = vmatprep.subr.bf16.mxu0 0
    %625 = vmatpush1.bf16.msra.mxu0 0
    %626 = vmatprep.mubr.bf16.mxu0 0
    %627 = vmatmul.mubr.bf16.gmra.mrb[0].mxu0 %v586
    %v628 = vpop.f32.mrb[0].mxu0
    %v629 = vadd.f32 0.0, %v628
    %v630 = vpop.f32.mrb[0].mxu0
    %v631 = vadd.f32 0.0, %v630
    %v632 = vpop.f32.mrb[0].mxu0
    %v633 = vadd.f32 0.0, %v632
    %v634 = vpop.f32.mrb[0].mxu0
    %v635 = vadd.f32 0.0, %v634
    %636 = vdwg.mxu0
    %v639 = vunpack.c.l.b16 %v35
    %v640 = vunpack.c.l.b16 %v36
    %v641 = vpack.c.b16 %v640, %v639
    %v643 = vunpack.c.l.b16 %v91
    %v644 = vunpack.c.h.b16 %v91
    %v645 = vpack.c.b16 %v643, %v643
    %v646 = vpack.c.b16 %v644, %v644
    %v648 = vsel %vm149, %v641, 0
    %v651 = vsel %vm153, %v645, 0
    %v654 = vsel %vm153, %v646, 0
    %656 = vmatprep.subr.bf16.mxu0 %v654
    %657 = vmatpush1.bf16.msra.mxu0 %v651
    %658 = vmatprep.subr.bf16.mxu0 0
    %659 = vmatpush1.bf16.msra.mxu0 0
    %660 = vmatprep.subr.bf16.mxu0 0
    %661 = vmatpush1.bf16.msra.mxu0 0
    %662 = vmatprep.subr.bf16.mxu0 0
    %663 = vmatpush1.bf16.msra.mxu0 0
    %664 = vmatprep.subr.bf16.mxu0 0
    %665 = vmatpush1.bf16.msra.mxu0 0
    %666 = vmatprep.subr.bf16.mxu0 0
    %667 = vmatpush1.bf16.msra.mxu0 0
    %668 = vmatprep.subr.bf16.mxu0 0
    %669 = vmatpush1.bf16.msra.mxu0 0
    %670 = vmatprep.subr.bf16.mxu0 0
    %671 = vmatpush1.bf16.msra.mxu0 0
    %672 = vmatprep.subr.bf16.mxu0 0
    %673 = vmatpush1.bf16.msra.mxu0 0
    %674 = vmatprep.subr.bf16.mxu0 0
    %675 = vmatpush1.bf16.msra.mxu0 0
    %676 = vmatprep.subr.bf16.mxu0 0
    %677 = vmatpush1.bf16.msra.mxu0 0
    %678 = vmatprep.subr.bf16.mxu0 0
    %679 = vmatpush1.bf16.msra.mxu0 0
    %680 = vmatprep.subr.bf16.mxu0 0
    %681 = vmatpush1.bf16.msra.mxu0 0
    %682 = vmatprep.subr.bf16.mxu0 0
    %683 = vmatpush1.bf16.msra.mxu0 0
    %684 = vmatprep.subr.bf16.mxu0 0
    %685 = vmatpush1.bf16.msra.mxu0 0
    %686 = vmatprep.subr.bf16.mxu0 0
    %687 = vmatpush1.bf16.msra.mxu0 0
    %688 = vmatprep.mubr.bf16.mxu0 0
    %689 = vmatmul.mubr.bf16.gmra.mrb[0].mxu0 %v648
    %v690 = vpop.f32.mrb[0].mxu0
    %v691 = vadd.f32 0.0, %v690
    %v692 = vpop.f32.mrb[0].mxu0
    %v693 = vadd.f32 0.0, %v692
    %v694 = vpop.f32.mrb[0].mxu0
    %v695 = vadd.f32 0.0, %v694
    %v696 = vpop.f32.mrb[0].mxu0
    %v697 = vadd.f32 0.0, %v696
    %698 = vdwg.mxu0
    %v701 = vunpack.c.l.b16 %v37
    %v702 = vunpack.c.l.b16 %v38
    %v703 = vpack.c.b16 %v702, %v701
    %v705 = vunpack.c.l.b16 %v92
    %v706 = vunpack.c.h.b16 %v92
    %v707 = vpack.c.b16 %v705, %v705
    %v708 = vpack.c.b16 %v706, %v706
    %v710 = vsel %vm149, %v703, 0
    %v713 = vsel %vm153, %v707, 0
    %v716 = vsel %vm153, %v708, 0
    %718 = vmatprep.subr.bf16.mxu0 %v716
    %719 = vmatpush1.bf16.msra.mxu0 %v713
    %720 = vmatprep.subr.bf16.mxu0 0
    %721 = vmatpush1.bf16.msra.mxu0 0
    %722 = vmatprep.subr.bf16.mxu0 0
    %723 = vmatpush1.bf16.msra.mxu0 0
    %724 = vmatprep.subr.bf16.mxu0 0
    %725 = vmatpush1.bf16.msra.mxu0 0
    %726 = vmatprep.subr.bf16.mxu0 0
    %727 = vmatpush1.bf16.msra.mxu0 0
    %728 = vmatprep.subr.bf16.mxu0 0
    %729 = vmatpush1.bf16.msra.mxu0 0
    %730 = vmatprep.subr.bf16.mxu0 0
    %731 = vmatpush1.bf16.msra.mxu0 0
    %732 = vmatprep.subr.bf16.mxu0 0
    %733 = vmatpush1.bf16.msra.mxu0 0
    %734 = vmatprep.subr.bf16.mxu0 0
    %735 = vmatpush1.bf16.msra.mxu0 0
    %736 = vmatprep.subr.bf16.mxu0 0
    %737 = vmatpush1.bf16.msra.mxu0 0
    %738 = vmatprep.subr.bf16.mxu0 0
    %739 = vmatpush1.bf16.msra.mxu0 0
    %740 = vmatprep.subr.bf16.mxu0 0
    %741 = vmatpush1.bf16.msra.mxu0 0
    %742 = vmatprep.subr.bf16.mxu0 0
    %743 = vmatpush1.bf16.msra.mxu0 0
    %744 = vmatprep.subr.bf16.mxu0 0
    %745 = vmatpush1.bf16.msra.mxu0 0
    %746 = vmatprep.subr.bf16.mxu0 0
    %747 = vmatpush1.bf16.msra.mxu0 0
    %748 = vmatprep.subr.bf16.mxu0 0
    %749 = vmatpush1.bf16.msra.mxu0 0
    %750 = vmatprep.mubr.bf16.mxu0 0
    %751 = vmatmul.mubr.bf16.gmra.mrb[0].mxu0 %v710
    %v752 = vpop.f32.mrb[0].mxu0
    %v753 = vadd.f32 0.0, %v752
    %v754 = vpop.f32.mrb[0].mxu0
    %v755 = vadd.f32 0.0, %v754
    %v756 = vpop.f32.mrb[0].mxu0
    %v757 = vadd.f32 0.0, %v756
    %v758 = vpop.f32.mrb[0].mxu0
    %v759 = vadd.f32 0.0, %v758
    %760 = vdwg.mxu0
    %v763 = vunpack.c.l.b16 %v39
    %v764 = vunpack.c.l.b16 %v40
    %v765 = vpack.c.b16 %v764, %v763
    %v767 = vunpack.c.l.b16 %v93
    %v768 = vunpack.c.h.b16 %v93
    %v769 = vpack.c.b16 %v767, %v767
    %v770 = vpack.c.b16 %v768, %v768
    %v772 = vsel %vm149, %v765, 0
    %v775 = vsel %vm153, %v769, 0
    %v778 = vsel %vm153, %v770, 0
    %780 = vmatprep.subr.bf16.mxu0 %v778
    %781 = vmatpush1.bf16.msra.mxu0 %v775
    %782 = vmatprep.subr.bf16.mxu0 0
    %783 = vmatpush1.bf16.msra.mxu0 0
    %784 = vmatprep.subr.bf16.mxu0 0
    %785 = vmatpush1.bf16.msra.mxu0 0
    %786 = vmatprep.subr.bf16.mxu0 0
    %787 = vmatpush1.bf16.msra.mxu0 0
    %788 = vmatprep.subr.bf16.mxu0 0
    %789 = vmatpush1.bf16.msra.mxu0 0
    %790 = vmatprep.subr.bf16.mxu0 0
    %791 = vmatpush1.bf16.msra.mxu0 0
    %792 = vmatprep.subr.bf16.mxu0 0
    %793 = vmatpush1.bf16.msra.mxu0 0
    %794 = vmatprep.subr.bf16.mxu0 0
    %795 = vmatpush1.bf16.msra.mxu0 0
    %796 = vmatprep.subr.bf16.mxu0 0
    %797 = vmatpush1.bf16.msra.mxu0 0
    %798 = vmatprep.subr.bf16.mxu0 0
    %799 = vmatpush1.bf16.msra.mxu0 0
    %800 = vmatprep.subr.bf16.mxu0 0
    %801 = vmatpush1.bf16.msra.mxu0 0
    %802 = vmatprep.subr.bf16.mxu0 0
    %803 = vmatpush1.bf16.msra.mxu0 0
    %804 = vmatprep.subr.bf16.mxu0 0
    %805 = vmatpush1.bf16.msra.mxu0 0
    %806 = vmatprep.subr.bf16.mxu0 0
    %807 = vmatpush1.bf16.msra.mxu0 0
    %808 = vmatprep.subr.bf16.mxu0 0
    %809 = vmatpush1.bf16.msra.mxu0 0
    %810 = vmatprep.subr.bf16.mxu0 0
    %811 = vmatpush1.bf16.msra.mxu0 0
    %812 = vmatprep.mubr.bf16.mxu0 0
    %813 = vmatmul.mubr.bf16.gmra.mrb[0].mxu0 %v772
    %v814 = vpop.f32.mrb[0].mxu0
    %v815 = vadd.f32 0.0, %v814
    %v816 = vpop.f32.mrb[0].mxu0
    %v817 = vadd.f32 0.0, %v816
    %v818 = vpop.f32.mrb[0].mxu0
    %v819 = vadd.f32 0.0, %v818
    %v820 = vpop.f32.mrb[0].mxu0
    %v821 = vadd.f32 0.0, %v820
    %822 = vdwg.mxu0
    %v825 = vunpack.c.l.b16 %v41
    %v826 = vunpack.c.l.b16 %v42
    %v827 = vpack.c.b16 %v826, %v825
    %v829 = vunpack.c.l.b16 %v94
    %v830 = vunpack.c.h.b16 %v94
    %v831 = vpack.c.b16 %v829, %v829
    %v832 = vpack.c.b16 %v830, %v830
    %v834 = vsel %vm149, %v827, 0
    %v837 = vsel %vm153, %v831, 0
    %v840 = vsel %vm153, %v832, 0
    %842 = vmatprep.subr.bf16.mxu0 %v840
    %843 = vmatpush1.bf16.msra.mxu0 %v837
    %844 = vmatprep.subr.bf16.mxu0 0
    %845 = vmatpush1.bf16.msra.mxu0 0
    %846 = vmatprep.subr.bf16.mxu0 0
    %847 = vmatpush1.bf16.msra.mxu0 0
    %848 = vmatprep.subr.bf16.mxu0 0
    %849 = vmatpush1.bf16.msra.mxu0 0
    %850 = vmatprep.subr.bf16.mxu0 0
    %851 = vmatpush1.bf16.msra.mxu0 0
    %852 = vmatprep.subr.bf16.mxu0 0
    %853 = vmatpush1.bf16.msra.mxu0 0
    %854 = vmatprep.subr.bf16.mxu0 0
    %855 = vmatpush1.bf16.msra.mxu0 0
    %856 = vmatprep.subr.bf16.mxu0 0
    %857 = vmatpush1.bf16.msra.mxu0 0
    %858 = vmatprep.subr.bf16.mxu0 0
    %859 = vmatpush1.bf16.msra.mxu0 0
    %860 = vmatprep.subr.bf16.mxu0 0
    %861 = vmatpush1.bf16.msra.mxu0 0
    %862 = vmatprep.subr.bf16.mxu0 0
    %863 = vmatpush1.bf16.msra.mxu0 0
    %864 = vmatprep.subr.bf16.mxu0 0
    %865 = vmatpush1.bf16.msra.mxu0 0
    %866 = vmatprep.subr.bf16.mxu0 0
    %867 = vmatpush1.bf16.msra.mxu0 0
    %868 = vmatprep.subr.bf16.mxu0 0
    %869 = vmatpush1.bf16.msra.mxu0 0
    %870 = vmatprep.subr.bf16.mxu0 0
    %871 = vmatpush1.bf16.msra.mxu0 0
    %872 = vmatprep.subr.bf16.mxu0 0
    %873 = vmatpush1.bf16.msra.mxu0 0
    %874 = vmatprep.mubr.bf16.mxu0 0
    %875 = vmatmul.mubr.bf16.gmra.mrb[0].mxu0 %v834
    %v876 = vpop.f32.mrb[0].mxu0
    %v877 = vadd.f32 0.0, %v876
    %v878 = vpop.f32.mrb[0].mxu0
    %v879 = vadd.f32 0.0, %v878
    %v880 = vpop.f32.mrb[0].mxu0
    %v881 = vadd.f32 0.0, %v880
    %v882 = vpop.f32.mrb[0].mxu0
    %v883 = vadd.f32 0.0, %v882
    %884 = vdwg.mxu0
    %v887 = vunpack.c.l.b16 %v43
    %v888 = vunpack.c.l.b16 %v44
    %v889 = vpack.c.b16 %v888, %v887
    %v891 = vunpack.c.l.b16 %v95
    %v892 = vunpack.c.h.b16 %v95
    %v893 = vpack.c.b16 %v891, %v891
    %v894 = vpack.c.b16 %v892, %v892
    %v896 = vsel %vm149, %v889, 0
    %v899 = vsel %vm153, %v893, 0
    %v902 = vsel %vm153, %v894, 0
    %904 = vmatprep.subr.bf16.mxu0 %v902
    %905 = vmatpush1.bf16.msra.mxu0 %v899
    %906 = vmatprep.subr.bf16.mxu0 0
    %907 = vmatpush1.bf16.msra.mxu0 0
    %908 = vmatprep.subr.bf16.mxu0 0
    %909 = vmatpush1.bf16.msra.mxu0 0
    %910 = vmatprep.subr.bf16.mxu0 0
    %911 = vmatpush1.bf16.msra.mxu0 0
    %912 = vmatprep.subr.bf16.mxu0 0
    %913 = vmatpush1.bf16.msra.mxu0 0
    %914 = vmatprep.subr.bf16.mxu0 0
    %915 = vmatpush1.bf16.msra.mxu0 0
    %916 = vmatprep.subr.bf16.mxu0 0
    %917 = vmatpush1.bf16.msra.mxu0 0
    %918 = vmatprep.subr.bf16.mxu0 0
    %919 = vmatpush1.bf16.msra.mxu0 0
    %920 = vmatprep.subr.bf16.mxu0 0
    %921 = vmatpush1.bf16.msra.mxu0 0
    %922 = vmatprep.subr.bf16.mxu0 0
    %923 = vmatpush1.bf16.msra.mxu0 0
    %924 = vmatprep.subr.bf16.mxu0 0
    %925 = vmatpush1.bf16.msra.mxu0 0
    %926 = vmatprep.subr.bf16.mxu0 0
    %927 = vmatpush1.bf16.msra.mxu0 0
    %928 = vmatprep.subr.bf16.mxu0 0
    %929 = vmatpush1.bf16.msra.mxu0 0
    %930 = vmatprep.subr.bf16.mxu0 0
    %931 = vmatpush1.bf16.msra.mxu0 0
    %932 = vmatprep.subr.bf16.mxu0 0
    %933 = vmatpush1.bf16.msra.mxu0 0
    %934 = vmatprep.subr.bf16.mxu0 0
    %935 = vmatpush1.bf16.msra.mxu0 0
    %936 = vmatprep.mubr.bf16.mxu0 0
    %937 = vmatmul.mubr.bf16.gmra.mrb[0].mxu0 %v896
    %v938 = vpop.f32.mrb[0].mxu0
    %v939 = vadd.f32 0.0, %v938
    %v940 = vpop.f32.mrb[0].mxu0
    %v941 = vadd.f32 0.0, %v940
    %v942 = vpop.f32.mrb[0].mxu0
    %v943 = vadd.f32 0.0, %v942
    %v944 = vpop.f32.mrb[0].mxu0
    %v945 = vadd.f32 0.0, %v944
    %946 = vdwg.mxu0
    %v949 = vunpack.c.l.b16 %v45
    %v950 = vunpack.c.l.b16 %v46
    %v951 = vpack.c.b16 %v950, %v949
    %v953 = vunpack.c.l.b16 %v96
    %v954 = vunpack.c.h.b16 %v96
    %v955 = vpack.c.b16 %v953, %v953
    %v956 = vpack.c.b16 %v954, %v954
    %v958 = vsel %vm149, %v951, 0
    %v961 = vsel %vm153, %v955, 0
    %v964 = vsel %vm153, %v956, 0
    %966 = vmatprep.subr.bf16.mxu0 %v964
    %967 = vmatpush1.bf16.msra.mxu0 %v961
    %968 = vmatprep.subr.bf16.mxu0 0
    %969 = vmatpush1.bf16.msra.mxu0 0
    %970 = vmatprep.subr.bf16.mxu0 0
    %971 = vmatpush1.bf16.msra.mxu0 0
    %972 = vmatprep.subr.bf16.mxu0 0
    %973 = vmatpush1.bf16.msra.mxu0 0
    %974 = vmatprep.subr.bf16.mxu0 0
    %975 = vmatpush1.bf16.msra.mxu0 0
    %976 = vmatprep.subr.bf16.mxu0 0
    %977 = vmatpush1.bf16.msra.mxu0 0
    %978 = vmatprep.subr.bf16.mxu0 0
    %979 = vmatpush1.bf16.msra.mxu0 0
    %980 = vmatprep.subr.bf16.mxu0 0
    %981 = vmatpush1.bf16.msra.mxu0 0
    %982 = vmatprep.subr.bf16.mxu0 0
    %983 = vmatpush1.bf16.msra.mxu0 0
    %984 = vmatprep.subr.bf16.mxu0 0
    %985 = vmatpush1.bf16.msra.mxu0 0
    %986 = vmatprep.subr.bf16.mxu0 0
    %987 = vmatpush1.bf16.msra.mxu0 0
    %988 = vmatprep.subr.bf16.mxu0 0
    %989 = vmatpush1.bf16.msra.mxu0 0
    %990 = vmatprep.subr.bf16.mxu0 0
    %991 = vmatpush1.bf16.msra.mxu0 0
    %992 = vmatprep.subr.bf16.mxu0 0
    %993 = vmatpush1.bf16.msra.mxu0 0
    %994 = vmatprep.subr.bf16.mxu0 0
    %995 = vmatpush1.bf16.msra.mxu0 0
    %996 = vmatprep.subr.bf16.mxu0 0
    %997 = vmatpush1.bf16.msra.mxu0 0
    %998 = vmatprep.mubr.bf16.mxu0 0
    %999 = vmatmul.mubr.bf16.gmra.mrb[0].mxu0 %v958
    %v1000 = vpop.f32.mrb[0].mxu0
    %v1001 = vadd.f32 0.0, %v1000
    %v1002 = vpop.f32.mrb[0].mxu0
    %v1003 = vadd.f32 0.0, %v1002
    %v1004 = vpop.f32.mrb[0].mxu0
    %v1005 = vadd.f32 0.0, %v1004
    %v1006 = vpop.f32.mrb[0].mxu0
    %v1007 = vadd.f32 0.0, %v1006
    %1008 = vdwg.mxu0
    %v1011 = vunpack.c.l.b16 %v47
    %v1012 = vunpack.c.l.b16 %v48
    %v1013 = vpack.c.b16 %v1012, %v1011
    %v1015 = vunpack.c.l.b16 %v97
    %v1016 = vunpack.c.h.b16 %v97
    %v1017 = vpack.c.b16 %v1015, %v1015
    %v1018 = vpack.c.b16 %v1016, %v1016
    %v1020 = vsel %vm149, %v1013, 0
    %v1023 = vsel %vm153, %v1017, 0
    %v1026 = vsel %vm153, %v1018, 0
    %1028 = vmatprep.subr.bf16.mxu0 %v1026
    %1029 = vmatpush1.bf16.msra.mxu0 %v1023
    %1030 = vmatprep.subr.bf16.mxu0 0
    %1031 = vmatpush1.bf16.msra.mxu0 0
    %1032 = vmatprep.subr.bf16.mxu0 0
    %1033 = vmatpush1.bf16.msra.mxu0 0
    %1034 = vmatprep.subr.bf16.mxu0 0
    %1035 = vmatpush1.bf16.msra.mxu0 0
    %1036 = vmatprep.subr.bf16.mxu0 0
    %1037 = vmatpush1.bf16.msra.mxu0 0
    %1038 = vmatprep.subr.bf16.mxu0 0
    %1039 = vmatpush1.bf16.msra.mxu0 0
    %1040 = vmatprep.subr.bf16.mxu0 0
    %1041 = vmatpush1.bf16.msra.mxu0 0
    %1042 = vmatprep.subr.bf16.mxu0 0
    %1043 = vmatpush1.bf16.msra.mxu0 0
    %1044 = vmatprep.subr.bf16.mxu0 0
    %1045 = vmatpush1.bf16.msra.mxu0 0
    %1046 = vmatprep.subr.bf16.mxu0 0
    %1047 = vmatpush1.bf16.msra.mxu0 0
    %1048 = vmatprep.subr.bf16.mxu0 0
    %1049 = vmatpush1.bf16.msra.mxu0 0
    %1050 = vmatprep.subr.bf16.mxu0 0
    %1051 = vmatpush1.bf16.msra.mxu0 0
    %1052 = vmatprep.subr.bf16.mxu0 0
    %1053 = vmatpush1.bf16.msra.mxu0 0
    %1054 = vmatprep.subr.bf16.mxu0 0
    %1055 = vmatpush1.bf16.msra.mxu0 0
    %1056 = vmatprep.subr.bf16.mxu0 0
    %1057 = vmatpush1.bf16.msra.mxu0 0
    %1058 = vmatprep.subr.bf16.mxu0 0
    %1059 = vmatpush1.bf16.msra.mxu0 0
    %1060 = vmatprep.mubr.bf16.mxu0 0
    %1061 = vmatmul.mubr.bf16.gmra.mrb[0].mxu0 %v1020
    %v1062 = vpop.f32.mrb[0].mxu0
    %v1063 = vadd.f32 0.0, %v1062
    %v1064 = vpop.f32.mrb[0].mxu0
    %v1065 = vadd.f32 0.0, %v1064
    %v1066 = vpop.f32.mrb[0].mxu0
    %v1067 = vadd.f32 0.0, %v1066
    %v1068 = vpop.f32.mrb[0].mxu0
    %v1069 = vadd.f32 0.0, %v1068
    %1070 = vdwg.mxu0
    %v1073 = vunpack.c.l.b16 %v49
    %v1074 = vunpack.c.l.b16 %v50
    %v1075 = vpack.c.b16 %v1074, %v1073
    %v1077 = vunpack.c.l.b16 %v98
    %v1078 = vunpack.c.h.b16 %v98
    %v1079 = vpack.c.b16 %v1077, %v1077
    %v1080 = vpack.c.b16 %v1078, %v1078
    %v1082 = vsel %vm149, %v1075, 0
    %v1085 = vsel %vm153, %v1079, 0
    %v1088 = vsel %vm153, %v1080, 0
    %1090 = vmatprep.subr.bf16.mxu0 %v1088
    %1091 = vmatpush1.bf16.msra.mxu0 %v1085
    %1092 = vmatprep.subr.bf16.mxu0 0
    %1093 = vmatpush1.bf16.msra.mxu0 0
    %1094 = vmatprep.subr.bf16.mxu0 0
    %1095 = vmatpush1.bf16.msra.mxu0 0
    %1096 = vmatprep.subr.bf16.mxu0 0
    %1097 = vmatpush1.bf16.msra.mxu0 0
    %1098 = vmatprep.subr.bf16.mxu0 0
    %1099 = vmatpush1.bf16.msra.mxu0 0
    %1100 = vmatprep.subr.bf16.mxu0 0
    %1101 = vmatpush1.bf16.msra.mxu0 0
    %1102 = vmatprep.subr.bf16.mxu0 0
    %1103 = vmatpush1.bf16.msra.mxu0 0
    %1104 = vmatprep.subr.bf16.mxu0 0
    %1105 = vmatpush1.bf16.msra.mxu0 0
    %1106 = vmatprep.subr.bf16.mxu0 0
    %1107 = vmatpush1.bf16.msra.mxu0 0
    %1108 = vmatprep.subr.bf16.mxu0 0
    %1109 = vmatpush1.bf16.msra.mxu0 0
    %1110 = vmatprep.subr.bf16.mxu0 0
    %1111 = vmatpush1.bf16.msra.mxu0 0
    %1112 = vmatprep.subr.bf16.mxu0 0
    %1113 = vmatpush1.bf16.msra.mxu0 0
    %1114 = vmatprep.subr.bf16.mxu0 0
    %1115 = vmatpush1.bf16.msra.mxu0 0
    %1116 = vmatprep.subr.bf16.mxu0 0
    %1117 = vmatpush1.bf16.msra.mxu0 0
    %1118 = vmatprep.subr.bf16.mxu0 0
    %1119 = vmatpush1.bf16.msra.mxu0 0
    %1120 = vmatprep.subr.bf16.mxu0 0
    %1121 = vmatpush1.bf16.msra.mxu0 0
    %1122 = vmatprep.mubr.bf16.mxu0 0
    %1123 = vmatmul.mubr.bf16.gmra.mrb[0].mxu0 %v1082
    %v1124 = vpop.f32.mrb[0].mxu0
    %v1125 = vadd.f32 0.0, %v1124
    %v1126 = vpop.f32.mrb[0].mxu0
    %v1127 = vadd.f32 0.0, %v1126
    %v1128 = vpop.f32.mrb[0].mxu0
    %v1129 = vadd.f32 0.0, %v1128
    %v1130 = vpop.f32.mrb[0].mxu0
    %v1131 = vadd.f32 0.0, %v1130
    %1132 = vdwg.mxu0
    %v1135 = vunpack.c.l.b16 %v51
    %v1136 = vunpack.c.l.b16 %v52
    %v1137 = vpack.c.b16 %v1136, %v1135
    %v1139 = vunpack.c.l.b16 %v99
    %v1140 = vunpack.c.h.b16 %v99
    %v1141 = vpack.c.b16 %v1139, %v1139
    %v1142 = vpack.c.b16 %v1140, %v1140
    %v1144 = vsel %vm149, %v1137, 0
    %v1147 = vsel %vm153, %v1141, 0
    %v1150 = vsel %vm153, %v1142, 0
    %1152 = vmatprep.subr.bf16.mxu0 %v1150
    %1153 = vmatpush1.bf16.msra.mxu0 %v1147
    %1154 = vmatprep.subr.bf16.mxu0 0
    %1155 = vmatpush1.bf16.msra.mxu0 0
    %1156 = vmatprep.subr.bf16.mxu0 0
    %1157 = vmatpush1.bf16.msra.mxu0 0
    %1158 = vmatprep.subr.bf16.mxu0 0
    %1159 = vmatpush1.bf16.msra.mxu0 0
    %1160 = vmatprep.subr.bf16.mxu0 0
    %1161 = vmatpush1.bf16.msra.mxu0 0
    %1162 = vmatprep.subr.bf16.mxu0 0
    %1163 = vmatpush1.bf16.msra.mxu0 0
    %1164 = vmatprep.subr.bf16.mxu0 0
    %1165 = vmatpush1.bf16.msra.mxu0 0
    %1166 = vmatprep.subr.bf16.mxu0 0
    %1167 = vmatpush1.bf16.msra.mxu0 0
    %1168 = vmatprep.subr.bf16.mxu0 0
    %1169 = vmatpush1.bf16.msra.mxu0 0
    %1170 = vmatprep.subr.bf16.mxu0 0
    %1171 = vmatpush1.bf16.msra.mxu0 0
    %1172 = vmatprep.subr.bf16.mxu0 0
    %1173 = vmatpush1.bf16.msra.mxu0 0
    %1174 = vmatprep.subr.bf16.mxu0 0
    %1175 = vmatpush1.bf16.msra.mxu0 0
    %1176 = vmatprep.subr.bf16.mxu0 0
    %1177 = vmatpush1.bf16.msra.mxu0 0
    %1178 = vmatprep.subr.bf16.mxu0 0
    %1179 = vmatpush1.bf16.msra.mxu0 0
    %1180 = vmatprep.subr.bf16.mxu0 0
    %1181 = vmatpush1.bf16.msra.mxu0 0
    %1182 = vmatprep.subr.bf16.mxu0 0
    %1183 = vmatpush1.bf16.msra.mxu0 0
    %1184 = vmatprep.mubr.bf16.mxu0 0
    %1185 = vmatmul.mubr.bf16.gmra.mrb[0].mxu0 %v1144
    %v1186 = vpop.f32.mrb[0].mxu0
    %v1187 = vadd.f32 0.0, %v1186
    %v1188 = vpop.f32.mrb[0].mxu0
    %v1189 = vadd.f32 0.0, %v1188
    %v1190 = vpop.f32.mrb[0].mxu0
    %v1191 = vadd.f32 0.0, %v1190
    %v1192 = vpop.f32.mrb[0].mxu0
    %v1193 = vadd.f32 0.0, %v1192
    %1194 = vdwg.mxu0
    %v1197 = vunpack.c.l.b16 %v53
    %v1198 = vunpack.c.l.b16 %v54
    %v1199 = vpack.c.b16 %v1198, %v1197
    %v1201 = vunpack.c.l.b16 %v100
    %v1202 = vunpack.c.h.b16 %v100
    %v1203 = vpack.c.b16 %v1201, %v1201
    %v1204 = vpack.c.b16 %v1202, %v1202
    %v1206 = vsel %vm149, %v1199, 0
    %v1209 = vsel %vm153, %v1203, 0
    %v1212 = vsel %vm153, %v1204, 0
    %1214 = vmatprep.subr.bf16.mxu0 %v1212
    %1215 = vmatpush1.bf16.msra.mxu0 %v1209
    %1216 = vmatprep.subr.bf16.mxu0 0
    %1217 = vmatpush1.bf16.msra.mxu0 0
    %1218 = vmatprep.subr.bf16.mxu0 0
    %1219 = vmatpush1.bf16.msra.mxu0 0
    %1220 = vmatprep.subr.bf16.mxu0 0
    %1221 = vmatpush1.bf16.msra.mxu0 0
    %1222 = vmatprep.subr.bf16.mxu0 0
    %1223 = vmatpush1.bf16.msra.mxu0 0
    %1224 = vmatprep.subr.bf16.mxu0 0
    %1225 = vmatpush1.bf16.msra.mxu0 0
    %1226 = vmatprep.subr.bf16.mxu0 0
    %1227 = vmatpush1.bf16.msra.mxu0 0
    %1228 = vmatprep.subr.bf16.mxu0 0
    %1229 = vmatpush1.bf16.msra.mxu0 0
    %1230 = vmatprep.subr.bf16.mxu0 0
    %1231 = vmatpush1.bf16.msra.mxu0 0
    %1232 = vmatprep.subr.bf16.mxu0 0
    %1233 = vmatpush1.bf16.msra.mxu0 0
    %1234 = vmatprep.subr.bf16.mxu0 0
    %1235 = vmatpush1.bf16.msra.mxu0 0
    %1236 = vmatprep.subr.bf16.mxu0 0
    %1237 = vmatpush1.bf16.msra.mxu0 0
    %1238 = vmatprep.subr.bf16.mxu0 0
    %1239 = vmatpush1.bf16.msra.mxu0 0
    %1240 = vmatprep.subr.bf16.mxu0 0
    %1241 = vmatpush1.bf16.msra.mxu0 0
    %1242 = vmatprep.subr.bf16.mxu0 0
    %1243 = vmatpush1.bf16.msra.mxu0 0
    %1244 = vmatprep.subr.bf16.mxu0 0
    %1245 = vmatpush1.bf16.msra.mxu0 0
    %1246 = vmatprep.mubr.bf16.mxu0 0
    %1247 = vmatmul.mubr.bf16.gmra.mrb[0].mxu0 %v1206
    %v1248 = vpop.f32.mrb[0].mxu0
    %v1249 = vadd.f32 0.0, %v1248
    %v1250 = vpop.f32.mrb[0].mxu0
    %v1251 = vadd.f32 0.0, %v1250
    %v1252 = vpop.f32.mrb[0].mxu0
    %v1253 = vadd.f32 0.0, %v1252
    %v1254 = vpop.f32.mrb[0].mxu0
    %v1255 = vadd.f32 0.0, %v1254
    %1256 = vdwg.mxu0
    %v1259 = vunpack.c.l.b16 %v55
    %v1260 = vunpack.c.l.b16 %v56
    %v1261 = vpack.c.b16 %v1260, %v1259
    %v1263 = vunpack.c.l.b16 %v101
    %v1264 = vunpack.c.h.b16 %v101
    %v1265 = vpack.c.b16 %v1263, %v1263
    %v1266 = vpack.c.b16 %v1264, %v1264
    %v1268 = vsel %vm149, %v1261, 0
    %v1271 = vsel %vm153, %v1265, 0
    %v1274 = vsel %vm153, %v1266, 0
    %1276 = vmatprep.subr.bf16.mxu0 %v1274
    %1277 = vmatpush1.bf16.msra.mxu0 %v1271
    %1278 = vmatprep.subr.bf16.mxu0 0
    %1279 = vmatpush1.bf16.msra.mxu0 0
    %1280 = vmatprep.subr.bf16.mxu0 0
    %1281 = vmatpush1.bf16.msra.mxu0 0
    %1282 = vmatprep.subr.bf16.mxu0 0
    %1283 = vmatpush1.bf16.msra.mxu0 0
    %1284 = vmatprep.subr.bf16.mxu0 0
    %1285 = vmatpush1.bf16.msra.mxu0 0
    %1286 = vmatprep.subr.bf16.mxu0 0
    %1287 = vmatpush1.bf16.msra.mxu0 0
    %1288 = vmatprep.subr.bf16.mxu0 0
    %1289 = vmatpush1.bf16.msra.mxu0 0
    %1290 = vmatprep.subr.bf16.mxu0 0
    %1291 = vmatpush1.bf16.msra.mxu0 0
    %1292 = vmatprep.subr.bf16.mxu0 0
    %1293 = vmatpush1.bf16.msra.mxu0 0
    %1294 = vmatprep.subr.bf16.mxu0 0
    %1295 = vmatpush1.bf16.msra.mxu0 0
    %1296 = vmatprep.subr.bf16.mxu0 0
    %1297 = vmatpush1.bf16.msra.mxu0 0
    %1298 = vmatprep.subr.bf16.mxu0 0
    %1299 = vmatpush1.bf16.msra.mxu0 0
    %1300 = vmatprep.subr.bf16.mxu0 0
    %1301 = vmatpush1.bf16.msra.mxu0 0
    %1302 = vmatprep.subr.bf16.mxu0 0
    %1303 = vmatpush1.bf16.msra.mxu0 0
    %1304 = vmatprep.subr.bf16.mxu0 0
    %1305 = vmatpush1.bf16.msra.mxu0 0
    %1306 = vmatprep.subr.bf16.mxu0 0
    %1307 = vmatpush1.bf16.msra.mxu0 0
    %1308 = vmatprep.mubr.bf16.mxu0 0
    %1309 = vmatmul.mubr.bf16.gmra.mrb[0].mxu0 %v1268
    %v1310 = vpop.f32.mrb[0].mxu0
    %v1311 = vadd.f32 0.0, %v1310
    %v1312 = vpop.f32.mrb[0].mxu0
    %v1313 = vadd.f32 0.0, %v1312
    %v1314 = vpop.f32.mrb[0].mxu0
    %v1315 = vadd.f32 0.0, %v1314
    %v1316 = vpop.f32.mrb[0].mxu0
    %v1317 = vadd.f32 0.0, %v1316
    %1318 = vdwg.mxu0
    %v1321 = vunpack.c.l.b16 %v57
    %v1322 = vunpack.c.l.b16 %v58
    %v1323 = vpack.c.b16 %v1322, %v1321
    %v1325 = vunpack.c.l.b16 %v102
    %v1326 = vunpack.c.h.b16 %v102
    %v1327 = vpack.c.b16 %v1325, %v1325
    %v1328 = vpack.c.b16 %v1326, %v1326
    %v1330 = vsel %vm149, %v1323, 0
    %v1333 = vsel %vm153, %v1327, 0
    %v1336 = vsel %vm153, %v1328, 0
    %1338 = vmatprep.subr.bf16.mxu0 %v1336
    %1339 = vmatpush1.bf16.msra.mxu0 %v1333
    %1340 = vmatprep.subr.bf16.mxu0 0
    %1341 = vmatpush1.bf16.msra.mxu0 0
    %1342 = vmatprep.subr.bf16.mxu0 0
    %1343 = vmatpush1.bf16.msra.mxu0 0
    %1344 = vmatprep.subr.bf16.mxu0 0
    %1345 = vmatpush1.bf16.msra.mxu0 0
    %1346 = vmatprep.subr.bf16.mxu0 0
    %1347 = vmatpush1.bf16.msra.mxu0 0
    %1348 = vmatprep.subr.bf16.mxu0 0
    %1349 = vmatpush1.bf16.msra.mxu0 0
    %1350 = vmatprep.subr.bf16.mxu0 0
    %1351 = vmatpush1.bf16.msra.mxu0 0
    %1352 = vmatprep.subr.bf16.mxu0 0
    %1353 = vmatpush1.bf16.msra.mxu0 0
    %1354 = vmatprep.subr.bf16.mxu0 0
    %1355 = vmatpush1.bf16.msra.mxu0 0
    %1356 = vmatprep.subr.bf16.mxu0 0
    %1357 = vmatpush1.bf16.msra.mxu0 0
    %1358 = vmatprep.subr.bf16.mxu0 0
    %1359 = vmatpush1.bf16.msra.mxu0 0
    %1360 = vmatprep.subr.bf16.mxu0 0
    %1361 = vmatpush1.bf16.msra.mxu0 0
    %1362 = vmatprep.subr.bf16.mxu0 0
    %1363 = vmatpush1.bf16.msra.mxu0 0
    %1364 = vmatprep.subr.bf16.mxu0 0
    %1365 = vmatpush1.bf16.msra.mxu0 0
    %1366 = vmatprep.subr.bf16.mxu0 0
    %1367 = vmatpush1.bf16.msra.mxu0 0
    %1368 = vmatprep.subr.bf16.mxu0 0
    %1369 = vmatpush1.bf16.msra.mxu0 0
    %1370 = vmatprep.mubr.bf16.mxu0 0
    %1371 = vmatmul.mubr.bf16.gmra.mrb[0].mxu0 %v1330
    %v1372 = vpop.f32.mrb[0].mxu0
    %v1373 = vadd.f32 0.0, %v1372
    %v1374 = vpop.f32.mrb[0].mxu0
    %v1375 = vadd.f32 0.0, %v1374
    %v1376 = vpop.f32.mrb[0].mxu0
    %v1377 = vadd.f32 0.0, %v1376
    %v1378 = vpop.f32.mrb[0].mxu0
    %v1379 = vadd.f32 0.0, %v1378
    %1380 = vdwg.mxu0
    %v1383 = vunpack.c.l.b16 %v59
    %v1384 = vunpack.c.l.b16 %v60
    %v1385 = vpack.c.b16 %v1384, %v1383
    %v1387 = vunpack.c.l.b16 %v103
    %v1388 = vunpack.c.h.b16 %v103
    %v1389 = vpack.c.b16 %v1387, %v1387
    %v1390 = vpack.c.b16 %v1388, %v1388
    %v1392 = vsel %vm149, %v1385, 0
    %v1395 = vsel %vm153, %v1389, 0
    %v1398 = vsel %vm153, %v1390, 0
    %1400 = vmatprep.subr.bf16.mxu0 %v1398
    %1401 = vmatpush1.bf16.msra.mxu0 %v1395
    %1402 = vmatprep.subr.bf16.mxu0 0
    %1403 = vmatpush1.bf16.msra.mxu0 0
    %1404 = vmatprep.subr.bf16.mxu0 0
    %1405 = vmatpush1.bf16.msra.mxu0 0
    %1406 = vmatprep.subr.bf16.mxu0 0
    %1407 = vmatpush1.bf16.msra.mxu0 0
    %1408 = vmatprep.subr.bf16.mxu0 0
    %1409 = vmatpush1.bf16.msra.mxu0 0
    %1410 = vmatprep.subr.bf16.mxu0 0
    %1411 = vmatpush1.bf16.msra.mxu0 0
    %1412 = vmatprep.subr.bf16.mxu0 0
    %1413 = vmatpush1.bf16.msra.mxu0 0
    %1414 = vmatprep.subr.bf16.mxu0 0
    %1415 = vmatpush1.bf16.msra.mxu0 0
    %1416 = vmatprep.subr.bf16.mxu0 0
    %1417 = vmatpush1.bf16.msra.mxu0 0
    %1418 = vmatprep.subr.bf16.mxu0 0
    %1419 = vmatpush1.bf16.msra.mxu0 0
    %1420 = vmatprep.subr.bf16.mxu0 0
    %1421 = vmatpush1.bf16.msra.mxu0 0
    %1422 = vmatprep.subr.bf16.mxu0 0
    %1423 = vmatpush1.bf16.msra.mxu0 0
    %1424 = vmatprep.subr.bf16.mxu0 0
    %1425 = vmatpush1.bf16.msra.mxu0 0
    %1426 = vmatprep.subr.bf16.mxu0 0
    %1427 = vmatpush1.bf16.msra.mxu0 0
    %1428 = vmatprep.subr.bf16.mxu0 0
    %1429 = vmatpush1.bf16.msra.mxu0 0
    %1430 = vmatprep.subr.bf16.mxu0 0
    %1431 = vmatpush1.bf16.msra.mxu0 0
    %1432 = vmatprep.mubr.bf16.mxu0 0
    %1433 = vmatmul.mubr.bf16.gmra.mrb[0].mxu0 %v1392
    %v1434 = vpop.f32.mrb[0].mxu0
    %v1435 = vadd.f32 0.0, %v1434
    %v1436 = vpop.f32.mrb[0].mxu0
    %v1437 = vadd.f32 0.0, %v1436
    %v1438 = vpop.f32.mrb[0].mxu0
    %v1439 = vadd.f32 0.0, %v1438
    %v1440 = vpop.f32.mrb[0].mxu0
    %v1441 = vadd.f32 0.0, %v1440
    %1442 = vdwg.mxu0
    %v1445 = vunpack.c.l.b16 %v61
    %v1446 = vunpack.c.l.b16 %v62
    %v1447 = vpack.c.b16 %v1446, %v1445
    %v1449 = vunpack.c.l.b16 %v104
    %v1450 = vunpack.c.h.b16 %v104
    %v1451 = vpack.c.b16 %v1449, %v1449
    %v1452 = vpack.c.b16 %v1450, %v1450
    %v1454 = vsel %vm149, %v1447, 0
    %v1457 = vsel %vm153, %v1451, 0
    %v1460 = vsel %vm153, %v1452, 0
    %1462 = vmatprep.subr.bf16.mxu0 %v1460
    %1463 = vmatpush1.bf16.msra.mxu0 %v1457
    %1464 = vmatprep.subr.bf16.mxu0 0
    %1465 = vmatpush1.bf16.msra.mxu0 0
    %1466 = vmatprep.subr.bf16.mxu0 0
    %1467 = vmatpush1.bf16.msra.mxu0 0
    %1468 = vmatprep.subr.bf16.mxu0 0
    %1469 = vmatpush1.bf16.msra.mxu0 0
    %1470 = vmatprep.subr.bf16.mxu0 0
    %1471 = vmatpush1.bf16.msra.mxu0 0
    %1472 = vmatprep.subr.bf16.mxu0 0
    %1473 = vmatpush1.bf16.msra.mxu0 0
    %1474 = vmatprep.subr.bf16.mxu0 0
    %1475 = vmatpush1.bf16.msra.mxu0 0
    %1476 = vmatprep.subr.bf16.mxu0 0
    %1477 = vmatpush1.bf16.msra.mxu0 0
    %1478 = vmatprep.subr.bf16.mxu0 0
    %1479 = vmatpush1.bf16.msra.mxu0 0
    %1480 = vmatprep.subr.bf16.mxu0 0
    %1481 = vmatpush1.bf16.msra.mxu0 0
    %1482 = vmatprep.subr.bf16.mxu0 0
    %1483 = vmatpush1.bf16.msra.mxu0 0
    %1484 = vmatprep.subr.bf16.mxu0 0
    %1485 = vmatpush1.bf16.msra.mxu0 0
    %1486 = vmatprep.subr.bf16.mxu0 0
    %1487 = vmatpush1.bf16.msra.mxu0 0
    %1488 = vmatprep.subr.bf16.mxu0 0
    %1489 = vmatpush1.bf16.msra.mxu0 0
    %1490 = vmatprep.subr.bf16.mxu0 0
    %1491 = vmatpush1.bf16.msra.mxu0 0
    %1492 = vmatprep.subr.bf16.mxu0 0
    %1493 = vmatpush1.bf16.msra.mxu0 0
    %1494 = vmatprep.mubr.bf16.mxu0 0
    %1495 = vmatmul.mubr.bf16.gmra.mrb[0].mxu0 %v1454
    %v1496 = vpop.f32.mrb[0].mxu0
    %v1497 = vadd.f32 0.0, %v1496
    %v1498 = vpop.f32.mrb[0].mxu0
    %v1499 = vadd.f32 0.0, %v1498
    %v1500 = vpop.f32.mrb[0].mxu0
    %v1501 = vadd.f32 0.0, %v1500
    %v1502 = vpop.f32.mrb[0].mxu0
    %v1503 = vadd.f32 0.0, %v1502
    %1504 = vdwg.mxu0
    %v1507 = vunpack.c.l.b16 %v63
    %v1508 = vunpack.c.l.b16 %v64
    %v1509 = vpack.c.b16 %v1508, %v1507
    %v1511 = vunpack.c.l.b16 %v105
    %v1512 = vunpack.c.h.b16 %v105
    %v1513 = vpack.c.b16 %v1511, %v1511
    %v1514 = vpack.c.b16 %v1512, %v1512
    %v1516 = vsel %vm149, %v1509, 0
    %v1519 = vsel %vm153, %v1513, 0
    %v1522 = vsel %vm153, %v1514, 0
    %1524 = vmatprep.subr.bf16.mxu0 %v1522
    %1525 = vmatpush1.bf16.msra.mxu0 %v1519
    %1526 = vmatprep.subr.bf16.mxu0 0
    %1527 = vmatpush1.bf16.msra.mxu0 0
    %1528 = vmatprep.subr.bf16.mxu0 0
    %1529 = vmatpush1.bf16.msra.mxu0 0
    %1530 = vmatprep.subr.bf16.mxu0 0
    %1531 = vmatpush1.bf16.msra.mxu0 0
    %1532 = vmatprep.subr.bf16.mxu0 0
    %1533 = vmatpush1.bf16.msra.mxu0 0
    %1534 = vmatprep.subr.bf16.mxu0 0
    %1535 = vmatpush1.bf16.msra.mxu0 0
    %1536 = vmatprep.subr.bf16.mxu0 0
    %1537 = vmatpush1.bf16.msra.mxu0 0
    %1538 = vmatprep.subr.bf16.mxu0 0
    %1539 = vmatpush1.bf16.msra.mxu0 0
    %1540 = vmatprep.subr.bf16.mxu0 0
    %1541 = vmatpush1.bf16.msra.mxu0 0
    %1542 = vmatprep.subr.bf16.mxu0 0
    %1543 = vmatpush1.bf16.msra.mxu0 0
    %1544 = vmatprep.subr.bf16.mxu0 0
    %1545 = vmatpush1.bf16.msra.mxu0 0
    %1546 = vmatprep.subr.bf16.mxu0 0
    %1547 = vmatpush1.bf16.msra.mxu0 0
    %1548 = vmatprep.subr.bf16.mxu0 0
    %1549 = vmatpush1.bf16.msra.mxu0 0
    %1550 = vmatprep.subr.bf16.mxu0 0
    %1551 = vmatpush1.bf16.msra.mxu0 0
    %1552 = vmatprep.subr.bf16.mxu0 0
    %1553 = vmatpush1.bf16.msra.mxu0 0
    %1554 = vmatprep.subr.bf16.mxu0 0
    %1555 = vmatpush1.bf16.msra.mxu0 0
    %1556 = vmatprep.mubr.bf16.mxu0 0
    %1557 = vmatmul.mubr.bf16.gmra.mrb[0].mxu0 %v1516
    %v1558 = vpop.f32.mrb[0].mxu0
    %v1559 = vadd.f32 0.0, %v1558
    %v1560 = vpop.f32.mrb[0].mxu0
    %v1561 = vadd.f32 0.0, %v1560
    %v1562 = vpop.f32.mrb[0].mxu0
    %v1563 = vadd.f32 0.0, %v1562
    %v1564 = vpop.f32.mrb[0].mxu0
    %v1565 = vadd.f32 0.0, %v1564
    %1566 = vdwg.mxu0
    %v1569 = vunpack.c.l.b16 %v65
    %v1570 = vunpack.c.l.b16 %v66
    %v1571 = vpack.c.b16 %v1570, %v1569
    %v1573 = vunpack.c.l.b16 %v106
    %v1574 = vunpack.c.h.b16 %v106
    %v1575 = vpack.c.b16 %v1573, %v1573
    %v1576 = vpack.c.b16 %v1574, %v1574
    %v1578 = vsel %vm149, %v1571, 0
    %v1581 = vsel %vm153, %v1575, 0
    %v1584 = vsel %vm153, %v1576, 0
    %1586 = vmatprep.subr.bf16.mxu0 %v1584
    %1587 = vmatpush1.bf16.msra.mxu0 %v1581
    %1588 = vmatprep.subr.bf16.mxu0 0
    %1589 = vmatpush1.bf16.msra.mxu0 0
    %1590 = vmatprep.subr.bf16.mxu0 0
    %1591 = vmatpush1.bf16.msra.mxu0 0
    %1592 = vmatprep.subr.bf16.mxu0 0
    %1593 = vmatpush1.bf16.msra.mxu0 0
    %1594 = vmatprep.subr.bf16.mxu0 0
    %1595 = vmatpush1.bf16.msra.mxu0 0
    %1596 = vmatprep.subr.bf16.mxu0 0
    %1597 = vmatpush1.bf16.msra.mxu0 0
    %1598 = vmatprep.subr.bf16.mxu0 0
    %1599 = vmatpush1.bf16.msra.mxu0 0
    %1600 = vmatprep.subr.bf16.mxu0 0
    %1601 = vmatpush1.bf16.msra.mxu0 0
    %1602 = vmatprep.subr.bf16.mxu0 0
    %1603 = vmatpush1.bf16.msra.mxu0 0
    %1604 = vmatprep.subr.bf16.mxu0 0
    %1605 = vmatpush1.bf16.msra.mxu0 0
    %1606 = vmatprep.subr.bf16.mxu0 0
    %1607 = vmatpush1.bf16.msra.mxu0 0
    %1608 = vmatprep.subr.bf16.mxu0 0
    %1609 = vmatpush1.bf16.msra.mxu0 0
    %1610 = vmatprep.subr.bf16.mxu0 0
    %1611 = vmatpush1.bf16.msra.mxu0 0
    %1612 = vmatprep.subr.bf16.mxu0 0
    %1613 = vmatpush1.bf16.msra.mxu0 0
    %1614 = vmatprep.subr.bf16.mxu0 0
    %1615 = vmatpush1.bf16.msra.mxu0 0
    %1616 = vmatprep.subr.bf16.mxu0 0
    %1617 = vmatpush1.bf16.msra.mxu0 0
    %1618 = vmatprep.mubr.bf16.mxu0 0
    %1619 = vmatmul.mubr.bf16.gmra.mrb[0].mxu0 %v1578
    %v1620 = vpop.f32.mrb[0].mxu0
    %v1621 = vadd.f32 0.0, %v1620
    %v1622 = vpop.f32.mrb[0].mxu0
    %v1623 = vadd.f32 0.0, %v1622
    %v1624 = vpop.f32.mrb[0].mxu0
    %v1625 = vadd.f32 0.0, %v1624
    %v1626 = vpop.f32.mrb[0].mxu0
    %v1627 = vadd.f32 0.0, %v1626
    %1628 = vdwg.mxu0
    %v1631 = vunpack.c.l.b16 %v67
    %v1632 = vunpack.c.l.b16 %v68
    %v1633 = vpack.c.b16 %v1632, %v1631
    %v1635 = vunpack.c.l.b16 %v107
    %v1636 = vunpack.c.h.b16 %v107
    %v1637 = vpack.c.b16 %v1635, %v1635
    %v1638 = vpack.c.b16 %v1636, %v1636
    %v1640 = vsel %vm149, %v1633, 0
    %v1643 = vsel %vm153, %v1637, 0
    %v1646 = vsel %vm153, %v1638, 0
    %1648 = vmatprep.subr.bf16.mxu0 %v1646
    %1649 = vmatpush1.bf16.msra.mxu0 %v1643
    %1650 = vmatprep.subr.bf16.mxu0 0
    %1651 = vmatpush1.bf16.msra.mxu0 0
    %1652 = vmatprep.subr.bf16.mxu0 0
    %1653 = vmatpush1.bf16.msra.mxu0 0
    %1654 = vmatprep.subr.bf16.mxu0 0
    %1655 = vmatpush1.bf16.msra.mxu0 0
    %1656 = vmatprep.subr.bf16.mxu0 0
    %1657 = vmatpush1.bf16.msra.mxu0 0
    %1658 = vmatprep.subr.bf16.mxu0 0
    %1659 = vmatpush1.bf16.msra.mxu0 0
    %1660 = vmatprep.subr.bf16.mxu0 0
    %1661 = vmatpush1.bf16.msra.mxu0 0
    %1662 = vmatprep.subr.bf16.mxu0 0
    %1663 = vmatpush1.bf16.msra.mxu0 0
    %1664 = vmatprep.subr.bf16.mxu0 0
    %1665 = vmatpush1.bf16.msra.mxu0 0
    %1666 = vmatprep.subr.bf16.mxu0 0
    %1667 = vmatpush1.bf16.msra.mxu0 0
    %1668 = vmatprep.subr.bf16.mxu0 0
    %1669 = vmatpush1.bf16.msra.mxu0 0
    %1670 = vmatprep.subr.bf16.mxu0 0
    %1671 = vmatpush1.bf16.msra.mxu0 0
    %1672 = vmatprep.subr.bf16.mxu0 0
    %1673 = vmatpush1.bf16.msra.mxu0 0
    %1674 = vmatprep.subr.bf16.mxu0 0
    %1675 = vmatpush1.bf16.msra.mxu0 0
    %1676 = vmatprep.subr.bf16.mxu0 0
    %1677 = vmatpush1.bf16.msra.mxu0 0
    %1678 = vmatprep.subr.bf16.mxu0 0
    %1679 = vmatpush1.bf16.msra.mxu0 0
    %1680 = vmatprep.mubr.bf16.mxu0 0
    %1681 = vmatmul.mubr.bf16.gmra.mrb[0].mxu0 %v1640
    %v1682 = vpop.f32.mrb[0].mxu0
    %v1683 = vadd.f32 0.0, %v1682
    %v1684 = vpop.f32.mrb[0].mxu0
    %v1685 = vadd.f32 0.0, %v1684
    %v1686 = vpop.f32.mrb[0].mxu0
    %v1687 = vadd.f32 0.0, %v1686
    %v1688 = vpop.f32.mrb[0].mxu0
    %v1689 = vadd.f32 0.0, %v1688
    %1690 = vdwg.mxu0
    %v1693 = vunpack.c.l.b16 %v69
    %v1694 = vunpack.c.l.b16 %v70
    %v1695 = vpack.c.b16 %v1694, %v1693
    %v1697 = vunpack.c.l.b16 %v108
    %v1698 = vunpack.c.h.b16 %v108
    %v1699 = vpack.c.b16 %v1697, %v1697
    %v1700 = vpack.c.b16 %v1698, %v1698
    %v1702 = vsel %vm149, %v1695, 0
    %v1705 = vsel %vm153, %v1699, 0
    %v1708 = vsel %vm153, %v1700, 0
    %1710 = vmatprep.subr.bf16.mxu0 %v1708
    %1711 = vmatpush1.bf16.msra.mxu0 %v1705
    %1712 = vmatprep.subr.bf16.mxu0 0
    %1713 = vmatpush1.bf16.msra.mxu0 0
    %1714 = vmatprep.subr.bf16.mxu0 0
    %1715 = vmatpush1.bf16.msra.mxu0 0
    %1716 = vmatprep.subr.bf16.mxu0 0
    %1717 = vmatpush1.bf16.msra.mxu0 0
    %1718 = vmatprep.subr.bf16.mxu0 0
    %1719 = vmatpush1.bf16.msra.mxu0 0
    %1720 = vmatprep.subr.bf16.mxu0 0
    %1721 = vmatpush1.bf16.msra.mxu0 0
    %1722 = vmatprep.subr.bf16.mxu0 0
    %1723 = vmatpush1.bf16.msra.mxu0 0
    %1724 = vmatprep.subr.bf16.mxu0 0
    %1725 = vmatpush1.bf16.msra.mxu0 0
    %1726 = vmatprep.subr.bf16.mxu0 0
    %1727 = vmatpush1.bf16.msra.mxu0 0
    %1728 = vmatprep.subr.bf16.mxu0 0
    %1729 = vmatpush1.bf16.msra.mxu0 0
    %1730 = vmatprep.subr.bf16.mxu0 0
    %1731 = vmatpush1.bf16.msra.mxu0 0
    %1732 = vmatprep.subr.bf16.mxu0 0
    %1733 = vmatpush1.bf16.msra.mxu0 0
    %1734 = vmatprep.subr.bf16.mxu0 0
    %1735 = vmatpush1.bf16.msra.mxu0 0
    %1736 = vmatprep.subr.bf16.mxu0 0
    %1737 = vmatpush1.bf16.msra.mxu0 0
    %1738 = vmatprep.subr.bf16.mxu0 0
    %1739 = vmatpush1.bf16.msra.mxu0 0
    %1740 = vmatprep.subr.bf16.mxu0 0
    %1741 = vmatpush1.bf16.msra.mxu0 0
    %1742 = vmatprep.mubr.bf16.mxu0 0
    %1743 = vmatmul.mubr.bf16.gmra.mrb[0].mxu0 %v1702
    %v1744 = vpop.f32.mrb[0].mxu0
    %v1745 = vadd.f32 0.0, %v1744
    %v1746 = vpop.f32.mrb[0].mxu0
    %v1747 = vadd.f32 0.0, %v1746
    %v1748 = vpop.f32.mrb[0].mxu0
    %v1749 = vadd.f32 0.0, %v1748
    %v1750 = vpop.f32.mrb[0].mxu0
    %v1751 = vadd.f32 0.0, %v1750
    %1752 = vdwg.mxu0
    %v1755 = vunpack.c.l.b16 %v71
    %v1756 = vunpack.c.l.b16 %v72
    %v1757 = vpack.c.b16 %v1756, %v1755
    %v1759 = vunpack.c.l.b16 %v109
    %v1760 = vunpack.c.h.b16 %v109
    %v1761 = vpack.c.b16 %v1759, %v1759
    %v1762 = vpack.c.b16 %v1760, %v1760
    %v1764 = vsel %vm149, %v1757, 0
    %v1767 = vsel %vm153, %v1761, 0
    %v1770 = vsel %vm153, %v1762, 0
    %1772 = vmatprep.subr.bf16.mxu0 %v1770
    %1773 = vmatpush1.bf16.msra.mxu0 %v1767
    %1774 = vmatprep.subr.bf16.mxu0 0
    %1775 = vmatpush1.bf16.msra.mxu0 0
    %1776 = vmatprep.subr.bf16.mxu0 0
    %1777 = vmatpush1.bf16.msra.mxu0 0
    %1778 = vmatprep.subr.bf16.mxu0 0
    %1779 = vmatpush1.bf16.msra.mxu0 0
    %1780 = vmatprep.subr.bf16.mxu0 0
    %1781 = vmatpush1.bf16.msra.mxu0 0
    %1782 = vmatprep.subr.bf16.mxu0 0
    %1783 = vmatpush1.bf16.msra.mxu0 0
    %1784 = vmatprep.subr.bf16.mxu0 0
    %1785 = vmatpush1.bf16.msra.mxu0 0
    %1786 = vmatprep.subr.bf16.mxu0 0
    %1787 = vmatpush1.bf16.msra.mxu0 0
    %1788 = vmatprep.subr.bf16.mxu0 0
    %1789 = vmatpush1.bf16.msra.mxu0 0
    %1790 = vmatprep.subr.bf16.mxu0 0
    %1791 = vmatpush1.bf16.msra.mxu0 0
    %1792 = vmatprep.subr.bf16.mxu0 0
    %1793 = vmatpush1.bf16.msra.mxu0 0
    %1794 = vmatprep.subr.bf16.mxu0 0
    %1795 = vmatpush1.bf16.msra.mxu0 0
    %1796 = vmatprep.subr.bf16.mxu0 0
    %1797 = vmatpush1.bf16.msra.mxu0 0
    %1798 = vmatprep.subr.bf16.mxu0 0
    %1799 = vmatpush1.bf16.msra.mxu0 0
    %1800 = vmatprep.subr.bf16.mxu0 0
    %1801 = vmatpush1.bf16.msra.mxu0 0
    %1802 = vmatprep.subr.bf16.mxu0 0
    %1803 = vmatpush1.bf16.msra.mxu0 0
    %1804 = vmatprep.mubr.bf16.mxu0 0
    %1805 = vmatmul.mubr.bf16.gmra.mrb[0].mxu0 %v1764
    %v1806 = vpop.f32.mrb[0].mxu0
    %v1807 = vadd.f32 0.0, %v1806
    %v1808 = vpop.f32.mrb[0].mxu0
    %v1809 = vadd.f32 0.0, %v1808
    %v1810 = vpop.f32.mrb[0].mxu0
    %v1811 = vadd.f32 0.0, %v1810
    %v1812 = vpop.f32.mrb[0].mxu0
    %v1813 = vadd.f32 0.0, %v1812
    %1814 = vdwg.mxu0
    %v1817 = vunpack.c.l.b16 %v73
    %v1818 = vunpack.c.l.b16 %v74
    %v1819 = vpack.c.b16 %v1818, %v1817
    %v1821 = vunpack.c.l.b16 %v110
    %v1822 = vunpack.c.h.b16 %v110
    %v1823 = vpack.c.b16 %v1821, %v1821
    %v1824 = vpack.c.b16 %v1822, %v1822
    %v1826 = vsel %vm149, %v1819, 0
    %v1829 = vsel %vm153, %v1823, 0
    %v1832 = vsel %vm153, %v1824, 0
    %1834 = vmatprep.subr.bf16.mxu0 %v1832
    %1835 = vmatpush1.bf16.msra.mxu0 %v1829
    %1836 = vmatprep.subr.bf16.mxu0 0
    %1837 = vmatpush1.bf16.msra.mxu0 0
    %1838 = vmatprep.subr.bf16.mxu0 0
    %1839 = vmatpush1.bf16.msra.mxu0 0
    %1840 = vmatprep.subr.bf16.mxu0 0
    %1841 = vmatpush1.bf16.msra.mxu0 0
    %1842 = vmatprep.subr.bf16.mxu0 0
    %1843 = vmatpush1.bf16.msra.mxu0 0
    %1844 = vmatprep.subr.bf16.mxu0 0
    %1845 = vmatpush1.bf16.msra.mxu0 0
    %1846 = vmatprep.subr.bf16.mxu0 0
    %1847 = vmatpush1.bf16.msra.mxu0 0
    %1848 = vmatprep.subr.bf16.mxu0 0
    %1849 = vmatpush1.bf16.msra.mxu0 0
    %1850 = vmatprep.subr.bf16.mxu0 0
    %1851 = vmatpush1.bf16.msra.mxu0 0
    %1852 = vmatprep.subr.bf16.mxu0 0
    %1853 = vmatpush1.bf16.msra.mxu0 0
    %1854 = vmatprep.subr.bf16.mxu0 0
    %1855 = vmatpush1.bf16.msra.mxu0 0
    %1856 = vmatprep.subr.bf16.mxu0 0
    %1857 = vmatpush1.bf16.msra.mxu0 0
    %1858 = vmatprep.subr.bf16.mxu0 0
    %1859 = vmatpush1.bf16.msra.mxu0 0
    %1860 = vmatprep.subr.bf16.mxu0 0
    %1861 = vmatpush1.bf16.msra.mxu0 0
    %1862 = vmatprep.subr.bf16.mxu0 0
    %1863 = vmatpush1.bf16.msra.mxu0 0
    %1864 = vmatprep.subr.bf16.mxu0 0
    %1865 = vmatpush1.bf16.msra.mxu0 0
    %1866 = vmatprep.mubr.bf16.mxu0 0
    %1867 = vmatmul.mubr.bf16.gmra.mrb[0].mxu0 %v1826
    %v1868 = vpop.f32.mrb[0].mxu0
    %v1869 = vadd.f32 0.0, %v1868
    %v1870 = vpop.f32.mrb[0].mxu0
    %v1871 = vadd.f32 0.0, %v1870
    %v1872 = vpop.f32.mrb[0].mxu0
    %v1873 = vadd.f32 0.0, %v1872
    %v1874 = vpop.f32.mrb[0].mxu0
    %v1875 = vadd.f32 0.0, %v1874
    %1876 = vdwg.mxu0
    %v1879 = vunpack.c.l.b16 %v75
    %v1880 = vunpack.c.l.b16 %v76
    %v1881 = vpack.c.b16 %v1880, %v1879
    %v1883 = vunpack.c.l.b16 %v111
    %v1884 = vunpack.c.h.b16 %v111
    %v1885 = vpack.c.b16 %v1883, %v1883
    %v1886 = vpack.c.b16 %v1884, %v1884
    %v1888 = vsel %vm149, %v1881, 0
    %v1891 = vsel %vm153, %v1885, 0
    %v1894 = vsel %vm153, %v1886, 0
    %1896 = vmatprep.subr.bf16.mxu0 %v1894
    %1897 = vmatpush1.bf16.msra.mxu0 %v1891
    %1898 = vmatprep.subr.bf16.mxu0 0
    %1899 = vmatpush1.bf16.msra.mxu0 0
    %1900 = vmatprep.subr.bf16.mxu0 0
    %1901 = vmatpush1.bf16.msra.mxu0 0
    %1902 = vmatprep.subr.bf16.mxu0 0
    %1903 = vmatpush1.bf16.msra.mxu0 0
    %1904 = vmatprep.subr.bf16.mxu0 0
    %1905 = vmatpush1.bf16.msra.mxu0 0
    %1906 = vmatprep.subr.bf16.mxu0 0
    %1907 = vmatpush1.bf16.msra.mxu0 0
    %1908 = vmatprep.subr.bf16.mxu0 0
    %1909 = vmatpush1.bf16.msra.mxu0 0
    %1910 = vmatprep.subr.bf16.mxu0 0
    %1911 = vmatpush1.bf16.msra.mxu0 0
    %1912 = vmatprep.subr.bf16.mxu0 0
    %1913 = vmatpush1.bf16.msra.mxu0 0
    %1914 = vmatprep.subr.bf16.mxu0 0
    %1915 = vmatpush1.bf16.msra.mxu0 0
    %1916 = vmatprep.subr.bf16.mxu0 0
    %1917 = vmatpush1.bf16.msra.mxu0 0
    %1918 = vmatprep.subr.bf16.mxu0 0
    %1919 = vmatpush1.bf16.msra.mxu0 0
    %1920 = vmatprep.subr.bf16.mxu0 0
    %1921 = vmatpush1.bf16.msra.mxu0 0
    %1922 = vmatprep.subr.bf16.mxu0 0
    %1923 = vmatpush1.bf16.msra.mxu0 0
    %1924 = vmatprep.subr.bf16.mxu0 0
    %1925 = vmatpush1.bf16.msra.mxu0 0
    %1926 = vmatprep.subr.bf16.mxu0 0
    %1927 = vmatpush1.bf16.msra.mxu0 0
    %1928 = vmatprep.mubr.bf16.mxu0 0
    %1929 = vmatmul.mubr.bf16.gmra.mrb[0].mxu0 %v1888
    %v1930 = vpop.f32.mrb[0].mxu0
    %v1931 = vadd.f32 0.0, %v1930
    %v1932 = vpop.f32.mrb[0].mxu0
    %v1933 = vadd.f32 0.0, %v1932
    %v1934 = vpop.f32.mrb[0].mxu0
    %v1935 = vadd.f32 0.0, %v1934
    %v1936 = vpop.f32.mrb[0].mxu0
    %v1937 = vadd.f32 0.0, %v1936
    %1938 = vdwg.mxu0
    %v1941 = vunpack.c.l.b16 %v77
    %v1942 = vunpack.c.l.b16 %v78
    %v1943 = vpack.c.b16 %v1942, %v1941
    %v1945 = vunpack.c.l.b16 %v112
    %v1946 = vunpack.c.h.b16 %v112
    %v1947 = vpack.c.b16 %v1945, %v1945
    %v1948 = vpack.c.b16 %v1946, %v1946
    %v1950 = vsel %vm149, %v1943, 0
    %v1953 = vsel %vm153, %v1947, 0
    %v1956 = vsel %vm153, %v1948, 0
    %1958 = vmatprep.subr.bf16.mxu0 %v1956
    %1959 = vmatpush1.bf16.msra.mxu0 %v1953
    %1960 = vmatprep.subr.bf16.mxu0 0
    %1961 = vmatpush1.bf16.msra.mxu0 0
    %1962 = vmatprep.subr.bf16.mxu0 0
    %1963 = vmatpush1.bf16.msra.mxu0 0
    %1964 = vmatprep.subr.bf16.mxu0 0
    %1965 = vmatpush1.bf16.msra.mxu0 0
    %1966 = vmatprep.subr.bf16.mxu0 0
    %1967 = vmatpush1.bf16.msra.mxu0 0
    %1968 = vmatprep.subr.bf16.mxu0 0
    %1969 = vmatpush1.bf16.msra.mxu0 0
    %1970 = vmatprep.subr.bf16.mxu0 0
    %1971 = vmatpush1.bf16.msra.mxu0 0
    %1972 = vmatprep.subr.bf16.mxu0 0
    %1973 = vmatpush1.bf16.msra.mxu0 0
    %1974 = vmatprep.subr.bf16.mxu0 0
    %1975 = vmatpush1.bf16.msra.mxu0 0
    %1976 = vmatprep.subr.bf16.mxu0 0
    %1977 = vmatpush1.bf16.msra.mxu0 0
    %1978 = vmatprep.subr.bf16.mxu0 0
    %1979 = vmatpush1.bf16.msra.mxu0 0
    %1980 = vmatprep.subr.bf16.mxu0 0
    %1981 = vmatpush1.bf16.msra.mxu0 0
    %1982 = vmatprep.subr.bf16.mxu0 0
    %1983 = vmatpush1.bf16.msra.mxu0 0
    %1984 = vmatprep.subr.bf16.mxu0 0
    %1985 = vmatpush1.bf16.msra.mxu0 0
    %1986 = vmatprep.subr.bf16.mxu0 0
    %1987 = vmatpush1.bf16.msra.mxu0 0
    %1988 = vmatprep.subr.bf16.mxu0 0
    %1989 = vmatpush1.bf16.msra.mxu0 0
    %1990 = vmatprep.mubr.bf16.mxu0 0
    %1991 = vmatmul.mubr.bf16.gmra.mrb[0].mxu0 %v1950
    %v1992 = vpop.f32.mrb[0].mxu0
    %v1993 = vadd.f32 0.0, %v1992
    %v1994 = vpop.f32.mrb[0].mxu0
    %v1995 = vadd.f32 0.0, %v1994
    %v1996 = vpop.f32.mrb[0].mxu0
    %v1997 = vadd.f32 0.0, %v1996
    %v1998 = vpop.f32.mrb[0].mxu0
    %v1999 = vadd.f32 0.0, %v1998
    %2000 = vdwg.mxu0
    %v2003 = vunpack.c.l.b16 %v79
    %v2004 = vunpack.c.l.b16 %v80
    %v2005 = vpack.c.b16 %v2004, %v2003
    %v2007 = vunpack.c.l.b16 %v113
    %v2008 = vunpack.c.h.b16 %v113
    %v2009 = vpack.c.b16 %v2007, %v2007
    %v2010 = vpack.c.b16 %v2008, %v2008
    %v2012 = vsel %vm149, %v2005, 0
    %v2015 = vsel %vm153, %v2009, 0
    %v2018 = vsel %vm153, %v2010, 0
    %2020 = vmatprep.subr.bf16.mxu0 %v2018
    %2021 = vmatpush1.bf16.msra.mxu0 %v2015
    %2022 = vmatprep.subr.bf16.mxu0 0
    %2023 = vmatpush1.bf16.msra.mxu0 0
    %2024 = vmatprep.subr.bf16.mxu0 0
    %2025 = vmatpush1.bf16.msra.mxu0 0
    %2026 = vmatprep.subr.bf16.mxu0 0
    %2027 = vmatpush1.bf16.msra.mxu0 0
    %2028 = vmatprep.subr.bf16.mxu0 0
    %2029 = vmatpush1.bf16.msra.mxu0 0
    %2030 = vmatprep.subr.bf16.mxu0 0
    %2031 = vmatpush1.bf16.msra.mxu0 0
    %2032 = vmatprep.subr.bf16.mxu0 0
    %2033 = vmatpush1.bf16.msra.mxu0 0
    %2034 = vmatprep.subr.bf16.mxu0 0
    %2035 = vmatpush1.bf16.msra.mxu0 0
    %2036 = vmatprep.subr.bf16.mxu0 0
    %2037 = vmatpush1.bf16.msra.mxu0 0
    %2038 = vmatprep.subr.bf16.mxu0 0
    %2039 = vmatpush1.bf16.msra.mxu0 0
    %2040 = vmatprep.subr.bf16.mxu0 0
    %2041 = vmatpush1.bf16.msra.mxu0 0
    %2042 = vmatprep.subr.bf16.mxu0 0
    %2043 = vmatpush1.bf16.msra.mxu0 0
    %2044 = vmatprep.subr.bf16.mxu0 0
    %2045 = vmatpush1.bf16.msra.mxu0 0
    %2046 = vmatprep.subr.bf16.mxu0 0
    %2047 = vmatpush1.bf16.msra.mxu0 0
    %2048 = vmatprep.subr.bf16.mxu0 0
    %2049 = vmatpush1.bf16.msra.mxu0 0
    %2050 = vmatprep.subr.bf16.mxu0 0
    %2051 = vmatpush1.bf16.msra.mxu0 0
    %2052 = vmatprep.mubr.bf16.mxu0 0
    %2053 = vmatmul.mubr.bf16.gmra.mrb[0].mxu0 %v2012
    %v2054 = vpop.f32.mrb[0].mxu0
    %v2055 = vadd.f32 0.0, %v2054
    %v2056 = vpop.f32.mrb[0].mxu0
    %v2057 = vadd.f32 0.0, %v2056
    %v2058 = vpop.f32.mrb[0].mxu0
    %v2059 = vadd.f32 0.0, %v2058
    %v2060 = vpop.f32.mrb[0].mxu0
    %v2061 = vadd.f32 0.0, %v2060
    %2062 = vdwg.mxu0
    %v2065 = vunpack.c.l.b16 %v81
    %v2066 = vunpack.c.l.b16 %v82
    %v2067 = vpack.c.b16 %v2066, %v2065
    %v2069 = vunpack.c.l.b16 %v114
    %v2070 = vunpack.c.h.b16 %v114
    %v2071 = vpack.c.b16 %v2069, %v2069
    %v2072 = vpack.c.b16 %v2070, %v2070
    %v2074 = vsel %vm149, %v2067, 0
    %v2077 = vsel %vm153, %v2071, 0
    %v2080 = vsel %vm153, %v2072, 0
    %2082 = vmatprep.subr.bf16.mxu0 %v2080
    %2083 = vmatpush1.bf16.msra.mxu0 %v2077
    %2084 = vmatprep.subr.bf16.mxu0 0
    %2085 = vmatpush1.bf16.msra.mxu0 0
    %2086 = vmatprep.subr.bf16.mxu0 0
    %2087 = vmatpush1.bf16.msra.mxu0 0
    %2088 = vmatprep.subr.bf16.mxu0 0
    %2089 = vmatpush1.bf16.msra.mxu0 0
    %2090 = vmatprep.subr.bf16.mxu0 0
    %2091 = vmatpush1.bf16.msra.mxu0 0
    %2092 = vmatprep.subr.bf16.mxu0 0
    %2093 = vmatpush1.bf16.msra.mxu0 0
    %2094 = vmatprep.subr.bf16.mxu0 0
    %2095 = vmatpush1.bf16.msra.mxu0 0
    %2096 = vmatprep.subr.bf16.mxu0 0
    %2097 = vmatpush1.bf16.msra.mxu0 0
    %2098 = vmatprep.subr.bf16.mxu0 0
    %2099 = vmatpush1.bf16.msra.mxu0 0
    %2100 = vmatprep.subr.bf16.mxu0 0
    %2101 = vmatpush1.bf16.msra.mxu0 0
    %2102 = vmatprep.subr.bf16.mxu0 0
    %2103 = vmatpush1.bf16.msra.mxu0 0
    %2104 = vmatprep.subr.bf16.mxu0 0
    %2105 = vmatpush1.bf16.msra.mxu0 0
    %2106 = vmatprep.subr.bf16.mxu0 0
    %2107 = vmatpush1.bf16.msra.mxu0 0
    %2108 = vmatprep.subr.bf16.mxu0 0
    %2109 = vmatpush1.bf16.msra.mxu0 0
    %2110 = vmatprep.subr.bf16.mxu0 0
    %2111 = vmatpush1.bf16.msra.mxu0 0
    %2112 = vmatprep.subr.bf16.mxu0 0
    %2113 = vmatpush1.bf16.msra.mxu0 0
    %2114 = vmatprep.mubr.bf16.mxu0 0
    %2115 = vmatmul.mubr.bf16.gmra.mrb[0].mxu0 %v2074
    %v2116 = vpop.f32.mrb[0].mxu0
    %v2117 = vadd.f32 0.0, %v2116
    %v2118 = vpop.f32.mrb[0].mxu0
    %v2119 = vadd.f32 0.0, %v2118
    %v2120 = vpop.f32.mrb[0].mxu0
    %v2121 = vadd.f32 0.0, %v2120
    %v2122 = vpop.f32.mrb[0].mxu0
    %v2123 = vadd.f32 0.0, %v2122
    %2124 = vdwg.mxu0
    %v2125 = vadd.f32 %v195, %v257
    %v2126 = vadd.f32 %v2125, %v319
    %v2127 = vadd.f32 %v2126, %v381
    %v2128 = vadd.f32 %v2127, %v443
    %v2129 = vadd.f32 %v2128, %v505
    %v2130 = vadd.f32 %v2129, %v567
    %v2131 = vadd.f32 %v2130, %v629
    %v2132 = vadd.f32 %v2131, %v691
    %v2133 = vadd.f32 %v2132, %v753
    %v2134 = vadd.f32 %v2133, %v815
    %v2135 = vadd.f32 %v2134, %v877
    %v2136 = vadd.f32 %v2135, %v939
    %v2137 = vadd.f32 %v2136, %v1001
    %v2138 = vadd.f32 %v2137, %v1063
    %v2139 = vadd.f32 %v2138, %v1125
    %v2140 = vadd.f32 %v2139, %v1187
    %v2141 = vadd.f32 %v2140, %v1249
    %v2142 = vadd.f32 %v2141, %v1311
    %v2143 = vadd.f32 %v2142, %v1373
    %v2144 = vadd.f32 %v2143, %v1435
    %v2145 = vadd.f32 %v2144, %v1497
    %v2146 = vadd.f32 %v2145, %v1559
    %v2147 = vadd.f32 %v2146, %v1621
    %v2148 = vadd.f32 %v2147, %v1683
    %v2149 = vadd.f32 %v2148, %v1745
    %v2150 = vadd.f32 %v2149, %v1807
    %v2151 = vadd.f32 %v2150, %v1869
    %v2152 = vadd.f32 %v2151, %v1931
    %v2153 = vadd.f32 %v2152, %v1993
    %v2154 = vadd.f32 %v2153, %v2055
    %v2155 = vadd.f32 %v2154, %v2117
    %vm2156 = vcmask 261120
    %v2157 = vsel %vm2156, %v197, 0.0
    %v2158 = vsel %vm2156, %v259, 0.0
    %v2159 = vadd.f32 %v2157, %v2158
    %v2160 = vsel %vm2156, %v321, 0.0
    %v2161 = vadd.f32 %v2159, %v2160
    %v2162 = vsel %vm2156, %v383, 0.0
    %v2163 = vadd.f32 %v2161, %v2162
    %v2164 = vsel %vm2156, %v445, 0.0
    %v2165 = vadd.f32 %v2163, %v2164
    %v2166 = vsel %vm2156, %v507, 0.0
    %v2167 = vadd.f32 %v2165, %v2166
    %v2168 = vsel %vm2156, %v569, 0.0
    %v2169 = vadd.f32 %v2167, %v2168
    %v2170 = vsel %vm2156, %v631, 0.0
    %v2171 = vadd.f32 %v2169, %v2170
    %v2172 = vsel %vm2156, %v693, 0.0
    %v2173 = vadd.f32 %v2171, %v2172
    %v2174 = vsel %vm2156, %v755, 0.0
    %v2175 = vadd.f32 %v2173, %v2174
    %v2176 = vsel %vm2156, %v817, 0.0
    %v2177 = vadd.f32 %v2175, %v2176
    %v2178 = vsel %vm2156, %v879, 0.0
    %v2179 = vadd.f32 %v2177, %v2178
    %v2180 = vsel %vm2156, %v941, 0.0
    %v2181 = vadd.f32 %v2179, %v2180
    %v2182 = vsel %vm2156, %v1003, 0.0
    %v2183 = vadd.f32 %v2181, %v2182
    %v2184 = vsel %vm2156, %v1065, 0.0
    %v2185 = vadd.f32 %v2183, %v2184
    %v2186 = vsel %vm2156, %v1127, 0.0
    %v2187 = vadd.f32 %v2185, %v2186
    %v2188 = vsel %vm2156, %v1189, 0.0
    %v2189 = vadd.f32 %v2187, %v2188
    %v2190 = vsel %vm2156, %v1251, 0.0
    %v2191 = vadd.f32 %v2189, %v2190
    %v2192 = vsel %vm2156, %v1313, 0.0
    %v2193 = vadd.f32 %v2191, %v2192
    %v2194 = vsel %vm2156, %v1375, 0.0
    %v2195 = vadd.f32 %v2193, %v2194
    %v2196 = vsel %vm2156, %v1437, 0.0
    %v2197 = vadd.f32 %v2195, %v2196
    %v2198 = vsel %vm2156, %v1499, 0.0
    %v2199 = vadd.f32 %v2197, %v2198
    %v2200 = vsel %vm2156, %v1561, 0.0
    %v2201 = vadd.f32 %v2199, %v2200
    %v2202 = vsel %vm2156, %v1623, 0.0
    %v2203 = vadd.f32 %v2201, %v2202
    %v2204 = vsel %vm2156, %v1685, 0.0
    %v2205 = vadd.f32 %v2203, %v2204
    %v2206 = vsel %vm2156, %v1747, 0.0
    %v2207 = vadd.f32 %v2205, %v2206
    %v2208 = vsel %vm2156, %v1809, 0.0
    %v2209 = vadd.f32 %v2207, %v2208
    %v2210 = vsel %vm2156, %v1871, 0.0
    %v2211 = vadd.f32 %v2209, %v2210
    %v2212 = vsel %vm2156, %v1933, 0.0
    %v2213 = vadd.f32 %v2211, %v2212
    %v2214 = vsel %vm2156, %v1995, 0.0
    %v2215 = vadd.f32 %v2213, %v2214
    %v2216 = vsel %vm2156, %v2057, 0.0
    %v2217 = vadd.f32 %v2215, %v2216
    %v2218 = vsel %vm2156, %v2119, 0.0
    %v2219 = vadd.f32 %v2217, %v2218
    %v2220 = vadd.f32 %v199, %v261
    %v2221 = vadd.f32 %v2220, %v323
    %v2222 = vadd.f32 %v2221, %v385
    %v2223 = vadd.f32 %v2222, %v447
    %v2224 = vadd.f32 %v2223, %v509
    %v2225 = vadd.f32 %v2224, %v571
    %v2226 = vadd.f32 %v2225, %v633
    %v2227 = vadd.f32 %v2226, %v695
    %v2228 = vadd.f32 %v2227, %v757
    %v2229 = vadd.f32 %v2228, %v819
    %v2230 = vadd.f32 %v2229, %v881
    %v2231 = vadd.f32 %v2230, %v943
    %v2232 = vadd.f32 %v2231, %v1005
    %v2233 = vadd.f32 %v2232, %v1067
    %v2234 = vadd.f32 %v2233, %v1129
    %v2235 = vadd.f32 %v2234, %v1191
    %v2236 = vadd.f32 %v2235, %v1253
    %v2237 = vadd.f32 %v2236, %v1315
    %v2238 = vadd.f32 %v2237, %v1377
    %v2239 = vadd.f32 %v2238, %v1439
    %v2240 = vadd.f32 %v2239, %v1501
    %v2241 = vadd.f32 %v2240, %v1563
    %v2242 = vadd.f32 %v2241, %v1625
    %v2243 = vadd.f32 %v2242, %v1687
    %v2244 = vadd.f32 %v2243, %v1749
    %v2245 = vadd.f32 %v2244, %v1811
    %v2246 = vadd.f32 %v2245, %v1873
    %v2247 = vadd.f32 %v2246, %v1935
    %v2248 = vadd.f32 %v2247, %v1997
    %v2249 = vadd.f32 %v2248, %v2059
    %v2250 = vadd.f32 %v2249, %v2121
    %v2251 = vsel %vm2156, %v201, 0.0
    %v2252 = vsel %vm2156, %v263, 0.0
    %v2253 = vadd.f32 %v2251, %v2252
    %v2254 = vsel %vm2156, %v325, 0.0
    %v2255 = vadd.f32 %v2253, %v2254
    %v2256 = vsel %vm2156, %v387, 0.0
    %v2257 = vadd.f32 %v2255, %v2256
    %v2258 = vsel %vm2156, %v449, 0.0
    %v2259 = vadd.f32 %v2257, %v2258
    %v2260 = vsel %vm2156, %v511, 0.0
    %v2261 = vadd.f32 %v2259, %v2260
    %v2262 = vsel %vm2156, %v573, 0.0
    %v2263 = vadd.f32 %v2261, %v2262
    %v2264 = vsel %vm2156, %v635, 0.0
    %v2265 = vadd.f32 %v2263, %v2264
    %v2266 = vsel %vm2156, %v697, 0.0
    %v2267 = vadd.f32 %v2265, %v2266
    %v2268 = vsel %vm2156, %v759, 0.0
    %v2269 = vadd.f32 %v2267, %v2268
    %v2270 = vsel %vm2156, %v821, 0.0
    %v2271 = vadd.f32 %v2269, %v2270
    %v2272 = vsel %vm2156, %v883, 0.0
    %v2273 = vadd.f32 %v2271, %v2272
    %v2274 = vsel %vm2156, %v945, 0.0
    %v2275 = vadd.f32 %v2273, %v2274
    %v2276 = vsel %vm2156, %v1007, 0.0
    %v2277 = vadd.f32 %v2275, %v2276
    %v2278 = vsel %vm2156, %v1069, 0.0
    %v2279 = vadd.f32 %v2277, %v2278
    %v2280 = vsel %vm2156, %v1131, 0.0
    %v2281 = vadd.f32 %v2279, %v2280
    %v2282 = vsel %vm2156, %v1193, 0.0
    %v2283 = vadd.f32 %v2281, %v2282
    %v2284 = vsel %vm2156, %v1255, 0.0
    %v2285 = vadd.f32 %v2283, %v2284
    %v2286 = vsel %vm2156, %v1317, 0.0
    %v2287 = vadd.f32 %v2285, %v2286
    %v2288 = vsel %vm2156, %v1379, 0.0
    %v2289 = vadd.f32 %v2287, %v2288
    %v2290 = vsel %vm2156, %v1441, 0.0
    %v2291 = vadd.f32 %v2289, %v2290
    %v2292 = vsel %vm2156, %v1503, 0.0
    %v2293 = vadd.f32 %v2291, %v2292
    %v2294 = vsel %vm2156, %v1565, 0.0
    %v2295 = vadd.f32 %v2293, %v2294
    %v2296 = vsel %vm2156, %v1627, 0.0
    %v2297 = vadd.f32 %v2295, %v2296
    %v2298 = vsel %vm2156, %v1689, 0.0
    %v2299 = vadd.f32 %v2297, %v2298
    %v2300 = vsel %vm2156, %v1751, 0.0
    %v2301 = vadd.f32 %v2299, %v2300
    %v2302 = vsel %vm2156, %v1813, 0.0
    %v2303 = vadd.f32 %v2301, %v2302
    %v2304 = vsel %vm2156, %v1875, 0.0
    %v2305 = vadd.f32 %v2303, %v2304
    %v2306 = vsel %vm2156, %v1937, 0.0
    %v2307 = vadd.f32 %v2305, %v2306
    %v2308 = vsel %vm2156, %v1999, 0.0
    %v2309 = vadd.f32 %v2307, %v2308
    %v2310 = vsel %vm2156, %v2061, 0.0
    %v2311 = vadd.f32 %v2309, %v2310
    %v2312 = vsel %vm2156, %v2123, 0.0
    %v2313 = vadd.f32 %v2311, %v2312
    %v2314 = vmul.f32 %v2155, 0.1
    %v2315 = vmul.f32 %v2219, 0.1
    %v2316 = vmul.f32 %v2250, 0.1
    %v2317 = vmul.f32 %v2313, 0.1
    %v2318 = vmul.f32 %v2314, %v2314
    %v2319 = vmul.f32 %v2315, %v2315
    %v2320 = vmul.f32 %v2316, %v2316
    %v2321 = vmul.f32 %v2317, %v2317
    %v2323 = vsel %vm2156, %v2319, 0
    %v2326 = vsel %vm2156, %v2321, 0
    %2328 = vmatprep.subr.mxu0 0.0
    %2329 = vmatpush1.msra.mxu0 %v119
    %2330 = vmatprep.subr.mxu0 0.0
    %2331 = vmatpush1.msra.mxu0 %v120
    %2332 = vmatprep.subr.mxu0 0.0
    %2333 = vmatpush1.msra.mxu0 %v121
    %2334 = vmatprep.subr.mxu0 0.0
    %2335 = vmatpush1.msra.mxu0 %v122
    %2336 = vmatprep.subr.mxu0 0.0
    %2337 = vmatpush1.msra.mxu0 %v123
    %2338 = vmatprep.subr.mxu0 0.0
    %2339 = vmatpush1.msra.mxu0 %v124
    %2340 = vmatprep.subr.mxu0 0.0
    %2341 = vmatpush1.msra.mxu0 %v125
    %2342 = vmatprep.subr.mxu0 0.0
    %2343 = vmatpush1.msra.mxu0 %v126
    %2344 = vmatprep.subr.mxu0 0.0
    %2345 = vmatpush1.msra.mxu0 %v127
    %2346 = vmatprep.subr.mxu0 0.0
    %2347 = vmatpush1.msra.mxu0 %v128
    %2348 = vmatprep.subr.mxu0 0.0
    %2349 = vmatpush1.msra.mxu0 %v129
    %2350 = vmatprep.subr.mxu0 0.0
    %2351 = vmatpush1.msra.mxu0 %v130
    %2352 = vmatprep.subr.mxu0 0.0
    %2353 = vmatpush1.msra.mxu0 %v131
    %2354 = vmatprep.subr.mxu0 0.0
    %2355 = vmatpush1.msra.mxu0 %v132
    %2356 = vmatprep.subr.mxu0 0.0
    %2357 = vmatpush1.msra.mxu0 %v133
    %2358 = vmatprep.subr.mxu0 0.0
    %2359 = vmatpush1.msra.mxu0 %v134
    %2360 = vmatprep.subr.mxu0 0.0
    %2361 = vmatpush1.msra.mxu0 %v135
    %2362 = vmatprep.subr.mxu0 0.0
    %2363 = vmatpush1.msra.mxu0 %v136
    %2364 = vmatprep.subr.mxu0 0.0
    %2365 = vmatpush1.msra.mxu0 %v137
    %2366 = vmatprep.subr.mxu0 0.0
    %2367 = vmatpush1.msra.mxu0 %v138
    %2368 = vmatprep.subr.mxu0 0.0
    %2369 = vmatpush1.msra.mxu0 0.0
    %2370 = vmatprep.subr.mxu0 0.0
    %2371 = vmatpush1.msra.mxu0 0.0
    %2372 = vmatprep.subr.mxu0 0.0
    %2373 = vmatpush1.msra.mxu0 0.0
    %2374 = vmatprep.subr.mxu0 0.0
    %2375 = vmatpush1.msra.mxu0 0.0
    %2376 = vmatprep.subr.mxu0 0.0
    %2377 = vmatpush1.msra.mxu0 0.0
    %2378 = vmatprep.subr.mxu0 0.0
    %2379 = vmatpush1.msra.mxu0 0.0
    %2380 = vmatprep.subr.mxu0 0.0
    %2381 = vmatpush1.msra.mxu0 0.0
    %2382 = vmatprep.subr.mxu0 0.0
    %2383 = vmatpush1.msra.mxu0 0.0
    %2384 = vmatprep.subr.mxu0 0.0
    %2385 = vmatpush1.msra.mxu0 0.0
    %2386 = vmatprep.subr.mxu0 0.0
    %2387 = vmatpush1.msra.mxu0 0.0
    %2388 = vmatprep.subr.mxu0 0.0
    %2389 = vmatpush1.msra.mxu0 0.0
    %2390 = vmatprep.subr.mxu0 0.0
    %2391 = vmatpush1.msra.mxu0 0.0
    %2392 = vmatprep.mubr.f32.mxu0 %v2323
    %2393 = vmatmul.mubr.f32.gmra.mrb[0].mxu0 %v2318
    %v2394 = vpop.f32.mrb[0].mxu0
    %v2395 = vadd.f32 0.0, %v2394
    %v2396 = vpop.f32.mrb[0].mxu0
    %2397 = vmatprep.mubr.f32.mxu0 %v2326
    %2398 = vmatmul.mubr.f32.gmra.mrb[0].mxu0 %v2320
    %v2399 = vpop.f32.mrb[0].mxu0
    %v2400 = vadd.f32 0.0, %v2399
    %v2401 = vpop.f32.mrb[0].mxu0
    %2402 = vdwg.mxu0
    %v2403 = vrsqrt.pop %v2395
    %v2404 = vmul.f32 %v2395, %v2403
    %vm2405 = vcmp.eq.f32.partialorder %v2395, inf
    %v2406 = vsel %vm2405, %v2395, %v2404
    %vm2407 = vcmp.eq.f32.partialorder %v2395, 0.0
    %v2408 = vand.u32 %v2395, 2147483648
    %v2409 = vsel %vm2407, %v2408, %v2406
    %v2410 = vrsqrt.pop %v2400
    %v2411 = vmul.f32 %v2400, %v2410
    %vm2412 = vcmp.eq.f32.partialorder %v2400, inf
    %v2413 = vsel %vm2412, %v2400, %v2411
    %vm2414 = vcmp.eq.f32.partialorder %v2400, 0.0
    %v2415 = vand.u32 %v2400, 2147483648
    %v2416 = vsel %vm2414, %v2415, %v2413
    %v2417 = vadd.f32 %v2395, 1.0
    %v2418 = vadd.f32 %v2400, 1.0
    %v2419 = vadd.f32 %v2409, 1e-08
    %v2420 = vadd.f32 %v2416, 1e-08
    %v2421 = vmul.f32 %v2417, %v2419
    %v2422 = vmul.f32 %v2418, %v2420
    %v2423 = vrcp.pop %v2421
    %v2424 = vrcp.pop %v2422
    %v2425 = vmul.f32 %v2395, %v2423
    %v2426 = vmul.f32 %v2400, %v2424
    %vm2427 = vcmask 80896
    %v2429 = vsel %vm2427, %v2425, 0
    %v2432 = vsel %vm2427, %v2426, 0
    %vm2434 = vcmask 1041408
    %v2436 = vsel %vm2434, %v117, 0
    %v2439 = vsel %vm2434, %v118, 0
    %2441 = vmatprep.subr.mxu0 %v116
    %2442 = vmatpush1.msra.mxu0 %v115
    %2443 = vmatprep.subr.mxu0 %v2439
    %2444 = vmatpush1.msra.mxu0 %v2436
    %2445 = vmatprep.subr.mxu0 0.0
    %2446 = vmatpush1.msra.mxu0 0.0
    %2447 = vmatprep.subr.mxu0 0.0
    %2448 = vmatpush1.msra.mxu0 0.0
    %2449 = vmatprep.subr.mxu0 0.0
    %2450 = vmatpush1.msra.mxu0 0.0
    %2451 = vmatprep.subr.mxu0 0.0
    %2452 = vmatpush1.msra.mxu0 0.0
    %2453 = vmatprep.subr.mxu0 0.0
    %2454 = vmatpush1.msra.mxu0 0.0
    %2455 = vmatprep.subr.mxu0 0.0
    %2456 = vmatpush1.msra.mxu0 0.0
    %2457 = vmatprep.subr.mxu0 0.0
    %2458 = vmatpush1.msra.mxu0 0.0
    %2459 = vmatprep.subr.mxu0 0.0
    %2460 = vmatpush1.msra.mxu0 0.0
    %2461 = vmatprep.subr.mxu0 0.0
    %2462 = vmatpush1.msra.mxu0 0.0
    %2463 = vmatprep.subr.mxu0 0.0
    %2464 = vmatpush1.msra.mxu0 0.0
    %2465 = vmatprep.subr.mxu0 0.0
    %2466 = vmatpush1.msra.mxu0 0.0
    %2467 = vmatprep.subr.mxu0 0.0
    %2468 = vmatpush1.msra.mxu0 0.0
    %2469 = vmatprep.subr.mxu0 0.0
    %2470 = vmatpush1.msra.mxu0 0.0
    %2471 = vmatprep.subr.mxu0 0.0
    %2472 = vmatpush1.msra.mxu0 0.0
    %2473 = vmatprep.subr.mxu0 0.0
    %2474 = vmatpush1.msra.mxu0 0.0
    %2475 = vmatprep.subr.mxu0 0.0
    %2476 = vmatpush1.msra.mxu0 0.0
    %2477 = vmatprep.subr.mxu0 0.0
    %2478 = vmatpush1.msra.mxu0 0.0
    %2479 = vmatprep.subr.mxu0 0.0
    %2480 = vmatpush1.msra.mxu0 0.0
    %2481 = vmatprep.subr.mxu0 0.0
    %2482 = vmatpush1.msra.mxu0 0.0
    %2483 = vmatprep.subr.mxu0 0.0
    %2484 = vmatpush1.msra.mxu0 0.0
    %2485 = vmatprep.subr.mxu0 0.0
    %2486 = vmatpush1.msra.mxu0 0.0
    %2487 = vmatprep.subr.mxu0 0.0
    %2488 = vmatpush1.msra.mxu0 0.0
    %2489 = vmatprep.subr.mxu0 0.0
    %2490 = vmatpush1.msra.mxu0 0.0
    %2491 = vmatprep.subr.mxu0 0.0
    %2492 = vmatpush1.msra.mxu0 0.0
    %2493 = vmatprep.subr.mxu0 0.0
    %2494 = vmatpush1.msra.mxu0 0.0
    %2495 = vmatprep.subr.mxu0 0.0
    %2496 = vmatpush1.msra.mxu0 0.0
    %2497 = vmatprep.subr.mxu0 0.0
    %2498 = vmatpush1.msra.mxu0 0.0
    %2499 = vmatprep.subr.mxu0 0.0
    %2500 = vmatpush1.msra.mxu0 0.0
    %2501 = vmatprep.subr.mxu0 0.0
    %2502 = vmatpush1.msra.mxu0 0.0
    %2503 = vmatprep.subr.mxu0 0.0
    %2504 = vmatpush1.msra.mxu0 0.0
    %2505 = vmatprep.mubr.f32.mxu0 0.0
    %2506 = vmatmul.mubr.f32.gmra.mrb[0].mxu0 %v2429
    %v2507 = vpop.f32.mrb[0].mxu0
    %v2508 = vadd.f32 0.0, %v2507
    %v2509 = vpop.f32.mrb[0].mxu0
    %v2510 = vadd.f32 0.0, %v2509
    %2511 = vmatprep.mubr.f32.mxu0 0.0
    %2512 = vmatmul.mubr.f32.gmra.mrb[0].mxu0 %v2432
    %v2513 = vpop.f32.mrb[0].mxu0
    %v2514 = vadd.f32 0.0, %v2513
    %v2515 = vpop.f32.mrb[0].mxu0
    %v2516 = vadd.f32 0.0, %v2515
    %2517 = vdwg.mxu0
    %v2518 = vmul.f32 %v2314, %v2508
    %v2519 = vmul.f32 %v2315, %v2510
    %v2520 = vmul.f32 %v2316, %v2514
    %v2521 = vmul.f32 %v2317, %v2516
    %v2522 = vmul.f32 %v195, %v2518
    %v2523 = vmul.f32 %v197, %v2519
    %v2524 = vmul.f32 %v199, %v2520
    %v2525 = vmul.f32 %v201, %v2521
    %v2526 = vmul.f32 %v257, %v2518
    %v2527 = vmul.f32 %v259, %v2519
    %v2528 = vmul.f32 %v261, %v2520
    %v2529 = vmul.f32 %v263, %v2521
    %v2530 = vmul.f32 %v319, %v2518
    %v2531 = vmul.f32 %v321, %v2519
    %v2532 = vmul.f32 %v323, %v2520
    %v2533 = vmul.f32 %v325, %v2521
    %v2534 = vmul.f32 %v381, %v2518
    %v2535 = vmul.f32 %v383, %v2519
    %v2536 = vmul.f32 %v385, %v2520
    %v2537 = vmul.f32 %v387, %v2521
    %v2538 = vmul.f32 %v443, %v2518
    %v2539 = vmul.f32 %v445, %v2519
    %v2540 = vmul.f32 %v447, %v2520
    %v2541 = vmul.f32 %v449, %v2521
    %v2542 = vmul.f32 %v505, %v2518
    %v2543 = vmul.f32 %v507, %v2519
    %v2544 = vmul.f32 %v509, %v2520
    %v2545 = vmul.f32 %v511, %v2521
    %v2546 = vmul.f32 %v567, %v2518
    %v2547 = vmul.f32 %v569, %v2519
    %v2548 = vmul.f32 %v571, %v2520
    %v2549 = vmul.f32 %v573, %v2521
    %v2550 = vmul.f32 %v629, %v2518
    %v2551 = vmul.f32 %v631, %v2519
    %v2552 = vmul.f32 %v633, %v2520
    %v2553 = vmul.f32 %v635, %v2521
    %v2554 = vmul.f32 %v691, %v2518
    %v2555 = vmul.f32 %v693, %v2519
    %v2556 = vmul.f32 %v695, %v2520
    %v2557 = vmul.f32 %v697, %v2521
    %v2558 = vmul.f32 %v753, %v2518
    %v2559 = vmul.f32 %v755, %v2519
    %v2560 = vmul.f32 %v757, %v2520
    %v2561 = vmul.f32 %v759, %v2521
    %v2562 = vmul.f32 %v815, %v2518
    %v2563 = vmul.f32 %v817, %v2519
    %v2564 = vmul.f32 %v819, %v2520
    %v2565 = vmul.f32 %v821, %v2521
    %v2566 = vmul.f32 %v877, %v2518
    %v2567 = vmul.f32 %v879, %v2519
    %v2568 = vmul.f32 %v881, %v2520
    %v2569 = vmul.f32 %v883, %v2521
    %v2570 = vmul.f32 %v939, %v2518
    %v2571 = vmul.f32 %v941, %v2519
    %v2572 = vmul.f32 %v943, %v2520
    %v2573 = vmul.f32 %v945, %v2521
    %v2574 = vmul.f32 %v1001, %v2518
    %v2575 = vmul.f32 %v1003, %v2519
    %v2576 = vmul.f32 %v1005, %v2520
    %v2577 = vmul.f32 %v1007, %v2521
    %v2578 = vmul.f32 %v1063, %v2518
    %v2579 = vmul.f32 %v1065, %v2519
    %v2580 = vmul.f32 %v1067, %v2520
    %v2581 = vmul.f32 %v1069, %v2521
    %v2582 = vmul.f32 %v1125, %v2518
    %v2583 = vmul.f32 %v1127, %v2519
    %v2584 = vmul.f32 %v1129, %v2520
    %v2585 = vmul.f32 %v1131, %v2521
    %v2586 = vmul.f32 %v1187, %v2518
    %v2587 = vmul.f32 %v1189, %v2519
    %v2588 = vmul.f32 %v1191, %v2520
    %v2589 = vmul.f32 %v1193, %v2521
    %v2590 = vmul.f32 %v1249, %v2518
    %v2591 = vmul.f32 %v1251, %v2519
    %v2592 = vmul.f32 %v1253, %v2520
    %v2593 = vmul.f32 %v1255, %v2521
    %v2594 = vmul.f32 %v1311, %v2518
    %v2595 = vmul.f32 %v1313, %v2519
    %v2596 = vmul.f32 %v1315, %v2520
    %v2597 = vmul.f32 %v1317, %v2521
    %v2598 = vmul.f32 %v1373, %v2518
    %v2599 = vmul.f32 %v1375, %v2519
    %v2600 = vmul.f32 %v1377, %v2520
    %v2601 = vmul.f32 %v1379, %v2521
    %v2602 = vmul.f32 %v1435, %v2518
    %v2603 = vmul.f32 %v1437, %v2519
    %v2604 = vmul.f32 %v1439, %v2520
    %v2605 = vmul.f32 %v1441, %v2521
    %v2606 = vmul.f32 %v1497, %v2518
    %v2607 = vmul.f32 %v1499, %v2519
    %v2608 = vmul.f32 %v1501, %v2520
    %v2609 = vmul.f32 %v1503, %v2521
    %v2610 = vmul.f32 %v1559, %v2518
    %v2611 = vmul.f32 %v1561, %v2519
    %v2612 = vmul.f32 %v1563, %v2520
    %v2613 = vmul.f32 %v1565, %v2521
    %v2614 = vmul.f32 %v1621, %v2518
    %v2615 = vmul.f32 %v1623, %v2519
    %v2616 = vmul.f32 %v1625, %v2520
    %v2617 = vmul.f32 %v1627, %v2521
    %v2618 = vmul.f32 %v1683, %v2518
    %v2619 = vmul.f32 %v1685, %v2519
    %v2620 = vmul.f32 %v1687, %v2520
    %v2621 = vmul.f32 %v1689, %v2521
    %v2622 = vmul.f32 %v1745, %v2518
    %v2623 = vmul.f32 %v1747, %v2519
    %v2624 = vmul.f32 %v1749, %v2520
    %v2625 = vmul.f32 %v1751, %v2521
    %v2626 = vmul.f32 %v1807, %v2518
    %v2627 = vmul.f32 %v1809, %v2519
    %v2628 = vmul.f32 %v1811, %v2520
    %v2629 = vmul.f32 %v1813, %v2521
    %v2630 = vmul.f32 %v1869, %v2518
    %v2631 = vmul.f32 %v1871, %v2519
    %v2632 = vmul.f32 %v1873, %v2520
    %v2633 = vmul.f32 %v1875, %v2521
    %v2634 = vmul.f32 %v1931, %v2518
    %v2635 = vmul.f32 %v1933, %v2519
    %v2636 = vmul.f32 %v1935, %v2520
    %v2637 = vmul.f32 %v1937, %v2521
    %v2638 = vmul.f32 %v1993, %v2518
    %v2639 = vmul.f32 %v1995, %v2519
    %v2640 = vmul.f32 %v1997, %v2520
    %v2641 = vmul.f32 %v1999, %v2521
    %v2642 = vmul.f32 %v2055, %v2518
    %v2643 = vmul.f32 %v2057, %v2519
    %v2644 = vmul.f32 %v2059, %v2520
    %v2645 = vmul.f32 %v2061, %v2521
    %v2646 = vmul.f32 %v2117, %v2518
    %v2647 = vmul.f32 %v2119, %v2519
    %v2648 = vmul.f32 %v2121, %v2520
    %v2649 = vmul.f32 %v2123, %v2521
    %v2651 = vsel %vm2156, %v2523, 0
    %v2654 = vsel %vm2156, %v2525, 0
    %v2657 = vsel %vm2156, %v2527, 0
    %v2660 = vsel %vm2156, %v2529, 0
    %v2663 = vsel %vm2156, %v2531, 0
    %v2666 = vsel %vm2156, %v2533, 0
    %v2669 = vsel %vm2156, %v2535, 0
    %v2672 = vsel %vm2156, %v2537, 0
    %v2675 = vsel %vm2156, %v2539, 0
    %v2678 = vsel %vm2156, %v2541, 0
    %v2681 = vsel %vm2156, %v2543, 0
    %v2684 = vsel %vm2156, %v2545, 0
    %v2687 = vsel %vm2156, %v2547, 0
    %v2690 = vsel %vm2156, %v2549, 0
    %v2693 = vsel %vm2156, %v2551, 0
    %v2696 = vsel %vm2156, %v2553, 0
    %v2699 = vsel %vm2156, %v2555, 0
    %v2702 = vsel %vm2156, %v2557, 0
    %v2705 = vsel %vm2156, %v2559, 0
    %v2708 = vsel %vm2156, %v2561, 0
    %v2711 = vsel %vm2156, %v2563, 0
    %v2714 = vsel %vm2156, %v2565, 0
    %v2717 = vsel %vm2156, %v2567, 0
    %v2720 = vsel %vm2156, %v2569, 0
    %v2723 = vsel %vm2156, %v2571, 0
    %v2726 = vsel %vm2156, %v2573, 0
    %v2729 = vsel %vm2156, %v2575, 0
    %v2732 = vsel %vm2156, %v2577, 0
    %v2735 = vsel %vm2156, %v2579, 0
    %v2738 = vsel %vm2156, %v2581, 0
    %v2741 = vsel %vm2156, %v2583, 0
    %v2744 = vsel %vm2156, %v2585, 0
    %v2747 = vsel %vm2156, %v2587, 0
    %v2750 = vsel %vm2156, %v2589, 0
    %v2753 = vsel %vm2156, %v2591, 0
    %v2756 = vsel %vm2156, %v2593, 0
    %v2759 = vsel %vm2156, %v2595, 0
    %v2762 = vsel %vm2156, %v2597, 0
    %v2765 = vsel %vm2156, %v2599, 0
    %v2768 = vsel %vm2156, %v2601, 0
    %v2771 = vsel %vm2156, %v2603, 0
    %v2774 = vsel %vm2156, %v2605, 0
    %v2777 = vsel %vm2156, %v2607, 0
    %v2780 = vsel %vm2156, %v2609, 0
    %v2783 = vsel %vm2156, %v2611, 0
    %v2786 = vsel %vm2156, %v2613, 0
    %v2789 = vsel %vm2156, %v2615, 0
    %v2792 = vsel %vm2156, %v2617, 0
    %v2795 = vsel %vm2156, %v2619, 0
    %v2798 = vsel %vm2156, %v2621, 0
    %v2801 = vsel %vm2156, %v2623, 0
    %v2804 = vsel %vm2156, %v2625, 0
    %v2807 = vsel %vm2156, %v2627, 0
    %v2810 = vsel %vm2156, %v2629, 0
    %v2813 = vsel %vm2156, %v2631, 0
    %v2816 = vsel %vm2156, %v2633, 0
    %v2819 = vsel %vm2156, %v2635, 0
    %v2822 = vsel %vm2156, %v2637, 0
    %v2825 = vsel %vm2156, %v2639, 0
    %v2828 = vsel %vm2156, %v2641, 0
    %v2831 = vsel %vm2156, %v2643, 0
    %v2834 = vsel %vm2156, %v2645, 0
    %v2837 = vsel %vm2156, %v2647, 0
    %v2840 = vsel %vm2156, %v2649, 0
    %2842 = vmatprep.subr.mxu0 0.0
    %2843 = vmatpush1.msra.mxu0 %v119
    %2844 = vmatprep.subr.mxu0 0.0
    %2845 = vmatpush1.msra.mxu0 %v120
    %2846 = vmatprep.subr.mxu0 0.0
    %2847 = vmatpush1.msra.mxu0 %v121
    %2848 = vmatprep.subr.mxu0 0.0
    %2849 = vmatpush1.msra.mxu0 %v122
    %2850 = vmatprep.subr.mxu0 0.0
    %2851 = vmatpush1.msra.mxu0 %v123
    %2852 = vmatprep.subr.mxu0 0.0
    %2853 = vmatpush1.msra.mxu0 %v124
    %2854 = vmatprep.subr.mxu0 0.0
    %2855 = vmatpush1.msra.mxu0 %v125
    %2856 = vmatprep.subr.mxu0 0.0
    %2857 = vmatpush1.msra.mxu0 %v126
    %2858 = vmatprep.subr.mxu0 0.0
    %2859 = vmatpush1.msra.mxu0 %v127
    %2860 = vmatprep.subr.mxu0 0.0
    %2861 = vmatpush1.msra.mxu0 %v128
    %2862 = vmatprep.subr.mxu0 0.0
    %2863 = vmatpush1.msra.mxu0 %v129
    %2864 = vmatprep.subr.mxu0 0.0
    %2865 = vmatpush1.msra.mxu0 %v130
    %2866 = vmatprep.subr.mxu0 0.0
    %2867 = vmatpush1.msra.mxu0 %v131
    %2868 = vmatprep.subr.mxu0 0.0
    %2869 = vmatpush1.msra.mxu0 %v132
    %2870 = vmatprep.subr.mxu0 0.0
    %2871 = vmatpush1.msra.mxu0 %v133
    %2872 = vmatprep.subr.mxu0 0.0
    %2873 = vmatpush1.msra.mxu0 %v134
    %2874 = vmatprep.subr.mxu0 0.0
    %2875 = vmatpush1.msra.mxu0 %v135
    %2876 = vmatprep.subr.mxu0 0.0
    %2877 = vmatpush1.msra.mxu0 %v136
    %2878 = vmatprep.subr.mxu0 0.0
    %2879 = vmatpush1.msra.mxu0 %v137
    %2880 = vmatprep.subr.mxu0 0.0
    %2881 = vmatpush1.msra.mxu0 %v138
    %2882 = vmatprep.subr.mxu0 0.0
    %2883 = vmatpush1.msra.mxu0 0.0
    %2884 = vmatprep.subr.mxu0 0.0
    %2885 = vmatpush1.msra.mxu0 0.0
    %2886 = vmatprep.subr.mxu0 0.0
    %2887 = vmatpush1.msra.mxu0 0.0
    %2888 = vmatprep.subr.mxu0 0.0
    %2889 = vmatpush1.msra.mxu0 0.0
    %2890 = vmatprep.subr.mxu0 0.0
    %2891 = vmatpush1.msra.mxu0 0.0
    %2892 = vmatprep.subr.mxu0 0.0
    %2893 = vmatpush1.msra.mxu0 0.0
    %2894 = vmatprep.subr.mxu0 0.0
    %2895 = vmatpush1.msra.mxu0 0.0
    %2896 = vmatprep.subr.mxu0 0.0
    %2897 = vmatpush1.msra.mxu0 0.0
    %2898 = vmatprep.subr.mxu0 0.0
    %2899 = vmatpush1.msra.mxu0 0.0
    %2900 = vmatprep.subr.mxu0 0.0
    %2901 = vmatpush1.msra.mxu0 0.0
    %2902 = vmatprep.subr.mxu0 0.0
    %2903 = vmatpush1.msra.mxu0 0.0
    %2904 = vmatprep.subr.mxu0 0.0
    %2905 = vmatpush1.msra.mxu0 0.0
    %2906 = vmatprep.mubr.f32.mxu0 %v2651
    %2907 = vmatmul.mubr.f32.gmra.mrb[0].mxu0 %v2522
    %v2908 = vpop.f32.mrb[0].mxu0
    %v2909 = vadd.f32 0.0, %v2908
    %v2910 = vpop.f32.mrb[0].mxu0
    %2911 = vmatprep.mubr.f32.mxu0 %v2654
    %2912 = vmatmul.mubr.f32.gmra.mrb[0].mxu0 %v2524
    %v2913 = vpop.f32.mrb[0].mxu0
    %v2914 = vadd.f32 0.0, %v2913
    %v2915 = vpop.f32.mrb[0].mxu0
    %2916 = vmatprep.mubr.f32.mxu0 %v2657
    %2917 = vmatmul.mubr.f32.gmra.mrb[0].mxu0 %v2526
    %v2918 = vpop.f32.mrb[0].mxu0
    %v2919 = vadd.f32 0.0, %v2918
    %v2920 = vpop.f32.mrb[0].mxu0
    %2921 = vmatprep.mubr.f32.mxu0 %v2660
    %2922 = vmatmul.mubr.f32.gmra.mrb[0].mxu0 %v2528
    %v2923 = vpop.f32.mrb[0].mxu0
    %v2924 = vadd.f32 0.0, %v2923
    %v2925 = vpop.f32.mrb[0].mxu0
    %2926 = vmatprep.mubr.f32.mxu0 %v2663
    %2927 = vmatmul.mubr.f32.gmra.mrb[0].mxu0 %v2530
    %v2928 = vpop.f32.mrb[0].mxu0
    %v2929 = vadd.f32 0.0, %v2928
    %v2930 = vpop.f32.mrb[0].mxu0
    %2931 = vmatprep.mubr.f32.mxu0 %v2666
    %2932 = vmatmul.mubr.f32.gmra.mrb[0].mxu0 %v2532
    %v2933 = vpop.f32.mrb[0].mxu0
    %v2934 = vadd.f32 0.0, %v2933
    %v2935 = vpop.f32.mrb[0].mxu0
    %2936 = vmatprep.mubr.f32.mxu0 %v2669
    %2937 = vmatmul.mubr.f32.gmra.mrb[0].mxu0 %v2534
    %v2938 = vpop.f32.mrb[0].mxu0
    %v2939 = vadd.f32 0.0, %v2938
    %v2940 = vpop.f32.mrb[0].mxu0
    %2941 = vmatprep.mubr.f32.mxu0 %v2672
    %2942 = vmatmul.mubr.f32.gmra.mrb[0].mxu0 %v2536
    %v2943 = vpop.f32.mrb[0].mxu0
    %v2944 = vadd.f32 0.0, %v2943
    %v2945 = vpop.f32.mrb[0].mxu0
    %2946 = vmatprep.mubr.f32.mxu0 %v2675
    %2947 = vmatmul.mubr.f32.gmra.mrb[0].mxu0 %v2538
    %v2948 = vpop.f32.mrb[0].mxu0
    %v2949 = vadd.f32 0.0, %v2948
    %v2950 = vpop.f32.mrb[0].mxu0
    %2951 = vmatprep.mubr.f32.mxu0 %v2678
    %2952 = vmatmul.mubr.f32.gmra.mrb[0].mxu0 %v2540
    %v2953 = vpop.f32.mrb[0].mxu0
    %v2954 = vadd.f32 0.0, %v2953
    %v2955 = vpop.f32.mrb[0].mxu0
    %2956 = vmatprep.mubr.f32.mxu0 %v2681
    %2957 = vmatmul.mubr.f32.gmra.mrb[0].mxu0 %v2542
    %v2958 = vpop.f32.mrb[0].mxu0
    %v2959 = vadd.f32 0.0, %v2958
    %v2960 = vpop.f32.mrb[0].mxu0
    %2961 = vmatprep.mubr.f32.mxu0 %v2684
    %2962 = vmatmul.mubr.f32.gmra.mrb[0].mxu0 %v2544
    %v2963 = vpop.f32.mrb[0].mxu0
    %v2964 = vadd.f32 0.0, %v2963
    %v2965 = vpop.f32.mrb[0].mxu0
    %2966 = vmatprep.mubr.f32.mxu0 %v2687
    %2967 = vmatmul.mubr.f32.gmra.mrb[0].mxu0 %v2546
    %v2968 = vpop.f32.mrb[0].mxu0
    %v2969 = vadd.f32 0.0, %v2968
    %v2970 = vpop.f32.mrb[0].mxu0
    %2971 = vmatprep.mubr.f32.mxu0 %v2690
    %2972 = vmatmul.mubr.f32.gmra.mrb[0].mxu0 %v2548
    %v2973 = vpop.f32.mrb[0].mxu0
    %v2974 = vadd.f32 0.0, %v2973
    %v2975 = vpop.f32.mrb[0].mxu0
    %2976 = vmatprep.mubr.f32.mxu0 %v2693
    %2977 = vmatmul.mubr.f32.gmra.mrb[0].mxu0 %v2550
    %v2978 = vpop.f32.mrb[0].mxu0
    %v2979 = vadd.f32 0.0, %v2978
    %v2980 = vpop.f32.mrb[0].mxu0
    %2981 = vmatprep.mubr.f32.mxu0 %v2696
    %2982 = vmatmul.mubr.f32.gmra.mrb[0].mxu0 %v2552
    %v2983 = vpop.f32.mrb[0].mxu0
    %v2984 = vadd.f32 0.0, %v2983
    %v2985 = vpop.f32.mrb[0].mxu0
    %2986 = vmatprep.mubr.f32.mxu0 %v2699
    %2987 = vmatmul.mubr.f32.gmra.mrb[0].mxu0 %v2554
    %v2988 = vpop.f32.mrb[0].mxu0
    %v2989 = vadd.f32 0.0, %v2988
    %v2990 = vpop.f32.mrb[0].mxu0
    %2991 = vmatprep.mubr.f32.mxu0 %v2702
    %2992 = vmatmul.mubr.f32.gmra.mrb[0].mxu0 %v2556
    %v2993 = vpop.f32.mrb[0].mxu0
    %v2994 = vadd.f32 0.0, %v2993
    %v2995 = vpop.f32.mrb[0].mxu0
    %2996 = vmatprep.mubr.f32.mxu0 %v2705
    %2997 = vmatmul.mubr.f32.gmra.mrb[0].mxu0 %v2558
    %v2998 = vpop.f32.mrb[0].mxu0
    %v2999 = vadd.f32 0.0, %v2998
    %v3000 = vpop.f32.mrb[0].mxu0
    %3001 = vmatprep.mubr.f32.mxu0 %v2708
    %3002 = vmatmul.mubr.f32.gmra.mrb[0].mxu0 %v2560
    %v3003 = vpop.f32.mrb[0].mxu0
    %v3004 = vadd.f32 0.0, %v3003
    %v3005 = vpop.f32.mrb[0].mxu0
    %3006 = vmatprep.mubr.f32.mxu0 %v2711
    %3007 = vmatmul.mubr.f32.gmra.mrb[0].mxu0 %v2562
    %v3008 = vpop.f32.mrb[0].mxu0
    %v3009 = vadd.f32 0.0, %v3008
    %v3010 = vpop.f32.mrb[0].mxu0
    %3011 = vmatprep.mubr.f32.mxu0 %v2714
    %3012 = vmatmul.mubr.f32.gmra.mrb[0].mxu0 %v2564
    %v3013 = vpop.f32.mrb[0].mxu0
    %v3014 = vadd.f32 0.0, %v3013
    %v3015 = vpop.f32.mrb[0].mxu0
    %3016 = vmatprep.mubr.f32.mxu0 %v2717
    %3017 = vmatmul.mubr.f32.gmra.mrb[0].mxu0 %v2566
    %v3018 = vpop.f32.mrb[0].mxu0
    %v3019 = vadd.f32 0.0, %v3018
    %v3020 = vpop.f32.mrb[0].mxu0
    %3021 = vmatprep.mubr.f32.mxu0 %v2720
    %3022 = vmatmul.mubr.f32.gmra.mrb[0].mxu0 %v2568
    %v3023 = vpop.f32.mrb[0].mxu0
    %v3024 = vadd.f32 0.0, %v3023
    %v3025 = vpop.f32.mrb[0].mxu0
    %3026 = vmatprep.mubr.f32.mxu0 %v2723
    %3027 = vmatmul.mubr.f32.gmra.mrb[0].mxu0 %v2570
    %v3028 = vpop.f32.mrb[0].mxu0
    %v3029 = vadd.f32 0.0, %v3028
    %v3030 = vpop.f32.mrb[0].mxu0
    %3031 = vmatprep.mubr.f32.mxu0 %v2726
    %3032 = vmatmul.mubr.f32.gmra.mrb[0].mxu0 %v2572
    %v3033 = vpop.f32.mrb[0].mxu0
    %v3034 = vadd.f32 0.0, %v3033
    %v3035 = vpop.f32.mrb[0].mxu0
    %3036 = vmatprep.mubr.f32.mxu0 %v2729
    %3037 = vmatmul.mubr.f32.gmra.mrb[0].mxu0 %v2574
    %v3038 = vpop.f32.mrb[0].mxu0
    %v3039 = vadd.f32 0.0, %v3038
    %v3040 = vpop.f32.mrb[0].mxu0
    %3041 = vmatprep.mubr.f32.mxu0 %v2732
    %3042 = vmatmul.mubr.f32.gmra.mrb[0].mxu0 %v2576
    %v3043 = vpop.f32.mrb[0].mxu0
    %v3044 = vadd.f32 0.0, %v3043
    %v3045 = vpop.f32.mrb[0].mxu0
    %3046 = vmatprep.mubr.f32.mxu0 %v2735
    %3047 = vmatmul.mubr.f32.gmra.mrb[0].mxu0 %v2578
    %v3048 = vpop.f32.mrb[0].mxu0
    %v3049 = vadd.f32 0.0, %v3048
    %v3050 = vpop.f32.mrb[0].mxu0
    %3051 = vmatprep.mubr.f32.mxu0 %v2738
    %3052 = vmatmul.mubr.f32.gmra.mrb[0].mxu0 %v2580
    %v3053 = vpop.f32.mrb[0].mxu0
    %v3054 = vadd.f32 0.0, %v3053
    %v3055 = vpop.f32.mrb[0].mxu0
    %3056 = vmatprep.mubr.f32.mxu0 %v2741
    %3057 = vmatmul.mubr.f32.gmra.mrb[0].mxu0 %v2582
    %v3058 = vpop.f32.mrb[0].mxu0
    %v3059 = vadd.f32 0.0, %v3058
    %v3060 = vpop.f32.mrb[0].mxu0
    %3061 = vmatprep.mubr.f32.mxu0 %v2744
    %3062 = vmatmul.mubr.f32.gmra.mrb[0].mxu0 %v2584
    %v3063 = vpop.f32.mrb[0].mxu0
    %v3064 = vadd.f32 0.0, %v3063
    %v3065 = vpop.f32.mrb[0].mxu0
    %3066 = vmatprep.mubr.f32.mxu0 %v2747
    %3067 = vmatmul.mubr.f32.gmra.mrb[0].mxu0 %v2586
    %v3068 = vpop.f32.mrb[0].mxu0
    %v3069 = vadd.f32 0.0, %v3068
    %v3070 = vpop.f32.mrb[0].mxu0
    %3071 = vmatprep.mubr.f32.mxu0 %v2750
    %3072 = vmatmul.mubr.f32.gmra.mrb[0].mxu0 %v2588
    %v3073 = vpop.f32.mrb[0].mxu0
    %v3074 = vadd.f32 0.0, %v3073
    %v3075 = vpop.f32.mrb[0].mxu0
    %3076 = vmatprep.mubr.f32.mxu0 %v2753
    %3077 = vmatmul.mubr.f32.gmra.mrb[0].mxu0 %v2590
    %v3078 = vpop.f32.mrb[0].mxu0
    %v3079 = vadd.f32 0.0, %v3078
    %v3080 = vpop.f32.mrb[0].mxu0
    %3081 = vmatprep.mubr.f32.mxu0 %v2756
    %3082 = vmatmul.mubr.f32.gmra.mrb[0].mxu0 %v2592
    %v3083 = vpop.f32.mrb[0].mxu0
    %v3084 = vadd.f32 0.0, %v3083
    %v3085 = vpop.f32.mrb[0].mxu0
    %3086 = vmatprep.mubr.f32.mxu0 %v2759
    %3087 = vmatmul.mubr.f32.gmra.mrb[0].mxu0 %v2594
    %v3088 = vpop.f32.mrb[0].mxu0
    %v3089 = vadd.f32 0.0, %v3088
    %v3090 = vpop.f32.mrb[0].mxu0
    %3091 = vmatprep.mubr.f32.mxu0 %v2762
    %3092 = vmatmul.mubr.f32.gmra.mrb[0].mxu0 %v2596
    %v3093 = vpop.f32.mrb[0].mxu0
    %v3094 = vadd.f32 0.0, %v3093
    %v3095 = vpop.f32.mrb[0].mxu0
    %3096 = vmatprep.mubr.f32.mxu0 %v2765
    %3097 = vmatmul.mubr.f32.gmra.mrb[0].mxu0 %v2598
    %v3098 = vpop.f32.mrb[0].mxu0
    %v3099 = vadd.f32 0.0, %v3098
    %v3100 = vpop.f32.mrb[0].mxu0
    %3101 = vmatprep.mubr.f32.mxu0 %v2768
    %3102 = vmatmul.mubr.f32.gmra.mrb[0].mxu0 %v2600
    %v3103 = vpop.f32.mrb[0].mxu0
    %v3104 = vadd.f32 0.0, %v3103
    %v3105 = vpop.f32.mrb[0].mxu0
    %3106 = vmatprep.mubr.f32.mxu0 %v2771
    %3107 = vmatmul.mubr.f32.gmra.mrb[0].mxu0 %v2602
    %v3108 = vpop.f32.mrb[0].mxu0
    %v3109 = vadd.f32 0.0, %v3108
    %v3110 = vpop.f32.mrb[0].mxu0
    %3111 = vmatprep.mubr.f32.mxu0 %v2774
    %3112 = vmatmul.mubr.f32.gmra.mrb[0].mxu0 %v2604
    %v3113 = vpop.f32.mrb[0].mxu0
    %v3114 = vadd.f32 0.0, %v3113
    %v3115 = vpop.f32.mrb[0].mxu0
    %3116 = vmatprep.mubr.f32.mxu0 %v2777
    %3117 = vmatmul.mubr.f32.gmra.mrb[0].mxu0 %v2606
    %v3118 = vpop.f32.mrb[0].mxu0
    %v3119 = vadd.f32 0.0, %v3118
    %v3120 = vpop.f32.mrb[0].mxu0
    %3121 = vmatprep.mubr.f32.mxu0 %v2780
    %3122 = vmatmul.mubr.f32.gmra.mrb[0].mxu0 %v2608
    %v3123 = vpop.f32.mrb[0].mxu0
    %v3124 = vadd.f32 0.0, %v3123
    %v3125 = vpop.f32.mrb[0].mxu0
    %3126 = vmatprep.mubr.f32.mxu0 %v2783
    %3127 = vmatmul.mubr.f32.gmra.mrb[0].mxu0 %v2610
    %v3128 = vpop.f32.mrb[0].mxu0
    %v3129 = vadd.f32 0.0, %v3128
    %v3130 = vpop.f32.mrb[0].mxu0
    %3131 = vmatprep.mubr.f32.mxu0 %v2786
    %3132 = vmatmul.mubr.f32.gmra.mrb[0].mxu0 %v2612
    %v3133 = vpop.f32.mrb[0].mxu0
    %v3134 = vadd.f32 0.0, %v3133
    %v3135 = vpop.f32.mrb[0].mxu0
    %3136 = vmatprep.mubr.f32.mxu0 %v2789
    %3137 = vmatmul.mubr.f32.gmra.mrb[0].mxu0 %v2614
    %v3138 = vpop.f32.mrb[0].mxu0
    %v3139 = vadd.f32 0.0, %v3138
    %v3140 = vpop.f32.mrb[0].mxu0
    %3141 = vmatprep.mubr.f32.mxu0 %v2792
    %3142 = vmatmul.mubr.f32.gmra.mrb[0].mxu0 %v2616
    %v3143 = vpop.f32.mrb[0].mxu0
    %v3144 = vadd.f32 0.0, %v3143
    %v3145 = vpop.f32.mrb[0].mxu0
    %3146 = vmatprep.mubr.f32.mxu0 %v2795
    %3147 = vmatmul.mubr.f32.gmra.mrb[0].mxu0 %v2618
    %v3148 = vpop.f32.mrb[0].mxu0
    %v3149 = vadd.f32 0.0, %v3148
    %v3150 = vpop.f32.mrb[0].mxu0
    %3151 = vmatprep.mubr.f32.mxu0 %v2798
    %3152 = vmatmul.mubr.f32.gmra.mrb[0].mxu0 %v2620
    %v3153 = vpop.f32.mrb[0].mxu0
    %v3154 = vadd.f32 0.0, %v3153
    %v3155 = vpop.f32.mrb[0].mxu0
    %3156 = vmatprep.mubr.f32.mxu0 %v2801
    %3157 = vmatmul.mubr.f32.gmra.mrb[0].mxu0 %v2622
    %v3158 = vpop.f32.mrb[0].mxu0
    %v3159 = vadd.f32 0.0, %v3158
    %v3160 = vpop.f32.mrb[0].mxu0
    %3161 = vmatprep.mubr.f32.mxu0 %v2804
    %3162 = vmatmul.mubr.f32.gmra.mrb[0].mxu0 %v2624
    %v3163 = vpop.f32.mrb[0].mxu0
    %v3164 = vadd.f32 0.0, %v3163
    %v3165 = vpop.f32.mrb[0].mxu0
    %3166 = vmatprep.mubr.f32.mxu0 %v2807
    %3167 = vmatmul.mubr.f32.gmra.mrb[0].mxu0 %v2626
    %v3168 = vpop.f32.mrb[0].mxu0
    %v3169 = vadd.f32 0.0, %v3168
    %v3170 = vpop.f32.mrb[0].mxu0
    %3171 = vmatprep.mubr.f32.mxu0 %v2810
    %3172 = vmatmul.mubr.f32.gmra.mrb[0].mxu0 %v2628
    %v3173 = vpop.f32.mrb[0].mxu0
    %v3174 = vadd.f32 0.0, %v3173
    %v3175 = vpop.f32.mrb[0].mxu0
    %3176 = vmatprep.mubr.f32.mxu0 %v2813
    %3177 = vmatmul.mubr.f32.gmra.mrb[0].mxu0 %v2630
    %v3178 = vpop.f32.mrb[0].mxu0
    %v3179 = vadd.f32 0.0, %v3178
    %v3180 = vpop.f32.mrb[0].mxu0
    %3181 = vmatprep.mubr.f32.mxu0 %v2816
    %3182 = vmatmul.mubr.f32.gmra.mrb[0].mxu0 %v2632
    %v3183 = vpop.f32.mrb[0].mxu0
    %v3184 = vadd.f32 0.0, %v3183
    %v3185 = vpop.f32.mrb[0].mxu0
    %3186 = vmatprep.mubr.f32.mxu0 %v2819
    %3187 = vmatmul.mubr.f32.gmra.mrb[0].mxu0 %v2634
    %v3188 = vpop.f32.mrb[0].mxu0
    %v3189 = vadd.f32 0.0, %v3188
    %v3190 = vpop.f32.mrb[0].mxu0
    %3191 = vmatprep.mubr.f32.mxu0 %v2822
    %3192 = vmatmul.mubr.f32.gmra.mrb[0].mxu0 %v2636
    %v3193 = vpop.f32.mrb[0].mxu0
    %v3194 = vadd.f32 0.0, %v3193
    %v3195 = vpop.f32.mrb[0].mxu0
    %3196 = vmatprep.mubr.f32.mxu0 %v2825
    %3197 = vmatmul.mubr.f32.gmra.mrb[0].mxu0 %v2638
    %v3198 = vpop.f32.mrb[0].mxu0
    %v3199 = vadd.f32 0.0, %v3198
    %v3200 = vpop.f32.mrb[0].mxu0
    %3201 = vmatprep.mubr.f32.mxu0 %v2828
    %3202 = vmatmul.mubr.f32.gmra.mrb[0].mxu0 %v2640
    %v3203 = vpop.f32.mrb[0].mxu0
    %v3204 = vadd.f32 0.0, %v3203
    %v3205 = vpop.f32.mrb[0].mxu0
    %3206 = vmatprep.mubr.f32.mxu0 %v2831
    %3207 = vmatmul.mubr.f32.gmra.mrb[0].mxu0 %v2642
    %v3208 = vpop.f32.mrb[0].mxu0
    %v3209 = vadd.f32 0.0, %v3208
    %v3210 = vpop.f32.mrb[0].mxu0
    %3211 = vmatprep.mubr.f32.mxu0 %v2834
    %3212 = vmatmul.mubr.f32.gmra.mrb[0].mxu0 %v2644
    %v3213 = vpop.f32.mrb[0].mxu0
    %v3214 = vadd.f32 0.0, %v3213
    %v3215 = vpop.f32.mrb[0].mxu0
    %3216 = vmatprep.mubr.f32.mxu0 %v2837
    %3217 = vmatmul.mubr.f32.gmra.mrb[0].mxu0 %v2646
    %v3218 = vpop.f32.mrb[0].mxu0
    %v3219 = vadd.f32 0.0, %v3218
    %v3220 = vpop.f32.mrb[0].mxu0
    %3221 = vmatprep.mubr.f32.mxu0 %v2840
    %3222 = vmatmul.mubr.f32.gmra.mrb[0].mxu0 %v2648
    %v3223 = vpop.f32.mrb[0].mxu0
    %v3224 = vadd.f32 0.0, %v3223
    %v3225 = vpop.f32.mrb[0].mxu0
    %3226 = vdwg.mxu0
    %v3227 = vsel %vm2427, %v2909, -inf
    %3228 = vmax.xlane.f32.xlu0 %v3227
    %v3229 = vpop.xlane.xlu0 %3228
    %v3230 = vsel %vm2427, %v2914, -inf
    %3231 = vmax.xlane.f32.xlu0 %v3230
    %v3232 = vpop.xlane.xlu0 %3231
    %v3233 = vsel %vm2427, %v2919, -inf
    %3234 = vmax.xlane.f32.xlu0 %v3233
    %v3235 = vpop.xlane.xlu0 %3234
    %v3236 = vsel %vm2427, %v2924, -inf
    %3237 = vmax.xlane.f32.xlu0 %v3236
    %v3238 = vpop.xlane.xlu0 %3237
    %v3239 = vsel %vm2427, %v2929, -inf
    %3240 = vmax.xlane.f32.xlu0 %v3239
    %v3241 = vpop.xlane.xlu0 %3240
    %v3242 = vsel %vm2427, %v2934, -inf
    %3243 = vmax.xlane.f32.xlu0 %v3242
    %v3244 = vpop.xlane.xlu0 %3243
    %v3245 = vsel %vm2427, %v2939, -inf
    %3246 = vmax.xlane.f32.xlu0 %v3245
    %v3247 = vpop.xlane.xlu0 %3246
    %v3248 = vsel %vm2427, %v2944, -inf
    %3249 = vmax.xlane.f32.xlu0 %v3248
    %v3250 = vpop.xlane.xlu0 %3249
    %v3251 = vsel %vm2427, %v2949, -inf
    %3252 = vmax.xlane.f32.xlu0 %v3251
    %v3253 = vpop.xlane.xlu0 %3252
    %v3254 = vsel %vm2427, %v2954, -inf
    %3255 = vmax.xlane.f32.xlu0 %v3254
    %v3256 = vpop.xlane.xlu0 %3255
    %v3257 = vsel %vm2427, %v2959, -inf
    %3258 = vmax.xlane.f32.xlu0 %v3257
    %v3259 = vpop.xlane.xlu0 %3258
    %v3260 = vsel %vm2427, %v2964, -inf
    %3261 = vmax.xlane.f32.xlu0 %v3260
    %v3262 = vpop.xlane.xlu0 %3261
    %v3263 = vsel %vm2427, %v2969, -inf
    %3264 = vmax.xlane.f32.xlu0 %v3263
    %v3265 = vpop.xlane.xlu0 %3264
    %v3266 = vsel %vm2427, %v2974, -inf
    %3267 = vmax.xlane.f32.xlu0 %v3266
    %v3268 = vpop.xlane.xlu0 %3267
    %v3269 = vsel %vm2427, %v2979, -inf
    %3270 = vmax.xlane.f32.xlu0 %v3269
    %v3271 = vpop.xlane.xlu0 %3270
    %v3272 = vsel %vm2427, %v2984, -inf
    %3273 = vmax.xlane.f32.xlu0 %v3272
    %v3274 = vpop.xlane.xlu0 %3273
    %v3275 = vsel %vm2427, %v2989, -inf
    %3276 = vmax.xlane.f32.xlu0 %v3275
    %v3277 = vpop.xlane.xlu0 %3276
    %v3278 = vsel %vm2427, %v2994, -inf
    %3279 = vmax.xlane.f32.xlu0 %v3278
    %v3280 = vpop.xlane.xlu0 %3279
    %v3281 = vsel %vm2427, %v2999, -inf
    %3282 = vmax.xlane.f32.xlu0 %v3281
    %v3283 = vpop.xlane.xlu0 %3282
    %v3284 = vsel %vm2427, %v3004, -inf
    %3285 = vmax.xlane.f32.xlu0 %v3284
    %v3286 = vpop.xlane.xlu0 %3285
    %v3287 = vsel %vm2427, %v3009, -inf
    %3288 = vmax.xlane.f32.xlu0 %v3287
    %v3289 = vpop.xlane.xlu0 %3288
    %v3290 = vsel %vm2427, %v3014, -inf
    %3291 = vmax.xlane.f32.xlu0 %v3290
    %v3292 = vpop.xlane.xlu0 %3291
    %v3293 = vsel %vm2427, %v3019, -inf
    %3294 = vmax.xlane.f32.xlu0 %v3293
    %v3295 = vpop.xlane.xlu0 %3294
    %v3296 = vsel %vm2427, %v3024, -inf
    %3297 = vmax.xlane.f32.xlu0 %v3296
    %v3298 = vpop.xlane.xlu0 %3297
    %v3299 = vsel %vm2427, %v3029, -inf
    %3300 = vmax.xlane.f32.xlu0 %v3299
    %v3301 = vpop.xlane.xlu0 %3300
    %v3302 = vsel %vm2427, %v3034, -inf
    %3303 = vmax.xlane.f32.xlu0 %v3302
    %v3304 = vpop.xlane.xlu0 %3303
    %v3305 = vsel %vm2427, %v3039, -inf
    %3306 = vmax.xlane.f32.xlu0 %v3305
    %v3307 = vpop.xlane.xlu0 %3306
    %v3308 = vsel %vm2427, %v3044, -inf
    %3309 = vmax.xlane.f32.xlu0 %v3308
    %v3310 = vpop.xlane.xlu0 %3309
    %v3311 = vsel %vm2427, %v3049, -inf
    %3312 = vmax.xlane.f32.xlu0 %v3311
    %v3313 = vpop.xlane.xlu0 %3312
    %v3314 = vsel %vm2427, %v3054, -inf
    %3315 = vmax.xlane.f32.xlu0 %v3314
    %v3316 = vpop.xlane.xlu0 %3315
    %v3317 = vsel %vm2427, %v3059, -inf
    %3318 = vmax.xlane.f32.xlu0 %v3317
    %v3319 = vpop.xlane.xlu0 %3318
    %v3320 = vsel %vm2427, %v3064, -inf
    %3321 = vmax.xlane.f32.xlu0 %v3320
    %v3322 = vpop.xlane.xlu0 %3321
    %v3323 = vsel %vm2427, %v3069, -inf
    %3324 = vmax.xlane.f32.xlu0 %v3323
    %v3325 = vpop.xlane.xlu0 %3324
    %v3326 = vsel %vm2427, %v3074, -inf
    %3327 = vmax.xlane.f32.xlu0 %v3326
    %v3328 = vpop.xlane.xlu0 %3327
    %v3329 = vsel %vm2427, %v3079, -inf
    %3330 = vmax.xlane.f32.xlu0 %v3329
    %v3331 = vpop.xlane.xlu0 %3330
    %v3332 = vsel %vm2427, %v3084, -inf
    %3333 = vmax.xlane.f32.xlu0 %v3332
    %v3334 = vpop.xlane.xlu0 %3333
    %v3335 = vsel %vm2427, %v3089, -inf
    %3336 = vmax.xlane.f32.xlu0 %v3335
    %v3337 = vpop.xlane.xlu0 %3336
    %v3338 = vsel %vm2427, %v3094, -inf
    %3339 = vmax.xlane.f32.xlu0 %v3338
    %v3340 = vpop.xlane.xlu0 %3339
    %v3341 = vsel %vm2427, %v3099, -inf
    %3342 = vmax.xlane.f32.xlu0 %v3341
    %v3343 = vpop.xlane.xlu0 %3342
    %v3344 = vsel %vm2427, %v3104, -inf
    %3345 = vmax.xlane.f32.xlu0 %v3344
    %v3346 = vpop.xlane.xlu0 %3345
    %v3347 = vsel %vm2427, %v3109, -inf
    %3348 = vmax.xlane.f32.xlu0 %v3347
    %v3349 = vpop.xlane.xlu0 %3348
    %v3350 = vsel %vm2427, %v3114, -inf
    %3351 = vmax.xlane.f32.xlu0 %v3350
    %v3352 = vpop.xlane.xlu0 %3351
    %v3353 = vsel %vm2427, %v3119, -inf
    %3354 = vmax.xlane.f32.xlu0 %v3353
    %v3355 = vpop.xlane.xlu0 %3354
    %v3356 = vsel %vm2427, %v3124, -inf
    %3357 = vmax.xlane.f32.xlu0 %v3356
    %v3358 = vpop.xlane.xlu0 %3357
    %v3359 = vsel %vm2427, %v3129, -inf
    %3360 = vmax.xlane.f32.xlu0 %v3359
    %v3361 = vpop.xlane.xlu0 %3360
    %v3362 = vsel %vm2427, %v3134, -inf
    %3363 = vmax.xlane.f32.xlu0 %v3362
    %v3364 = vpop.xlane.xlu0 %3363
    %v3365 = vsel %vm2427, %v3139, -inf
    %3366 = vmax.xlane.f32.xlu0 %v3365
    %v3367 = vpop.xlane.xlu0 %3366
    %v3368 = vsel %vm2427, %v3144, -inf
    %3369 = vmax.xlane.f32.xlu0 %v3368
    %v3370 = vpop.xlane.xlu0 %3369
    %v3371 = vsel %vm2427, %v3149, -inf
    %3372 = vmax.xlane.f32.xlu0 %v3371
    %v3373 = vpop.xlane.xlu0 %3372
    %v3374 = vsel %vm2427, %v3154, -inf
    %3375 = vmax.xlane.f32.xlu0 %v3374
    %v3376 = vpop.xlane.xlu0 %3375
    %v3377 = vsel %vm2427, %v3159, -inf
    %3378 = vmax.xlane.f32.xlu0 %v3377
    %v3379 = vpop.xlane.xlu0 %3378
    %v3380 = vsel %vm2427, %v3164, -inf
    %3381 = vmax.xlane.f32.xlu0 %v3380
    %v3382 = vpop.xlane.xlu0 %3381
    %v3383 = vsel %vm2427, %v3169, -inf
    %3384 = vmax.xlane.f32.xlu0 %v3383
    %v3385 = vpop.xlane.xlu0 %3384
    %v3386 = vsel %vm2427, %v3174, -inf
    %3387 = vmax.xlane.f32.xlu0 %v3386
    %v3388 = vpop.xlane.xlu0 %3387
    %v3389 = vsel %vm2427, %v3179, -inf
    %3390 = vmax.xlane.f32.xlu0 %v3389
    %v3391 = vpop.xlane.xlu0 %3390
    %v3392 = vsel %vm2427, %v3184, -inf
    %3393 = vmax.xlane.f32.xlu0 %v3392
    %v3394 = vpop.xlane.xlu0 %3393
    %v3395 = vsel %vm2427, %v3189, -inf
    %3396 = vmax.xlane.f32.xlu0 %v3395
    %v3397 = vpop.xlane.xlu0 %3396
    %v3398 = vsel %vm2427, %v3194, -inf
    %3399 = vmax.xlane.f32.xlu0 %v3398
    %v3400 = vpop.xlane.xlu0 %3399
    %v3401 = vsel %vm2427, %v3199, -inf
    %3402 = vmax.xlane.f32.xlu0 %v3401
    %v3403 = vpop.xlane.xlu0 %3402
    %v3404 = vsel %vm2427, %v3204, -inf
    %3405 = vmax.xlane.f32.xlu0 %v3404
    %v3406 = vpop.xlane.xlu0 %3405
    %v3407 = vsel %vm2427, %v3209, -inf
    %3408 = vmax.xlane.f32.xlu0 %v3407
    %v3409 = vpop.xlane.xlu0 %3408
    %v3410 = vsel %vm2427, %v3214, -inf
    %3411 = vmax.xlane.f32.xlu0 %v3410
    %v3412 = vpop.xlane.xlu0 %3411
    %v3413 = vsel %vm2427, %v3219, -inf
    %3414 = vmax.xlane.f32.xlu0 %v3413
    %v3415 = vpop.xlane.xlu0 %3414
    %v3416 = vsel %vm2427, %v3224, -inf
    %3417 = vmax.xlane.f32.xlu0 %v3416
    %v3418 = vpop.xlane.xlu0 %3417
    %v3419 = vsub.f32 %v2909, %v3229
    %v3420 = vsub.f32 %v2914, %v3232
    %v3421 = vsub.f32 %v2919, %v3235
    %v3422 = vsub.f32 %v2924, %v3238
    %v3423 = vsub.f32 %v2929, %v3241
    %v3424 = vsub.f32 %v2934, %v3244
    %v3425 = vsub.f32 %v2939, %v3247
    %v3426 = vsub.f32 %v2944, %v3250
    %v3427 = vsub.f32 %v2949, %v3253
    %v3428 = vsub.f32 %v2954, %v3256
    %v3429 = vsub.f32 %v2959, %v3259
    %v3430 = vsub.f32 %v2964, %v3262
    %v3431 = vsub.f32 %v2969, %v3265
    %v3432 = vsub.f32 %v2974, %v3268
    %v3433 = vsub.f32 %v2979, %v3271
    %v3434 = vsub.f32 %v2984, %v3274
    %v3435 = vsub.f32 %v2989, %v3277
    %v3436 = vsub.f32 %v2994, %v3280
    %v3437 = vsub.f32 %v2999, %v3283
    %v3438 = vsub.f32 %v3004, %v3286
    %v3439 = vsub.f32 %v3009, %v3289
    %v3440 = vsub.f32 %v3014, %v3292
    %v3441 = vsub.f32 %v3019, %v3295
    %v3442 = vsub.f32 %v3024, %v3298
    %v3443 = vsub.f32 %v3029, %v3301
    %v3444 = vsub.f32 %v3034, %v3304
    %v3445 = vsub.f32 %v3039, %v3307
    %v3446 = vsub.f32 %v3044, %v3310
    %v3447 = vsub.f32 %v3049, %v3313
    %v3448 = vsub.f32 %v3054, %v3316
    %v3449 = vsub.f32 %v3059, %v3319
    %v3450 = vsub.f32 %v3064, %v3322
    %v3451 = vsub.f32 %v3069, %v3325
    %v3452 = vsub.f32 %v3074, %v3328
    %v3453 = vsub.f32 %v3079, %v3331
    %v3454 = vsub.f32 %v3084, %v3334
    %v3455 = vsub.f32 %v3089, %v3337
    %v3456 = vsub.f32 %v3094, %v3340
    %v3457 = vsub.f32 %v3099, %v3343
    %v3458 = vsub.f32 %v3104, %v3346
    %v3459 = vsub.f32 %v3109, %v3349
    %v3460 = vsub.f32 %v3114, %v3352
    %v3461 = vsub.f32 %v3119, %v3355
    %v3462 = vsub.f32 %v3124, %v3358
    %v3463 = vsub.f32 %v3129, %v3361
    %v3464 = vsub.f32 %v3134, %v3364
    %v3465 = vsub.f32 %v3139, %v3367
    %v3466 = vsub.f32 %v3144, %v3370
    %v3467 = vsub.f32 %v3149, %v3373
    %v3468 = vsub.f32 %v3154, %v3376
    %v3469 = vsub.f32 %v3159, %v3379
    %v3470 = vsub.f32 %v3164, %v3382
    %v3471 = vsub.f32 %v3169, %v3385
    %v3472 = vsub.f32 %v3174, %v3388
    %v3473 = vsub.f32 %v3179, %v3391
    %v3474 = vsub.f32 %v3184, %v3394
    %v3475 = vsub.f32 %v3189, %v3397
    %v3476 = vsub.f32 %v3194, %v3400
    %v3477 = vsub.f32 %v3199, %v3403
    %v3478 = vsub.f32 %v3204, %v3406
    %v3479 = vsub.f32 %v3209, %v3409
    %v3480 = vsub.f32 %v3214, %v3412
    %v3481 = vsub.f32 %v3219, %v3415
    %v3482 = vsub.f32 %v3224, %v3418
    %v3483 = vmul.f32 %v3419, 1.442695
    %v3484 = vpow.pop %v3483
    %v3485 = vmul.f32 %v3420, 1.442695
    %v3486 = vpow.pop %v3485
    %v3487 = vmul.f32 %v3421, 1.442695
    %v3488 = vpow.pop %v3487
    %v3489 = vmul.f32 %v3422, 1.442695
    %v3490 = vpow.pop %v3489
    %v3491 = vmul.f32 %v3423, 1.442695
    %v3492 = vpow.pop %v3491
    %v3493 = vmul.f32 %v3424, 1.442695
    %v3494 = vpow.pop %v3493
    %v3495 = vmul.f32 %v3425, 1.442695
    %v3496 = vpow.pop %v3495
    %v3497 = vmul.f32 %v3426, 1.442695
    %v3498 = vpow.pop %v3497
    %v3499 = vmul.f32 %v3427, 1.442695
    %v3500 = vpow.pop %v3499
    %v3501 = vmul.f32 %v3428, 1.442695
    %v3502 = vpow.pop %v3501
    %v3503 = vmul.f32 %v3429, 1.442695
    %v3504 = vpow.pop %v3503
    %v3505 = vmul.f32 %v3430, 1.442695
    %v3506 = vpow.pop %v3505
    %v3507 = vmul.f32 %v3431, 1.442695
    %v3508 = vpow.pop %v3507
    %v3509 = vmul.f32 %v3432, 1.442695
    %v3510 = vpow.pop %v3509
    %v3511 = vmul.f32 %v3433, 1.442695
    %v3512 = vpow.pop %v3511
    %v3513 = vmul.f32 %v3434, 1.442695
    %v3514 = vpow.pop %v3513
    %v3515 = vmul.f32 %v3435, 1.442695
    %v3516 = vpow.pop %v3515
    %v3517 = vmul.f32 %v3436, 1.442695
    %v3518 = vpow.pop %v3517
    %v3519 = vmul.f32 %v3437, 1.442695
    %v3520 = vpow.pop %v3519
    %v3521 = vmul.f32 %v3438, 1.442695
    %v3522 = vpow.pop %v3521
    %v3523 = vmul.f32 %v3439, 1.442695
    %v3524 = vpow.pop %v3523
    %v3525 = vmul.f32 %v3440, 1.442695
    %v3526 = vpow.pop %v3525
    %v3527 = vmul.f32 %v3441, 1.442695
    %v3528 = vpow.pop %v3527
    %v3529 = vmul.f32 %v3442, 1.442695
    %v3530 = vpow.pop %v3529
    %v3531 = vmul.f32 %v3443, 1.442695
    %v3532 = vpow.pop %v3531
    %v3533 = vmul.f32 %v3444, 1.442695
    %v3534 = vpow.pop %v3533
    %v3535 = vmul.f32 %v3445, 1.442695
    %v3536 = vpow.pop %v3535
    %v3537 = vmul.f32 %v3446, 1.442695
    %v3538 = vpow.pop %v3537
    %v3539 = vmul.f32 %v3447, 1.442695
    %v3540 = vpow.pop %v3539
    %v3541 = vmul.f32 %v3448, 1.442695
    %v3542 = vpow.pop %v3541
    %v3543 = vmul.f32 %v3449, 1.442695
    %v3544 = vpow.pop %v3543
    %v3545 = vmul.f32 %v3450, 1.442695
    %v3546 = vpow.pop %v3545
    %v3547 = vmul.f32 %v3451, 1.442695
    %v3548 = vpow.pop %v3547
    %v3549 = vmul.f32 %v3452, 1.442695
    %v3550 = vpow.pop %v3549
    %v3551 = vmul.f32 %v3453, 1.442695
    %v3552 = vpow.pop %v3551
    %v3553 = vmul.f32 %v3454, 1.442695
    %v3554 = vpow.pop %v3553
    %v3555 = vmul.f32 %v3455, 1.442695
    %v3556 = vpow.pop %v3555
    %v3557 = vmul.f32 %v3456, 1.442695
    %v3558 = vpow.pop %v3557
    %v3559 = vmul.f32 %v3457, 1.442695
    %v3560 = vpow.pop %v3559
    %v3561 = vmul.f32 %v3458, 1.442695
    %v3562 = vpow.pop %v3561
    %v3563 = vmul.f32 %v3459, 1.442695
    %v3564 = vpow.pop %v3563
    %v3565 = vmul.f32 %v3460, 1.442695
    %v3566 = vpow.pop %v3565
    %v3567 = vmul.f32 %v3461, 1.442695
    %v3568 = vpow.pop %v3567
    %v3569 = vmul.f32 %v3462, 1.442695
    %v3570 = vpow.pop %v3569
    %v3571 = vmul.f32 %v3463, 1.442695
    %v3572 = vpow.pop %v3571
    %v3573 = vmul.f32 %v3464, 1.442695
    %v3574 = vpow.pop %v3573
    %v3575 = vmul.f32 %v3465, 1.442695
    %v3576 = vpow.pop %v3575
    %v3577 = vmul.f32 %v3466, 1.442695
    %v3578 = vpow.pop %v3577
    %v3579 = vmul.f32 %v3467, 1.442695
    %v3580 = vpow.pop %v3579
    %v3581 = vmul.f32 %v3468, 1.442695
    %v3582 = vpow.pop %v3581
    %v3583 = vmul.f32 %v3469, 1.442695
    %v3584 = vpow.pop %v3583
    %v3585 = vmul.f32 %v3470, 1.442695
    %v3586 = vpow.pop %v3585
    %v3587 = vmul.f32 %v3471, 1.442695
    %v3588 = vpow.pop %v3587
    %v3589 = vmul.f32 %v3472, 1.442695
    %v3590 = vpow.pop %v3589
    %v3591 = vmul.f32 %v3473, 1.442695
    %v3592 = vpow.pop %v3591
    %v3593 = vmul.f32 %v3474, 1.442695
    %v3594 = vpow.pop %v3593
    %v3595 = vmul.f32 %v3475, 1.442695
    %v3596 = vpow.pop %v3595
    %v3597 = vmul.f32 %v3476, 1.442695
    %v3598 = vpow.pop %v3597
    %v3599 = vmul.f32 %v3477, 1.442695
    %v3600 = vpow.pop %v3599
    %v3601 = vmul.f32 %v3478, 1.442695
    %v3602 = vpow.pop %v3601
    %v3603 = vmul.f32 %v3479, 1.442695
    %v3604 = vpow.pop %v3603
    %v3605 = vmul.f32 %v3480, 1.442695
    %v3606 = vpow.pop %v3605
    %v3607 = vmul.f32 %v3481, 1.442695
    %v3608 = vpow.pop %v3607
    %v3609 = vmul.f32 %v3482, 1.442695
    %v3610 = vpow.pop %v3609
    %v3611 = vsel %vm2427, %v3484, 0.0
    %3612 = vadd.xlane.f32.xlu0 %v3611
    %v3613 = vpop.xlane.xlu0 %3612
    %v3614 = vsel %vm2427, %v3486, 0.0
    %3615 = vadd.xlane.f32.xlu0 %v3614
    %v3616 = vpop.xlane.xlu0 %3615
    %v3617 = vsel %vm2427, %v3488, 0.0
    %3618 = vadd.xlane.f32.xlu0 %v3617
    %v3619 = vpop.xlane.xlu0 %3618
    %v3620 = vsel %vm2427, %v3490, 0.0
    %3621 = vadd.xlane.f32.xlu0 %v3620
    %v3622 = vpop.xlane.xlu0 %3621
    %v3623 = vsel %vm2427, %v3492, 0.0
    %3624 = vadd.xlane.f32.xlu0 %v3623
    %v3625 = vpop.xlane.xlu0 %3624
    %v3626 = vsel %vm2427, %v3494, 0.0
    %3627 = vadd.xlane.f32.xlu0 %v3626
    %v3628 = vpop.xlane.xlu0 %3627
    %v3629 = vsel %vm2427, %v3496, 0.0
    %3630 = vadd.xlane.f32.xlu0 %v3629
    %v3631 = vpop.xlane.xlu0 %3630
    %v3632 = vsel %vm2427, %v3498, 0.0
    %3633 = vadd.xlane.f32.xlu0 %v3632
    %v3634 = vpop.xlane.xlu0 %3633
    %v3635 = vsel %vm2427, %v3500, 0.0
    %3636 = vadd.xlane.f32.xlu0 %v3635
    %v3637 = vpop.xlane.xlu0 %3636
    %v3638 = vsel %vm2427, %v3502, 0.0
    %3639 = vadd.xlane.f32.xlu0 %v3638
    %v3640 = vpop.xlane.xlu0 %3639
    %v3641 = vsel %vm2427, %v3504, 0.0
    %3642 = vadd.xlane.f32.xlu0 %v3641
    %v3643 = vpop.xlane.xlu0 %3642
    %v3644 = vsel %vm2427, %v3506, 0.0
    %3645 = vadd.xlane.f32.xlu0 %v3644
    %v3646 = vpop.xlane.xlu0 %3645
    %v3647 = vsel %vm2427, %v3508, 0.0
    %3648 = vadd.xlane.f32.xlu0 %v3647
    %v3649 = vpop.xlane.xlu0 %3648
    %v3650 = vsel %vm2427, %v3510, 0.0
    %3651 = vadd.xlane.f32.xlu0 %v3650
    %v3652 = vpop.xlane.xlu0 %3651
    %v3653 = vsel %vm2427, %v3512, 0.0
    %3654 = vadd.xlane.f32.xlu0 %v3653
    %v3655 = vpop.xlane.xlu0 %3654
    %v3656 = vsel %vm2427, %v3514, 0.0
    %3657 = vadd.xlane.f32.xlu0 %v3656
    %v3658 = vpop.xlane.xlu0 %3657
    %v3659 = vsel %vm2427, %v3516, 0.0
    %3660 = vadd.xlane.f32.xlu0 %v3659
    %v3661 = vpop.xlane.xlu0 %3660
    %v3662 = vsel %vm2427, %v3518, 0.0
    %3663 = vadd.xlane.f32.xlu0 %v3662
    %v3664 = vpop.xlane.xlu0 %3663
    %v3665 = vsel %vm2427, %v3520, 0.0
    %3666 = vadd.xlane.f32.xlu0 %v3665
    %v3667 = vpop.xlane.xlu0 %3666
    %v3668 = vsel %vm2427, %v3522, 0.0
    %3669 = vadd.xlane.f32.xlu0 %v3668
    %v3670 = vpop.xlane.xlu0 %3669
    %v3671 = vsel %vm2427, %v3524, 0.0
    %3672 = vadd.xlane.f32.xlu0 %v3671
    %v3673 = vpop.xlane.xlu0 %3672
    %v3674 = vsel %vm2427, %v3526, 0.0
    %3675 = vadd.xlane.f32.xlu0 %v3674
    %v3676 = vpop.xlane.xlu0 %3675
    %v3677 = vsel %vm2427, %v3528, 0.0
    %3678 = vadd.xlane.f32.xlu0 %v3677
    %v3679 = vpop.xlane.xlu0 %3678
    %v3680 = vsel %vm2427, %v3530, 0.0
    %3681 = vadd.xlane.f32.xlu0 %v3680
    %v3682 = vpop.xlane.xlu0 %3681
    %v3683 = vsel %vm2427, %v3532, 0.0
    %3684 = vadd.xlane.f32.xlu0 %v3683
    %v3685 = vpop.xlane.xlu0 %3684
    %v3686 = vsel %vm2427, %v3534, 0.0
    %3687 = vadd.xlane.f32.xlu0 %v3686
    %v3688 = vpop.xlane.xlu0 %3687
    %v3689 = vsel %vm2427, %v3536, 0.0
    %3690 = vadd.xlane.f32.xlu0 %v3689
    %v3691 = vpop.xlane.xlu0 %3690
    %v3692 = vsel %vm2427, %v3538, 0.0
    %3693 = vadd.xlane.f32.xlu0 %v3692
    %v3694 = vpop.xlane.xlu0 %3693
    %v3695 = vsel %vm2427, %v3540, 0.0
    %3696 = vadd.xlane.f32.xlu0 %v3695
    %v3697 = vpop.xlane.xlu0 %3696
    %v3698 = vsel %vm2427, %v3542, 0.0
    %3699 = vadd.xlane.f32.xlu0 %v3698
    %v3700 = vpop.xlane.xlu0 %3699
    %v3701 = vsel %vm2427, %v3544, 0.0
    %3702 = vadd.xlane.f32.xlu0 %v3701
    %v3703 = vpop.xlane.xlu0 %3702
    %v3704 = vsel %vm2427, %v3546, 0.0
    %3705 = vadd.xlane.f32.xlu0 %v3704
    %v3706 = vpop.xlane.xlu0 %3705
    %v3707 = vsel %vm2427, %v3548, 0.0
    %3708 = vadd.xlane.f32.xlu0 %v3707
    %v3709 = vpop.xlane.xlu0 %3708
    %v3710 = vsel %vm2427, %v3550, 0.0
    %3711 = vadd.xlane.f32.xlu0 %v3710
    %v3712 = vpop.xlane.xlu0 %3711
    %v3713 = vsel %vm2427, %v3552, 0.0
    %3714 = vadd.xlane.f32.xlu0 %v3713
    %v3715 = vpop.xlane.xlu0 %3714
    %v3716 = vsel %vm2427, %v3554, 0.0
    %3717 = vadd.xlane.f32.xlu0 %v3716
    %v3718 = vpop.xlane.xlu0 %3717
    %v3719 = vsel %vm2427, %v3556, 0.0
    %3720 = vadd.xlane.f32.xlu0 %v3719
    %v3721 = vpop.xlane.xlu0 %3720
    %v3722 = vsel %vm2427, %v3558, 0.0
    %3723 = vadd.xlane.f32.xlu0 %v3722
    %v3724 = vpop.xlane.xlu0 %3723
    %v3725 = vsel %vm2427, %v3560, 0.0
    %3726 = vadd.xlane.f32.xlu0 %v3725
    %v3727 = vpop.xlane.xlu0 %3726
    %v3728 = vsel %vm2427, %v3562, 0.0
    %3729 = vadd.xlane.f32.xlu0 %v3728
    %v3730 = vpop.xlane.xlu0 %3729
    %v3731 = vsel %vm2427, %v3564, 0.0
    %3732 = vadd.xlane.f32.xlu0 %v3731
    %v3733 = vpop.xlane.xlu0 %3732
    %v3734 = vsel %vm2427, %v3566, 0.0
    %3735 = vadd.xlane.f32.xlu0 %v3734
    %v3736 = vpop.xlane.xlu0 %3735
    %v3737 = vsel %vm2427, %v3568, 0.0
    %3738 = vadd.xlane.f32.xlu0 %v3737
    %v3739 = vpop.xlane.xlu0 %3738
    %v3740 = vsel %vm2427, %v3570, 0.0
    %3741 = vadd.xlane.f32.xlu0 %v3740
    %v3742 = vpop.xlane.xlu0 %3741
    %v3743 = vsel %vm2427, %v3572, 0.0
    %3744 = vadd.xlane.f32.xlu0 %v3743
    %v3745 = vpop.xlane.xlu0 %3744
    %v3746 = vsel %vm2427, %v3574, 0.0
    %3747 = vadd.xlane.f32.xlu0 %v3746
    %v3748 = vpop.xlane.xlu0 %3747
    %v3749 = vsel %vm2427, %v3576, 0.0
    %3750 = vadd.xlane.f32.xlu0 %v3749
    %v3751 = vpop.xlane.xlu0 %3750
    %v3752 = vsel %vm2427, %v3578, 0.0
    %3753 = vadd.xlane.f32.xlu0 %v3752
    %v3754 = vpop.xlane.xlu0 %3753
    %v3755 = vsel %vm2427, %v3580, 0.0
    %3756 = vadd.xlane.f32.xlu0 %v3755
    %v3757 = vpop.xlane.xlu0 %3756
    %v3758 = vsel %vm2427, %v3582, 0.0
    %3759 = vadd.xlane.f32.xlu0 %v3758
    %v3760 = vpop.xlane.xlu0 %3759
    %v3761 = vsel %vm2427, %v3584, 0.0
    %3762 = vadd.xlane.f32.xlu0 %v3761
    %v3763 = vpop.xlane.xlu0 %3762
    %v3764 = vsel %vm2427, %v3586, 0.0
    %3765 = vadd.xlane.f32.xlu0 %v3764
    %v3766 = vpop.xlane.xlu0 %3765
    %v3767 = vsel %vm2427, %v3588, 0.0
    %3768 = vadd.xlane.f32.xlu0 %v3767
    %v3769 = vpop.xlane.xlu0 %3768
    %v3770 = vsel %vm2427, %v3590, 0.0
    %3771 = vadd.xlane.f32.xlu0 %v3770
    %v3772 = vpop.xlane.xlu0 %3771
    %v3773 = vsel %vm2427, %v3592, 0.0
    %3774 = vadd.xlane.f32.xlu0 %v3773
    %v3775 = vpop.xlane.xlu0 %3774
    %v3776 = vsel %vm2427, %v3594, 0.0
    %3777 = vadd.xlane.f32.xlu0 %v3776
    %v3778 = vpop.xlane.xlu0 %3777
    %v3779 = vsel %vm2427, %v3596, 0.0
    %3780 = vadd.xlane.f32.xlu0 %v3779
    %v3781 = vpop.xlane.xlu0 %3780
    %v3782 = vsel %vm2427, %v3598, 0.0
    %3783 = vadd.xlane.f32.xlu0 %v3782
    %v3784 = vpop.xlane.xlu0 %3783
    %v3785 = vsel %vm2427, %v3600, 0.0
    %3786 = vadd.xlane.f32.xlu0 %v3785
    %v3787 = vpop.xlane.xlu0 %3786
    %v3788 = vsel %vm2427, %v3602, 0.0
    %3789 = vadd.xlane.f32.xlu0 %v3788
    %v3790 = vpop.xlane.xlu0 %3789
    %v3791 = vsel %vm2427, %v3604, 0.0
    %3792 = vadd.xlane.f32.xlu0 %v3791
    %v3793 = vpop.xlane.xlu0 %3792
    %v3794 = vsel %vm2427, %v3606, 0.0
    %3795 = vadd.xlane.f32.xlu0 %v3794
    %v3796 = vpop.xlane.xlu0 %3795
    %v3797 = vsel %vm2427, %v3608, 0.0
    %3798 = vadd.xlane.f32.xlu0 %v3797
    %v3799 = vpop.xlane.xlu0 %3798
    %v3800 = vsel %vm2427, %v3610, 0.0
    %3801 = vadd.xlane.f32.xlu0 %v3800
    %v3802 = vpop.xlane.xlu0 %3801
    %v3803 = vrcp.pop %v3613
    %v3804 = vrcp.pop %v3616
    %v3805 = vrcp.pop %v3619
    %v3806 = vrcp.pop %v3622
    %v3807 = vrcp.pop %v3625
    %v3808 = vrcp.pop %v3628
    %v3809 = vrcp.pop %v3631
    %v3810 = vrcp.pop %v3634
    %v3811 = vrcp.pop %v3637
    %v3812 = vrcp.pop %v3640
    %v3813 = vrcp.pop %v3643
    %v3814 = vrcp.pop %v3646
    %v3815 = vrcp.pop %v3649
    %v3816 = vrcp.pop %v3652
    %v3817 = vrcp.pop %v3655
    %v3818 = vrcp.pop %v3658
    %v3819 = vrcp.pop %v3661
    %v3820 = vrcp.pop %v3664
    %v3821 = vrcp.pop %v3667
    %v3822 = vrcp.pop %v3670
    %v3823 = vrcp.pop %v3673
    %v3824 = vrcp.pop %v3676
    %v3825 = vrcp.pop %v3679
    %v3826 = vrcp.pop %v3682
    %v3827 = vrcp.pop %v3685
    %v3828 = vrcp.pop %v3688
    %v3829 = vrcp.pop %v3691
    %v3830 = vrcp.pop %v3694
    %v3831 = vrcp.pop %v3697
    %v3832 = vrcp.pop %v3700
    %v3833 = vrcp.pop %v3703
    %v3834 = vrcp.pop %v3706
    %v3835 = vrcp.pop %v3709
    %v3836 = vrcp.pop %v3712
    %v3837 = vrcp.pop %v3715
    %v3838 = vrcp.pop %v3718
    %v3839 = vrcp.pop %v3721
    %v3840 = vrcp.pop %v3724
    %v3841 = vrcp.pop %v3727
    %v3842 = vrcp.pop %v3730
    %v3843 = vrcp.pop %v3733
    %v3844 = vrcp.pop %v3736
    %v3845 = vrcp.pop %v3739
    %v3846 = vrcp.pop %v3742
    %v3847 = vrcp.pop %v3745
    %v3848 = vrcp.pop %v3748
    %v3849 = vrcp.pop %v3751
    %v3850 = vrcp.pop %v3754
    %v3851 = vrcp.pop %v3757
    %v3852 = vrcp.pop %v3760
    %v3853 = vrcp.pop %v3763
    %v3854 = vrcp.pop %v3766
    %v3855 = vrcp.pop %v3769
    %v3856 = vrcp.pop %v3772
    %v3857 = vrcp.pop %v3775
    %v3858 = vrcp.pop %v3778
    %v3859 = vrcp.pop %v3781
    %v3860 = vrcp.pop %v3784
    %v3861 = vrcp.pop %v3787
    %v3862 = vrcp.pop %v3790
    %v3863 = vrcp.pop %v3793
    %v3864 = vrcp.pop %v3796
    %v3865 = vrcp.pop %v3799
    %v3866 = vrcp.pop %v3802
    %v3867 = vmul.f32 %v3484, %v3803
    %v3868 = vmul.f32 %v3486, %v3804
    %v3869 = vmul.f32 %v3488, %v3805
    %v3870 = vmul.f32 %v3490, %v3806
    %v3871 = vmul.f32 %v3492, %v3807
    %v3872 = vmul.f32 %v3494, %v3808
    %v3873 = vmul.f32 %v3496, %v3809
    %v3874 = vmul.f32 %v3498, %v3810
    %v3875 = vmul.f32 %v3500, %v3811
    %v3876 = vmul.f32 %v3502, %v3812
    %v3877 = vmul.f32 %v3504, %v3813
    %v3878 = vmul.f32 %v3506, %v3814
    %v3879 = vmul.f32 %v3508, %v3815
    %v3880 = vmul.f32 %v3510, %v3816
    %v3881 = vmul.f32 %v3512, %v3817
    %v3882 = vmul.f32 %v3514, %v3818
    %v3883 = vmul.f32 %v3516, %v3819
    %v3884 = vmul.f32 %v3518, %v3820
    %v3885 = vmul.f32 %v3520, %v3821
    %v3886 = vmul.f32 %v3522, %v3822
    %v3887 = vmul.f32 %v3524, %v3823
    %v3888 = vmul.f32 %v3526, %v3824
    %v3889 = vmul.f32 %v3528, %v3825
    %v3890 = vmul.f32 %v3530, %v3826
    %v3891 = vmul.f32 %v3532, %v3827
    %v3892 = vmul.f32 %v3534, %v3828
    %v3893 = vmul.f32 %v3536, %v3829
    %v3894 = vmul.f32 %v3538, %v3830
    %v3895 = vmul.f32 %v3540, %v3831
    %v3896 = vmul.f32 %v3542, %v3832
    %v3897 = vmul.f32 %v3544, %v3833
    %v3898 = vmul.f32 %v3546, %v3834
    %v3899 = vmul.f32 %v3548, %v3835
    %v3900 = vmul.f32 %v3550, %v3836
    %v3901 = vmul.f32 %v3552, %v3837
    %v3902 = vmul.f32 %v3554, %v3838
    %v3903 = vmul.f32 %v3556, %v3839
    %v3904 = vmul.f32 %v3558, %v3840
    %v3905 = vmul.f32 %v3560, %v3841
    %v3906 = vmul.f32 %v3562, %v3842
    %v3907 = vmul.f32 %v3564, %v3843
    %v3908 = vmul.f32 %v3566, %v3844
    %v3909 = vmul.f32 %v3568, %v3845
    %v3910 = vmul.f32 %v3570, %v3846
    %v3911 = vmul.f32 %v3572, %v3847
    %v3912 = vmul.f32 %v3574, %v3848
    %v3913 = vmul.f32 %v3576, %v3849
    %v3914 = vmul.f32 %v3578, %v3850
    %v3915 = vmul.f32 %v3580, %v3851
    %v3916 = vmul.f32 %v3582, %v3852
    %v3917 = vmul.f32 %v3584, %v3853
    %v3918 = vmul.f32 %v3586, %v3854
    %v3919 = vmul.f32 %v3588, %v3855
    %v3920 = vmul.f32 %v3590, %v3856
    %v3921 = vmul.f32 %v3592, %v3857
    %v3922 = vmul.f32 %v3594, %v3858
    %v3923 = vmul.f32 %v3596, %v3859
    %v3924 = vmul.f32 %v3598, %v3860
    %v3925 = vmul.f32 %v3600, %v3861
    %v3926 = vmul.f32 %v3602, %v3862
    %v3927 = vmul.f32 %v3604, %v3863
    %v3928 = vmul.f32 %v3606, %v3864
    %v3929 = vmul.f32 %v3608, %v3865
    %v3930 = vmul.f32 %v3610, %v3866
    %v3932 = vsel %vm2427, %v3867, 0
    %v3935 = vsel %vm2427, %v3868, 0
    %v3938 = vsel %vm2427, %v3869, 0
    %v3941 = vsel %vm2427, %v3870, 0
    %v3944 = vsel %vm2427, %v3871, 0
    %v3947 = vsel %vm2427, %v3872, 0
    %v3950 = vsel %vm2427, %v3873, 0
    %v3953 = vsel %vm2427, %v3874, 0
    %v3956 = vsel %vm2427, %v3875, 0
    %v3959 = vsel %vm2427, %v3876, 0
    %v3962 = vsel %vm2427, %v3877, 0
    %v3965 = vsel %vm2427, %v3878, 0
    %v3968 = vsel %vm2427, %v3879, 0
    %v3971 = vsel %vm2427, %v3880, 0
    %v3974 = vsel %vm2427, %v3881, 0
    %v3977 = vsel %vm2427, %v3882, 0
    %v3980 = vsel %vm2427, %v3883, 0
    %v3983 = vsel %vm2427, %v3884, 0
    %v3986 = vsel %vm2427, %v3885, 0
    %v3989 = vsel %vm2427, %v3886, 0
    %v3992 = vsel %vm2427, %v3887, 0
    %v3995 = vsel %vm2427, %v3888, 0
    %v3998 = vsel %vm2427, %v3889, 0
    %v4001 = vsel %vm2427, %v3890, 0
    %v4004 = vsel %vm2427, %v3891, 0
    %v4007 = vsel %vm2427, %v3892, 0
    %v4010 = vsel %vm2427, %v3893, 0
    %v4013 = vsel %vm2427, %v3894, 0
    %v4016 = vsel %vm2427, %v3895, 0
    %v4019 = vsel %vm2427, %v3896, 0
    %v4022 = vsel %vm2427, %v3897, 0
    %v4025 = vsel %vm2427, %v3898, 0
    %v4028 = vsel %vm2427, %v3899, 0
    %v4031 = vsel %vm2427, %v3900, 0
    %v4034 = vsel %vm2427, %v3901, 0
    %v4037 = vsel %vm2427, %v3902, 0
    %v4040 = vsel %vm2427, %v3903, 0
    %v4043 = vsel %vm2427, %v3904, 0
    %v4046 = vsel %vm2427, %v3905, 0
    %v4049 = vsel %vm2427, %v3906, 0
    %v4052 = vsel %vm2427, %v3907, 0
    %v4055 = vsel %vm2427, %v3908, 0
    %v4058 = vsel %vm2427, %v3909, 0
    %v4061 = vsel %vm2427, %v3910, 0
    %v4064 = vsel %vm2427, %v3911, 0
    %v4067 = vsel %vm2427, %v3912, 0
    %v4070 = vsel %vm2427, %v3913, 0
    %v4073 = vsel %vm2427, %v3914, 0
    %v4076 = vsel %vm2427, %v3915, 0
    %v4079 = vsel %vm2427, %v3916, 0
    %v4082 = vsel %vm2427, %v3917, 0
    %v4085 = vsel %vm2427, %v3918, 0
    %v4088 = vsel %vm2427, %v3919, 0
    %v4091 = vsel %vm2427, %v3920, 0
    %v4094 = vsel %vm2427, %v3921, 0
    %v4097 = vsel %vm2427, %v3922, 0
    %v4100 = vsel %vm2427, %v3923, 0
    %v4103 = vsel %vm2427, %v3924, 0
    %v4106 = vsel %vm2427, %v3925, 0
    %v4109 = vsel %vm2427, %v3926, 0
    %v4112 = vsel %vm2427, %v3927, 0
    %v4115 = vsel %vm2427, %v3928, 0
    %v4118 = vsel %vm2427, %v3929, 0
    %v4121 = vsel %vm2427, %v3930, 0
    %4123 = vmatprep.subr.mxu0 %v116
    %4124 = vmatpush1.msra.mxu0 %v115
    %4125 = vmatprep.subr.mxu0 %v2439
    %4126 = vmatpush1.msra.mxu0 %v2436
    %4127 = vmatprep.subr.mxu0 0.0
    %4128 = vmatpush1.msra.mxu0 0.0
    %4129 = vmatprep.subr.mxu0 0.0
    %4130 = vmatpush1.msra.mxu0 0.0
    %4131 = vmatprep.subr.mxu0 0.0
    %4132 = vmatpush1.msra.mxu0 0.0
    %4133 = vmatprep.subr.mxu0 0.0
    %4134 = vmatpush1.msra.mxu0 0.0
    %4135 = vmatprep.subr.mxu0 0.0
    %4136 = vmatpush1.msra.mxu0 0.0
    %4137 = vmatprep.subr.mxu0 0.0
    %4138 = vmatpush1.msra.mxu0 0.0
    %4139 = vmatprep.subr.mxu0 0.0
    %4140 = vmatpush1.msra.mxu0 0.0
    %4141 = vmatprep.subr.mxu0 0.0
    %4142 = vmatpush1.msra.mxu0 0.0
    %4143 = vmatprep.subr.mxu0 0.0
    %4144 = vmatpush1.msra.mxu0 0.0
    %4145 = vmatprep.subr.mxu0 0.0
    %4146 = vmatpush1.msra.mxu0 0.0
    %4147 = vmatprep.subr.mxu0 0.0
    %4148 = vmatpush1.msra.mxu0 0.0
    %4149 = vmatprep.subr.mxu0 0.0
    %4150 = vmatpush1.msra.mxu0 0.0
    %4151 = vmatprep.subr.mxu0 0.0
    %4152 = vmatpush1.msra.mxu0 0.0
    %4153 = vmatprep.subr.mxu0 0.0
    %4154 = vmatpush1.msra.mxu0 0.0
    %4155 = vmatprep.subr.mxu0 0.0
    %4156 = vmatpush1.msra.mxu0 0.0
    %4157 = vmatprep.subr.mxu0 0.0
    %4158 = vmatpush1.msra.mxu0 0.0
    %4159 = vmatprep.subr.mxu0 0.0
    %4160 = vmatpush1.msra.mxu0 0.0
    %4161 = vmatprep.subr.mxu0 0.0
    %4162 = vmatpush1.msra.mxu0 0.0
    %4163 = vmatprep.subr.mxu0 0.0
    %4164 = vmatpush1.msra.mxu0 0.0
    %4165 = vmatprep.subr.mxu0 0.0
    %4166 = vmatpush1.msra.mxu0 0.0
    %4167 = vmatprep.subr.mxu0 0.0
    %4168 = vmatpush1.msra.mxu0 0.0
    %4169 = vmatprep.subr.mxu0 0.0
    %4170 = vmatpush1.msra.mxu0 0.0
    %4171 = vmatprep.subr.mxu0 0.0
    %4172 = vmatpush1.msra.mxu0 0.0
    %4173 = vmatprep.subr.mxu0 0.0
    %4174 = vmatpush1.msra.mxu0 0.0
    %4175 = vmatprep.subr.mxu0 0.0
    %4176 = vmatpush1.msra.mxu0 0.0
    %4177 = vmatprep.subr.mxu0 0.0
    %4178 = vmatpush1.msra.mxu0 0.0
    %4179 = vmatprep.subr.mxu0 0.0
    %4180 = vmatpush1.msra.mxu0 0.0
    %4181 = vmatprep.subr.mxu0 0.0
    %4182 = vmatpush1.msra.mxu0 0.0
    %4183 = vmatprep.subr.mxu0 0.0
    %4184 = vmatpush1.msra.mxu0 0.0
    %4185 = vmatprep.subr.mxu0 0.0
    %4186 = vmatpush1.msra.mxu0 0.0
    %4187 = vmatprep.mubr.f32.mxu0 0.0
    %4188 = vmatmul.mubr.f32.gmra.mrb[0].mxu0 %v3932
    %v4189 = vpop.f32.mrb[0].mxu0
    %v4190 = vadd.f32 0.0, %v4189
    %v4191 = vpop.f32.mrb[0].mxu0
    %v4192 = vadd.f32 0.0, %v4191
    %4193 = vmatprep.mubr.f32.mxu0 0.0
    %4194 = vmatmul.mubr.f32.gmra.mrb[0].mxu0 %v3935
    %v4195 = vpop.f32.mrb[0].mxu0
    %v4196 = vadd.f32 0.0, %v4195
    %v4197 = vpop.f32.mrb[0].mxu0
    %v4198 = vadd.f32 0.0, %v4197
    %4199 = vmatprep.mubr.f32.mxu0 0.0
    %4200 = vmatmul.mubr.f32.gmra.mrb[0].mxu0 %v3938
    %v4201 = vpop.f32.mrb[0].mxu0
    %v4202 = vadd.f32 0.0, %v4201
    %v4203 = vpop.f32.mrb[0].mxu0
    %v4204 = vadd.f32 0.0, %v4203
    %4205 = vmatprep.mubr.f32.mxu0 0.0
    %4206 = vmatmul.mubr.f32.gmra.mrb[0].mxu0 %v3941
    %v4207 = vpop.f32.mrb[0].mxu0
    %v4208 = vadd.f32 0.0, %v4207
    %v4209 = vpop.f32.mrb[0].mxu0
    %v4210 = vadd.f32 0.0, %v4209
    %4211 = vmatprep.mubr.f32.mxu0 0.0
    %4212 = vmatmul.mubr.f32.gmra.mrb[0].mxu0 %v3944
    %v4213 = vpop.f32.mrb[0].mxu0
    %v4214 = vadd.f32 0.0, %v4213
    %v4215 = vpop.f32.mrb[0].mxu0
    %v4216 = vadd.f32 0.0, %v4215
    %4217 = vmatprep.mubr.f32.mxu0 0.0
    %4218 = vmatmul.mubr.f32.gmra.mrb[0].mxu0 %v3947
    %v4219 = vpop.f32.mrb[0].mxu0
    %v4220 = vadd.f32 0.0, %v4219
    %v4221 = vpop.f32.mrb[0].mxu0
    %v4222 = vadd.f32 0.0, %v4221
    %4223 = vmatprep.mubr.f32.mxu0 0.0
    %4224 = vmatmul.mubr.f32.gmra.mrb[0].mxu0 %v3950
    %v4225 = vpop.f32.mrb[0].mxu0
    %v4226 = vadd.f32 0.0, %v4225
    %v4227 = vpop.f32.mrb[0].mxu0
    %v4228 = vadd.f32 0.0, %v4227
    %4229 = vmatprep.mubr.f32.mxu0 0.0
    %4230 = vmatmul.mubr.f32.gmra.mrb[0].mxu0 %v3953
    %v4231 = vpop.f32.mrb[0].mxu0
    %v4232 = vadd.f32 0.0, %v4231
    %v4233 = vpop.f32.mrb[0].mxu0
    %v4234 = vadd.f32 0.0, %v4233
    %4235 = vmatprep.mubr.f32.mxu0 0.0
    %4236 = vmatmul.mubr.f32.gmra.mrb[0].mxu0 %v3956
    %v4237 = vpop.f32.mrb[0].mxu0
    %v4238 = vadd.f32 0.0, %v4237
    %v4239 = vpop.f32.mrb[0].mxu0
    %v4240 = vadd.f32 0.0, %v4239
    %4241 = vmatprep.mubr.f32.mxu0 0.0
    %4242 = vmatmul.mubr.f32.gmra.mrb[0].mxu0 %v3959
    %v4243 = vpop.f32.mrb[0].mxu0
    %v4244 = vadd.f32 0.0, %v4243
    %v4245 = vpop.f32.mrb[0].mxu0
    %v4246 = vadd.f32 0.0, %v4245
    %4247 = vmatprep.mubr.f32.mxu0 0.0
    %4248 = vmatmul.mubr.f32.gmra.mrb[0].mxu0 %v3962
    %v4249 = vpop.f32.mrb[0].mxu0
    %v4250 = vadd.f32 0.0, %v4249
    %v4251 = vpop.f32.mrb[0].mxu0
    %v4252 = vadd.f32 0.0, %v4251
    %4253 = vmatprep.mubr.f32.mxu0 0.0
    %4254 = vmatmul.mubr.f32.gmra.mrb[0].mxu0 %v3965
    %v4255 = vpop.f32.mrb[0].mxu0
    %v4256 = vadd.f32 0.0, %v4255
    %v4257 = vpop.f32.mrb[0].mxu0
    %v4258 = vadd.f32 0.0, %v4257
    %4259 = vmatprep.mubr.f32.mxu0 0.0
    %4260 = vmatmul.mubr.f32.gmra.mrb[0].mxu0 %v3968
    %v4261 = vpop.f32.mrb[0].mxu0
    %v4262 = vadd.f32 0.0, %v4261
    %v4263 = vpop.f32.mrb[0].mxu0
    %v4264 = vadd.f32 0.0, %v4263
    %4265 = vmatprep.mubr.f32.mxu0 0.0
    %4266 = vmatmul.mubr.f32.gmra.mrb[0].mxu0 %v3971
    %v4267 = vpop.f32.mrb[0].mxu0
    %v4268 = vadd.f32 0.0, %v4267
    %v4269 = vpop.f32.mrb[0].mxu0
    %v4270 = vadd.f32 0.0, %v4269
    %4271 = vmatprep.mubr.f32.mxu0 0.0
    %4272 = vmatmul.mubr.f32.gmra.mrb[0].mxu0 %v3974
    %v4273 = vpop.f32.mrb[0].mxu0
    %v4274 = vadd.f32 0.0, %v4273
    %v4275 = vpop.f32.mrb[0].mxu0
    %v4276 = vadd.f32 0.0, %v4275
    %4277 = vmatprep.mubr.f32.mxu0 0.0
    %4278 = vmatmul.mubr.f32.gmra.mrb[0].mxu0 %v3977
    %v4279 = vpop.f32.mrb[0].mxu0
    %v4280 = vadd.f32 0.0, %v4279
    %v4281 = vpop.f32.mrb[0].mxu0
    %v4282 = vadd.f32 0.0, %v4281
    %4283 = vmatprep.mubr.f32.mxu0 0.0
    %4284 = vmatmul.mubr.f32.gmra.mrb[0].mxu0 %v3980
    %v4285 = vpop.f32.mrb[0].mxu0
    %v4286 = vadd.f32 0.0, %v4285
    %v4287 = vpop.f32.mrb[0].mxu0
    %v4288 = vadd.f32 0.0, %v4287
    %4289 = vmatprep.mubr.f32.mxu0 0.0
    %4290 = vmatmul.mubr.f32.gmra.mrb[0].mxu0 %v3983
    %v4291 = vpop.f32.mrb[0].mxu0
    %v4292 = vadd.f32 0.0, %v4291
    %v4293 = vpop.f32.mrb[0].mxu0
    %v4294 = vadd.f32 0.0, %v4293
    %4295 = vmatprep.mubr.f32.mxu0 0.0
    %4296 = vmatmul.mubr.f32.gmra.mrb[0].mxu0 %v3986
    %v4297 = vpop.f32.mrb[0].mxu0
    %v4298 = vadd.f32 0.0, %v4297
    %v4299 = vpop.f32.mrb[0].mxu0
    %v4300 = vadd.f32 0.0, %v4299
    %4301 = vmatprep.mubr.f32.mxu0 0.0
    %4302 = vmatmul.mubr.f32.gmra.mrb[0].mxu0 %v3989
    %v4303 = vpop.f32.mrb[0].mxu0
    %v4304 = vadd.f32 0.0, %v4303
    %v4305 = vpop.f32.mrb[0].mxu0
    %v4306 = vadd.f32 0.0, %v4305
    %4307 = vmatprep.mubr.f32.mxu0 0.0
    %4308 = vmatmul.mubr.f32.gmra.mrb[0].mxu0 %v3992
    %v4309 = vpop.f32.mrb[0].mxu0
    %v4310 = vadd.f32 0.0, %v4309
    %v4311 = vpop.f32.mrb[0].mxu0
    %v4312 = vadd.f32 0.0, %v4311
    %4313 = vmatprep.mubr.f32.mxu0 0.0
    %4314 = vmatmul.mubr.f32.gmra.mrb[0].mxu0 %v3995
    %v4315 = vpop.f32.mrb[0].mxu0
    %v4316 = vadd.f32 0.0, %v4315
    %v4317 = vpop.f32.mrb[0].mxu0
    %v4318 = vadd.f32 0.0, %v4317
    %4319 = vmatprep.mubr.f32.mxu0 0.0
    %4320 = vmatmul.mubr.f32.gmra.mrb[0].mxu0 %v3998
    %v4321 = vpop.f32.mrb[0].mxu0
    %v4322 = vadd.f32 0.0, %v4321
    %v4323 = vpop.f32.mrb[0].mxu0
    %v4324 = vadd.f32 0.0, %v4323
    %4325 = vmatprep.mubr.f32.mxu0 0.0
    %4326 = vmatmul.mubr.f32.gmra.mrb[0].mxu0 %v4001
    %v4327 = vpop.f32.mrb[0].mxu0
    %v4328 = vadd.f32 0.0, %v4327
    %v4329 = vpop.f32.mrb[0].mxu0
    %v4330 = vadd.f32 0.0, %v4329
    %4331 = vmatprep.mubr.f32.mxu0 0.0
    %4332 = vmatmul.mubr.f32.gmra.mrb[0].mxu0 %v4004
    %v4333 = vpop.f32.mrb[0].mxu0
    %v4334 = vadd.f32 0.0, %v4333
    %v4335 = vpop.f32.mrb[0].mxu0
    %v4336 = vadd.f32 0.0, %v4335
    %4337 = vmatprep.mubr.f32.mxu0 0.0
    %4338 = vmatmul.mubr.f32.gmra.mrb[0].mxu0 %v4007
    %v4339 = vpop.f32.mrb[0].mxu0
    %v4340 = vadd.f32 0.0, %v4339
    %v4341 = vpop.f32.mrb[0].mxu0
    %v4342 = vadd.f32 0.0, %v4341
    %4343 = vmatprep.mubr.f32.mxu0 0.0
    %4344 = vmatmul.mubr.f32.gmra.mrb[0].mxu0 %v4010
    %v4345 = vpop.f32.mrb[0].mxu0
    %v4346 = vadd.f32 0.0, %v4345
    %v4347 = vpop.f32.mrb[0].mxu0
    %v4348 = vadd.f32 0.0, %v4347
    %4349 = vmatprep.mubr.f32.mxu0 0.0
    %4350 = vmatmul.mubr.f32.gmra.mrb[0].mxu0 %v4013
    %v4351 = vpop.f32.mrb[0].mxu0
    %v4352 = vadd.f32 0.0, %v4351
    %v4353 = vpop.f32.mrb[0].mxu0
    %v4354 = vadd.f32 0.0, %v4353
    %4355 = vmatprep.mubr.f32.mxu0 0.0
    %4356 = vmatmul.mubr.f32.gmra.mrb[0].mxu0 %v4016
    %v4357 = vpop.f32.mrb[0].mxu0
    %v4358 = vadd.f32 0.0, %v4357
    %v4359 = vpop.f32.mrb[0].mxu0
    %v4360 = vadd.f32 0.0, %v4359
    %4361 = vmatprep.mubr.f32.mxu0 0.0
    %4362 = vmatmul.mubr.f32.gmra.mrb[0].mxu0 %v4019
    %v4363 = vpop.f32.mrb[0].mxu0
    %v4364 = vadd.f32 0.0, %v4363
    %v4365 = vpop.f32.mrb[0].mxu0
    %v4366 = vadd.f32 0.0, %v4365
    %4367 = vmatprep.mubr.f32.mxu0 0.0
    %4368 = vmatmul.mubr.f32.gmra.mrb[0].mxu0 %v4022
    %v4369 = vpop.f32.mrb[0].mxu0
    %v4370 = vadd.f32 0.0, %v4369
    %v4371 = vpop.f32.mrb[0].mxu0
    %v4372 = vadd.f32 0.0, %v4371
    %4373 = vmatprep.mubr.f32.mxu0 0.0
    %4374 = vmatmul.mubr.f32.gmra.mrb[0].mxu0 %v4025
    %v4375 = vpop.f32.mrb[0].mxu0
    %v4376 = vadd.f32 0.0, %v4375
    %v4377 = vpop.f32.mrb[0].mxu0
    %v4378 = vadd.f32 0.0, %v4377
    %4379 = vmatprep.mubr.f32.mxu0 0.0
    %4380 = vmatmul.mubr.f32.gmra.mrb[0].mxu0 %v4028
    %v4381 = vpop.f32.mrb[0].mxu0
    %v4382 = vadd.f32 0.0, %v4381
    %v4383 = vpop.f32.mrb[0].mxu0
    %v4384 = vadd.f32 0.0, %v4383
    %4385 = vmatprep.mubr.f32.mxu0 0.0
    %4386 = vmatmul.mubr.f32.gmra.mrb[0].mxu0 %v4031
    %v4387 = vpop.f32.mrb[0].mxu0
    %v4388 = vadd.f32 0.0, %v4387
    %v4389 = vpop.f32.mrb[0].mxu0
    %v4390 = vadd.f32 0.0, %v4389
    %4391 = vmatprep.mubr.f32.mxu0 0.0
    %4392 = vmatmul.mubr.f32.gmra.mrb[0].mxu0 %v4034
    %v4393 = vpop.f32.mrb[0].mxu0
    %v4394 = vadd.f32 0.0, %v4393
    %v4395 = vpop.f32.mrb[0].mxu0
    %v4396 = vadd.f32 0.0, %v4395
    %4397 = vmatprep.mubr.f32.mxu0 0.0
    %4398 = vmatmul.mubr.f32.gmra.mrb[0].mxu0 %v4037
    %v4399 = vpop.f32.mrb[0].mxu0
    %v4400 = vadd.f32 0.0, %v4399
    %v4401 = vpop.f32.mrb[0].mxu0
    %v4402 = vadd.f32 0.0, %v4401
    %4403 = vmatprep.mubr.f32.mxu0 0.0
    %4404 = vmatmul.mubr.f32.gmra.mrb[0].mxu0 %v4040
    %v4405 = vpop.f32.mrb[0].mxu0
    %v4406 = vadd.f32 0.0, %v4405
    %v4407 = vpop.f32.mrb[0].mxu0
    %v4408 = vadd.f32 0.0, %v4407
    %4409 = vmatprep.mubr.f32.mxu0 0.0
    %4410 = vmatmul.mubr.f32.gmra.mrb[0].mxu0 %v4043
    %v4411 = vpop.f32.mrb[0].mxu0
    %v4412 = vadd.f32 0.0, %v4411
    %v4413 = vpop.f32.mrb[0].mxu0
    %v4414 = vadd.f32 0.0, %v4413
    %4415 = vmatprep.mubr.f32.mxu0 0.0
    %4416 = vmatmul.mubr.f32.gmra.mrb[0].mxu0 %v4046
    %v4417 = vpop.f32.mrb[0].mxu0
    %v4418 = vadd.f32 0.0, %v4417
    %v4419 = vpop.f32.mrb[0].mxu0
    %v4420 = vadd.f32 0.0, %v4419
    %4421 = vmatprep.mubr.f32.mxu0 0.0
    %4422 = vmatmul.mubr.f32.gmra.mrb[0].mxu0 %v4049
    %v4423 = vpop.f32.mrb[0].mxu0
    %v4424 = vadd.f32 0.0, %v4423
    %v4425 = vpop.f32.mrb[0].mxu0
    %v4426 = vadd.f32 0.0, %v4425
    %4427 = vmatprep.mubr.f32.mxu0 0.0
    %4428 = vmatmul.mubr.f32.gmra.mrb[0].mxu0 %v4052
    %v4429 = vpop.f32.mrb[0].mxu0
    %v4430 = vadd.f32 0.0, %v4429
    %v4431 = vpop.f32.mrb[0].mxu0
    %v4432 = vadd.f32 0.0, %v4431
    %4433 = vmatprep.mubr.f32.mxu0 0.0
    %4434 = vmatmul.mubr.f32.gmra.mrb[0].mxu0 %v4055
    %v4435 = vpop.f32.mrb[0].mxu0
    %v4436 = vadd.f32 0.0, %v4435
    %v4437 = vpop.f32.mrb[0].mxu0
    %v4438 = vadd.f32 0.0, %v4437
    %4439 = vmatprep.mubr.f32.mxu0 0.0
    %4440 = vmatmul.mubr.f32.gmra.mrb[0].mxu0 %v4058
    %v4441 = vpop.f32.mrb[0].mxu0
    %v4442 = vadd.f32 0.0, %v4441
    %v4443 = vpop.f32.mrb[0].mxu0
    %v4444 = vadd.f32 0.0, %v4443
    %4445 = vmatprep.mubr.f32.mxu0 0.0
    %4446 = vmatmul.mubr.f32.gmra.mrb[0].mxu0 %v4061
    %v4447 = vpop.f32.mrb[0].mxu0
    %v4448 = vadd.f32 0.0, %v4447
    %v4449 = vpop.f32.mrb[0].mxu0
    %v4450 = vadd.f32 0.0, %v4449
    %4451 = vmatprep.mubr.f32.mxu0 0.0
    %4452 = vmatmul.mubr.f32.gmra.mrb[0].mxu0 %v4064
    %v4453 = vpop.f32.mrb[0].mxu0
    %v4454 = vadd.f32 0.0, %v4453
    %v4455 = vpop.f32.mrb[0].mxu0
    %v4456 = vadd.f32 0.0, %v4455
    %4457 = vmatprep.mubr.f32.mxu0 0.0
    %4458 = vmatmul.mubr.f32.gmra.mrb[0].mxu0 %v4067
    %v4459 = vpop.f32.mrb[0].mxu0
    %v4460 = vadd.f32 0.0, %v4459
    %v4461 = vpop.f32.mrb[0].mxu0
    %v4462 = vadd.f32 0.0, %v4461
    %4463 = vmatprep.mubr.f32.mxu0 0.0
    %4464 = vmatmul.mubr.f32.gmra.mrb[0].mxu0 %v4070
    %v4465 = vpop.f32.mrb[0].mxu0
    %v4466 = vadd.f32 0.0, %v4465
    %v4467 = vpop.f32.mrb[0].mxu0
    %v4468 = vadd.f32 0.0, %v4467
    %4469 = vmatprep.mubr.f32.mxu0 0.0
    %4470 = vmatmul.mubr.f32.gmra.mrb[0].mxu0 %v4073
    %v4471 = vpop.f32.mrb[0].mxu0
    %v4472 = vadd.f32 0.0, %v4471
    %v4473 = vpop.f32.mrb[0].mxu0
    %v4474 = vadd.f32 0.0, %v4473
    %4475 = vmatprep.mubr.f32.mxu0 0.0
    %4476 = vmatmul.mubr.f32.gmra.mrb[0].mxu0 %v4076
    %v4477 = vpop.f32.mrb[0].mxu0
    %v4478 = vadd.f32 0.0, %v4477
    %v4479 = vpop.f32.mrb[0].mxu0
    %v4480 = vadd.f32 0.0, %v4479
    %4481 = vmatprep.mubr.f32.mxu0 0.0
    %4482 = vmatmul.mubr.f32.gmra.mrb[0].mxu0 %v4079
    %v4483 = vpop.f32.mrb[0].mxu0
    %v4484 = vadd.f32 0.0, %v4483
    %v4485 = vpop.f32.mrb[0].mxu0
    %v4486 = vadd.f32 0.0, %v4485
    %4487 = vmatprep.mubr.f32.mxu0 0.0
    %4488 = vmatmul.mubr.f32.gmra.mrb[0].mxu0 %v4082
    %v4489 = vpop.f32.mrb[0].mxu0
    %v4490 = vadd.f32 0.0, %v4489
    %v4491 = vpop.f32.mrb[0].mxu0
    %v4492 = vadd.f32 0.0, %v4491
    %4493 = vmatprep.mubr.f32.mxu0 0.0
    %4494 = vmatmul.mubr.f32.gmra.mrb[0].mxu0 %v4085
    %v4495 = vpop.f32.mrb[0].mxu0
    %v4496 = vadd.f32 0.0, %v4495
    %v4497 = vpop.f32.mrb[0].mxu0
    %v4498 = vadd.f32 0.0, %v4497
    %4499 = vmatprep.mubr.f32.mxu0 0.0
    %4500 = vmatmul.mubr.f32.gmra.mrb[0].mxu0 %v4088
    %v4501 = vpop.f32.mrb[0].mxu0
    %v4502 = vadd.f32 0.0, %v4501
    %v4503 = vpop.f32.mrb[0].mxu0
    %v4504 = vadd.f32 0.0, %v4503
    %4505 = vmatprep.mubr.f32.mxu0 0.0
    %4506 = vmatmul.mubr.f32.gmra.mrb[0].mxu0 %v4091
    %v4507 = vpop.f32.mrb[0].mxu0
    %v4508 = vadd.f32 0.0, %v4507
    %v4509 = vpop.f32.mrb[0].mxu0
    %v4510 = vadd.f32 0.0, %v4509
    %4511 = vmatprep.mubr.f32.mxu0 0.0
    %4512 = vmatmul.mubr.f32.gmra.mrb[0].mxu0 %v4094
    %v4513 = vpop.f32.mrb[0].mxu0
    %v4514 = vadd.f32 0.0, %v4513
    %v4515 = vpop.f32.mrb[0].mxu0
    %v4516 = vadd.f32 0.0, %v4515
    %4517 = vmatprep.mubr.f32.mxu0 0.0
    %4518 = vmatmul.mubr.f32.gmra.mrb[0].mxu0 %v4097
    %v4519 = vpop.f32.mrb[0].mxu0
    %v4520 = vadd.f32 0.0, %v4519
    %v4521 = vpop.f32.mrb[0].mxu0
    %v4522 = vadd.f32 0.0, %v4521
    %4523 = vmatprep.mubr.f32.mxu0 0.0
    %4524 = vmatmul.mubr.f32.gmra.mrb[0].mxu0 %v4100
    %v4525 = vpop.f32.mrb[0].mxu0
    %v4526 = vadd.f32 0.0, %v4525
    %v4527 = vpop.f32.mrb[0].mxu0
    %v4528 = vadd.f32 0.0, %v4527
    %4529 = vmatprep.mubr.f32.mxu0 0.0
    %4530 = vmatmul.mubr.f32.gmra.mrb[0].mxu0 %v4103
    %v4531 = vpop.f32.mrb[0].mxu0
    %v4532 = vadd.f32 0.0, %v4531
    %v4533 = vpop.f32.mrb[0].mxu0
    %v4534 = vadd.f32 0.0, %v4533
    %4535 = vmatprep.mubr.f32.mxu0 0.0
    %4536 = vmatmul.mubr.f32.gmra.mrb[0].mxu0 %v4106
    %v4537 = vpop.f32.mrb[0].mxu0
    %v4538 = vadd.f32 0.0, %v4537
    %v4539 = vpop.f32.mrb[0].mxu0
    %v4540 = vadd.f32 0.0, %v4539
    %4541 = vmatprep.mubr.f32.mxu0 0.0
    %4542 = vmatmul.mubr.f32.gmra.mrb[0].mxu0 %v4109
    %v4543 = vpop.f32.mrb[0].mxu0
    %v4544 = vadd.f32 0.0, %v4543
    %v4545 = vpop.f32.mrb[0].mxu0
    %v4546 = vadd.f32 0.0, %v4545
    %4547 = vmatprep.mubr.f32.mxu0 0.0
    %4548 = vmatmul.mubr.f32.gmra.mrb[0].mxu0 %v4112
    %v4549 = vpop.f32.mrb[0].mxu0
    %v4550 = vadd.f32 0.0, %v4549
    %v4551 = vpop.f32.mrb[0].mxu0
    %v4552 = vadd.f32 0.0, %v4551
    %4553 = vmatprep.mubr.f32.mxu0 0.0
    %4554 = vmatmul.mubr.f32.gmra.mrb[0].mxu0 %v4115
    %v4555 = vpop.f32.mrb[0].mxu0
    %v4556 = vadd.f32 0.0, %v4555
    %v4557 = vpop.f32.mrb[0].mxu0
    %v4558 = vadd.f32 0.0, %v4557
    %4559 = vmatprep.mubr.f32.mxu0 0.0
    %4560 = vmatmul.mubr.f32.gmra.mrb[0].mxu0 %v4118
    %v4561 = vpop.f32.mrb[0].mxu0
    %v4562 = vadd.f32 0.0, %v4561
    %v4563 = vpop.f32.mrb[0].mxu0
    %v4564 = vadd.f32 0.0, %v4563
    %4565 = vmatprep.mubr.f32.mxu0 0.0
    %4566 = vmatmul.mubr.f32.gmra.mrb[0].mxu0 %v4121
    %v4567 = vpop.f32.mrb[0].mxu0
    %v4568 = vadd.f32 0.0, %v4567
    %v4569 = vpop.f32.mrb[0].mxu0
    %v4570 = vadd.f32 0.0, %v4569
    %4571 = vdwg.mxu0
    %v4572 = vmul.f32 %v4190, %v195
    %v4573 = vmul.f32 %v4192, %v197
    %v4574 = vmul.f32 %v4196, %v199
    %v4575 = vmul.f32 %v4198, %v201
    %v4576 = vmul.f32 %v4202, %v257
    %v4577 = vmul.f32 %v4204, %v259
    %v4578 = vmul.f32 %v4208, %v261
    %v4579 = vmul.f32 %v4210, %v263
    %v4580 = vmul.f32 %v4214, %v319
    %v4581 = vmul.f32 %v4216, %v321
    %v4582 = vmul.f32 %v4220, %v323
    %v4583 = vmul.f32 %v4222, %v325
    %v4584 = vmul.f32 %v4226, %v381
    %v4585 = vmul.f32 %v4228, %v383
    %v4586 = vmul.f32 %v4232, %v385
    %v4587 = vmul.f32 %v4234, %v387
    %v4588 = vmul.f32 %v4238, %v443
    %v4589 = vmul.f32 %v4240, %v445
    %v4590 = vmul.f32 %v4244, %v447
    %v4591 = vmul.f32 %v4246, %v449
    %v4592 = vmul.f32 %v4250, %v505
    %v4593 = vmul.f32 %v4252, %v507
    %v4594 = vmul.f32 %v4256, %v509
    %v4595 = vmul.f32 %v4258, %v511
    %v4596 = vmul.f32 %v4262, %v567
    %v4597 = vmul.f32 %v4264, %v569
    %v4598 = vmul.f32 %v4268, %v571
    %v4599 = vmul.f32 %v4270, %v573
    %v4600 = vmul.f32 %v4274, %v629
    %v4601 = vmul.f32 %v4276, %v631
    %v4602 = vmul.f32 %v4280, %v633
    %v4603 = vmul.f32 %v4282, %v635
    %v4604 = vmul.f32 %v4286, %v691
    %v4605 = vmul.f32 %v4288, %v693
    %v4606 = vmul.f32 %v4292, %v695
    %v4607 = vmul.f32 %v4294, %v697
    %v4608 = vmul.f32 %v4298, %v753
    %v4609 = vmul.f32 %v4300, %v755
    %v4610 = vmul.f32 %v4304, %v757
    %v4611 = vmul.f32 %v4306, %v759
    %v4612 = vmul.f32 %v4310, %v815
    %v4613 = vmul.f32 %v4312, %v817
    %v4614 = vmul.f32 %v4316, %v819
    %v4615 = vmul.f32 %v4318, %v821
    %v4616 = vmul.f32 %v4322, %v877
    %v4617 = vmul.f32 %v4324, %v879
    %v4618 = vmul.f32 %v4328, %v881
    %v4619 = vmul.f32 %v4330, %v883
    %v4620 = vmul.f32 %v4334, %v939
    %v4621 = vmul.f32 %v4336, %v941
    %v4622 = vmul.f32 %v4340, %v943
    %v4623 = vmul.f32 %v4342, %v945
    %v4624 = vmul.f32 %v4346, %v1001
    %v4625 = vmul.f32 %v4348, %v1003
    %v4626 = vmul.f32 %v4352, %v1005
    %v4627 = vmul.f32 %v4354, %v1007
    %v4628 = vmul.f32 %v4358, %v1063
    %v4629 = vmul.f32 %v4360, %v1065
    %v4630 = vmul.f32 %v4364, %v1067
    %v4631 = vmul.f32 %v4366, %v1069
    %v4632 = vmul.f32 %v4370, %v1125
    %v4633 = vmul.f32 %v4372, %v1127
    %v4634 = vmul.f32 %v4376, %v1129
    %v4635 = vmul.f32 %v4378, %v1131
    %v4636 = vmul.f32 %v4382, %v1187
    %v4637 = vmul.f32 %v4384, %v1189
    %v4638 = vmul.f32 %v4388, %v1191
    %v4639 = vmul.f32 %v4390, %v1193
    %v4640 = vmul.f32 %v4394, %v1249
    %v4641 = vmul.f32 %v4396, %v1251
    %v4642 = vmul.f32 %v4400, %v1253
    %v4643 = vmul.f32 %v4402, %v1255
    %v4644 = vmul.f32 %v4406, %v1311
    %v4645 = vmul.f32 %v4408, %v1313
    %v4646 = vmul.f32 %v4412, %v1315
    %v4647 = vmul.f32 %v4414, %v1317
    %v4648 = vmul.f32 %v4418, %v1373
    %v4649 = vmul.f32 %v4420, %v1375
    %v4650 = vmul.f32 %v4424, %v1377
    %v4651 = vmul.f32 %v4426, %v1379
    %v4652 = vmul.f32 %v4430, %v1435
    %v4653 = vmul.f32 %v4432, %v1437
    %v4654 = vmul.f32 %v4436, %v1439
    %v4655 = vmul.f32 %v4438, %v1441
    %v4656 = vmul.f32 %v4442, %v1497
    %v4657 = vmul.f32 %v4444, %v1499
    %v4658 = vmul.f32 %v4448, %v1501
    %v4659 = vmul.f32 %v4450, %v1503
    %v4660 = vmul.f32 %v4454, %v1559
    %v4661 = vmul.f32 %v4456, %v1561
    %v4662 = vmul.f32 %v4460, %v1563
    %v4663 = vmul.f32 %v4462, %v1565
    %v4664 = vmul.f32 %v4466, %v1621
    %v4665 = vmul.f32 %v4468, %v1623
    %v4666 = vmul.f32 %v4472, %v1625
    %v4667 = vmul.f32 %v4474, %v1627
    %v4668 = vmul.f32 %v4478, %v1683
    %v4669 = vmul.f32 %v4480, %v1685
    %v4670 = vmul.f32 %v4484, %v1687
    %v4671 = vmul.f32 %v4486, %v1689
    %v4672 = vmul.f32 %v4490, %v1745
    %v4673 = vmul.f32 %v4492, %v1747
    %v4674 = vmul.f32 %v4496, %v1749
    %v4675 = vmul.f32 %v4498, %v1751
    %v4676 = vmul.f32 %v4502, %v1807
    %v4677 = vmul.f32 %v4504, %v1809
    %v4678 = vmul.f32 %v4508, %v1811
    %v4679 = vmul.f32 %v4510, %v1813
    %v4680 = vmul.f32 %v4514, %v1869
    %v4681 = vmul.f32 %v4516, %v1871
    %v4682 = vmul.f32 %v4520, %v1873
    %v4683 = vmul.f32 %v4522, %v1875
    %v4684 = vmul.f32 %v4526, %v1931
    %v4685 = vmul.f32 %v4528, %v1933
    %v4686 = vmul.f32 %v4532, %v1935
    %v4687 = vmul.f32 %v4534, %v1937
    %v4688 = vmul.f32 %v4538, %v1993
    %v4689 = vmul.f32 %v4540, %v1995
    %v4690 = vmul.f32 %v4544, %v1997
    %v4691 = vmul.f32 %v4546, %v1999
    %v4692 = vmul.f32 %v4550, %v2055
    %v4693 = vmul.f32 %v4552, %v2057
    %v4694 = vmul.f32 %v4556, %v2059
    %v4695 = vmul.f32 %v4558, %v2061
    %v4696 = vmul.f32 %v4562, %v2117
    %v4697 = vmul.f32 %v4564, %v2119
    %v4698 = vmul.f32 %v4568, %v2121
    %v4699 = vmul.f32 %v4570, %v2123
    %v4700 = vadd.f32 %v4572, %v4576
    %v4701 = vadd.f32 %v4700, %v4580
    %v4702 = vadd.f32 %v4701, %v4584
    %v4703 = vadd.f32 %v4702, %v4588
    %v4704 = vadd.f32 %v4703, %v4592
    %v4705 = vadd.f32 %v4704, %v4596
    %v4706 = vadd.f32 %v4705, %v4600
    %v4707 = vadd.f32 %v4706, %v4604
    %v4708 = vadd.f32 %v4707, %v4608
    %v4709 = vadd.f32 %v4708, %v4612
    %v4710 = vadd.f32 %v4709, %v4616
    %v4711 = vadd.f32 %v4710, %v4620
    %v4712 = vadd.f32 %v4711, %v4624
    %v4713 = vadd.f32 %v4712, %v4628
    %v4714 = vadd.f32 %v4713, %v4632
    %v4715 = vadd.f32 %v4714, %v4636
    %v4716 = vadd.f32 %v4715, %v4640
    %v4717 = vadd.f32 %v4716, %v4644
    %v4718 = vadd.f32 %v4717, %v4648
    %v4719 = vadd.f32 %v4718, %v4652
    %v4720 = vadd.f32 %v4719, %v4656
    %v4721 = vadd.f32 %v4720, %v4660
    %v4722 = vadd.f32 %v4721, %v4664
    %v4723 = vadd.f32 %v4722, %v4668
    %v4724 = vadd.f32 %v4723, %v4672
    %v4725 = vadd.f32 %v4724, %v4676
    %v4726 = vadd.f32 %v4725, %v4680
    %v4727 = vadd.f32 %v4726, %v4684
    %v4728 = vadd.f32 %v4727, %v4688
    %v4729 = vadd.f32 %v4728, %v4692
    %v4730 = vadd.f32 %v4729, %v4696
    %v4731 = vsel %vm2156, %v4573, 0.0
    %v4732 = vsel %vm2156, %v4577, 0.0
    %v4733 = vadd.f32 %v4731, %v4732
    %v4734 = vsel %vm2156, %v4581, 0.0
    %v4735 = vadd.f32 %v4733, %v4734
    %v4736 = vsel %vm2156, %v4585, 0.0
    %v4737 = vadd.f32 %v4735, %v4736
    %v4738 = vsel %vm2156, %v4589, 0.0
    %v4739 = vadd.f32 %v4737, %v4738
    %v4740 = vsel %vm2156, %v4593, 0.0
    %v4741 = vadd.f32 %v4739, %v4740
    %v4742 = vsel %vm2156, %v4597, 0.0
    %v4743 = vadd.f32 %v4741, %v4742
    %v4744 = vsel %vm2156, %v4601, 0.0
    %v4745 = vadd.f32 %v4743, %v4744
    %v4746 = vsel %vm2156, %v4605, 0.0
    %v4747 = vadd.f32 %v4745, %v4746
    %v4748 = vsel %vm2156, %v4609, 0.0
    %v4749 = vadd.f32 %v4747, %v4748
    %v4750 = vsel %vm2156, %v4613, 0.0
    %v4751 = vadd.f32 %v4749, %v4750
    %v4752 = vsel %vm2156, %v4617, 0.0
    %v4753 = vadd.f32 %v4751, %v4752
    %v4754 = vsel %vm2156, %v4621, 0.0
    %v4755 = vadd.f32 %v4753, %v4754
    %v4756 = vsel %vm2156, %v4625, 0.0
    %v4757 = vadd.f32 %v4755, %v4756
    %v4758 = vsel %vm2156, %v4629, 0.0
    %v4759 = vadd.f32 %v4757, %v4758
    %v4760 = vsel %vm2156, %v4633, 0.0
    %v4761 = vadd.f32 %v4759, %v4760
    %v4762 = vsel %vm2156, %v4637, 0.0
    %v4763 = vadd.f32 %v4761, %v4762
    %v4764 = vsel %vm2156, %v4641, 0.0
    %v4765 = vadd.f32 %v4763, %v4764
    %v4766 = vsel %vm2156, %v4645, 0.0
    %v4767 = vadd.f32 %v4765, %v4766
    %v4768 = vsel %vm2156, %v4649, 0.0
    %v4769 = vadd.f32 %v4767, %v4768
    %v4770 = vsel %vm2156, %v4653, 0.0
    %v4771 = vadd.f32 %v4769, %v4770
    %v4772 = vsel %vm2156, %v4657, 0.0
    %v4773 = vadd.f32 %v4771, %v4772
    %v4774 = vsel %vm2156, %v4661, 0.0
    %v4775 = vadd.f32 %v4773, %v4774
    %v4776 = vsel %vm2156, %v4665, 0.0
    %v4777 = vadd.f32 %v4775, %v4776
    %v4778 = vsel %vm2156, %v4669, 0.0
    %v4779 = vadd.f32 %v4777, %v4778
    %v4780 = vsel %vm2156, %v4673, 0.0
    %v4781 = vadd.f32 %v4779, %v4780
    %v4782 = vsel %vm2156, %v4677, 0.0
    %v4783 = vadd.f32 %v4781, %v4782
    %v4784 = vsel %vm2156, %v4681, 0.0
    %v4785 = vadd.f32 %v4783, %v4784
    %v4786 = vsel %vm2156, %v4685, 0.0
    %v4787 = vadd.f32 %v4785, %v4786
    %v4788 = vsel %vm2156, %v4689, 0.0
    %v4789 = vadd.f32 %v4787, %v4788
    %v4790 = vsel %vm2156, %v4693, 0.0
    %v4791 = vadd.f32 %v4789, %v4790
    %v4792 = vsel %vm2156, %v4697, 0.0
    %v4793 = vadd.f32 %v4791, %v4792
    %v4794 = vadd.f32 %v4574, %v4578
    %v4795 = vadd.f32 %v4794, %v4582
    %v4796 = vadd.f32 %v4795, %v4586
    %v4797 = vadd.f32 %v4796, %v4590
    %v4798 = vadd.f32 %v4797, %v4594
    %v4799 = vadd.f32 %v4798, %v4598
    %v4800 = vadd.f32 %v4799, %v4602
    %v4801 = vadd.f32 %v4800, %v4606
    %v4802 = vadd.f32 %v4801, %v4610
    %v4803 = vadd.f32 %v4802, %v4614
    %v4804 = vadd.f32 %v4803, %v4618
    %v4805 = vadd.f32 %v4804, %v4622
    %v4806 = vadd.f32 %v4805, %v4626
    %v4807 = vadd.f32 %v4806, %v4630
    %v4808 = vadd.f32 %v4807, %v4634
    %v4809 = vadd.f32 %v4808, %v4638
    %v4810 = vadd.f32 %v4809, %v4642
    %v4811 = vadd.f32 %v4810, %v4646
    %v4812 = vadd.f32 %v4811, %v4650
    %v4813 = vadd.f32 %v4812, %v4654
    %v4814 = vadd.f32 %v4813, %v4658
    %v4815 = vadd.f32 %v4814, %v4662
    %v4816 = vadd.f32 %v4815, %v4666
    %v4817 = vadd.f32 %v4816, %v4670
    %v4818 = vadd.f32 %v4817, %v4674
    %v4819 = vadd.f32 %v4818, %v4678
    %v4820 = vadd.f32 %v4819, %v4682
    %v4821 = vadd.f32 %v4820, %v4686
    %v4822 = vadd.f32 %v4821, %v4690
    %v4823 = vadd.f32 %v4822, %v4694
    %v4824 = vadd.f32 %v4823, %v4698
    %v4825 = vsel %vm2156, %v4575, 0.0
    %v4826 = vsel %vm2156, %v4579, 0.0
    %v4827 = vadd.f32 %v4825, %v4826
    %v4828 = vsel %vm2156, %v4583, 0.0
    %v4829 = vadd.f32 %v4827, %v4828
    %v4830 = vsel %vm2156, %v4587, 0.0
    %v4831 = vadd.f32 %v4829, %v4830
    %v4832 = vsel %vm2156, %v4591, 0.0
    %v4833 = vadd.f32 %v4831, %v4832
    %v4834 = vsel %vm2156, %v4595, 0.0
    %v4835 = vadd.f32 %v4833, %v4834
    %v4836 = vsel %vm2156, %v4599, 0.0
    %v4837 = vadd.f32 %v4835, %v4836
    %v4838 = vsel %vm2156, %v4603, 0.0
    %v4839 = vadd.f32 %v4837, %v4838
    %v4840 = vsel %vm2156, %v4607, 0.0
    %v4841 = vadd.f32 %v4839, %v4840
    %v4842 = vsel %vm2156, %v4611, 0.0
    %v4843 = vadd.f32 %v4841, %v4842
    %v4844 = vsel %vm2156, %v4615, 0.0
    %v4845 = vadd.f32 %v4843, %v4844
    %v4846 = vsel %vm2156, %v4619, 0.0
    %v4847 = vadd.f32 %v4845, %v4846
    %v4848 = vsel %vm2156, %v4623, 0.0
    %v4849 = vadd.f32 %v4847, %v4848
    %v4850 = vsel %vm2156, %v4627, 0.0
    %v4851 = vadd.f32 %v4849, %v4850
    %v4852 = vsel %vm2156, %v4631, 0.0
    %v4853 = vadd.f32 %v4851, %v4852
    %v4854 = vsel %vm2156, %v4635, 0.0
    %v4855 = vadd.f32 %v4853, %v4854
    %v4856 = vsel %vm2156, %v4639, 0.0
    %v4857 = vadd.f32 %v4855, %v4856
    %v4858 = vsel %vm2156, %v4643, 0.0
    %v4859 = vadd.f32 %v4857, %v4858
    %v4860 = vsel %vm2156, %v4647, 0.0
    %v4861 = vadd.f32 %v4859, %v4860
    %v4862 = vsel %vm2156, %v4651, 0.0
    %v4863 = vadd.f32 %v4861, %v4862
    %v4864 = vsel %vm2156, %v4655, 0.0
    %v4865 = vadd.f32 %v4863, %v4864
    %v4866 = vsel %vm2156, %v4659, 0.0
    %v4867 = vadd.f32 %v4865, %v4866
    %v4868 = vsel %vm2156, %v4663, 0.0
    %v4869 = vadd.f32 %v4867, %v4868
    %v4870 = vsel %vm2156, %v4667, 0.0
    %v4871 = vadd.f32 %v4869, %v4870
    %v4872 = vsel %vm2156, %v4671, 0.0
    %v4873 = vadd.f32 %v4871, %v4872
    %v4874 = vsel %vm2156, %v4675, 0.0
    %v4875 = vadd.f32 %v4873, %v4874
    %v4876 = vsel %vm2156, %v4679, 0.0
    %v4877 = vadd.f32 %v4875, %v4876
    %v4878 = vsel %vm2156, %v4683, 0.0
    %v4879 = vadd.f32 %v4877, %v4878
    %v4880 = vsel %vm2156, %v4687, 0.0
    %v4881 = vadd.f32 %v4879, %v4880
    %v4882 = vsel %vm2156, %v4691, 0.0
    %v4883 = vadd.f32 %v4881, %v4882
    %v4884 = vsel %vm2156, %v4695, 0.0
    %v4885 = vadd.f32 %v4883, %v4884
    %v4886 = vsel %vm2156, %v4699, 0.0
    %v4887 = vadd.f32 %v4885, %v4886
    %v4888 = vmul.f32 %v4730, %v4730
    %v4889 = vmul.f32 %v4793, %v4793
    %v4890 = vmul.f32 %v4824, %v4824
    %v4891 = vmul.f32 %v4887, %v4887
    %v4893 = vsel %vm2156, %v4889, 0
    %v4896 = vsel %vm2156, %v4891, 0
    %4898 = vmatprep.subr.mxu0 0.0
    %4899 = vmatpush1.msra.mxu0 %v119
    %4900 = vmatprep.subr.mxu0 0.0
    %4901 = vmatpush1.msra.mxu0 %v120
    %4902 = vmatprep.subr.mxu0 0.0
    %4903 = vmatpush1.msra.mxu0 %v121
    %4904 = vmatprep.subr.mxu0 0.0
    %4905 = vmatpush1.msra.mxu0 %v122
    %4906 = vmatprep.subr.mxu0 0.0
    %4907 = vmatpush1.msra.mxu0 %v123
    %4908 = vmatprep.subr.mxu0 0.0
    %4909 = vmatpush1.msra.mxu0 %v124
    %4910 = vmatprep.subr.mxu0 0.0
    %4911 = vmatpush1.msra.mxu0 %v125
    %4912 = vmatprep.subr.mxu0 0.0
    %4913 = vmatpush1.msra.mxu0 %v126
    %4914 = vmatprep.subr.mxu0 0.0
    %4915 = vmatpush1.msra.mxu0 %v127
    %4916 = vmatprep.subr.mxu0 0.0
    %4917 = vmatpush1.msra.mxu0 %v128
    %4918 = vmatprep.subr.mxu0 0.0
    %4919 = vmatpush1.msra.mxu0 %v129
    %4920 = vmatprep.subr.mxu0 0.0
    %4921 = vmatpush1.msra.mxu0 %v130
    %4922 = vmatprep.subr.mxu0 0.0
    %4923 = vmatpush1.msra.mxu0 %v131
    %4924 = vmatprep.subr.mxu0 0.0
    %4925 = vmatpush1.msra.mxu0 %v132
    %4926 = vmatprep.subr.mxu0 0.0
    %4927 = vmatpush1.msra.mxu0 %v133
    %4928 = vmatprep.subr.mxu0 0.0
    %4929 = vmatpush1.msra.mxu0 %v134
    %4930 = vmatprep.subr.mxu0 0.0
    %4931 = vmatpush1.msra.mxu0 %v135
    %4932 = vmatprep.subr.mxu0 0.0
    %4933 = vmatpush1.msra.mxu0 %v136
    %4934 = vmatprep.subr.mxu0 0.0
    %4935 = vmatpush1.msra.mxu0 %v137
    %4936 = vmatprep.subr.mxu0 0.0
    %4937 = vmatpush1.msra.mxu0 %v138
    %4938 = vmatprep.subr.mxu0 0.0
    %4939 = vmatpush1.msra.mxu0 0.0
    %4940 = vmatprep.subr.mxu0 0.0
    %4941 = vmatpush1.msra.mxu0 0.0
    %4942 = vmatprep.subr.mxu0 0.0
    %4943 = vmatpush1.msra.mxu0 0.0
    %4944 = vmatprep.subr.mxu0 0.0
    %4945 = vmatpush1.msra.mxu0 0.0
    %4946 = vmatprep.subr.mxu0 0.0
    %4947 = vmatpush1.msra.mxu0 0.0
    %4948 = vmatprep.subr.mxu0 0.0
    %4949 = vmatpush1.msra.mxu0 0.0
    %4950 = vmatprep.subr.mxu0 0.0
    %4951 = vmatpush1.msra.mxu0 0.0
    %4952 = vmatprep.subr.mxu0 0.0
    %4953 = vmatpush1.msra.mxu0 0.0
    %4954 = vmatprep.subr.mxu0 0.0
    %4955 = vmatpush1.msra.mxu0 0.0
    %4956 = vmatprep.subr.mxu0 0.0
    %4957 = vmatpush1.msra.mxu0 0.0
    %4958 = vmatprep.subr.mxu0 0.0
    %4959 = vmatpush1.msra.mxu0 0.0
    %4960 = vmatprep.subr.mxu0 0.0
    %4961 = vmatpush1.msra.mxu0 0.0
    %4962 = vmatprep.mubr.f32.mxu0 %v4893
    %4963 = vmatmul.mubr.f32.gmra.mrb[0].mxu0 %v4888
    %v4964 = vpop.f32.mrb[0].mxu0
    %v4965 = vadd.f32 0.0, %v4964
    %v4966 = vpop.f32.mrb[0].mxu0
    %4967 = vmatprep.mubr.f32.mxu0 %v4896
    %4968 = vmatmul.mubr.f32.gmra.mrb[0].mxu0 %v4890
    %v4969 = vpop.f32.mrb[0].mxu0
    %v4970 = vadd.f32 0.0, %v4969
    %v4971 = vpop.f32.mrb[0].mxu0
    %4972 = vdwg.mxu0
    %v4973 = vrsqrt.pop %v4965
    %v4974 = vmul.f32 %v4965, %v4973
    %vm4975 = vcmp.eq.f32.partialorder %v4965, inf
    %v4976 = vsel %vm4975, %v4965, %v4974
    %vm4977 = vcmp.eq.f32.partialorder %v4965, 0.0
    %v4978 = vand.u32 %v4965, 2147483648
    %v4979 = vsel %vm4977, %v4978, %v4976
    %v4980 = vrsqrt.pop %v4970
    %v4981 = vmul.f32 %v4970, %v4980
    %vm4982 = vcmp.eq.f32.partialorder %v4970, inf
    %v4983 = vsel %vm4982, %v4970, %v4981
    %vm4984 = vcmp.eq.f32.partialorder %v4970, 0.0
    %v4985 = vand.u32 %v4970, 2147483648
    %v4986 = vsel %vm4984, %v4985, %v4983
    %v4987 = vadd.f32 %v4965, 1.0
    %v4988 = vadd.f32 %v4970, 1.0
    %v4989 = vadd.f32 %v4979, 1e-08
    %v4990 = vadd.f32 %v4986, 1e-08
    %v4991 = vmul.f32 %v4987, %v4989
    %v4992 = vmul.f32 %v4988, %v4990
    %v4993 = vrcp.pop %v4991
    %v4994 = vrcp.pop %v4992
    %v4995 = vmul.f32 %v4965, %v4993
    %v4996 = vmul.f32 %v4970, %v4994
    %v4998 = vsel %vm2427, %v4995, 0
    %v5001 = vsel %vm2427, %v4996, 0
    %5003 = vmatprep.subr.mxu0 %v116
    %5004 = vmatpush1.msra.mxu0 %v115
    %5005 = vmatprep.subr.mxu0 %v2439
    %5006 = vmatpush1.msra.mxu0 %v2436
    %5007 = vmatprep.subr.mxu0 0.0
    %5008 = vmatpush1.msra.mxu0 0.0
    %5009 = vmatprep.subr.mxu0 0.0
    %5010 = vmatpush1.msra.mxu0 0.0
    %5011 = vmatprep.subr.mxu0 0.0
    %5012 = vmatpush1.msra.mxu0 0.0
    %5013 = vmatprep.subr.mxu0 0.0
    %5014 = vmatpush1.msra.mxu0 0.0
    %5015 = vmatprep.subr.mxu0 0.0
    %5016 = vmatpush1.msra.mxu0 0.0
    %5017 = vmatprep.subr.mxu0 0.0
    %5018 = vmatpush1.msra.mxu0 0.0
    %5019 = vmatprep.subr.mxu0 0.0
    %5020 = vmatpush1.msra.mxu0 0.0
    %5021 = vmatprep.subr.mxu0 0.0
    %5022 = vmatpush1.msra.mxu0 0.0
    %5023 = vmatprep.subr.mxu0 0.0
    %5024 = vmatpush1.msra.mxu0 0.0
    %5025 = vmatprep.subr.mxu0 0.0
    %5026 = vmatpush1.msra.mxu0 0.0
    %5027 = vmatprep.subr.mxu0 0.0
    %5028 = vmatpush1.msra.mxu0 0.0
    %5029 = vmatprep.subr.mxu0 0.0
    %5030 = vmatpush1.msra.mxu0 0.0
    %5031 = vmatprep.subr.mxu0 0.0
    %5032 = vmatpush1.msra.mxu0 0.0
    %5033 = vmatprep.subr.mxu0 0.0
    %5034 = vmatpush1.msra.mxu0 0.0
    %5035 = vmatprep.subr.mxu0 0.0
    %5036 = vmatpush1.msra.mxu0 0.0
    %5037 = vmatprep.subr.mxu0 0.0
    %5038 = vmatpush1.msra.mxu0 0.0
    %5039 = vmatprep.subr.mxu0 0.0
    %5040 = vmatpush1.msra.mxu0 0.0
    %5041 = vmatprep.subr.mxu0 0.0
    %5042 = vmatpush1.msra.mxu0 0.0
    %5043 = vmatprep.subr.mxu0 0.0
    %5044 = vmatpush1.msra.mxu0 0.0
    %5045 = vmatprep.subr.mxu0 0.0
    %5046 = vmatpush1.msra.mxu0 0.0
    %5047 = vmatprep.subr.mxu0 0.0
    %5048 = vmatpush1.msra.mxu0 0.0
    %5049 = vmatprep.subr.mxu0 0.0
    %5050 = vmatpush1.msra.mxu0 0.0
    %5051 = vmatprep.subr.mxu0 0.0
    %5052 = vmatpush1.msra.mxu0 0.0
    %5053 = vmatprep.subr.mxu0 0.0
    %5054 = vmatpush1.msra.mxu0 0.0
    %5055 = vmatprep.subr.mxu0 0.0
    %5056 = vmatpush1.msra.mxu0 0.0
    %5057 = vmatprep.subr.mxu0 0.0
    %5058 = vmatpush1.msra.mxu0 0.0
    %5059 = vmatprep.subr.mxu0 0.0
    %5060 = vmatpush1.msra.mxu0 0.0
    %5061 = vmatprep.subr.mxu0 0.0
    %5062 = vmatpush1.msra.mxu0 0.0
    %5063 = vmatprep.subr.mxu0 0.0
    %5064 = vmatpush1.msra.mxu0 0.0
    %5065 = vmatprep.subr.mxu0 0.0
    %5066 = vmatpush1.msra.mxu0 0.0
    %5067 = vmatprep.mubr.f32.mxu0 0.0
    %5068 = vmatmul.mubr.f32.gmra.mrb[0].mxu0 %v4998
    %v5069 = vpop.f32.mrb[0].mxu0
    %v5070 = vadd.f32 0.0, %v5069
    %v5071 = vpop.f32.mrb[0].mxu0
    %v5072 = vadd.f32 0.0, %v5071
    %5073 = vmatprep.mubr.f32.mxu0 0.0
    %5074 = vmatmul.mubr.f32.gmra.mrb[0].mxu0 %v5001
    %v5075 = vpop.f32.mrb[0].mxu0
    %v5076 = vadd.f32 0.0, %v5075
    %v5077 = vpop.f32.mrb[0].mxu0
    %v5078 = vadd.f32 0.0, %v5077
    %5079 = vdwg.mxu0
    %v5080 = vmul.f32 %v4730, %v5070
    %v5081 = vmul.f32 %v4793, %v5072
    %v5082 = vmul.f32 %v4824, %v5076
    %v5083 = vmul.f32 %v4887, %v5078
    %v5084 = vmul.f32 %v195, %v5080
    %v5085 = vmul.f32 %v197, %v5081
    %v5086 = vmul.f32 %v199, %v5082
    %v5087 = vmul.f32 %v201, %v5083
    %v5088 = vmul.f32 %v257, %v5080
    %v5089 = vmul.f32 %v259, %v5081
    %v5090 = vmul.f32 %v261, %v5082
    %v5091 = vmul.f32 %v263, %v5083
    %v5092 = vmul.f32 %v319, %v5080
    %v5093 = vmul.f32 %v321, %v5081
    %v5094 = vmul.f32 %v323, %v5082
    %v5095 = vmul.f32 %v325, %v5083
    %v5096 = vmul.f32 %v381, %v5080
    %v5097 = vmul.f32 %v383, %v5081
    %v5098 = vmul.f32 %v385, %v5082
    %v5099 = vmul.f32 %v387, %v5083
    %v5100 = vmul.f32 %v443, %v5080
    %v5101 = vmul.f32 %v445, %v5081
    %v5102 = vmul.f32 %v447, %v5082
    %v5103 = vmul.f32 %v449, %v5083
    %v5104 = vmul.f32 %v505, %v5080
    %v5105 = vmul.f32 %v507, %v5081
    %v5106 = vmul.f32 %v509, %v5082
    %v5107 = vmul.f32 %v511, %v5083
    %v5108 = vmul.f32 %v567, %v5080
    %v5109 = vmul.f32 %v569, %v5081
    %v5110 = vmul.f32 %v571, %v5082
    %v5111 = vmul.f32 %v573, %v5083
    %v5112 = vmul.f32 %v629, %v5080
    %v5113 = vmul.f32 %v631, %v5081
    %v5114 = vmul.f32 %v633, %v5082
    %v5115 = vmul.f32 %v635, %v5083
    %v5116 = vmul.f32 %v691, %v5080
    %v5117 = vmul.f32 %v693, %v5081
    %v5118 = vmul.f32 %v695, %v5082
    %v5119 = vmul.f32 %v697, %v5083
    %v5120 = vmul.f32 %v753, %v5080
    %v5121 = vmul.f32 %v755, %v5081
    %v5122 = vmul.f32 %v757, %v5082
    %v5123 = vmul.f32 %v759, %v5083
    %v5124 = vmul.f32 %v815, %v5080
    %v5125 = vmul.f32 %v817, %v5081
    %v5126 = vmul.f32 %v819, %v5082
    %v5127 = vmul.f32 %v821, %v5083
    %v5128 = vmul.f32 %v877, %v5080
    %v5129 = vmul.f32 %v879, %v5081
    %v5130 = vmul.f32 %v881, %v5082
    %v5131 = vmul.f32 %v883, %v5083
    %v5132 = vmul.f32 %v939, %v5080
    %v5133 = vmul.f32 %v941, %v5081
    %v5134 = vmul.f32 %v943, %v5082
    %v5135 = vmul.f32 %v945, %v5083
    %v5136 = vmul.f32 %v1001, %v5080
    %v5137 = vmul.f32 %v1003, %v5081
    %v5138 = vmul.f32 %v1005, %v5082
    %v5139 = vmul.f32 %v1007, %v5083
    %v5140 = vmul.f32 %v1063, %v5080
    %v5141 = vmul.f32 %v1065, %v5081
    %v5142 = vmul.f32 %v1067, %v5082
    %v5143 = vmul.f32 %v1069, %v5083
    %v5144 = vmul.f32 %v1125, %v5080
    %v5145 = vmul.f32 %v1127, %v5081
    %v5146 = vmul.f32 %v1129, %v5082
    %v5147 = vmul.f32 %v1131, %v5083
    %v5148 = vmul.f32 %v1187, %v5080
    %v5149 = vmul.f32 %v1189, %v5081
    %v5150 = vmul.f32 %v1191, %v5082
    %v5151 = vmul.f32 %v1193, %v5083
    %v5152 = vmul.f32 %v1249, %v5080
    %v5153 = vmul.f32 %v1251, %v5081
    %v5154 = vmul.f32 %v1253, %v5082
    %v5155 = vmul.f32 %v1255, %v5083
    %v5156 = vmul.f32 %v1311, %v5080
    %v5157 = vmul.f32 %v1313, %v5081
    %v5158 = vmul.f32 %v1315, %v5082
    %v5159 = vmul.f32 %v1317, %v5083
    %v5160 = vmul.f32 %v1373, %v5080
    %v5161 = vmul.f32 %v1375, %v5081
    %v5162 = vmul.f32 %v1377, %v5082
    %v5163 = vmul.f32 %v1379, %v5083
    %v5164 = vmul.f32 %v1435, %v5080
    %v5165 = vmul.f32 %v1437, %v5081
    %v5166 = vmul.f32 %v1439, %v5082
    %v5167 = vmul.f32 %v1441, %v5083
    %v5168 = vmul.f32 %v1497, %v5080
    %v5169 = vmul.f32 %v1499, %v5081
    %v5170 = vmul.f32 %v1501, %v5082
    %v5171 = vmul.f32 %v1503, %v5083
    %v5172 = vmul.f32 %v1559, %v5080
    %v5173 = vmul.f32 %v1561, %v5081
    %v5174 = vmul.f32 %v1563, %v5082
    %v5175 = vmul.f32 %v1565, %v5083
    %v5176 = vmul.f32 %v1621, %v5080
    %v5177 = vmul.f32 %v1623, %v5081
    %v5178 = vmul.f32 %v1625, %v5082
    %v5179 = vmul.f32 %v1627, %v5083
    %v5180 = vmul.f32 %v1683, %v5080
    %v5181 = vmul.f32 %v1685, %v5081
    %v5182 = vmul.f32 %v1687, %v5082
    %v5183 = vmul.f32 %v1689, %v5083
    %v5184 = vmul.f32 %v1745, %v5080
    %v5185 = vmul.f32 %v1747, %v5081
    %v5186 = vmul.f32 %v1749, %v5082
    %v5187 = vmul.f32 %v1751, %v5083
    %v5188 = vmul.f32 %v1807, %v5080
    %v5189 = vmul.f32 %v1809, %v5081
    %v5190 = vmul.f32 %v1811, %v5082
    %v5191 = vmul.f32 %v1813, %v5083
    %v5192 = vmul.f32 %v1869, %v5080
    %v5193 = vmul.f32 %v1871, %v5081
    %v5194 = vmul.f32 %v1873, %v5082
    %v5195 = vmul.f32 %v1875, %v5083
    %v5196 = vmul.f32 %v1931, %v5080
    %v5197 = vmul.f32 %v1933, %v5081
    %v5198 = vmul.f32 %v1935, %v5082
    %v5199 = vmul.f32 %v1937, %v5083
    %v5200 = vmul.f32 %v1993, %v5080
    %v5201 = vmul.f32 %v1995, %v5081
    %v5202 = vmul.f32 %v1997, %v5082
    %v5203 = vmul.f32 %v1999, %v5083
    %v5204 = vmul.f32 %v2055, %v5080
    %v5205 = vmul.f32 %v2057, %v5081
    %v5206 = vmul.f32 %v2059, %v5082
    %v5207 = vmul.f32 %v2061, %v5083
    %v5208 = vmul.f32 %v2117, %v5080
    %v5209 = vmul.f32 %v2119, %v5081
    %v5210 = vmul.f32 %v2121, %v5082
    %v5211 = vmul.f32 %v2123, %v5083
    %v5213 = vsel %vm2156, %v5085, 0
    %v5216 = vsel %vm2156, %v5087, 0
    %v5219 = vsel %vm2156, %v5089, 0
    %v5222 = vsel %vm2156, %v5091, 0
    %v5225 = vsel %vm2156, %v5093, 0
    %v5228 = vsel %vm2156, %v5095, 0
    %v5231 = vsel %vm2156, %v5097, 0
    %v5234 = vsel %vm2156, %v5099, 0
    %v5237 = vsel %vm2156, %v5101, 0
    %v5240 = vsel %vm2156, %v5103, 0
    %v5243 = vsel %vm2156, %v5105, 0
    %v5246 = vsel %vm2156, %v5107, 0
    %v5249 = vsel %vm2156, %v5109, 0
    %v5252 = vsel %vm2156, %v5111, 0
    %v5255 = vsel %vm2156, %v5113, 0
    %v5258 = vsel %vm2156, %v5115, 0
    %v5261 = vsel %vm2156, %v5117, 0
    %v5264 = vsel %vm2156, %v5119, 0
    %v5267 = vsel %vm2156, %v5121, 0
    %v5270 = vsel %vm2156, %v5123, 0
    %v5273 = vsel %vm2156, %v5125, 0
    %v5276 = vsel %vm2156, %v5127, 0
    %v5279 = vsel %vm2156, %v5129, 0
    %v5282 = vsel %vm2156, %v5131, 0
    %v5285 = vsel %vm2156, %v5133, 0
    %v5288 = vsel %vm2156, %v5135, 0
    %v5291 = vsel %vm2156, %v5137, 0
    %v5294 = vsel %vm2156, %v5139, 0
    %v5297 = vsel %vm2156, %v5141, 0
    %v5300 = vsel %vm2156, %v5143, 0
    %v5303 = vsel %vm2156, %v5145, 0
    %v5306 = vsel %vm2156, %v5147, 0
    %v5309 = vsel %vm2156, %v5149, 0
    %v5312 = vsel %vm2156, %v5151, 0
    %v5315 = vsel %vm2156, %v5153, 0
    %v5318 = vsel %vm2156, %v5155, 0
    %v5321 = vsel %vm2156, %v5157, 0
    %v5324 = vsel %vm2156, %v5159, 0
    %v5327 = vsel %vm2156, %v5161, 0
    %v5330 = vsel %vm2156, %v5163, 0
    %v5333 = vsel %vm2156, %v5165, 0
    %v5336 = vsel %vm2156, %v5167, 0
    %v5339 = vsel %vm2156, %v5169, 0
    %v5342 = vsel %vm2156, %v5171, 0
    %v5345 = vsel %vm2156, %v5173, 0
    %v5348 = vsel %vm2156, %v5175, 0
    %v5351 = vsel %vm2156, %v5177, 0
    %v5354 = vsel %vm2156, %v5179, 0
    %v5357 = vsel %vm2156, %v5181, 0
    %v5360 = vsel %vm2156, %v5183, 0
    %v5363 = vsel %vm2156, %v5185, 0
    %v5366 = vsel %vm2156, %v5187, 0
    %v5369 = vsel %vm2156, %v5189, 0
    %v5372 = vsel %vm2156, %v5191, 0
    %v5375 = vsel %vm2156, %v5193, 0
    %v5378 = vsel %vm2156, %v5195, 0
    %v5381 = vsel %vm2156, %v5197, 0
    %v5384 = vsel %vm2156, %v5199, 0
    %v5387 = vsel %vm2156, %v5201, 0
    %v5390 = vsel %vm2156, %v5203, 0
    %v5393 = vsel %vm2156, %v5205, 0
    %v5396 = vsel %vm2156, %v5207, 0
    %v5399 = vsel %vm2156, %v5209, 0
    %v5402 = vsel %vm2156, %v5211, 0
    %5404 = vmatprep.subr.mxu0 0.0
    %5405 = vmatpush1.msra.mxu0 %v119
    %5406 = vmatprep.subr.mxu0 0.0
    %5407 = vmatpush1.msra.mxu0 %v120
    %5408 = vmatprep.subr.mxu0 0.0
    %5409 = vmatpush1.msra.mxu0 %v121
    %5410 = vmatprep.subr.mxu0 0.0
    %5411 = vmatpush1.msra.mxu0 %v122
    %5412 = vmatprep.subr.mxu0 0.0
    %5413 = vmatpush1.msra.mxu0 %v123
    %5414 = vmatprep.subr.mxu0 0.0
    %5415 = vmatpush1.msra.mxu0 %v124
    %5416 = vmatprep.subr.mxu0 0.0
    %5417 = vmatpush1.msra.mxu0 %v125
    %5418 = vmatprep.subr.mxu0 0.0
    %5419 = vmatpush1.msra.mxu0 %v126
    %5420 = vmatprep.subr.mxu0 0.0
    %5421 = vmatpush1.msra.mxu0 %v127
    %5422 = vmatprep.subr.mxu0 0.0
    %5423 = vmatpush1.msra.mxu0 %v128
    %5424 = vmatprep.subr.mxu0 0.0
    %5425 = vmatpush1.msra.mxu0 %v129
    %5426 = vmatprep.subr.mxu0 0.0
    %5427 = vmatpush1.msra.mxu0 %v130
    %5428 = vmatprep.subr.mxu0 0.0
    %5429 = vmatpush1.msra.mxu0 %v131
    %5430 = vmatprep.subr.mxu0 0.0
    %5431 = vmatpush1.msra.mxu0 %v132
    %5432 = vmatprep.subr.mxu0 0.0
    %5433 = vmatpush1.msra.mxu0 %v133
    %5434 = vmatprep.subr.mxu0 0.0
    %5435 = vmatpush1.msra.mxu0 %v134
    %5436 = vmatprep.subr.mxu0 0.0
    %5437 = vmatpush1.msra.mxu0 %v135
    %5438 = vmatprep.subr.mxu0 0.0
    %5439 = vmatpush1.msra.mxu0 %v136
    %5440 = vmatprep.subr.mxu0 0.0
    %5441 = vmatpush1.msra.mxu0 %v137
    %5442 = vmatprep.subr.mxu0 0.0
    %5443 = vmatpush1.msra.mxu0 %v138
    %5444 = vmatprep.subr.mxu0 0.0
    %5445 = vmatpush1.msra.mxu0 0.0
    %5446 = vmatprep.subr.mxu0 0.0
    %5447 = vmatpush1.msra.mxu0 0.0
    %5448 = vmatprep.subr.mxu0 0.0
    %5449 = vmatpush1.msra.mxu0 0.0
    %5450 = vmatprep.subr.mxu0 0.0
    %5451 = vmatpush1.msra.mxu0 0.0
    %5452 = vmatprep.subr.mxu0 0.0
    %5453 = vmatpush1.msra.mxu0 0.0
    %5454 = vmatprep.subr.mxu0 0.0
    %5455 = vmatpush1.msra.mxu0 0.0
    %5456 = vmatprep.subr.mxu0 0.0
    %5457 = vmatpush1.msra.mxu0 0.0
    %5458 = vmatprep.subr.mxu0 0.0
    %5459 = vmatpush1.msra.mxu0 0.0
    %5460 = vmatprep.subr.mxu0 0.0
    %5461 = vmatpush1.msra.mxu0 0.0
    %5462 = vmatprep.subr.mxu0 0.0
    %5463 = vmatpush1.msra.mxu0 0.0
    %5464 = vmatprep.subr.mxu0 0.0
    %5465 = vmatpush1.msra.mxu0 0.0
    %5466 = vmatprep.subr.mxu0 0.0
    %5467 = vmatpush1.msra.mxu0 0.0
    %5468 = vmatprep.mubr.f32.mxu0 %v5213
    %5469 = vmatmul.mubr.f32.gmra.mrb[0].mxu0 %v5084
    %v5470 = vpop.f32.mrb[0].mxu0
    %v5471 = vadd.f32 0.0, %v5470
    %v5472 = vpop.f32.mrb[0].mxu0
    %5473 = vmatprep.mubr.f32.mxu0 %v5216
    %5474 = vmatmul.mubr.f32.gmra.mrb[0].mxu0 %v5086
    %v5475 = vpop.f32.mrb[0].mxu0
    %v5476 = vadd.f32 0.0, %v5475
    %v5477 = vpop.f32.mrb[0].mxu0
    %5478 = vmatprep.mubr.f32.mxu0 %v5219
    %5479 = vmatmul.mubr.f32.gmra.mrb[0].mxu0 %v5088
    %v5480 = vpop.f32.mrb[0].mxu0
    %v5481 = vadd.f32 0.0, %v5480
    %v5482 = vpop.f32.mrb[0].mxu0
    %5483 = vmatprep.mubr.f32.mxu0 %v5222
    %5484 = vmatmul.mubr.f32.gmra.mrb[0].mxu0 %v5090
    %v5485 = vpop.f32.mrb[0].mxu0
    %v5486 = vadd.f32 0.0, %v5485
    %v5487 = vpop.f32.mrb[0].mxu0
    %5488 = vmatprep.mubr.f32.mxu0 %v5225
    %5489 = vmatmul.mubr.f32.gmra.mrb[0].mxu0 %v5092
    %v5490 = vpop.f32.mrb[0].mxu0
    %v5491 = vadd.f32 0.0, %v5490
    %v5492 = vpop.f32.mrb[0].mxu0
    %5493 = vmatprep.mubr.f32.mxu0 %v5228
    %5494 = vmatmul.mubr.f32.gmra.mrb[0].mxu0 %v5094
    %v5495 = vpop.f32.mrb[0].mxu0
    %v5496 = vadd.f32 0.0, %v5495
    %v5497 = vpop.f32.mrb[0].mxu0
    %5498 = vmatprep.mubr.f32.mxu0 %v5231
    %5499 = vmatmul.mubr.f32.gmra.mrb[0].mxu0 %v5096
    %v5500 = vpop.f32.mrb[0].mxu0
    %v5501 = vadd.f32 0.0, %v5500
    %v5502 = vpop.f32.mrb[0].mxu0
    %5503 = vmatprep.mubr.f32.mxu0 %v5234
    %5504 = vmatmul.mubr.f32.gmra.mrb[0].mxu0 %v5098
    %v5505 = vpop.f32.mrb[0].mxu0
    %v5506 = vadd.f32 0.0, %v5505
    %v5507 = vpop.f32.mrb[0].mxu0
    %5508 = vmatprep.mubr.f32.mxu0 %v5237
    %5509 = vmatmul.mubr.f32.gmra.mrb[0].mxu0 %v5100
    %v5510 = vpop.f32.mrb[0].mxu0
    %v5511 = vadd.f32 0.0, %v5510
    %v5512 = vpop.f32.mrb[0].mxu0
    %5513 = vmatprep.mubr.f32.mxu0 %v5240
    %5514 = vmatmul.mubr.f32.gmra.mrb[0].mxu0 %v5102
    %v5515 = vpop.f32.mrb[0].mxu0
    %v5516 = vadd.f32 0.0, %v5515
    %v5517 = vpop.f32.mrb[0].mxu0
    %5518 = vmatprep.mubr.f32.mxu0 %v5243
    %5519 = vmatmul.mubr.f32.gmra.mrb[0].mxu0 %v5104
    %v5520 = vpop.f32.mrb[0].mxu0
    %v5521 = vadd.f32 0.0, %v5520
    %v5522 = vpop.f32.mrb[0].mxu0
    %5523 = vmatprep.mubr.f32.mxu0 %v5246
    %5524 = vmatmul.mubr.f32.gmra.mrb[0].mxu0 %v5106
    %v5525 = vpop.f32.mrb[0].mxu0
    %v5526 = vadd.f32 0.0, %v5525
    %v5527 = vpop.f32.mrb[0].mxu0
    %5528 = vmatprep.mubr.f32.mxu0 %v5249
    %5529 = vmatmul.mubr.f32.gmra.mrb[0].mxu0 %v5108
    %v5530 = vpop.f32.mrb[0].mxu0
    %v5531 = vadd.f32 0.0, %v5530
    %v5532 = vpop.f32.mrb[0].mxu0
    %5533 = vmatprep.mubr.f32.mxu0 %v5252
    %5534 = vmatmul.mubr.f32.gmra.mrb[0].mxu0 %v5110
    %v5535 = vpop.f32.mrb[0].mxu0
    %v5536 = vadd.f32 0.0, %v5535
    %v5537 = vpop.f32.mrb[0].mxu0
    %5538 = vmatprep.mubr.f32.mxu0 %v5255
    %5539 = vmatmul.mubr.f32.gmra.mrb[0].mxu0 %v5112
    %v5540 = vpop.f32.mrb[0].mxu0
    %v5541 = vadd.f32 0.0, %v5540
    %v5542 = vpop.f32.mrb[0].mxu0
    %5543 = vmatprep.mubr.f32.mxu0 %v5258
    %5544 = vmatmul.mubr.f32.gmra.mrb[0].mxu0 %v5114
    %v5545 = vpop.f32.mrb[0].mxu0
    %v5546 = vadd.f32 0.0, %v5545
    %v5547 = vpop.f32.mrb[0].mxu0
    %5548 = vmatprep.mubr.f32.mxu0 %v5261
    %5549 = vmatmul.mubr.f32.gmra.mrb[0].mxu0 %v5116
    %v5550 = vpop.f32.mrb[0].mxu0
    %v5551 = vadd.f32 0.0, %v5550
    %v5552 = vpop.f32.mrb[0].mxu0
    %5553 = vmatprep.mubr.f32.mxu0 %v5264
    %5554 = vmatmul.mubr.f32.gmra.mrb[0].mxu0 %v5118
    %v5555 = vpop.f32.mrb[0].mxu0
    %v5556 = vadd.f32 0.0, %v5555
    %v5557 = vpop.f32.mrb[0].mxu0
    %5558 = vmatprep.mubr.f32.mxu0 %v5267
    %5559 = vmatmul.mubr.f32.gmra.mrb[0].mxu0 %v5120
    %v5560 = vpop.f32.mrb[0].mxu0
    %v5561 = vadd.f32 0.0, %v5560
    %v5562 = vpop.f32.mrb[0].mxu0
    %5563 = vmatprep.mubr.f32.mxu0 %v5270
    %5564 = vmatmul.mubr.f32.gmra.mrb[0].mxu0 %v5122
    %v5565 = vpop.f32.mrb[0].mxu0
    %v5566 = vadd.f32 0.0, %v5565
    %v5567 = vpop.f32.mrb[0].mxu0
    %5568 = vmatprep.mubr.f32.mxu0 %v5273
    %5569 = vmatmul.mubr.f32.gmra.mrb[0].mxu0 %v5124
    %v5570 = vpop.f32.mrb[0].mxu0
    %v5571 = vadd.f32 0.0, %v5570
    %v5572 = vpop.f32.mrb[0].mxu0
    %5573 = vmatprep.mubr.f32.mxu0 %v5276
    %5574 = vmatmul.mubr.f32.gmra.mrb[0].mxu0 %v5126
    %v5575 = vpop.f32.mrb[0].mxu0
    %v5576 = vadd.f32 0.0, %v5575
    %v5577 = vpop.f32.mrb[0].mxu0
    %5578 = vmatprep.mubr.f32.mxu0 %v5279
    %5579 = vmatmul.mubr.f32.gmra.mrb[0].mxu0 %v5128
    %v5580 = vpop.f32.mrb[0].mxu0
    %v5581 = vadd.f32 0.0, %v5580
    %v5582 = vpop.f32.mrb[0].mxu0
    %5583 = vmatprep.mubr.f32.mxu0 %v5282
    %5584 = vmatmul.mubr.f32.gmra.mrb[0].mxu0 %v5130
    %v5585 = vpop.f32.mrb[0].mxu0
    %v5586 = vadd.f32 0.0, %v5585
    %v5587 = vpop.f32.mrb[0].mxu0
    %5588 = vmatprep.mubr.f32.mxu0 %v5285
    %5589 = vmatmul.mubr.f32.gmra.mrb[0].mxu0 %v5132
    %v5590 = vpop.f32.mrb[0].mxu0
    %v5591 = vadd.f32 0.0, %v5590
    %v5592 = vpop.f32.mrb[0].mxu0
    %5593 = vmatprep.mubr.f32.mxu0 %v5288
    %5594 = vmatmul.mubr.f32.gmra.mrb[0].mxu0 %v5134
    %v5595 = vpop.f32.mrb[0].mxu0
    %v5596 = vadd.f32 0.0, %v5595
    %v5597 = vpop.f32.mrb[0].mxu0
    %5598 = vmatprep.mubr.f32.mxu0 %v5291
    %5599 = vmatmul.mubr.f32.gmra.mrb[0].mxu0 %v5136
    %v5600 = vpop.f32.mrb[0].mxu0
    %v5601 = vadd.f32 0.0, %v5600
    %v5602 = vpop.f32.mrb[0].mxu0
    %5603 = vmatprep.mubr.f32.mxu0 %v5294
    %5604 = vmatmul.mubr.f32.gmra.mrb[0].mxu0 %v5138
    %v5605 = vpop.f32.mrb[0].mxu0
    %v5606 = vadd.f32 0.0, %v5605
    %v5607 = vpop.f32.mrb[0].mxu0
    %5608 = vmatprep.mubr.f32.mxu0 %v5297
    %5609 = vmatmul.mubr.f32.gmra.mrb[0].mxu0 %v5140
    %v5610 = vpop.f32.mrb[0].mxu0
    %v5611 = vadd.f32 0.0, %v5610
    %v5612 = vpop.f32.mrb[0].mxu0
    %5613 = vmatprep.mubr.f32.mxu0 %v5300
    %5614 = vmatmul.mubr.f32.gmra.mrb[0].mxu0 %v5142
    %v5615 = vpop.f32.mrb[0].mxu0
    %v5616 = vadd.f32 0.0, %v5615
    %v5617 = vpop.f32.mrb[0].mxu0
    %5618 = vmatprep.mubr.f32.mxu0 %v5303
    %5619 = vmatmul.mubr.f32.gmra.mrb[0].mxu0 %v5144
    %v5620 = vpop.f32.mrb[0].mxu0
    %v5621 = vadd.f32 0.0, %v5620
    %v5622 = vpop.f32.mrb[0].mxu0
    %5623 = vmatprep.mubr.f32.mxu0 %v5306
    %5624 = vmatmul.mubr.f32.gmra.mrb[0].mxu0 %v5146
    %v5625 = vpop.f32.mrb[0].mxu0
    %v5626 = vadd.f32 0.0, %v5625
    %v5627 = vpop.f32.mrb[0].mxu0
    %5628 = vmatprep.mubr.f32.mxu0 %v5309
    %5629 = vmatmul.mubr.f32.gmra.mrb[0].mxu0 %v5148
    %v5630 = vpop.f32.mrb[0].mxu0
    %v5631 = vadd.f32 0.0, %v5630
    %v5632 = vpop.f32.mrb[0].mxu0
    %5633 = vmatprep.mubr.f32.mxu0 %v5312
    %5634 = vmatmul.mubr.f32.gmra.mrb[0].mxu0 %v5150
    %v5635 = vpop.f32.mrb[0].mxu0
    %v5636 = vadd.f32 0.0, %v5635
    %v5637 = vpop.f32.mrb[0].mxu0
    %5638 = vmatprep.mubr.f32.mxu0 %v5315
    %5639 = vmatmul.mubr.f32.gmra.mrb[0].mxu0 %v5152
    %v5640 = vpop.f32.mrb[0].mxu0
    %v5641 = vadd.f32 0.0, %v5640
    %v5642 = vpop.f32.mrb[0].mxu0
    %5643 = vmatprep.mubr.f32.mxu0 %v5318
    %5644 = vmatmul.mubr.f32.gmra.mrb[0].mxu0 %v5154
    %v5645 = vpop.f32.mrb[0].mxu0
    %v5646 = vadd.f32 0.0, %v5645
    %v5647 = vpop.f32.mrb[0].mxu0
    %5648 = vmatprep.mubr.f32.mxu0 %v5321
    %5649 = vmatmul.mubr.f32.gmra.mrb[0].mxu0 %v5156
    %v5650 = vpop.f32.mrb[0].mxu0
    %v5651 = vadd.f32 0.0, %v5650
    %v5652 = vpop.f32.mrb[0].mxu0
    %5653 = vmatprep.mubr.f32.mxu0 %v5324
    %5654 = vmatmul.mubr.f32.gmra.mrb[0].mxu0 %v5158
    %v5655 = vpop.f32.mrb[0].mxu0
    %v5656 = vadd.f32 0.0, %v5655
    %v5657 = vpop.f32.mrb[0].mxu0
    %5658 = vmatprep.mubr.f32.mxu0 %v5327
    %5659 = vmatmul.mubr.f32.gmra.mrb[0].mxu0 %v5160
    %v5660 = vpop.f32.mrb[0].mxu0
    %v5661 = vadd.f32 0.0, %v5660
    %v5662 = vpop.f32.mrb[0].mxu0
    %5663 = vmatprep.mubr.f32.mxu0 %v5330
    %5664 = vmatmul.mubr.f32.gmra.mrb[0].mxu0 %v5162
    %v5665 = vpop.f32.mrb[0].mxu0
    %v5666 = vadd.f32 0.0, %v5665
    %v5667 = vpop.f32.mrb[0].mxu0
    %5668 = vmatprep.mubr.f32.mxu0 %v5333
    %5669 = vmatmul.mubr.f32.gmra.mrb[0].mxu0 %v5164
    %v5670 = vpop.f32.mrb[0].mxu0
    %v5671 = vadd.f32 0.0, %v5670
    %v5672 = vpop.f32.mrb[0].mxu0
    %5673 = vmatprep.mubr.f32.mxu0 %v5336
    %5674 = vmatmul.mubr.f32.gmra.mrb[0].mxu0 %v5166
    %v5675 = vpop.f32.mrb[0].mxu0
    %v5676 = vadd.f32 0.0, %v5675
    %v5677 = vpop.f32.mrb[0].mxu0
    %5678 = vmatprep.mubr.f32.mxu0 %v5339
    %5679 = vmatmul.mubr.f32.gmra.mrb[0].mxu0 %v5168
    %v5680 = vpop.f32.mrb[0].mxu0
    %v5681 = vadd.f32 0.0, %v5680
    %v5682 = vpop.f32.mrb[0].mxu0
    %5683 = vmatprep.mubr.f32.mxu0 %v5342
    %5684 = vmatmul.mubr.f32.gmra.mrb[0].mxu0 %v5170
    %v5685 = vpop.f32.mrb[0].mxu0
    %v5686 = vadd.f32 0.0, %v5685
    %v5687 = vpop.f32.mrb[0].mxu0
    %5688 = vmatprep.mubr.f32.mxu0 %v5345
    %5689 = vmatmul.mubr.f32.gmra.mrb[0].mxu0 %v5172
    %v5690 = vpop.f32.mrb[0].mxu0
    %v5691 = vadd.f32 0.0, %v5690
    %v5692 = vpop.f32.mrb[0].mxu0
    %5693 = vmatprep.mubr.f32.mxu0 %v5348
    %5694 = vmatmul.mubr.f32.gmra.mrb[0].mxu0 %v5174
    %v5695 = vpop.f32.mrb[0].mxu0
    %v5696 = vadd.f32 0.0, %v5695
    %v5697 = vpop.f32.mrb[0].mxu0
    %5698 = vmatprep.mubr.f32.mxu0 %v5351
    %5699 = vmatmul.mubr.f32.gmra.mrb[0].mxu0 %v5176
    %v5700 = vpop.f32.mrb[0].mxu0
    %v5701 = vadd.f32 0.0, %v5700
    %v5702 = vpop.f32.mrb[0].mxu0
    %5703 = vmatprep.mubr.f32.mxu0 %v5354
    %5704 = vmatmul.mubr.f32.gmra.mrb[0].mxu0 %v5178
    %v5705 = vpop.f32.mrb[0].mxu0
    %v5706 = vadd.f32 0.0, %v5705
    %v5707 = vpop.f32.mrb[0].mxu0
    %5708 = vmatprep.mubr.f32.mxu0 %v5357
    %5709 = vmatmul.mubr.f32.gmra.mrb[0].mxu0 %v5180
    %v5710 = vpop.f32.mrb[0].mxu0
    %v5711 = vadd.f32 0.0, %v5710
    %v5712 = vpop.f32.mrb[0].mxu0
    %5713 = vmatprep.mubr.f32.mxu0 %v5360
    %5714 = vmatmul.mubr.f32.gmra.mrb[0].mxu0 %v5182
    %v5715 = vpop.f32.mrb[0].mxu0
    %v5716 = vadd.f32 0.0, %v5715
    %v5717 = vpop.f32.mrb[0].mxu0
    %5718 = vmatprep.mubr.f32.mxu0 %v5363
    %5719 = vmatmul.mubr.f32.gmra.mrb[0].mxu0 %v5184
    %v5720 = vpop.f32.mrb[0].mxu0
    %v5721 = vadd.f32 0.0, %v5720
    %v5722 = vpop.f32.mrb[0].mxu0
    %5723 = vmatprep.mubr.f32.mxu0 %v5366
    %5724 = vmatmul.mubr.f32.gmra.mrb[0].mxu0 %v5186
    %v5725 = vpop.f32.mrb[0].mxu0
    %v5726 = vadd.f32 0.0, %v5725
    %v5727 = vpop.f32.mrb[0].mxu0
    %5728 = vmatprep.mubr.f32.mxu0 %v5369
    %5729 = vmatmul.mubr.f32.gmra.mrb[0].mxu0 %v5188
    %v5730 = vpop.f32.mrb[0].mxu0
    %v5731 = vadd.f32 0.0, %v5730
    %v5732 = vpop.f32.mrb[0].mxu0
    %5733 = vmatprep.mubr.f32.mxu0 %v5372
    %5734 = vmatmul.mubr.f32.gmra.mrb[0].mxu0 %v5190
    %v5735 = vpop.f32.mrb[0].mxu0
    %v5736 = vadd.f32 0.0, %v5735
    %v5737 = vpop.f32.mrb[0].mxu0
    %5738 = vmatprep.mubr.f32.mxu0 %v5375
    %5739 = vmatmul.mubr.f32.gmra.mrb[0].mxu0 %v5192
    %v5740 = vpop.f32.mrb[0].mxu0
    %v5741 = vadd.f32 0.0, %v5740
    %v5742 = vpop.f32.mrb[0].mxu0
    %5743 = vmatprep.mubr.f32.mxu0 %v5378
    %5744 = vmatmul.mubr.f32.gmra.mrb[0].mxu0 %v5194
    %v5745 = vpop.f32.mrb[0].mxu0
    %v5746 = vadd.f32 0.0, %v5745
    %v5747 = vpop.f32.mrb[0].mxu0
    %5748 = vmatprep.mubr.f32.mxu0 %v5381
    %5749 = vmatmul.mubr.f32.gmra.mrb[0].mxu0 %v5196
    %v5750 = vpop.f32.mrb[0].mxu0
    %v5751 = vadd.f32 0.0, %v5750
    %v5752 = vpop.f32.mrb[0].mxu0
    %5753 = vmatprep.mubr.f32.mxu0 %v5384
    %5754 = vmatmul.mubr.f32.gmra.mrb[0].mxu0 %v5198
    %v5755 = vpop.f32.mrb[0].mxu0
    %v5756 = vadd.f32 0.0, %v5755
    %v5757 = vpop.f32.mrb[0].mxu0
    %5758 = vmatprep.mubr.f32.mxu0 %v5387
    %5759 = vmatmul.mubr.f32.gmra.mrb[0].mxu0 %v5200
    %v5760 = vpop.f32.mrb[0].mxu0
    %v5761 = vadd.f32 0.0, %v5760
    %v5762 = vpop.f32.mrb[0].mxu0
    %5763 = vmatprep.mubr.f32.mxu0 %v5390
    %5764 = vmatmul.mubr.f32.gmra.mrb[0].mxu0 %v5202
    %v5765 = vpop.f32.mrb[0].mxu0
    %v5766 = vadd.f32 0.0, %v5765
    %v5767 = vpop.f32.mrb[0].mxu0
    %5768 = vmatprep.mubr.f32.mxu0 %v5393
    %5769 = vmatmul.mubr.f32.gmra.mrb[0].mxu0 %v5204
    %v5770 = vpop.f32.mrb[0].mxu0
    %v5771 = vadd.f32 0.0, %v5770
    %v5772 = vpop.f32.mrb[0].mxu0
    %5773 = vmatprep.mubr.f32.mxu0 %v5396
    %5774 = vmatmul.mubr.f32.gmra.mrb[0].mxu0 %v5206
    %v5775 = vpop.f32.mrb[0].mxu0
    %v5776 = vadd.f32 0.0, %v5775
    %v5777 = vpop.f32.mrb[0].mxu0
    %5778 = vmatprep.mubr.f32.mxu0 %v5399
    %5779 = vmatmul.mubr.f32.gmra.mrb[0].mxu0 %v5208
    %v5780 = vpop.f32.mrb[0].mxu0
    %v5781 = vadd.f32 0.0, %v5780
    %v5782 = vpop.f32.mrb[0].mxu0
    %5783 = vmatprep.mubr.f32.mxu0 %v5402
    %5784 = vmatmul.mubr.f32.gmra.mrb[0].mxu0 %v5210
    %v5785 = vpop.f32.mrb[0].mxu0
    %v5786 = vadd.f32 0.0, %v5785
    %v5787 = vpop.f32.mrb[0].mxu0
    %5788 = vdwg.mxu0
    %v5789 = vadd.f32 %v2909, %v5471
    %v5790 = vadd.f32 %v2914, %v5476
    %v5791 = vadd.f32 %v2919, %v5481
    %v5792 = vadd.f32 %v2924, %v5486
    %v5793 = vadd.f32 %v2929, %v5491
    %v5794 = vadd.f32 %v2934, %v5496
    %v5795 = vadd.f32 %v2939, %v5501
    %v5796 = vadd.f32 %v2944, %v5506
    %v5797 = vadd.f32 %v2949, %v5511
    %v5798 = vadd.f32 %v2954, %v5516
    %v5799 = vadd.f32 %v2959, %v5521
    %v5800 = vadd.f32 %v2964, %v5526
    %v5801 = vadd.f32 %v2969, %v5531
    %v5802 = vadd.f32 %v2974, %v5536
    %v5803 = vadd.f32 %v2979, %v5541
    %v5804 = vadd.f32 %v2984, %v5546
    %v5805 = vadd.f32 %v2989, %v5551
    %v5806 = vadd.f32 %v2994, %v5556
    %v5807 = vadd.f32 %v2999, %v5561
    %v5808 = vadd.f32 %v3004, %v5566
    %v5809 = vadd.f32 %v3009, %v5571
    %v5810 = vadd.f32 %v3014, %v5576
    %v5811 = vadd.f32 %v3019, %v5581
    %v5812 = vadd.f32 %v3024, %v5586
    %v5813 = vadd.f32 %v3029, %v5591
    %v5814 = vadd.f32 %v3034, %v5596
    %v5815 = vadd.f32 %v3039, %v5601
    %v5816 = vadd.f32 %v3044, %v5606
    %v5817 = vadd.f32 %v3049, %v5611
    %v5818 = vadd.f32 %v3054, %v5616
    %v5819 = vadd.f32 %v3059, %v5621
    %v5820 = vadd.f32 %v3064, %v5626
    %v5821 = vadd.f32 %v3069, %v5631
    %v5822 = vadd.f32 %v3074, %v5636
    %v5823 = vadd.f32 %v3079, %v5641
    %v5824 = vadd.f32 %v3084, %v5646
    %v5825 = vadd.f32 %v3089, %v5651
    %v5826 = vadd.f32 %v3094, %v5656
    %v5827 = vadd.f32 %v3099, %v5661
    %v5828 = vadd.f32 %v3104, %v5666
    %v5829 = vadd.f32 %v3109, %v5671
    %v5830 = vadd.f32 %v3114, %v5676
    %v5831 = vadd.f32 %v3119, %v5681
    %v5832 = vadd.f32 %v3124, %v5686
    %v5833 = vadd.f32 %v3129, %v5691
    %v5834 = vadd.f32 %v3134, %v5696
    %v5835 = vadd.f32 %v3139, %v5701
    %v5836 = vadd.f32 %v3144, %v5706
    %v5837 = vadd.f32 %v3149, %v5711
    %v5838 = vadd.f32 %v3154, %v5716
    %v5839 = vadd.f32 %v3159, %v5721
    %v5840 = vadd.f32 %v3164, %v5726
    %v5841 = vadd.f32 %v3169, %v5731
    %v5842 = vadd.f32 %v3174, %v5736
    %v5843 = vadd.f32 %v3179, %v5741
    %v5844 = vadd.f32 %v3184, %v5746
    %v5845 = vadd.f32 %v3189, %v5751
    %v5846 = vadd.f32 %v3194, %v5756
    %v5847 = vadd.f32 %v3199, %v5761
    %v5848 = vadd.f32 %v3204, %v5766
    %v5849 = vadd.f32 %v3209, %v5771
    %v5850 = vadd.f32 %v3214, %v5776
    %v5851 = vadd.f32 %v3219, %v5781
    %v5852 = vadd.f32 %v3224, %v5786
    %v5853 = vsel %vm2427, %v5789, -inf
    %5854 = vmax.xlane.f32.xlu0 %v5853
    %v5855 = vpop.xlane.xlu0 %5854
    %v5856 = vsel %vm2427, %v5790, -inf
    %5857 = vmax.xlane.f32.xlu0 %v5856
    %v5858 = vpop.xlane.xlu0 %5857
    %v5859 = vsel %vm2427, %v5791, -inf
    %5860 = vmax.xlane.f32.xlu0 %v5859
    %v5861 = vpop.xlane.xlu0 %5860
    %v5862 = vsel %vm2427, %v5792, -inf
    %5863 = vmax.xlane.f32.xlu0 %v5862
    %v5864 = vpop.xlane.xlu0 %5863
    %v5865 = vsel %vm2427, %v5793, -inf
    %5866 = vmax.xlane.f32.xlu0 %v5865
    %v5867 = vpop.xlane.xlu0 %5866
    %v5868 = vsel %vm2427, %v5794, -inf
    %5869 = vmax.xlane.f32.xlu0 %v5868
    %v5870 = vpop.xlane.xlu0 %5869
    %v5871 = vsel %vm2427, %v5795, -inf
    %5872 = vmax.xlane.f32.xlu0 %v5871
    %v5873 = vpop.xlane.xlu0 %5872
    %v5874 = vsel %vm2427, %v5796, -inf
    %5875 = vmax.xlane.f32.xlu0 %v5874
    %v5876 = vpop.xlane.xlu0 %5875
    %v5877 = vsel %vm2427, %v5797, -inf
    %5878 = vmax.xlane.f32.xlu0 %v5877
    %v5879 = vpop.xlane.xlu0 %5878
    %v5880 = vsel %vm2427, %v5798, -inf
    %5881 = vmax.xlane.f32.xlu0 %v5880
    %v5882 = vpop.xlane.xlu0 %5881
    %v5883 = vsel %vm2427, %v5799, -inf
    %5884 = vmax.xlane.f32.xlu0 %v5883
    %v5885 = vpop.xlane.xlu0 %5884
    %v5886 = vsel %vm2427, %v5800, -inf
    %5887 = vmax.xlane.f32.xlu0 %v5886
    %v5888 = vpop.xlane.xlu0 %5887
    %v5889 = vsel %vm2427, %v5801, -inf
    %5890 = vmax.xlane.f32.xlu0 %v5889
    %v5891 = vpop.xlane.xlu0 %5890
    %v5892 = vsel %vm2427, %v5802, -inf
    %5893 = vmax.xlane.f32.xlu0 %v5892
    %v5894 = vpop.xlane.xlu0 %5893
    %v5895 = vsel %vm2427, %v5803, -inf
    %5896 = vmax.xlane.f32.xlu0 %v5895
    %v5897 = vpop.xlane.xlu0 %5896
    %v5898 = vsel %vm2427, %v5804, -inf
    %5899 = vmax.xlane.f32.xlu0 %v5898
    %v5900 = vpop.xlane.xlu0 %5899
    %v5901 = vsel %vm2427, %v5805, -inf
    %5902 = vmax.xlane.f32.xlu0 %v5901
    %v5903 = vpop.xlane.xlu0 %5902
    %v5904 = vsel %vm2427, %v5806, -inf
    %5905 = vmax.xlane.f32.xlu0 %v5904
    %v5906 = vpop.xlane.xlu0 %5905
    %v5907 = vsel %vm2427, %v5807, -inf
    %5908 = vmax.xlane.f32.xlu0 %v5907
    %v5909 = vpop.xlane.xlu0 %5908
    %v5910 = vsel %vm2427, %v5808, -inf
    %5911 = vmax.xlane.f32.xlu0 %v5910
    %v5912 = vpop.xlane.xlu0 %5911
    %v5913 = vsel %vm2427, %v5809, -inf
    %5914 = vmax.xlane.f32.xlu0 %v5913
    %v5915 = vpop.xlane.xlu0 %5914
    %v5916 = vsel %vm2427, %v5810, -inf
    %5917 = vmax.xlane.f32.xlu0 %v5916
    %v5918 = vpop.xlane.xlu0 %5917
    %v5919 = vsel %vm2427, %v5811, -inf
    %5920 = vmax.xlane.f32.xlu0 %v5919
    %v5921 = vpop.xlane.xlu0 %5920
    %v5922 = vsel %vm2427, %v5812, -inf
    %5923 = vmax.xlane.f32.xlu0 %v5922
    %v5924 = vpop.xlane.xlu0 %5923
    %v5925 = vsel %vm2427, %v5813, -inf
    %5926 = vmax.xlane.f32.xlu0 %v5925
    %v5927 = vpop.xlane.xlu0 %5926
    %v5928 = vsel %vm2427, %v5814, -inf
    %5929 = vmax.xlane.f32.xlu0 %v5928
    %v5930 = vpop.xlane.xlu0 %5929
    %v5931 = vsel %vm2427, %v5815, -inf
    %5932 = vmax.xlane.f32.xlu0 %v5931
    %v5933 = vpop.xlane.xlu0 %5932
    %v5934 = vsel %vm2427, %v5816, -inf
    %5935 = vmax.xlane.f32.xlu0 %v5934
    %v5936 = vpop.xlane.xlu0 %5935
    %v5937 = vsel %vm2427, %v5817, -inf
    %5938 = vmax.xlane.f32.xlu0 %v5937
    %v5939 = vpop.xlane.xlu0 %5938
    %v5940 = vsel %vm2427, %v5818, -inf
    %5941 = vmax.xlane.f32.xlu0 %v5940
    %v5942 = vpop.xlane.xlu0 %5941
    %v5943 = vsel %vm2427, %v5819, -inf
    %5944 = vmax.xlane.f32.xlu0 %v5943
    %v5945 = vpop.xlane.xlu0 %5944
    %v5946 = vsel %vm2427, %v5820, -inf
    %5947 = vmax.xlane.f32.xlu0 %v5946
    %v5948 = vpop.xlane.xlu0 %5947
    %v5949 = vsel %vm2427, %v5821, -inf
    %5950 = vmax.xlane.f32.xlu0 %v5949
    %v5951 = vpop.xlane.xlu0 %5950
    %v5952 = vsel %vm2427, %v5822, -inf
    %5953 = vmax.xlane.f32.xlu0 %v5952
    %v5954 = vpop.xlane.xlu0 %5953
    %v5955 = vsel %vm2427, %v5823, -inf
    %5956 = vmax.xlane.f32.xlu0 %v5955
    %v5957 = vpop.xlane.xlu0 %5956
    %v5958 = vsel %vm2427, %v5824, -inf
    %5959 = vmax.xlane.f32.xlu0 %v5958
    %v5960 = vpop.xlane.xlu0 %5959
    %v5961 = vsel %vm2427, %v5825, -inf
    %5962 = vmax.xlane.f32.xlu0 %v5961
    %v5963 = vpop.xlane.xlu0 %5962
    %v5964 = vsel %vm2427, %v5826, -inf
    %5965 = vmax.xlane.f32.xlu0 %v5964
    %v5966 = vpop.xlane.xlu0 %5965
    %v5967 = vsel %vm2427, %v5827, -inf
    %5968 = vmax.xlane.f32.xlu0 %v5967
    %v5969 = vpop.xlane.xlu0 %5968
    %v5970 = vsel %vm2427, %v5828, -inf
    %5971 = vmax.xlane.f32.xlu0 %v5970
    %v5972 = vpop.xlane.xlu0 %5971
    %v5973 = vsel %vm2427, %v5829, -inf
    %5974 = vmax.xlane.f32.xlu0 %v5973
    %v5975 = vpop.xlane.xlu0 %5974
    %v5976 = vsel %vm2427, %v5830, -inf
    %5977 = vmax.xlane.f32.xlu0 %v5976
    %v5978 = vpop.xlane.xlu0 %5977
    %v5979 = vsel %vm2427, %v5831, -inf
    %5980 = vmax.xlane.f32.xlu0 %v5979
    %v5981 = vpop.xlane.xlu0 %5980
    %v5982 = vsel %vm2427, %v5832, -inf
    %5983 = vmax.xlane.f32.xlu0 %v5982
    %v5984 = vpop.xlane.xlu0 %5983
    %v5985 = vsel %vm2427, %v5833, -inf
    %5986 = vmax.xlane.f32.xlu0 %v5985
    %v5987 = vpop.xlane.xlu0 %5986
    %v5988 = vsel %vm2427, %v5834, -inf
    %5989 = vmax.xlane.f32.xlu0 %v5988
    %v5990 = vpop.xlane.xlu0 %5989
    %v5991 = vsel %vm2427, %v5835, -inf
    %5992 = vmax.xlane.f32.xlu0 %v5991
    %v5993 = vpop.xlane.xlu0 %5992
    %v5994 = vsel %vm2427, %v5836, -inf
    %5995 = vmax.xlane.f32.xlu0 %v5994
    %v5996 = vpop.xlane.xlu0 %5995
    %v5997 = vsel %vm2427, %v5837, -inf
    %5998 = vmax.xlane.f32.xlu0 %v5997
    %v5999 = vpop.xlane.xlu0 %5998
    %v6000 = vsel %vm2427, %v5838, -inf
    %6001 = vmax.xlane.f32.xlu0 %v6000
    %v6002 = vpop.xlane.xlu0 %6001
    %v6003 = vsel %vm2427, %v5839, -inf
    %6004 = vmax.xlane.f32.xlu0 %v6003
    %v6005 = vpop.xlane.xlu0 %6004
    %v6006 = vsel %vm2427, %v5840, -inf
    %6007 = vmax.xlane.f32.xlu0 %v6006
    %v6008 = vpop.xlane.xlu0 %6007
    %v6009 = vsel %vm2427, %v5841, -inf
    %6010 = vmax.xlane.f32.xlu0 %v6009
    %v6011 = vpop.xlane.xlu0 %6010
    %v6012 = vsel %vm2427, %v5842, -inf
    %6013 = vmax.xlane.f32.xlu0 %v6012
    %v6014 = vpop.xlane.xlu0 %6013
    %v6015 = vsel %vm2427, %v5843, -inf
    %6016 = vmax.xlane.f32.xlu0 %v6015
    %v6017 = vpop.xlane.xlu0 %6016
    %v6018 = vsel %vm2427, %v5844, -inf
    %6019 = vmax.xlane.f32.xlu0 %v6018
    %v6020 = vpop.xlane.xlu0 %6019
    %v6021 = vsel %vm2427, %v5845, -inf
    %6022 = vmax.xlane.f32.xlu0 %v6021
    %v6023 = vpop.xlane.xlu0 %6022
    %v6024 = vsel %vm2427, %v5846, -inf
    %6025 = vmax.xlane.f32.xlu0 %v6024
    %v6026 = vpop.xlane.xlu0 %6025
    %v6027 = vsel %vm2427, %v5847, -inf
    %6028 = vmax.xlane.f32.xlu0 %v6027
    %v6029 = vpop.xlane.xlu0 %6028
    %v6030 = vsel %vm2427, %v5848, -inf
    %6031 = vmax.xlane.f32.xlu0 %v6030
    %v6032 = vpop.xlane.xlu0 %6031
    %v6033 = vsel %vm2427, %v5849, -inf
    %6034 = vmax.xlane.f32.xlu0 %v6033
    %v6035 = vpop.xlane.xlu0 %6034
    %v6036 = vsel %vm2427, %v5850, -inf
    %6037 = vmax.xlane.f32.xlu0 %v6036
    %v6038 = vpop.xlane.xlu0 %6037
    %v6039 = vsel %vm2427, %v5851, -inf
    %6040 = vmax.xlane.f32.xlu0 %v6039
    %v6041 = vpop.xlane.xlu0 %6040
    %v6042 = vsel %vm2427, %v5852, -inf
    %6043 = vmax.xlane.f32.xlu0 %v6042
    %v6044 = vpop.xlane.xlu0 %6043
    %v6045 = vsub.f32 %v5789, %v5855
    %v6046 = vsub.f32 %v5790, %v5858
    %v6047 = vsub.f32 %v5791, %v5861
    %v6048 = vsub.f32 %v5792, %v5864
    %v6049 = vsub.f32 %v5793, %v5867
    %v6050 = vsub.f32 %v5794, %v5870
    %v6051 = vsub.f32 %v5795, %v5873
    %v6052 = vsub.f32 %v5796, %v5876
    %v6053 = vsub.f32 %v5797, %v5879
    %v6054 = vsub.f32 %v5798, %v5882
    %v6055 = vsub.f32 %v5799, %v5885
    %v6056 = vsub.f32 %v5800, %v5888
    %v6057 = vsub.f32 %v5801, %v5891
    %v6058 = vsub.f32 %v5802, %v5894
    %v6059 = vsub.f32 %v5803, %v5897
    %v6060 = vsub.f32 %v5804, %v5900
    %v6061 = vsub.f32 %v5805, %v5903
    %v6062 = vsub.f32 %v5806, %v5906
    %v6063 = vsub.f32 %v5807, %v5909
    %v6064 = vsub.f32 %v5808, %v5912
    %v6065 = vsub.f32 %v5809, %v5915
    %v6066 = vsub.f32 %v5810, %v5918
    %v6067 = vsub.f32 %v5811, %v5921
    %v6068 = vsub.f32 %v5812, %v5924
    %v6069 = vsub.f32 %v5813, %v5927
    %v6070 = vsub.f32 %v5814, %v5930
    %v6071 = vsub.f32 %v5815, %v5933
    %v6072 = vsub.f32 %v5816, %v5936
    %v6073 = vsub.f32 %v5817, %v5939
    %v6074 = vsub.f32 %v5818, %v5942
    %v6075 = vsub.f32 %v5819, %v5945
    %v6076 = vsub.f32 %v5820, %v5948
    %v6077 = vsub.f32 %v5821, %v5951
    %v6078 = vsub.f32 %v5822, %v5954
    %v6079 = vsub.f32 %v5823, %v5957
    %v6080 = vsub.f32 %v5824, %v5960
    %v6081 = vsub.f32 %v5825, %v5963
    %v6082 = vsub.f32 %v5826, %v5966
    %v6083 = vsub.f32 %v5827, %v5969
    %v6084 = vsub.f32 %v5828, %v5972
    %v6085 = vsub.f32 %v5829, %v5975
    %v6086 = vsub.f32 %v5830, %v5978
    %v6087 = vsub.f32 %v5831, %v5981
    %v6088 = vsub.f32 %v5832, %v5984
    %v6089 = vsub.f32 %v5833, %v5987
    %v6090 = vsub.f32 %v5834, %v5990
    %v6091 = vsub.f32 %v5835, %v5993
    %v6092 = vsub.f32 %v5836, %v5996
    %v6093 = vsub.f32 %v5837, %v5999
    %v6094 = vsub.f32 %v5838, %v6002
    %v6095 = vsub.f32 %v5839, %v6005
    %v6096 = vsub.f32 %v5840, %v6008
    %v6097 = vsub.f32 %v5841, %v6011
    %v6098 = vsub.f32 %v5842, %v6014
    %v6099 = vsub.f32 %v5843, %v6017
    %v6100 = vsub.f32 %v5844, %v6020
    %v6101 = vsub.f32 %v5845, %v6023
    %v6102 = vsub.f32 %v5846, %v6026
    %v6103 = vsub.f32 %v5847, %v6029
    %v6104 = vsub.f32 %v5848, %v6032
    %v6105 = vsub.f32 %v5849, %v6035
    %v6106 = vsub.f32 %v5850, %v6038
    %v6107 = vsub.f32 %v5851, %v6041
    %v6108 = vsub.f32 %v5852, %v6044
    %v6109 = vmul.f32 %v6045, 1.442695
    %v6110 = vpow.pop %v6109
    %v6111 = vmul.f32 %v6046, 1.442695
    %v6112 = vpow.pop %v6111
    %v6113 = vmul.f32 %v6047, 1.442695
    %v6114 = vpow.pop %v6113
    %v6115 = vmul.f32 %v6048, 1.442695
    %v6116 = vpow.pop %v6115
    %v6117 = vmul.f32 %v6049, 1.442695
    %v6118 = vpow.pop %v6117
    %v6119 = vmul.f32 %v6050, 1.442695
    %v6120 = vpow.pop %v6119
    %v6121 = vmul.f32 %v6051, 1.442695
    %v6122 = vpow.pop %v6121
    %v6123 = vmul.f32 %v6052, 1.442695
    %v6124 = vpow.pop %v6123
    %v6125 = vmul.f32 %v6053, 1.442695
    %v6126 = vpow.pop %v6125
    %v6127 = vmul.f32 %v6054, 1.442695
    %v6128 = vpow.pop %v6127
    %v6129 = vmul.f32 %v6055, 1.442695
    %v6130 = vpow.pop %v6129
    %v6131 = vmul.f32 %v6056, 1.442695
    %v6132 = vpow.pop %v6131
    %v6133 = vmul.f32 %v6057, 1.442695
    %v6134 = vpow.pop %v6133
    %v6135 = vmul.f32 %v6058, 1.442695
    %v6136 = vpow.pop %v6135
    %v6137 = vmul.f32 %v6059, 1.442695
    %v6138 = vpow.pop %v6137
    %v6139 = vmul.f32 %v6060, 1.442695
    %v6140 = vpow.pop %v6139
    %v6141 = vmul.f32 %v6061, 1.442695
    %v6142 = vpow.pop %v6141
    %v6143 = vmul.f32 %v6062, 1.442695
    %v6144 = vpow.pop %v6143
    %v6145 = vmul.f32 %v6063, 1.442695
    %v6146 = vpow.pop %v6145
    %v6147 = vmul.f32 %v6064, 1.442695
    %v6148 = vpow.pop %v6147
    %v6149 = vmul.f32 %v6065, 1.442695
    %v6150 = vpow.pop %v6149
    %v6151 = vmul.f32 %v6066, 1.442695
    %v6152 = vpow.pop %v6151
    %v6153 = vmul.f32 %v6067, 1.442695
    %v6154 = vpow.pop %v6153
    %v6155 = vmul.f32 %v6068, 1.442695
    %v6156 = vpow.pop %v6155
    %v6157 = vmul.f32 %v6069, 1.442695
    %v6158 = vpow.pop %v6157
    %v6159 = vmul.f32 %v6070, 1.442695
    %v6160 = vpow.pop %v6159
    %v6161 = vmul.f32 %v6071, 1.442695
    %v6162 = vpow.pop %v6161
    %v6163 = vmul.f32 %v6072, 1.442695
    %v6164 = vpow.pop %v6163
    %v6165 = vmul.f32 %v6073, 1.442695
    %v6166 = vpow.pop %v6165
    %v6167 = vmul.f32 %v6074, 1.442695
    %v6168 = vpow.pop %v6167
    %v6169 = vmul.f32 %v6075, 1.442695
    %v6170 = vpow.pop %v6169
    %v6171 = vmul.f32 %v6076, 1.442695
    %v6172 = vpow.pop %v6171
    %v6173 = vmul.f32 %v6077, 1.442695
    %v6174 = vpow.pop %v6173
    %v6175 = vmul.f32 %v6078, 1.442695
    %v6176 = vpow.pop %v6175
    %v6177 = vmul.f32 %v6079, 1.442695
    %v6178 = vpow.pop %v6177
    %v6179 = vmul.f32 %v6080, 1.442695
    %v6180 = vpow.pop %v6179
    %v6181 = vmul.f32 %v6081, 1.442695
    %v6182 = vpow.pop %v6181
    %v6183 = vmul.f32 %v6082, 1.442695
    %v6184 = vpow.pop %v6183
    %v6185 = vmul.f32 %v6083, 1.442695
    %v6186 = vpow.pop %v6185
    %v6187 = vmul.f32 %v6084, 1.442695
    %v6188 = vpow.pop %v6187
    %v6189 = vmul.f32 %v6085, 1.442695
    %v6190 = vpow.pop %v6189
    %v6191 = vmul.f32 %v6086, 1.442695
    %v6192 = vpow.pop %v6191
    %v6193 = vmul.f32 %v6087, 1.442695
    %v6194 = vpow.pop %v6193
    %v6195 = vmul.f32 %v6088, 1.442695
    %v6196 = vpow.pop %v6195
    %v6197 = vmul.f32 %v6089, 1.442695
    %v6198 = vpow.pop %v6197
    %v6199 = vmul.f32 %v6090, 1.442695
    %v6200 = vpow.pop %v6199
    %v6201 = vmul.f32 %v6091, 1.442695
    %v6202 = vpow.pop %v6201
    %v6203 = vmul.f32 %v6092, 1.442695
    %v6204 = vpow.pop %v6203
    %v6205 = vmul.f32 %v6093, 1.442695
    %v6206 = vpow.pop %v6205
    %v6207 = vmul.f32 %v6094, 1.442695
    %v6208 = vpow.pop %v6207
    %v6209 = vmul.f32 %v6095, 1.442695
    %v6210 = vpow.pop %v6209
    %v6211 = vmul.f32 %v6096, 1.442695
    %v6212 = vpow.pop %v6211
    %v6213 = vmul.f32 %v6097, 1.442695
    %v6214 = vpow.pop %v6213
    %v6215 = vmul.f32 %v6098, 1.442695
    %v6216 = vpow.pop %v6215
    %v6217 = vmul.f32 %v6099, 1.442695
    %v6218 = vpow.pop %v6217
    %v6219 = vmul.f32 %v6100, 1.442695
    %v6220 = vpow.pop %v6219
    %v6221 = vmul.f32 %v6101, 1.442695
    %v6222 = vpow.pop %v6221
    %v6223 = vmul.f32 %v6102, 1.442695
    %v6224 = vpow.pop %v6223
    %v6225 = vmul.f32 %v6103, 1.442695
    %v6226 = vpow.pop %v6225
    %v6227 = vmul.f32 %v6104, 1.442695
    %v6228 = vpow.pop %v6227
    %v6229 = vmul.f32 %v6105, 1.442695
    %v6230 = vpow.pop %v6229
    %v6231 = vmul.f32 %v6106, 1.442695
    %v6232 = vpow.pop %v6231
    %v6233 = vmul.f32 %v6107, 1.442695
    %v6234 = vpow.pop %v6233
    %v6235 = vmul.f32 %v6108, 1.442695
    %v6236 = vpow.pop %v6235
    %v6237 = vsel %vm2427, %v6110, 0.0
    %6238 = vadd.xlane.f32.xlu0 %v6237
    %v6239 = vpop.xlane.xlu0 %6238
    %v6240 = vsel %vm2427, %v6112, 0.0
    %6241 = vadd.xlane.f32.xlu0 %v6240
    %v6242 = vpop.xlane.xlu0 %6241
    %v6243 = vsel %vm2427, %v6114, 0.0
    %6244 = vadd.xlane.f32.xlu0 %v6243
    %v6245 = vpop.xlane.xlu0 %6244
    %v6246 = vsel %vm2427, %v6116, 0.0
    %6247 = vadd.xlane.f32.xlu0 %v6246
    %v6248 = vpop.xlane.xlu0 %6247
    %v6249 = vsel %vm2427, %v6118, 0.0
    %6250 = vadd.xlane.f32.xlu0 %v6249
    %v6251 = vpop.xlane.xlu0 %6250
    %v6252 = vsel %vm2427, %v6120, 0.0
    %6253 = vadd.xlane.f32.xlu0 %v6252
    %v6254 = vpop.xlane.xlu0 %6253
    %v6255 = vsel %vm2427, %v6122, 0.0
    %6256 = vadd.xlane.f32.xlu0 %v6255
    %v6257 = vpop.xlane.xlu0 %6256
    %v6258 = vsel %vm2427, %v6124, 0.0
    %6259 = vadd.xlane.f32.xlu0 %v6258
    %v6260 = vpop.xlane.xlu0 %6259
    %v6261 = vsel %vm2427, %v6126, 0.0
    %6262 = vadd.xlane.f32.xlu0 %v6261
    %v6263 = vpop.xlane.xlu0 %6262
    %v6264 = vsel %vm2427, %v6128, 0.0
    %6265 = vadd.xlane.f32.xlu0 %v6264
    %v6266 = vpop.xlane.xlu0 %6265
    %v6267 = vsel %vm2427, %v6130, 0.0
    %6268 = vadd.xlane.f32.xlu0 %v6267
    %v6269 = vpop.xlane.xlu0 %6268
    %v6270 = vsel %vm2427, %v6132, 0.0
    %6271 = vadd.xlane.f32.xlu0 %v6270
    %v6272 = vpop.xlane.xlu0 %6271
    %v6273 = vsel %vm2427, %v6134, 0.0
    %6274 = vadd.xlane.f32.xlu0 %v6273
    %v6275 = vpop.xlane.xlu0 %6274
    %v6276 = vsel %vm2427, %v6136, 0.0
    %6277 = vadd.xlane.f32.xlu0 %v6276
    %v6278 = vpop.xlane.xlu0 %6277
    %v6279 = vsel %vm2427, %v6138, 0.0
    %6280 = vadd.xlane.f32.xlu0 %v6279
    %v6281 = vpop.xlane.xlu0 %6280
    %v6282 = vsel %vm2427, %v6140, 0.0
    %6283 = vadd.xlane.f32.xlu0 %v6282
    %v6284 = vpop.xlane.xlu0 %6283
    %v6285 = vsel %vm2427, %v6142, 0.0
    %6286 = vadd.xlane.f32.xlu0 %v6285
    %v6287 = vpop.xlane.xlu0 %6286
    %v6288 = vsel %vm2427, %v6144, 0.0
    %6289 = vadd.xlane.f32.xlu0 %v6288
    %v6290 = vpop.xlane.xlu0 %6289
    %v6291 = vsel %vm2427, %v6146, 0.0
    %6292 = vadd.xlane.f32.xlu0 %v6291
    %v6293 = vpop.xlane.xlu0 %6292
    %v6294 = vsel %vm2427, %v6148, 0.0
    %6295 = vadd.xlane.f32.xlu0 %v6294
    %v6296 = vpop.xlane.xlu0 %6295
    %v6297 = vsel %vm2427, %v6150, 0.0
    %6298 = vadd.xlane.f32.xlu0 %v6297
    %v6299 = vpop.xlane.xlu0 %6298
    %v6300 = vsel %vm2427, %v6152, 0.0
    %6301 = vadd.xlane.f32.xlu0 %v6300
    %v6302 = vpop.xlane.xlu0 %6301
    %v6303 = vsel %vm2427, %v6154, 0.0
    %6304 = vadd.xlane.f32.xlu0 %v6303
    %v6305 = vpop.xlane.xlu0 %6304
    %v6306 = vsel %vm2427, %v6156, 0.0
    %6307 = vadd.xlane.f32.xlu0 %v6306
    %v6308 = vpop.xlane.xlu0 %6307
    %v6309 = vsel %vm2427, %v6158, 0.0
    %6310 = vadd.xlane.f32.xlu0 %v6309
    %v6311 = vpop.xlane.xlu0 %6310
    %v6312 = vsel %vm2427, %v6160, 0.0
    %6313 = vadd.xlane.f32.xlu0 %v6312
    %v6314 = vpop.xlane.xlu0 %6313
    %v6315 = vsel %vm2427, %v6162, 0.0
    %6316 = vadd.xlane.f32.xlu0 %v6315
    %v6317 = vpop.xlane.xlu0 %6316
    %v6318 = vsel %vm2427, %v6164, 0.0
    %6319 = vadd.xlane.f32.xlu0 %v6318
    %v6320 = vpop.xlane.xlu0 %6319
    %v6321 = vsel %vm2427, %v6166, 0.0
    %6322 = vadd.xlane.f32.xlu0 %v6321
    %v6323 = vpop.xlane.xlu0 %6322
    %v6324 = vsel %vm2427, %v6168, 0.0
    %6325 = vadd.xlane.f32.xlu0 %v6324
    %v6326 = vpop.xlane.xlu0 %6325
    %v6327 = vsel %vm2427, %v6170, 0.0
    %6328 = vadd.xlane.f32.xlu0 %v6327
    %v6329 = vpop.xlane.xlu0 %6328
    %v6330 = vsel %vm2427, %v6172, 0.0
    %6331 = vadd.xlane.f32.xlu0 %v6330
    %v6332 = vpop.xlane.xlu0 %6331
    %v6333 = vsel %vm2427, %v6174, 0.0
    %6334 = vadd.xlane.f32.xlu0 %v6333
    %v6335 = vpop.xlane.xlu0 %6334
    %v6336 = vsel %vm2427, %v6176, 0.0
    %6337 = vadd.xlane.f32.xlu0 %v6336
    %v6338 = vpop.xlane.xlu0 %6337
    %v6339 = vsel %vm2427, %v6178, 0.0
    %6340 = vadd.xlane.f32.xlu0 %v6339
    %v6341 = vpop.xlane.xlu0 %6340
    %v6342 = vsel %vm2427, %v6180, 0.0
    %6343 = vadd.xlane.f32.xlu0 %v6342
    %v6344 = vpop.xlane.xlu0 %6343
    %v6345 = vsel %vm2427, %v6182, 0.0
    %6346 = vadd.xlane.f32.xlu0 %v6345
    %v6347 = vpop.xlane.xlu0 %6346
    %v6348 = vsel %vm2427, %v6184, 0.0
    %6349 = vadd.xlane.f32.xlu0 %v6348
    %v6350 = vpop.xlane.xlu0 %6349
    %v6351 = vsel %vm2427, %v6186, 0.0
    %6352 = vadd.xlane.f32.xlu0 %v6351
    %v6353 = vpop.xlane.xlu0 %6352
    %v6354 = vsel %vm2427, %v6188, 0.0
    %6355 = vadd.xlane.f32.xlu0 %v6354
    %v6356 = vpop.xlane.xlu0 %6355
    %v6357 = vsel %vm2427, %v6190, 0.0
    %6358 = vadd.xlane.f32.xlu0 %v6357
    %v6359 = vpop.xlane.xlu0 %6358
    %v6360 = vsel %vm2427, %v6192, 0.0
    %6361 = vadd.xlane.f32.xlu0 %v6360
    %v6362 = vpop.xlane.xlu0 %6361
    %v6363 = vsel %vm2427, %v6194, 0.0
    %6364 = vadd.xlane.f32.xlu0 %v6363
    %v6365 = vpop.xlane.xlu0 %6364
    %v6366 = vsel %vm2427, %v6196, 0.0
    %6367 = vadd.xlane.f32.xlu0 %v6366
    %v6368 = vpop.xlane.xlu0 %6367
    %v6369 = vsel %vm2427, %v6198, 0.0
    %6370 = vadd.xlane.f32.xlu0 %v6369
    %v6371 = vpop.xlane.xlu0 %6370
    %v6372 = vsel %vm2427, %v6200, 0.0
    %6373 = vadd.xlane.f32.xlu0 %v6372
    %v6374 = vpop.xlane.xlu0 %6373
    %v6375 = vsel %vm2427, %v6202, 0.0
    %6376 = vadd.xlane.f32.xlu0 %v6375
    %v6377 = vpop.xlane.xlu0 %6376
    %v6378 = vsel %vm2427, %v6204, 0.0
    %6379 = vadd.xlane.f32.xlu0 %v6378
    %v6380 = vpop.xlane.xlu0 %6379
    %v6381 = vsel %vm2427, %v6206, 0.0
    %6382 = vadd.xlane.f32.xlu0 %v6381
    %v6383 = vpop.xlane.xlu0 %6382
    %v6384 = vsel %vm2427, %v6208, 0.0
    %6385 = vadd.xlane.f32.xlu0 %v6384
    %v6386 = vpop.xlane.xlu0 %6385
    %v6387 = vsel %vm2427, %v6210, 0.0
    %6388 = vadd.xlane.f32.xlu0 %v6387
    %v6389 = vpop.xlane.xlu0 %6388
    %v6390 = vsel %vm2427, %v6212, 0.0
    %6391 = vadd.xlane.f32.xlu0 %v6390
    %v6392 = vpop.xlane.xlu0 %6391
    %v6393 = vsel %vm2427, %v6214, 0.0
    %6394 = vadd.xlane.f32.xlu0 %v6393
    %v6395 = vpop.xlane.xlu0 %6394
    %v6396 = vsel %vm2427, %v6216, 0.0
    %6397 = vadd.xlane.f32.xlu0 %v6396
    %v6398 = vpop.xlane.xlu0 %6397
    %v6399 = vsel %vm2427, %v6218, 0.0
    %6400 = vadd.xlane.f32.xlu0 %v6399
    %v6401 = vpop.xlane.xlu0 %6400
    %v6402 = vsel %vm2427, %v6220, 0.0
    %6403 = vadd.xlane.f32.xlu0 %v6402
    %v6404 = vpop.xlane.xlu0 %6403
    %v6405 = vsel %vm2427, %v6222, 0.0
    %6406 = vadd.xlane.f32.xlu0 %v6405
    %v6407 = vpop.xlane.xlu0 %6406
    %v6408 = vsel %vm2427, %v6224, 0.0
    %6409 = vadd.xlane.f32.xlu0 %v6408
    %v6410 = vpop.xlane.xlu0 %6409
    %v6411 = vsel %vm2427, %v6226, 0.0
    %6412 = vadd.xlane.f32.xlu0 %v6411
    %v6413 = vpop.xlane.xlu0 %6412
    %v6414 = vsel %vm2427, %v6228, 0.0
    %6415 = vadd.xlane.f32.xlu0 %v6414
    %v6416 = vpop.xlane.xlu0 %6415
    %v6417 = vsel %vm2427, %v6230, 0.0
    %6418 = vadd.xlane.f32.xlu0 %v6417
    %v6419 = vpop.xlane.xlu0 %6418
    %v6420 = vsel %vm2427, %v6232, 0.0
    %6421 = vadd.xlane.f32.xlu0 %v6420
    %v6422 = vpop.xlane.xlu0 %6421
    %v6423 = vsel %vm2427, %v6234, 0.0
    %6424 = vadd.xlane.f32.xlu0 %v6423
    %v6425 = vpop.xlane.xlu0 %6424
    %v6426 = vsel %vm2427, %v6236, 0.0
    %6427 = vadd.xlane.f32.xlu0 %v6426
    %v6428 = vpop.xlane.xlu0 %6427
    %v6429 = vrcp.pop %v6239
    %v6430 = vrcp.pop %v6242
    %v6431 = vrcp.pop %v6245
    %v6432 = vrcp.pop %v6248
    %v6433 = vrcp.pop %v6251
    %v6434 = vrcp.pop %v6254
    %v6435 = vrcp.pop %v6257
    %v6436 = vrcp.pop %v6260
    %v6437 = vrcp.pop %v6263
    %v6438 = vrcp.pop %v6266
    %v6439 = vrcp.pop %v6269
    %v6440 = vrcp.pop %v6272
    %v6441 = vrcp.pop %v6275
    %v6442 = vrcp.pop %v6278
    %v6443 = vrcp.pop %v6281
    %v6444 = vrcp.pop %v6284
    %v6445 = vrcp.pop %v6287
    %v6446 = vrcp.pop %v6290
    %v6447 = vrcp.pop %v6293
    %v6448 = vrcp.pop %v6296
    %v6449 = vrcp.pop %v6299
    %v6450 = vrcp.pop %v6302
    %v6451 = vrcp.pop %v6305
    %v6452 = vrcp.pop %v6308
    %v6453 = vrcp.pop %v6311
    %v6454 = vrcp.pop %v6314
    %v6455 = vrcp.pop %v6317
    %v6456 = vrcp.pop %v6320
    %v6457 = vrcp.pop %v6323
    %v6458 = vrcp.pop %v6326
    %v6459 = vrcp.pop %v6329
    %v6460 = vrcp.pop %v6332
    %v6461 = vrcp.pop %v6335
    %v6462 = vrcp.pop %v6338
    %v6463 = vrcp.pop %v6341
    %v6464 = vrcp.pop %v6344
    %v6465 = vrcp.pop %v6347
    %v6466 = vrcp.pop %v6350
    %v6467 = vrcp.pop %v6353
    %v6468 = vrcp.pop %v6356
    %v6469 = vrcp.pop %v6359
    %v6470 = vrcp.pop %v6362
    %v6471 = vrcp.pop %v6365
    %v6472 = vrcp.pop %v6368
    %v6473 = vrcp.pop %v6371
    %v6474 = vrcp.pop %v6374
    %v6475 = vrcp.pop %v6377
    %v6476 = vrcp.pop %v6380
    %v6477 = vrcp.pop %v6383
    %v6478 = vrcp.pop %v6386
    %v6479 = vrcp.pop %v6389
    %v6480 = vrcp.pop %v6392
    %v6481 = vrcp.pop %v6395
    %v6482 = vrcp.pop %v6398
    %v6483 = vrcp.pop %v6401
    %v6484 = vrcp.pop %v6404
    %v6485 = vrcp.pop %v6407
    %v6486 = vrcp.pop %v6410
    %v6487 = vrcp.pop %v6413
    %v6488 = vrcp.pop %v6416
    %v6489 = vrcp.pop %v6419
    %v6490 = vrcp.pop %v6422
    %v6491 = vrcp.pop %v6425
    %v6492 = vrcp.pop %v6428
    %v6493 = vmul.f32 %v6110, %v6429
    %v6494 = vmul.f32 %v6112, %v6430
    %v6495 = vmul.f32 %v6114, %v6431
    %v6496 = vmul.f32 %v6116, %v6432
    %v6497 = vmul.f32 %v6118, %v6433
    %v6498 = vmul.f32 %v6120, %v6434
    %v6499 = vmul.f32 %v6122, %v6435
    %v6500 = vmul.f32 %v6124, %v6436
    %v6501 = vmul.f32 %v6126, %v6437
    %v6502 = vmul.f32 %v6128, %v6438
    %v6503 = vmul.f32 %v6130, %v6439
    %v6504 = vmul.f32 %v6132, %v6440
    %v6505 = vmul.f32 %v6134, %v6441
    %v6506 = vmul.f32 %v6136, %v6442
    %v6507 = vmul.f32 %v6138, %v6443
    %v6508 = vmul.f32 %v6140, %v6444
    %v6509 = vmul.f32 %v6142, %v6445
    %v6510 = vmul.f32 %v6144, %v6446
    %v6511 = vmul.f32 %v6146, %v6447
    %v6512 = vmul.f32 %v6148, %v6448
    %v6513 = vmul.f32 %v6150, %v6449
    %v6514 = vmul.f32 %v6152, %v6450
    %v6515 = vmul.f32 %v6154, %v6451
    %v6516 = vmul.f32 %v6156, %v6452
    %v6517 = vmul.f32 %v6158, %v6453
    %v6518 = vmul.f32 %v6160, %v6454
    %v6519 = vmul.f32 %v6162, %v6455
    %v6520 = vmul.f32 %v6164, %v6456
    %v6521 = vmul.f32 %v6166, %v6457
    %v6522 = vmul.f32 %v6168, %v6458
    %v6523 = vmul.f32 %v6170, %v6459
    %v6524 = vmul.f32 %v6172, %v6460
    %v6525 = vmul.f32 %v6174, %v6461
    %v6526 = vmul.f32 %v6176, %v6462
    %v6527 = vmul.f32 %v6178, %v6463
    %v6528 = vmul.f32 %v6180, %v6464
    %v6529 = vmul.f32 %v6182, %v6465
    %v6530 = vmul.f32 %v6184, %v6466
    %v6531 = vmul.f32 %v6186, %v6467
    %v6532 = vmul.f32 %v6188, %v6468
    %v6533 = vmul.f32 %v6190, %v6469
    %v6534 = vmul.f32 %v6192, %v6470
    %v6535 = vmul.f32 %v6194, %v6471
    %v6536 = vmul.f32 %v6196, %v6472
    %v6537 = vmul.f32 %v6198, %v6473
    %v6538 = vmul.f32 %v6200, %v6474
    %v6539 = vmul.f32 %v6202, %v6475
    %v6540 = vmul.f32 %v6204, %v6476
    %v6541 = vmul.f32 %v6206, %v6477
    %v6542 = vmul.f32 %v6208, %v6478
    %v6543 = vmul.f32 %v6210, %v6479
    %v6544 = vmul.f32 %v6212, %v6480
    %v6545 = vmul.f32 %v6214, %v6481
    %v6546 = vmul.f32 %v6216, %v6482
    %v6547 = vmul.f32 %v6218, %v6483
    %v6548 = vmul.f32 %v6220, %v6484
    %v6549 = vmul.f32 %v6222, %v6485
    %v6550 = vmul.f32 %v6224, %v6486
    %v6551 = vmul.f32 %v6226, %v6487
    %v6552 = vmul.f32 %v6228, %v6488
    %v6553 = vmul.f32 %v6230, %v6489
    %v6554 = vmul.f32 %v6232, %v6490
    %v6555 = vmul.f32 %v6234, %v6491
    %v6556 = vmul.f32 %v6236, %v6492
    %v6558 = vsel %vm2427, %v6493, 0
    %v6561 = vsel %vm2427, %v6494, 0
    %v6564 = vsel %vm2427, %v6495, 0
    %v6567 = vsel %vm2427, %v6496, 0
    %v6570 = vsel %vm2427, %v6497, 0
    %v6573 = vsel %vm2427, %v6498, 0
    %v6576 = vsel %vm2427, %v6499, 0
    %v6579 = vsel %vm2427, %v6500, 0
    %v6582 = vsel %vm2427, %v6501, 0
    %v6585 = vsel %vm2427, %v6502, 0
    %v6588 = vsel %vm2427, %v6503, 0
    %v6591 = vsel %vm2427, %v6504, 0
    %v6594 = vsel %vm2427, %v6505, 0
    %v6597 = vsel %vm2427, %v6506, 0
    %v6600 = vsel %vm2427, %v6507, 0
    %v6603 = vsel %vm2427, %v6508, 0
    %v6606 = vsel %vm2427, %v6509, 0
    %v6609 = vsel %vm2427, %v6510, 0
    %v6612 = vsel %vm2427, %v6511, 0
    %v6615 = vsel %vm2427, %v6512, 0
    %v6618 = vsel %vm2427, %v6513, 0
    %v6621 = vsel %vm2427, %v6514, 0
    %v6624 = vsel %vm2427, %v6515, 0
    %v6627 = vsel %vm2427, %v6516, 0
    %v6630 = vsel %vm2427, %v6517, 0
    %v6633 = vsel %vm2427, %v6518, 0
    %v6636 = vsel %vm2427, %v6519, 0
    %v6639 = vsel %vm2427, %v6520, 0
    %v6642 = vsel %vm2427, %v6521, 0
    %v6645 = vsel %vm2427, %v6522, 0
    %v6648 = vsel %vm2427, %v6523, 0
    %v6651 = vsel %vm2427, %v6524, 0
    %v6654 = vsel %vm2427, %v6525, 0
    %v6657 = vsel %vm2427, %v6526, 0
    %v6660 = vsel %vm2427, %v6527, 0
    %v6663 = vsel %vm2427, %v6528, 0
    %v6666 = vsel %vm2427, %v6529, 0
    %v6669 = vsel %vm2427, %v6530, 0
    %v6672 = vsel %vm2427, %v6531, 0
    %v6675 = vsel %vm2427, %v6532, 0
    %v6678 = vsel %vm2427, %v6533, 0
    %v6681 = vsel %vm2427, %v6534, 0
    %v6684 = vsel %vm2427, %v6535, 0
    %v6687 = vsel %vm2427, %v6536, 0
    %v6690 = vsel %vm2427, %v6537, 0
    %v6693 = vsel %vm2427, %v6538, 0
    %v6696 = vsel %vm2427, %v6539, 0
    %v6699 = vsel %vm2427, %v6540, 0
    %v6702 = vsel %vm2427, %v6541, 0
    %v6705 = vsel %vm2427, %v6542, 0
    %v6708 = vsel %vm2427, %v6543, 0
    %v6711 = vsel %vm2427, %v6544, 0
    %v6714 = vsel %vm2427, %v6545, 0
    %v6717 = vsel %vm2427, %v6546, 0
    %v6720 = vsel %vm2427, %v6547, 0
    %v6723 = vsel %vm2427, %v6548, 0
    %v6726 = vsel %vm2427, %v6549, 0
    %v6729 = vsel %vm2427, %v6550, 0
    %v6732 = vsel %vm2427, %v6551, 0
    %v6735 = vsel %vm2427, %v6552, 0
    %v6738 = vsel %vm2427, %v6553, 0
    %v6741 = vsel %vm2427, %v6554, 0
    %v6744 = vsel %vm2427, %v6555, 0
    %v6747 = vsel %vm2427, %v6556, 0
    %6749 = vmatprep.subr.mxu0 %v116
    %6750 = vmatpush1.msra.mxu0 %v115
    %6751 = vmatprep.subr.mxu0 %v2439
    %6752 = vmatpush1.msra.mxu0 %v2436
    %6753 = vmatprep.subr.mxu0 0.0
    %6754 = vmatpush1.msra.mxu0 0.0
    %6755 = vmatprep.subr.mxu0 0.0
    %6756 = vmatpush1.msra.mxu0 0.0
    %6757 = vmatprep.subr.mxu0 0.0
    %6758 = vmatpush1.msra.mxu0 0.0
    %6759 = vmatprep.subr.mxu0 0.0
    %6760 = vmatpush1.msra.mxu0 0.0
    %6761 = vmatprep.subr.mxu0 0.0
    %6762 = vmatpush1.msra.mxu0 0.0
    %6763 = vmatprep.subr.mxu0 0.0
    %6764 = vmatpush1.msra.mxu0 0.0
    %6765 = vmatprep.subr.mxu0 0.0
    %6766 = vmatpush1.msra.mxu0 0.0
    %6767 = vmatprep.subr.mxu0 0.0
    %6768 = vmatpush1.msra.mxu0 0.0
    %6769 = vmatprep.subr.mxu0 0.0
    %6770 = vmatpush1.msra.mxu0 0.0
    %6771 = vmatprep.subr.mxu0 0.0
    %6772 = vmatpush1.msra.mxu0 0.0
    %6773 = vmatprep.subr.mxu0 0.0
    %6774 = vmatpush1.msra.mxu0 0.0
    %6775 = vmatprep.subr.mxu0 0.0
    %6776 = vmatpush1.msra.mxu0 0.0
    %6777 = vmatprep.subr.mxu0 0.0
    %6778 = vmatpush1.msra.mxu0 0.0
    %6779 = vmatprep.subr.mxu0 0.0
    %6780 = vmatpush1.msra.mxu0 0.0
    %6781 = vmatprep.subr.mxu0 0.0
    %6782 = vmatpush1.msra.mxu0 0.0
    %6783 = vmatprep.subr.mxu0 0.0
    %6784 = vmatpush1.msra.mxu0 0.0
    %6785 = vmatprep.subr.mxu0 0.0
    %6786 = vmatpush1.msra.mxu0 0.0
    %6787 = vmatprep.subr.mxu0 0.0
    %6788 = vmatpush1.msra.mxu0 0.0
    %6789 = vmatprep.subr.mxu0 0.0
    %6790 = vmatpush1.msra.mxu0 0.0
    %6791 = vmatprep.subr.mxu0 0.0
    %6792 = vmatpush1.msra.mxu0 0.0
    %6793 = vmatprep.subr.mxu0 0.0
    %6794 = vmatpush1.msra.mxu0 0.0
    %6795 = vmatprep.subr.mxu0 0.0
    %6796 = vmatpush1.msra.mxu0 0.0
    %6797 = vmatprep.subr.mxu0 0.0
    %6798 = vmatpush1.msra.mxu0 0.0
    %6799 = vmatprep.subr.mxu0 0.0
    %6800 = vmatpush1.msra.mxu0 0.0
    %6801 = vmatprep.subr.mxu0 0.0
    %6802 = vmatpush1.msra.mxu0 0.0
    %6803 = vmatprep.subr.mxu0 0.0
    %6804 = vmatpush1.msra.mxu0 0.0
    %6805 = vmatprep.subr.mxu0 0.0
    %6806 = vmatpush1.msra.mxu0 0.0
    %6807 = vmatprep.subr.mxu0 0.0
    %6808 = vmatpush1.msra.mxu0 0.0
    %6809 = vmatprep.subr.mxu0 0.0
    %6810 = vmatpush1.msra.mxu0 0.0
    %6811 = vmatprep.subr.mxu0 0.0
    %6812 = vmatpush1.msra.mxu0 0.0
    %6813 = vmatprep.mubr.f32.mxu0 0.0
    %6814 = vmatmul.mubr.f32.gmra.mrb[0].mxu0 %v6558
    %v6815 = vpop.f32.mrb[0].mxu0
    %v6816 = vadd.f32 0.0, %v6815
    %v6817 = vpop.f32.mrb[0].mxu0
    %v6818 = vadd.f32 0.0, %v6817
    %6819 = vmatprep.mubr.f32.mxu0 0.0
    %6820 = vmatmul.mubr.f32.gmra.mrb[0].mxu0 %v6561
    %v6821 = vpop.f32.mrb[0].mxu0
    %v6822 = vadd.f32 0.0, %v6821
    %v6823 = vpop.f32.mrb[0].mxu0
    %v6824 = vadd.f32 0.0, %v6823
    %6825 = vmatprep.mubr.f32.mxu0 0.0
    %6826 = vmatmul.mubr.f32.gmra.mrb[0].mxu0 %v6564
    %v6827 = vpop.f32.mrb[0].mxu0
    %v6828 = vadd.f32 0.0, %v6827
    %v6829 = vpop.f32.mrb[0].mxu0
    %v6830 = vadd.f32 0.0, %v6829
    %6831 = vmatprep.mubr.f32.mxu0 0.0
    %6832 = vmatmul.mubr.f32.gmra.mrb[0].mxu0 %v6567
    %v6833 = vpop.f32.mrb[0].mxu0
    %v6834 = vadd.f32 0.0, %v6833
    %v6835 = vpop.f32.mrb[0].mxu0
    %v6836 = vadd.f32 0.0, %v6835
    %6837 = vmatprep.mubr.f32.mxu0 0.0
    %6838 = vmatmul.mubr.f32.gmra.mrb[0].mxu0 %v6570
    %v6839 = vpop.f32.mrb[0].mxu0
    %v6840 = vadd.f32 0.0, %v6839
    %v6841 = vpop.f32.mrb[0].mxu0
    %v6842 = vadd.f32 0.0, %v6841
    %6843 = vmatprep.mubr.f32.mxu0 0.0
    %6844 = vmatmul.mubr.f32.gmra.mrb[0].mxu0 %v6573
    %v6845 = vpop.f32.mrb[0].mxu0
    %v6846 = vadd.f32 0.0, %v6845
    %v6847 = vpop.f32.mrb[0].mxu0
    %v6848 = vadd.f32 0.0, %v6847
    %6849 = vmatprep.mubr.f32.mxu0 0.0
    %6850 = vmatmul.mubr.f32.gmra.mrb[0].mxu0 %v6576
    %v6851 = vpop.f32.mrb[0].mxu0
    %v6852 = vadd.f32 0.0, %v6851
    %v6853 = vpop.f32.mrb[0].mxu0
    %v6854 = vadd.f32 0.0, %v6853
    %6855 = vmatprep.mubr.f32.mxu0 0.0
    %6856 = vmatmul.mubr.f32.gmra.mrb[0].mxu0 %v6579
    %v6857 = vpop.f32.mrb[0].mxu0
    %v6858 = vadd.f32 0.0, %v6857
    %v6859 = vpop.f32.mrb[0].mxu0
    %v6860 = vadd.f32 0.0, %v6859
    %6861 = vmatprep.mubr.f32.mxu0 0.0
    %6862 = vmatmul.mubr.f32.gmra.mrb[0].mxu0 %v6582
    %v6863 = vpop.f32.mrb[0].mxu0
    %v6864 = vadd.f32 0.0, %v6863
    %v6865 = vpop.f32.mrb[0].mxu0
    %v6866 = vadd.f32 0.0, %v6865
    %6867 = vmatprep.mubr.f32.mxu0 0.0
    %6868 = vmatmul.mubr.f32.gmra.mrb[0].mxu0 %v6585
    %v6869 = vpop.f32.mrb[0].mxu0
    %v6870 = vadd.f32 0.0, %v6869
    %v6871 = vpop.f32.mrb[0].mxu0
    %v6872 = vadd.f32 0.0, %v6871
    %6873 = vmatprep.mubr.f32.mxu0 0.0
    %6874 = vmatmul.mubr.f32.gmra.mrb[0].mxu0 %v6588
    %v6875 = vpop.f32.mrb[0].mxu0
    %v6876 = vadd.f32 0.0, %v6875
    %v6877 = vpop.f32.mrb[0].mxu0
    %v6878 = vadd.f32 0.0, %v6877
    %6879 = vmatprep.mubr.f32.mxu0 0.0
    %6880 = vmatmul.mubr.f32.gmra.mrb[0].mxu0 %v6591
    %v6881 = vpop.f32.mrb[0].mxu0
    %v6882 = vadd.f32 0.0, %v6881
    %v6883 = vpop.f32.mrb[0].mxu0
    %v6884 = vadd.f32 0.0, %v6883
    %6885 = vmatprep.mubr.f32.mxu0 0.0
    %6886 = vmatmul.mubr.f32.gmra.mrb[0].mxu0 %v6594
    %v6887 = vpop.f32.mrb[0].mxu0
    %v6888 = vadd.f32 0.0, %v6887
    %v6889 = vpop.f32.mrb[0].mxu0
    %v6890 = vadd.f32 0.0, %v6889
    %6891 = vmatprep.mubr.f32.mxu0 0.0
    %6892 = vmatmul.mubr.f32.gmra.mrb[0].mxu0 %v6597
    %v6893 = vpop.f32.mrb[0].mxu0
    %v6894 = vadd.f32 0.0, %v6893
    %v6895 = vpop.f32.mrb[0].mxu0
    %v6896 = vadd.f32 0.0, %v6895
    %6897 = vmatprep.mubr.f32.mxu0 0.0
    %6898 = vmatmul.mubr.f32.gmra.mrb[0].mxu0 %v6600
    %v6899 = vpop.f32.mrb[0].mxu0
    %v6900 = vadd.f32 0.0, %v6899
    %v6901 = vpop.f32.mrb[0].mxu0
    %v6902 = vadd.f32 0.0, %v6901
    %6903 = vmatprep.mubr.f32.mxu0 0.0
    %6904 = vmatmul.mubr.f32.gmra.mrb[0].mxu0 %v6603
    %v6905 = vpop.f32.mrb[0].mxu0
    %v6906 = vadd.f32 0.0, %v6905
    %v6907 = vpop.f32.mrb[0].mxu0
    %v6908 = vadd.f32 0.0, %v6907
    %6909 = vmatprep.mubr.f32.mxu0 0.0
    %6910 = vmatmul.mubr.f32.gmra.mrb[0].mxu0 %v6606
    %v6911 = vpop.f32.mrb[0].mxu0
    %v6912 = vadd.f32 0.0, %v6911
    %v6913 = vpop.f32.mrb[0].mxu0
    %v6914 = vadd.f32 0.0, %v6913
    %6915 = vmatprep.mubr.f32.mxu0 0.0
    %6916 = vmatmul.mubr.f32.gmra.mrb[0].mxu0 %v6609
    %v6917 = vpop.f32.mrb[0].mxu0
    %v6918 = vadd.f32 0.0, %v6917
    %v6919 = vpop.f32.mrb[0].mxu0
    %v6920 = vadd.f32 0.0, %v6919
    %6921 = vmatprep.mubr.f32.mxu0 0.0
    %6922 = vmatmul.mubr.f32.gmra.mrb[0].mxu0 %v6612
    %v6923 = vpop.f32.mrb[0].mxu0
    %v6924 = vadd.f32 0.0, %v6923
    %v6925 = vpop.f32.mrb[0].mxu0
    %v6926 = vadd.f32 0.0, %v6925
    %6927 = vmatprep.mubr.f32.mxu0 0.0
    %6928 = vmatmul.mubr.f32.gmra.mrb[0].mxu0 %v6615
    %v6929 = vpop.f32.mrb[0].mxu0
    %v6930 = vadd.f32 0.0, %v6929
    %v6931 = vpop.f32.mrb[0].mxu0
    %v6932 = vadd.f32 0.0, %v6931
    %6933 = vmatprep.mubr.f32.mxu0 0.0
    %6934 = vmatmul.mubr.f32.gmra.mrb[0].mxu0 %v6618
    %v6935 = vpop.f32.mrb[0].mxu0
    %v6936 = vadd.f32 0.0, %v6935
    %v6937 = vpop.f32.mrb[0].mxu0
    %v6938 = vadd.f32 0.0, %v6937
    %6939 = vmatprep.mubr.f32.mxu0 0.0
    %6940 = vmatmul.mubr.f32.gmra.mrb[0].mxu0 %v6621
    %v6941 = vpop.f32.mrb[0].mxu0
    %v6942 = vadd.f32 0.0, %v6941
    %v6943 = vpop.f32.mrb[0].mxu0
    %v6944 = vadd.f32 0.0, %v6943
    %6945 = vmatprep.mubr.f32.mxu0 0.0
    %6946 = vmatmul.mubr.f32.gmra.mrb[0].mxu0 %v6624
    %v6947 = vpop.f32.mrb[0].mxu0
    %v6948 = vadd.f32 0.0, %v6947
    %v6949 = vpop.f32.mrb[0].mxu0
    %v6950 = vadd.f32 0.0, %v6949
    %6951 = vmatprep.mubr.f32.mxu0 0.0
    %6952 = vmatmul.mubr.f32.gmra.mrb[0].mxu0 %v6627
    %v6953 = vpop.f32.mrb[0].mxu0
    %v6954 = vadd.f32 0.0, %v6953
    %v6955 = vpop.f32.mrb[0].mxu0
    %v6956 = vadd.f32 0.0, %v6955
    %6957 = vmatprep.mubr.f32.mxu0 0.0
    %6958 = vmatmul.mubr.f32.gmra.mrb[0].mxu0 %v6630
    %v6959 = vpop.f32.mrb[0].mxu0
    %v6960 = vadd.f32 0.0, %v6959
    %v6961 = vpop.f32.mrb[0].mxu0
    %v6962 = vadd.f32 0.0, %v6961
    %6963 = vmatprep.mubr.f32.mxu0 0.0
    %6964 = vmatmul.mubr.f32.gmra.mrb[0].mxu0 %v6633
    %v6965 = vpop.f32.mrb[0].mxu0
    %v6966 = vadd.f32 0.0, %v6965
    %v6967 = vpop.f32.mrb[0].mxu0
    %v6968 = vadd.f32 0.0, %v6967
    %6969 = vmatprep.mubr.f32.mxu0 0.0
    %6970 = vmatmul.mubr.f32.gmra.mrb[0].mxu0 %v6636
    %v6971 = vpop.f32.mrb[0].mxu0
    %v6972 = vadd.f32 0.0, %v6971
    %v6973 = vpop.f32.mrb[0].mxu0
    %v6974 = vadd.f32 0.0, %v6973
    %6975 = vmatprep.mubr.f32.mxu0 0.0
    %6976 = vmatmul.mubr.f32.gmra.mrb[0].mxu0 %v6639
    %v6977 = vpop.f32.mrb[0].mxu0
    %v6978 = vadd.f32 0.0, %v6977
    %v6979 = vpop.f32.mrb[0].mxu0
    %v6980 = vadd.f32 0.0, %v6979
    %6981 = vmatprep.mubr.f32.mxu0 0.0
    %6982 = vmatmul.mubr.f32.gmra.mrb[0].mxu0 %v6642
    %v6983 = vpop.f32.mrb[0].mxu0
    %v6984 = vadd.f32 0.0, %v6983
    %v6985 = vpop.f32.mrb[0].mxu0
    %v6986 = vadd.f32 0.0, %v6985
    %6987 = vmatprep.mubr.f32.mxu0 0.0
    %6988 = vmatmul.mubr.f32.gmra.mrb[0].mxu0 %v6645
    %v6989 = vpop.f32.mrb[0].mxu0
    %v6990 = vadd.f32 0.0, %v6989
    %v6991 = vpop.f32.mrb[0].mxu0
    %v6992 = vadd.f32 0.0, %v6991
    %6993 = vmatprep.mubr.f32.mxu0 0.0
    %6994 = vmatmul.mubr.f32.gmra.mrb[0].mxu0 %v6648
    %v6995 = vpop.f32.mrb[0].mxu0
    %v6996 = vadd.f32 0.0, %v6995
    %v6997 = vpop.f32.mrb[0].mxu0
    %v6998 = vadd.f32 0.0, %v6997
    %6999 = vmatprep.mubr.f32.mxu0 0.0
    %7000 = vmatmul.mubr.f32.gmra.mrb[0].mxu0 %v6651
    %v7001 = vpop.f32.mrb[0].mxu0
    %v7002 = vadd.f32 0.0, %v7001
    %v7003 = vpop.f32.mrb[0].mxu0
    %v7004 = vadd.f32 0.0, %v7003
    %7005 = vmatprep.mubr.f32.mxu0 0.0
    %7006 = vmatmul.mubr.f32.gmra.mrb[0].mxu0 %v6654
    %v7007 = vpop.f32.mrb[0].mxu0
    %v7008 = vadd.f32 0.0, %v7007
    %v7009 = vpop.f32.mrb[0].mxu0
    %v7010 = vadd.f32 0.0, %v7009
    %7011 = vmatprep.mubr.f32.mxu0 0.0
    %7012 = vmatmul.mubr.f32.gmra.mrb[0].mxu0 %v6657
    %v7013 = vpop.f32.mrb[0].mxu0
    %v7014 = vadd.f32 0.0, %v7013
    %v7015 = vpop.f32.mrb[0].mxu0
    %v7016 = vadd.f32 0.0, %v7015
    %7017 = vmatprep.mubr.f32.mxu0 0.0
    %7018 = vmatmul.mubr.f32.gmra.mrb[0].mxu0 %v6660
    %v7019 = vpop.f32.mrb[0].mxu0
    %v7020 = vadd.f32 0.0, %v7019
    %v7021 = vpop.f32.mrb[0].mxu0
    %v7022 = vadd.f32 0.0, %v7021
    %7023 = vmatprep.mubr.f32.mxu0 0.0
    %7024 = vmatmul.mubr.f32.gmra.mrb[0].mxu0 %v6663
    %v7025 = vpop.f32.mrb[0].mxu0
    %v7026 = vadd.f32 0.0, %v7025
    %v7027 = vpop.f32.mrb[0].mxu0
    %v7028 = vadd.f32 0.0, %v7027
    %7029 = vmatprep.mubr.f32.mxu0 0.0
    %7030 = vmatmul.mubr.f32.gmra.mrb[0].mxu0 %v6666
    %v7031 = vpop.f32.mrb[0].mxu0
    %v7032 = vadd.f32 0.0, %v7031
    %v7033 = vpop.f32.mrb[0].mxu0
    %v7034 = vadd.f32 0.0, %v7033
    %7035 = vmatprep.mubr.f32.mxu0 0.0
    %7036 = vmatmul.mubr.f32.gmra.mrb[0].mxu0 %v6669
    %v7037 = vpop.f32.mrb[0].mxu0
    %v7038 = vadd.f32 0.0, %v7037
    %v7039 = vpop.f32.mrb[0].mxu0
    %v7040 = vadd.f32 0.0, %v7039
    %7041 = vmatprep.mubr.f32.mxu0 0.0
    %7042 = vmatmul.mubr.f32.gmra.mrb[0].mxu0 %v6672
    %v7043 = vpop.f32.mrb[0].mxu0
    %v7044 = vadd.f32 0.0, %v7043
    %v7045 = vpop.f32.mrb[0].mxu0
    %v7046 = vadd.f32 0.0, %v7045
    %7047 = vmatprep.mubr.f32.mxu0 0.0
    %7048 = vmatmul.mubr.f32.gmra.mrb[0].mxu0 %v6675
    %v7049 = vpop.f32.mrb[0].mxu0
    %v7050 = vadd.f32 0.0, %v7049
    %v7051 = vpop.f32.mrb[0].mxu0
    %v7052 = vadd.f32 0.0, %v7051
    %7053 = vmatprep.mubr.f32.mxu0 0.0
    %7054 = vmatmul.mubr.f32.gmra.mrb[0].mxu0 %v6678
    %v7055 = vpop.f32.mrb[0].mxu0
    %v7056 = vadd.f32 0.0, %v7055
    %v7057 = vpop.f32.mrb[0].mxu0
    %v7058 = vadd.f32 0.0, %v7057
    %7059 = vmatprep.mubr.f32.mxu0 0.0
    %7060 = vmatmul.mubr.f32.gmra.mrb[0].mxu0 %v6681
    %v7061 = vpop.f32.mrb[0].mxu0
    %v7062 = vadd.f32 0.0, %v7061
    %v7063 = vpop.f32.mrb[0].mxu0
    %v7064 = vadd.f32 0.0, %v7063
    %7065 = vmatprep.mubr.f32.mxu0 0.0
    %7066 = vmatmul.mubr.f32.gmra.mrb[0].mxu0 %v6684
    %v7067 = vpop.f32.mrb[0].mxu0
    %v7068 = vadd.f32 0.0, %v7067
    %v7069 = vpop.f32.mrb[0].mxu0
    %v7070 = vadd.f32 0.0, %v7069
    %7071 = vmatprep.mubr.f32.mxu0 0.0
    %7072 = vmatmul.mubr.f32.gmra.mrb[0].mxu0 %v6687
    %v7073 = vpop.f32.mrb[0].mxu0
    %v7074 = vadd.f32 0.0, %v7073
    %v7075 = vpop.f32.mrb[0].mxu0
    %v7076 = vadd.f32 0.0, %v7075
    %7077 = vmatprep.mubr.f32.mxu0 0.0
    %7078 = vmatmul.mubr.f32.gmra.mrb[0].mxu0 %v6690
    %v7079 = vpop.f32.mrb[0].mxu0
    %v7080 = vadd.f32 0.0, %v7079
    %v7081 = vpop.f32.mrb[0].mxu0
    %v7082 = vadd.f32 0.0, %v7081
    %7083 = vmatprep.mubr.f32.mxu0 0.0
    %7084 = vmatmul.mubr.f32.gmra.mrb[0].mxu0 %v6693
    %v7085 = vpop.f32.mrb[0].mxu0
    %v7086 = vadd.f32 0.0, %v7085
    %v7087 = vpop.f32.mrb[0].mxu0
    %v7088 = vadd.f32 0.0, %v7087
    %7089 = vmatprep.mubr.f32.mxu0 0.0
    %7090 = vmatmul.mubr.f32.gmra.mrb[0].mxu0 %v6696
    %v7091 = vpop.f32.mrb[0].mxu0
    %v7092 = vadd.f32 0.0, %v7091
    %v7093 = vpop.f32.mrb[0].mxu0
    %v7094 = vadd.f32 0.0, %v7093
    %7095 = vmatprep.mubr.f32.mxu0 0.0
    %7096 = vmatmul.mubr.f32.gmra.mrb[0].mxu0 %v6699
    %v7097 = vpop.f32.mrb[0].mxu0
    %v7098 = vadd.f32 0.0, %v7097
    %v7099 = vpop.f32.mrb[0].mxu0
    %v7100 = vadd.f32 0.0, %v7099
    %7101 = vmatprep.mubr.f32.mxu0 0.0
    %7102 = vmatmul.mubr.f32.gmra.mrb[0].mxu0 %v6702
    %v7103 = vpop.f32.mrb[0].mxu0
    %v7104 = vadd.f32 0.0, %v7103
    %v7105 = vpop.f32.mrb[0].mxu0
    %v7106 = vadd.f32 0.0, %v7105
    %7107 = vmatprep.mubr.f32.mxu0 0.0
    %7108 = vmatmul.mubr.f32.gmra.mrb[0].mxu0 %v6705
    %v7109 = vpop.f32.mrb[0].mxu0
    %v7110 = vadd.f32 0.0, %v7109
    %v7111 = vpop.f32.mrb[0].mxu0
    %v7112 = vadd.f32 0.0, %v7111
    %7113 = vmatprep.mubr.f32.mxu0 0.0
    %7114 = vmatmul.mubr.f32.gmra.mrb[0].mxu0 %v6708
    %v7115 = vpop.f32.mrb[0].mxu0
    %v7116 = vadd.f32 0.0, %v7115
    %v7117 = vpop.f32.mrb[0].mxu0
    %v7118 = vadd.f32 0.0, %v7117
    %7119 = vmatprep.mubr.f32.mxu0 0.0
    %7120 = vmatmul.mubr.f32.gmra.mrb[0].mxu0 %v6711
    %v7121 = vpop.f32.mrb[0].mxu0
    %v7122 = vadd.f32 0.0, %v7121
    %v7123 = vpop.f32.mrb[0].mxu0
    %v7124 = vadd.f32 0.0, %v7123
    %7125 = vmatprep.mubr.f32.mxu0 0.0
    %7126 = vmatmul.mubr.f32.gmra.mrb[0].mxu0 %v6714
    %v7127 = vpop.f32.mrb[0].mxu0
    %v7128 = vadd.f32 0.0, %v7127
    %v7129 = vpop.f32.mrb[0].mxu0
    %v7130 = vadd.f32 0.0, %v7129
    %7131 = vmatprep.mubr.f32.mxu0 0.0
    %7132 = vmatmul.mubr.f32.gmra.mrb[0].mxu0 %v6717
    %v7133 = vpop.f32.mrb[0].mxu0
    %v7134 = vadd.f32 0.0, %v7133
    %v7135 = vpop.f32.mrb[0].mxu0
    %v7136 = vadd.f32 0.0, %v7135
    %7137 = vmatprep.mubr.f32.mxu0 0.0
    %7138 = vmatmul.mubr.f32.gmra.mrb[0].mxu0 %v6720
    %v7139 = vpop.f32.mrb[0].mxu0
    %v7140 = vadd.f32 0.0, %v7139
    %v7141 = vpop.f32.mrb[0].mxu0
    %v7142 = vadd.f32 0.0, %v7141
    %7143 = vmatprep.mubr.f32.mxu0 0.0
    %7144 = vmatmul.mubr.f32.gmra.mrb[0].mxu0 %v6723
    %v7145 = vpop.f32.mrb[0].mxu0
    %v7146 = vadd.f32 0.0, %v7145
    %v7147 = vpop.f32.mrb[0].mxu0
    %v7148 = vadd.f32 0.0, %v7147
    %7149 = vmatprep.mubr.f32.mxu0 0.0
    %7150 = vmatmul.mubr.f32.gmra.mrb[0].mxu0 %v6726
    %v7151 = vpop.f32.mrb[0].mxu0
    %v7152 = vadd.f32 0.0, %v7151
    %v7153 = vpop.f32.mrb[0].mxu0
    %v7154 = vadd.f32 0.0, %v7153
    %7155 = vmatprep.mubr.f32.mxu0 0.0
    %7156 = vmatmul.mubr.f32.gmra.mrb[0].mxu0 %v6729
    %v7157 = vpop.f32.mrb[0].mxu0
    %v7158 = vadd.f32 0.0, %v7157
    %v7159 = vpop.f32.mrb[0].mxu0
    %v7160 = vadd.f32 0.0, %v7159
    %7161 = vmatprep.mubr.f32.mxu0 0.0
    %7162 = vmatmul.mubr.f32.gmra.mrb[0].mxu0 %v6732
    %v7163 = vpop.f32.mrb[0].mxu0
    %v7164 = vadd.f32 0.0, %v7163
    %v7165 = vpop.f32.mrb[0].mxu0
    %v7166 = vadd.f32 0.0, %v7165
    %7167 = vmatprep.mubr.f32.mxu0 0.0
    %7168 = vmatmul.mubr.f32.gmra.mrb[0].mxu0 %v6735
    %v7169 = vpop.f32.mrb[0].mxu0
    %v7170 = vadd.f32 0.0, %v7169
    %v7171 = vpop.f32.mrb[0].mxu0
    %v7172 = vadd.f32 0.0, %v7171
    %7173 = vmatprep.mubr.f32.mxu0 0.0
    %7174 = vmatmul.mubr.f32.gmra.mrb[0].mxu0 %v6738
    %v7175 = vpop.f32.mrb[0].mxu0
    %v7176 = vadd.f32 0.0, %v7175
    %v7177 = vpop.f32.mrb[0].mxu0
    %v7178 = vadd.f32 0.0, %v7177
    %7179 = vmatprep.mubr.f32.mxu0 0.0
    %7180 = vmatmul.mubr.f32.gmra.mrb[0].mxu0 %v6741
    %v7181 = vpop.f32.mrb[0].mxu0
    %v7182 = vadd.f32 0.0, %v7181
    %v7183 = vpop.f32.mrb[0].mxu0
    %v7184 = vadd.f32 0.0, %v7183
    %7185 = vmatprep.mubr.f32.mxu0 0.0
    %7186 = vmatmul.mubr.f32.gmra.mrb[0].mxu0 %v6744
    %v7187 = vpop.f32.mrb[0].mxu0
    %v7188 = vadd.f32 0.0, %v7187
    %v7189 = vpop.f32.mrb[0].mxu0
    %v7190 = vadd.f32 0.0, %v7189
    %7191 = vmatprep.mubr.f32.mxu0 0.0
    %7192 = vmatmul.mubr.f32.gmra.mrb[0].mxu0 %v6747
    %v7193 = vpop.f32.mrb[0].mxu0
    %v7194 = vadd.f32 0.0, %v7193
    %v7195 = vpop.f32.mrb[0].mxu0
    %v7196 = vadd.f32 0.0, %v7195
    %7197 = vdwg.mxu0
    %v7198 = vmul.f32 %v6816, %v195
    %v7199 = vmul.f32 %v6818, %v197
    %v7200 = vmul.f32 %v6822, %v199
    %v7201 = vmul.f32 %v6824, %v201
    %v7202 = vmul.f32 %v6828, %v257
    %v7203 = vmul.f32 %v6830, %v259
    %v7204 = vmul.f32 %v6834, %v261
    %v7205 = vmul.f32 %v6836, %v263
    %v7206 = vmul.f32 %v6840, %v319
    %v7207 = vmul.f32 %v6842, %v321
    %v7208 = vmul.f32 %v6846, %v323
    %v7209 = vmul.f32 %v6848, %v325
    %v7210 = vmul.f32 %v6852, %v381
    %v7211 = vmul.f32 %v6854, %v383
    %v7212 = vmul.f32 %v6858, %v385
    %v7213 = vmul.f32 %v6860, %v387
    %v7214 = vmul.f32 %v6864, %v443
    %v7215 = vmul.f32 %v6866, %v445
    %v7216 = vmul.f32 %v6870, %v447
    %v7217 = vmul.f32 %v6872, %v449
    %v7218 = vmul.f32 %v6876, %v505
    %v7219 = vmul.f32 %v6878, %v507
    %v7220 = vmul.f32 %v6882, %v509
    %v7221 = vmul.f32 %v6884, %v511
    %v7222 = vmul.f32 %v6888, %v567
    %v7223 = vmul.f32 %v6890, %v569
    %v7224 = vmul.f32 %v6894, %v571
    %v7225 = vmul.f32 %v6896, %v573
    %v7226 = vmul.f32 %v6900, %v629
    %v7227 = vmul.f32 %v6902, %v631
    %v7228 = vmul.f32 %v6906, %v633
    %v7229 = vmul.f32 %v6908, %v635
    %v7230 = vmul.f32 %v6912, %v691
    %v7231 = vmul.f32 %v6914, %v693
    %v7232 = vmul.f32 %v6918, %v695
    %v7233 = vmul.f32 %v6920, %v697
    %v7234 = vmul.f32 %v6924, %v753
    %v7235 = vmul.f32 %v6926, %v755
    %v7236 = vmul.f32 %v6930, %v757
    %v7237 = vmul.f32 %v6932, %v759
    %v7238 = vmul.f32 %v6936, %v815
    %v7239 = vmul.f32 %v6938, %v817
    %v7240 = vmul.f32 %v6942, %v819
    %v7241 = vmul.f32 %v6944, %v821
    %v7242 = vmul.f32 %v6948, %v877
    %v7243 = vmul.f32 %v6950, %v879
    %v7244 = vmul.f32 %v6954, %v881
    %v7245 = vmul.f32 %v6956, %v883
    %v7246 = vmul.f32 %v6960, %v939
    %v7247 = vmul.f32 %v6962, %v941
    %v7248 = vmul.f32 %v6966, %v943
    %v7249 = vmul.f32 %v6968, %v945
    %v7250 = vmul.f32 %v6972, %v1001
    %v7251 = vmul.f32 %v6974, %v1003
    %v7252 = vmul.f32 %v6978, %v1005
    %v7253 = vmul.f32 %v6980, %v1007
    %v7254 = vmul.f32 %v6984, %v1063
    %v7255 = vmul.f32 %v6986, %v1065
    %v7256 = vmul.f32 %v6990, %v1067
    %v7257 = vmul.f32 %v6992, %v1069
    %v7258 = vmul.f32 %v6996, %v1125
    %v7259 = vmul.f32 %v6998, %v1127
    %v7260 = vmul.f32 %v7002, %v1129
    %v7261 = vmul.f32 %v7004, %v1131
    %v7262 = vmul.f32 %v7008, %v1187
    %v7263 = vmul.f32 %v7010, %v1189
    %v7264 = vmul.f32 %v7014, %v1191
    %v7265 = vmul.f32 %v7016, %v1193
    %v7266 = vmul.f32 %v7020, %v1249
    %v7267 = vmul.f32 %v7022, %v1251
    %v7268 = vmul.f32 %v7026, %v1253
    %v7269 = vmul.f32 %v7028, %v1255
    %v7270 = vmul.f32 %v7032, %v1311
    %v7271 = vmul.f32 %v7034, %v1313
    %v7272 = vmul.f32 %v7038, %v1315
    %v7273 = vmul.f32 %v7040, %v1317
    %v7274 = vmul.f32 %v7044, %v1373
    %v7275 = vmul.f32 %v7046, %v1375
    %v7276 = vmul.f32 %v7050, %v1377
    %v7277 = vmul.f32 %v7052, %v1379
    %v7278 = vmul.f32 %v7056, %v1435
    %v7279 = vmul.f32 %v7058, %v1437
    %v7280 = vmul.f32 %v7062, %v1439
    %v7281 = vmul.f32 %v7064, %v1441
    %v7282 = vmul.f32 %v7068, %v1497
    %v7283 = vmul.f32 %v7070, %v1499
    %v7284 = vmul.f32 %v7074, %v1501
    %v7285 = vmul.f32 %v7076, %v1503
    %v7286 = vmul.f32 %v7080, %v1559
    %v7287 = vmul.f32 %v7082, %v1561
    %v7288 = vmul.f32 %v7086, %v1563
    %v7289 = vmul.f32 %v7088, %v1565
    %v7290 = vmul.f32 %v7092, %v1621
    %v7291 = vmul.f32 %v7094, %v1623
    %v7292 = vmul.f32 %v7098, %v1625
    %v7293 = vmul.f32 %v7100, %v1627
    %v7294 = vmul.f32 %v7104, %v1683
    %v7295 = vmul.f32 %v7106, %v1685
    %v7296 = vmul.f32 %v7110, %v1687
    %v7297 = vmul.f32 %v7112, %v1689
    %v7298 = vmul.f32 %v7116, %v1745
    %v7299 = vmul.f32 %v7118, %v1747
    %v7300 = vmul.f32 %v7122, %v1749
    %v7301 = vmul.f32 %v7124, %v1751
    %v7302 = vmul.f32 %v7128, %v1807
    %v7303 = vmul.f32 %v7130, %v1809
    %v7304 = vmul.f32 %v7134, %v1811
    %v7305 = vmul.f32 %v7136, %v1813
    %v7306 = vmul.f32 %v7140, %v1869
    %v7307 = vmul.f32 %v7142, %v1871
    %v7308 = vmul.f32 %v7146, %v1873
    %v7309 = vmul.f32 %v7148, %v1875
    %v7310 = vmul.f32 %v7152, %v1931
    %v7311 = vmul.f32 %v7154, %v1933
    %v7312 = vmul.f32 %v7158, %v1935
    %v7313 = vmul.f32 %v7160, %v1937
    %v7314 = vmul.f32 %v7164, %v1993
    %v7315 = vmul.f32 %v7166, %v1995
    %v7316 = vmul.f32 %v7170, %v1997
    %v7317 = vmul.f32 %v7172, %v1999
    %v7318 = vmul.f32 %v7176, %v2055
    %v7319 = vmul.f32 %v7178, %v2057
    %v7320 = vmul.f32 %v7182, %v2059
    %v7321 = vmul.f32 %v7184, %v2061
    %v7322 = vmul.f32 %v7188, %v2117
    %v7323 = vmul.f32 %v7190, %v2119
    %v7324 = vmul.f32 %v7194, %v2121
    %v7325 = vmul.f32 %v7196, %v2123
    %v7326 = vadd.f32 %v7198, %v7202
    %v7327 = vadd.f32 %v7326, %v7206
    %v7328 = vadd.f32 %v7327, %v7210
    %v7329 = vadd.f32 %v7328, %v7214
    %v7330 = vadd.f32 %v7329, %v7218
    %v7331 = vadd.f32 %v7330, %v7222
    %v7332 = vadd.f32 %v7331, %v7226
    %v7333 = vadd.f32 %v7332, %v7230
    %v7334 = vadd.f32 %v7333, %v7234
    %v7335 = vadd.f32 %v7334, %v7238
    %v7336 = vadd.f32 %v7335, %v7242
    %v7337 = vadd.f32 %v7336, %v7246
    %v7338 = vadd.f32 %v7337, %v7250
    %v7339 = vadd.f32 %v7338, %v7254
    %v7340 = vadd.f32 %v7339, %v7258
    %v7341 = vadd.f32 %v7340, %v7262
    %v7342 = vadd.f32 %v7341, %v7266
    %v7343 = vadd.f32 %v7342, %v7270
    %v7344 = vadd.f32 %v7343, %v7274
    %v7345 = vadd.f32 %v7344, %v7278
    %v7346 = vadd.f32 %v7345, %v7282
    %v7347 = vadd.f32 %v7346, %v7286
    %v7348 = vadd.f32 %v7347, %v7290
    %v7349 = vadd.f32 %v7348, %v7294
    %v7350 = vadd.f32 %v7349, %v7298
    %v7351 = vadd.f32 %v7350, %v7302
    %v7352 = vadd.f32 %v7351, %v7306
    %v7353 = vadd.f32 %v7352, %v7310
    %v7354 = vadd.f32 %v7353, %v7314
    %v7355 = vadd.f32 %v7354, %v7318
    %v7356 = vadd.f32 %v7355, %v7322
    %v7357 = vsel %vm2156, %v7199, 0.0
    %v7358 = vsel %vm2156, %v7203, 0.0
    %v7359 = vadd.f32 %v7357, %v7358
    %v7360 = vsel %vm2156, %v7207, 0.0
    %v7361 = vadd.f32 %v7359, %v7360
    %v7362 = vsel %vm2156, %v7211, 0.0
    %v7363 = vadd.f32 %v7361, %v7362
    %v7364 = vsel %vm2156, %v7215, 0.0
    %v7365 = vadd.f32 %v7363, %v7364
    %v7366 = vsel %vm2156, %v7219, 0.0
    %v7367 = vadd.f32 %v7365, %v7366
    %v7368 = vsel %vm2156, %v7223, 0.0
    %v7369 = vadd.f32 %v7367, %v7368
    %v7370 = vsel %vm2156, %v7227, 0.0
    %v7371 = vadd.f32 %v7369, %v7370
    %v7372 = vsel %vm2156, %v7231, 0.0
    %v7373 = vadd.f32 %v7371, %v7372
    %v7374 = vsel %vm2156, %v7235, 0.0
    %v7375 = vadd.f32 %v7373, %v7374
    %v7376 = vsel %vm2156, %v7239, 0.0
    %v7377 = vadd.f32 %v7375, %v7376
    %v7378 = vsel %vm2156, %v7243, 0.0
    %v7379 = vadd.f32 %v7377, %v7378
    %v7380 = vsel %vm2156, %v7247, 0.0
    %v7381 = vadd.f32 %v7379, %v7380
    %v7382 = vsel %vm2156, %v7251, 0.0
    %v7383 = vadd.f32 %v7381, %v7382
    %v7384 = vsel %vm2156, %v7255, 0.0
    %v7385 = vadd.f32 %v7383, %v7384
    %v7386 = vsel %vm2156, %v7259, 0.0
    %v7387 = vadd.f32 %v7385, %v7386
    %v7388 = vsel %vm2156, %v7263, 0.0
    %v7389 = vadd.f32 %v7387, %v7388
    %v7390 = vsel %vm2156, %v7267, 0.0
    %v7391 = vadd.f32 %v7389, %v7390
    %v7392 = vsel %vm2156, %v7271, 0.0
    %v7393 = vadd.f32 %v7391, %v7392
    %v7394 = vsel %vm2156, %v7275, 0.0
    %v7395 = vadd.f32 %v7393, %v7394
    %v7396 = vsel %vm2156, %v7279, 0.0
    %v7397 = vadd.f32 %v7395, %v7396
    %v7398 = vsel %vm2156, %v7283, 0.0
    %v7399 = vadd.f32 %v7397, %v7398
    %v7400 = vsel %vm2156, %v7287, 0.0
    %v7401 = vadd.f32 %v7399, %v7400
    %v7402 = vsel %vm2156, %v7291, 0.0
    %v7403 = vadd.f32 %v7401, %v7402
    %v7404 = vsel %vm2156, %v7295, 0.0
    %v7405 = vadd.f32 %v7403, %v7404
    %v7406 = vsel %vm2156, %v7299, 0.0
    %v7407 = vadd.f32 %v7405, %v7406
    %v7408 = vsel %vm2156, %v7303, 0.0
    %v7409 = vadd.f32 %v7407, %v7408
    %v7410 = vsel %vm2156, %v7307, 0.0
    %v7411 = vadd.f32 %v7409, %v7410
    %v7412 = vsel %vm2156, %v7311, 0.0
    %v7413 = vadd.f32 %v7411, %v7412
    %v7414 = vsel %vm2156, %v7315, 0.0
    %v7415 = vadd.f32 %v7413, %v7414
    %v7416 = vsel %vm2156, %v7319, 0.0
    %v7417 = vadd.f32 %v7415, %v7416
    %v7418 = vsel %vm2156, %v7323, 0.0
    %v7419 = vadd.f32 %v7417, %v7418
    %v7420 = vadd.f32 %v7200, %v7204
    %v7421 = vadd.f32 %v7420, %v7208
    %v7422 = vadd.f32 %v7421, %v7212
    %v7423 = vadd.f32 %v7422, %v7216
    %v7424 = vadd.f32 %v7423, %v7220
    %v7425 = vadd.f32 %v7424, %v7224
    %v7426 = vadd.f32 %v7425, %v7228
    %v7427 = vadd.f32 %v7426, %v7232
    %v7428 = vadd.f32 %v7427, %v7236
    %v7429 = vadd.f32 %v7428, %v7240
    %v7430 = vadd.f32 %v7429, %v7244
    %v7431 = vadd.f32 %v7430, %v7248
    %v7432 = vadd.f32 %v7431, %v7252
    %v7433 = vadd.f32 %v7432, %v7256
    %v7434 = vadd.f32 %v7433, %v7260
    %v7435 = vadd.f32 %v7434, %v7264
    %v7436 = vadd.f32 %v7435, %v7268
    %v7437 = vadd.f32 %v7436, %v7272
    %v7438 = vadd.f32 %v7437, %v7276
    %v7439 = vadd.f32 %v7438, %v7280
    %v7440 = vadd.f32 %v7439, %v7284
    %v7441 = vadd.f32 %v7440, %v7288
    %v7442 = vadd.f32 %v7441, %v7292
    %v7443 = vadd.f32 %v7442, %v7296
    %v7444 = vadd.f32 %v7443, %v7300
    %v7445 = vadd.f32 %v7444, %v7304
    %v7446 = vadd.f32 %v7445, %v7308
    %v7447 = vadd.f32 %v7446, %v7312
    %v7448 = vadd.f32 %v7447, %v7316
    %v7449 = vadd.f32 %v7448, %v7320
    %v7450 = vadd.f32 %v7449, %v7324
    %v7451 = vsel %vm2156, %v7201, 0.0
    %v7452 = vsel %vm2156, %v7205, 0.0
    %v7453 = vadd.f32 %v7451, %v7452
    %v7454 = vsel %vm2156, %v7209, 0.0
    %v7455 = vadd.f32 %v7453, %v7454
    %v7456 = vsel %vm2156, %v7213, 0.0
    %v7457 = vadd.f32 %v7455, %v7456
    %v7458 = vsel %vm2156, %v7217, 0.0
    %v7459 = vadd.f32 %v7457, %v7458
    %v7460 = vsel %vm2156, %v7221, 0.0
    %v7461 = vadd.f32 %v7459, %v7460
    %v7462 = vsel %vm2156, %v7225, 0.0
    %v7463 = vadd.f32 %v7461, %v7462
    %v7464 = vsel %vm2156, %v7229, 0.0
    %v7465 = vadd.f32 %v7463, %v7464
    %v7466 = vsel %vm2156, %v7233, 0.0
    %v7467 = vadd.f32 %v7465, %v7466
    %v7468 = vsel %vm2156, %v7237, 0.0
    %v7469 = vadd.f32 %v7467, %v7468
    %v7470 = vsel %vm2156, %v7241, 0.0
    %v7471 = vadd.f32 %v7469, %v7470
    %v7472 = vsel %vm2156, %v7245, 0.0
    %v7473 = vadd.f32 %v7471, %v7472
    %v7474 = vsel %vm2156, %v7249, 0.0
    %v7475 = vadd.f32 %v7473, %v7474
    %v7476 = vsel %vm2156, %v7253, 0.0
    %v7477 = vadd.f32 %v7475, %v7476
    %v7478 = vsel %vm2156, %v7257, 0.0
    %v7479 = vadd.f32 %v7477, %v7478
    %v7480 = vsel %vm2156, %v7261, 0.0
    %v7481 = vadd.f32 %v7479, %v7480
    %v7482 = vsel %vm2156, %v7265, 0.0
    %v7483 = vadd.f32 %v7481, %v7482
    %v7484 = vsel %vm2156, %v7269, 0.0
    %v7485 = vadd.f32 %v7483, %v7484
    %v7486 = vsel %vm2156, %v7273, 0.0
    %v7487 = vadd.f32 %v7485, %v7486
    %v7488 = vsel %vm2156, %v7277, 0.0
    %v7489 = vadd.f32 %v7487, %v7488
    %v7490 = vsel %vm2156, %v7281, 0.0
    %v7491 = vadd.f32 %v7489, %v7490
    %v7492 = vsel %vm2156, %v7285, 0.0
    %v7493 = vadd.f32 %v7491, %v7492
    %v7494 = vsel %vm2156, %v7289, 0.0
    %v7495 = vadd.f32 %v7493, %v7494
    %v7496 = vsel %vm2156, %v7293, 0.0
    %v7497 = vadd.f32 %v7495, %v7496
    %v7498 = vsel %vm2156, %v7297, 0.0
    %v7499 = vadd.f32 %v7497, %v7498
    %v7500 = vsel %vm2156, %v7301, 0.0
    %v7501 = vadd.f32 %v7499, %v7500
    %v7502 = vsel %vm2156, %v7305, 0.0
    %v7503 = vadd.f32 %v7501, %v7502
    %v7504 = vsel %vm2156, %v7309, 0.0
    %v7505 = vadd.f32 %v7503, %v7504
    %v7506 = vsel %vm2156, %v7313, 0.0
    %v7507 = vadd.f32 %v7505, %v7506
    %v7508 = vsel %vm2156, %v7317, 0.0
    %v7509 = vadd.f32 %v7507, %v7508
    %v7510 = vsel %vm2156, %v7321, 0.0
    %v7511 = vadd.f32 %v7509, %v7510
    %v7512 = vsel %vm2156, %v7325, 0.0
    %v7513 = vadd.f32 %v7511, %v7512
    %v7514 = vmul.f32 %v7356, %v7356
    %v7515 = vmul.f32 %v7419, %v7419
    %v7516 = vmul.f32 %v7450, %v7450
    %v7517 = vmul.f32 %v7513, %v7513
    %v7519 = vsel %vm2156, %v7515, 0
    %v7522 = vsel %vm2156, %v7517, 0
    %7524 = vmatprep.subr.mxu0 0.0
    %7525 = vmatpush1.msra.mxu0 %v119
    %7526 = vmatprep.subr.mxu0 0.0
    %7527 = vmatpush1.msra.mxu0 %v120
    %7528 = vmatprep.subr.mxu0 0.0
    %7529 = vmatpush1.msra.mxu0 %v121
    %7530 = vmatprep.subr.mxu0 0.0
    %7531 = vmatpush1.msra.mxu0 %v122
    %7532 = vmatprep.subr.mxu0 0.0
    %7533 = vmatpush1.msra.mxu0 %v123
    %7534 = vmatprep.subr.mxu0 0.0
    %7535 = vmatpush1.msra.mxu0 %v124
    %7536 = vmatprep.subr.mxu0 0.0
    %7537 = vmatpush1.msra.mxu0 %v125
    %7538 = vmatprep.subr.mxu0 0.0
    %7539 = vmatpush1.msra.mxu0 %v126
    %7540 = vmatprep.subr.mxu0 0.0
    %7541 = vmatpush1.msra.mxu0 %v127
    %7542 = vmatprep.subr.mxu0 0.0
    %7543 = vmatpush1.msra.mxu0 %v128
    %7544 = vmatprep.subr.mxu0 0.0
    %7545 = vmatpush1.msra.mxu0 %v129
    %7546 = vmatprep.subr.mxu0 0.0
    %7547 = vmatpush1.msra.mxu0 %v130
    %7548 = vmatprep.subr.mxu0 0.0
    %7549 = vmatpush1.msra.mxu0 %v131
    %7550 = vmatprep.subr.mxu0 0.0
    %7551 = vmatpush1.msra.mxu0 %v132
    %7552 = vmatprep.subr.mxu0 0.0
    %7553 = vmatpush1.msra.mxu0 %v133
    %7554 = vmatprep.subr.mxu0 0.0
    %7555 = vmatpush1.msra.mxu0 %v134
    %7556 = vmatprep.subr.mxu0 0.0
    %7557 = vmatpush1.msra.mxu0 %v135
    %7558 = vmatprep.subr.mxu0 0.0
    %7559 = vmatpush1.msra.mxu0 %v136
    %7560 = vmatprep.subr.mxu0 0.0
    %7561 = vmatpush1.msra.mxu0 %v137
    %7562 = vmatprep.subr.mxu0 0.0
    %7563 = vmatpush1.msra.mxu0 %v138
    %7564 = vmatprep.subr.mxu0 0.0
    %7565 = vmatpush1.msra.mxu0 0.0
    %7566 = vmatprep.subr.mxu0 0.0
    %7567 = vmatpush1.msra.mxu0 0.0
    %7568 = vmatprep.subr.mxu0 0.0
    %7569 = vmatpush1.msra.mxu0 0.0
    %7570 = vmatprep.subr.mxu0 0.0
    %7571 = vmatpush1.msra.mxu0 0.0
    %7572 = vmatprep.subr.mxu0 0.0
    %7573 = vmatpush1.msra.mxu0 0.0
    %7574 = vmatprep.subr.mxu0 0.0
    %7575 = vmatpush1.msra.mxu0 0.0
    %7576 = vmatprep.subr.mxu0 0.0
    %7577 = vmatpush1.msra.mxu0 0.0
    %7578 = vmatprep.subr.mxu0 0.0
    %7579 = vmatpush1.msra.mxu0 0.0
    %7580 = vmatprep.subr.mxu0 0.0
    %7581 = vmatpush1.msra.mxu0 0.0
    %7582 = vmatprep.subr.mxu0 0.0
    %7583 = vmatpush1.msra.mxu0 0.0
    %7584 = vmatprep.subr.mxu0 0.0
    %7585 = vmatpush1.msra.mxu0 0.0
    %7586 = vmatprep.subr.mxu0 0.0
    %7587 = vmatpush1.msra.mxu0 0.0
    %7588 = vmatprep.mubr.f32.mxu0 %v7519
    %7589 = vmatmul.mubr.f32.gmra.mrb[0].mxu0 %v7514
    %v7590 = vpop.f32.mrb[0].mxu0
    %v7591 = vadd.f32 0.0, %v7590
    %v7592 = vpop.f32.mrb[0].mxu0
    %7593 = vmatprep.mubr.f32.mxu0 %v7522
    %7594 = vmatmul.mubr.f32.gmra.mrb[0].mxu0 %v7516
    %v7595 = vpop.f32.mrb[0].mxu0
    %v7596 = vadd.f32 0.0, %v7595
    %v7597 = vpop.f32.mrb[0].mxu0
    %7598 = vdwg.mxu0
    %v7599 = vrsqrt.pop %v7591
    %v7600 = vmul.f32 %v7591, %v7599
    %vm7601 = vcmp.eq.f32.partialorder %v7591, inf
    %v7602 = vsel %vm7601, %v7591, %v7600
    %vm7603 = vcmp.eq.f32.partialorder %v7591, 0.0
    %v7604 = vand.u32 %v7591, 2147483648
    %v7605 = vsel %vm7603, %v7604, %v7602
    %v7606 = vrsqrt.pop %v7596
    %v7607 = vmul.f32 %v7596, %v7606
    %vm7608 = vcmp.eq.f32.partialorder %v7596, inf
    %v7609 = vsel %vm7608, %v7596, %v7607
    %vm7610 = vcmp.eq.f32.partialorder %v7596, 0.0
    %v7611 = vand.u32 %v7596, 2147483648
    %v7612 = vsel %vm7610, %v7611, %v7609
    %v7613 = vadd.f32 %v7591, 1.0
    %v7614 = vadd.f32 %v7596, 1.0
    %v7615 = vadd.f32 %v7605, 1e-08
    %v7616 = vadd.f32 %v7612, 1e-08
    %v7617 = vmul.f32 %v7613, %v7615
    %v7618 = vmul.f32 %v7614, %v7616
    %v7619 = vrcp.pop %v7617
    %v7620 = vrcp.pop %v7618
    %v7621 = vmul.f32 %v7591, %v7619
    %v7622 = vmul.f32 %v7596, %v7620
    %v7624 = vsel %vm2427, %v7621, 0
    %v7627 = vsel %vm2427, %v7622, 0
    %7629 = vmatprep.subr.mxu0 %v116
    %7630 = vmatpush1.msra.mxu0 %v115
    %7631 = vmatprep.subr.mxu0 %v2439
    %7632 = vmatpush1.msra.mxu0 %v2436
    %7633 = vmatprep.subr.mxu0 0.0
    %7634 = vmatpush1.msra.mxu0 0.0
    %7635 = vmatprep.subr.mxu0 0.0
    %7636 = vmatpush1.msra.mxu0 0.0
    %7637 = vmatprep.subr.mxu0 0.0
    %7638 = vmatpush1.msra.mxu0 0.0
    %7639 = vmatprep.subr.mxu0 0.0
    %7640 = vmatpush1.msra.mxu0 0.0
    %7641 = vmatprep.subr.mxu0 0.0
    %7642 = vmatpush1.msra.mxu0 0.0
    %7643 = vmatprep.subr.mxu0 0.0
    %7644 = vmatpush1.msra.mxu0 0.0
    %7645 = vmatprep.subr.mxu0 0.0
    %7646 = vmatpush1.msra.mxu0 0.0
    %7647 = vmatprep.subr.mxu0 0.0
    %7648 = vmatpush1.msra.mxu0 0.0
    %7649 = vmatprep.subr.mxu0 0.0
    %7650 = vmatpush1.msra.mxu0 0.0
    %7651 = vmatprep.subr.mxu0 0.0
    %7652 = vmatpush1.msra.mxu0 0.0
    %7653 = vmatprep.subr.mxu0 0.0
    %7654 = vmatpush1.msra.mxu0 0.0
    %7655 = vmatprep.subr.mxu0 0.0
    %7656 = vmatpush1.msra.mxu0 0.0
    %7657 = vmatprep.subr.mxu0 0.0
    %7658 = vmatpush1.msra.mxu0 0.0
    %7659 = vmatprep.subr.mxu0 0.0
    %7660 = vmatpush1.msra.mxu0 0.0
    %7661 = vmatprep.subr.mxu0 0.0
    %7662 = vmatpush1.msra.mxu0 0.0
    %7663 = vmatprep.subr.mxu0 0.0
    %7664 = vmatpush1.msra.mxu0 0.0
    %7665 = vmatprep.subr.mxu0 0.0
    %7666 = vmatpush1.msra.mxu0 0.0
    %7667 = vmatprep.subr.mxu0 0.0
    %7668 = vmatpush1.msra.mxu0 0.0
    %7669 = vmatprep.subr.mxu0 0.0
    %7670 = vmatpush1.msra.mxu0 0.0
    %7671 = vmatprep.subr.mxu0 0.0
    %7672 = vmatpush1.msra.mxu0 0.0
    %7673 = vmatprep.subr.mxu0 0.0
    %7674 = vmatpush1.msra.mxu0 0.0
    %7675 = vmatprep.subr.mxu0 0.0
    %7676 = vmatpush1.msra.mxu0 0.0
    %7677 = vmatprep.subr.mxu0 0.0
    %7678 = vmatpush1.msra.mxu0 0.0
    %7679 = vmatprep.subr.mxu0 0.0
    %7680 = vmatpush1.msra.mxu0 0.0
    %7681 = vmatprep.subr.mxu0 0.0
    %7682 = vmatpush1.msra.mxu0 0.0
    %7683 = vmatprep.subr.mxu0 0.0
    %7684 = vmatpush1.msra.mxu0 0.0
    %7685 = vmatprep.subr.mxu0 0.0
    %7686 = vmatpush1.msra.mxu0 0.0
    %7687 = vmatprep.subr.mxu0 0.0
    %7688 = vmatpush1.msra.mxu0 0.0
    %7689 = vmatprep.subr.mxu0 0.0
    %7690 = vmatpush1.msra.mxu0 0.0
    %7691 = vmatprep.subr.mxu0 0.0
    %7692 = vmatpush1.msra.mxu0 0.0
    %7693 = vmatprep.mubr.f32.mxu0 0.0
    %7694 = vmatmul.mubr.f32.gmra.mrb[0].mxu0 %v7624
    %v7695 = vpop.f32.mrb[0].mxu0
    %v7696 = vadd.f32 0.0, %v7695
    %v7697 = vpop.f32.mrb[0].mxu0
    %v7698 = vadd.f32 0.0, %v7697
    %7699 = vmatprep.mubr.f32.mxu0 0.0
    %7700 = vmatmul.mubr.f32.gmra.mrb[0].mxu0 %v7627
    %v7701 = vpop.f32.mrb[0].mxu0
    %v7702 = vadd.f32 0.0, %v7701
    %v7703 = vpop.f32.mrb[0].mxu0
    %v7704 = vadd.f32 0.0, %v7703
    %7705 = vdwg.mxu0
    %v7706 = vmul.f32 %v7356, %v7696
    %v7707 = vmul.f32 %v7419, %v7698
    %v7708 = vmul.f32 %v7450, %v7702
    %v7709 = vmul.f32 %v7513, %v7704
    %7710 = vst [vmem:[#allocation2] sm:$0xff] %v7706
    %7711 = vst.msk [vmem:[#allocation2 + $0x8] sm:$0xff] %vm2156, %v7707
    %7712 = vst [vmem:[#allocation2 + $0x10] sm:$0xff] %v7708
    %7713 = vst.msk [vmem:[#allocation2 + $0x18] sm:$0xff] %vm2156, %v7709
    // Predicated region
    $region18: #{tpu_custom_call.1} parent=1 // pred_check
      _
    $region19: #{tpu_custom_call.1} parent=1 // pred_check_branch
      %7715 = sbr.rel (0) target = $region21
    $region20: #{tpu_custom_call.1} parent=1 // pred_region
      %s7717 = ssub.s32 512, 512
      %7718 = vsyncadd [#allocation3], %s7717
      %s7719 = sshll.u32 [#allocation2], 4
      %s7720 = int_to_ptr.vmem [resolvable:$true] %s7719
      %7725 = dma.vmem_to_hbm [thread:$0]  %s7720, 512, %s4, [#allocation3], 256, 256, 16
    $region21: #{tpu_custom_call.1} parent=1 // pred_fallthru
      _
    // Predicated region
    $region22: #{tpu_custom_call.1} parent=1 // pred_check
      _
    $region23: #{tpu_custom_call.1} parent=1 // pred_check_branch
      %7727 = sbr.rel (0) target = $region25
    $region24: #{tpu_custom_call.1} parent=1 // pred_region
      %7728 = dma.done [#allocation3], 512
    $region25: #{tpu_custom_call.1} parent=1 // pred_fallthru
      _
    %7729 = vsyncpa [#allocation3], 1

</llo_original>
